<compile_context>
chip_gen: v7x
topology: tpu7x:2x2x1
jax: 0.10.0
libtpu: 0.0.40
codegen_flags: <defaults>
</compile_context>

<pallas_src>
import functools

import jax
import jax.numpy as jnp
from jax.experimental import pallas as pl
from jax.experimental.pallas import tpu as pltpu

LRELU_SLOPE = 0.2
GN_EPS = 1e-5
VMEM_LIMIT = 32 * 1024 * 1024


def _round_up(x, m):
    return ((x + m - 1) // m) * m


# ----------------------------- Pallas kernels -----------------------------

def _conv_gemm_kernel(p_ref, w_ref, b_ref, o_ref, acc_ref, *, act):
    # p_ref: (tm, tk) bf16, w_ref: (tk, tn) bf16, b_ref: (1, tn) f32
    # o_ref: (tm, tn), acc_ref: (tm, tn) f32 scratch. Grid: (M/tm, N/tn, K/tk).
    k = pl.program_id(2)

    @pl.when(k == 0)
    def _():
        acc_ref[...] = jnp.zeros_like(acc_ref)

    acc_ref[...] += jnp.dot(p_ref[...], w_ref[...],
                            preferred_element_type=jnp.float32)

    @pl.when(k == pl.num_programs(2) - 1)
    def _():
        acc = acc_ref[...] + b_ref[...]
        if act == "lrelu":
            acc = jnp.maximum(acc, LRELU_SLOPE * acc)
        o_ref[...] = acc.astype(o_ref.dtype)


def _groupnorm_lrelu_kernel(x_ref, g_ref, gt_ref, gamma_ref, beta_ref, o_ref, *, cg):
    # x_ref: (1, HW, C) bf16 for one sample; g_ref: (C, G) one-hot membership.
    # Centered variance (safer than E[x^2]-E[x]^2); all math in f32.
    x = x_ref[0].astype(jnp.float32)                                # (HW, C)
    hw = x.shape[0]
    cnt = float(hw * cg)
    s1 = jnp.sum(x, axis=0, keepdims=True)                          # (1, C)
    gs1 = jnp.dot(s1, g_ref[...], preferred_element_type=jnp.float32)   # (1, G)
    mean_c = jnp.dot(gs1 / cnt, gt_ref[...],
                     preferred_element_type=jnp.float32)            # (1, C)
    xc = x - mean_c
    s2 = jnp.sum(xc * xc, axis=0, keepdims=True)                    # (1, C)
    gvar = jnp.dot(s2, g_ref[...], preferred_element_type=jnp.float32) / cnt
    inv_c = jnp.dot(jax.lax.rsqrt(gvar + GN_EPS), gt_ref[...],
                    preferred_element_type=jnp.float32)             # (1, C)
    y = xc * inv_c * gamma_ref[...] + beta_ref[...]
    o_ref[0] = jnp.maximum(y, LRELU_SLOPE * y).astype(o_ref.dtype)


def _conv5_head_kernel(p_ref, w_ref, b_ref, o_ref, acc_ref, *, hw):
    # Lane-dense head: per sample compute (1, tk) @ (tk, HWp) and accumulate
    # over K tiles; finalize = bias + sigmoid + masked mean over spatial dims.
    # p_ref: (1, tk, HWp) bf16; w_ref: (1, tk) bf16; b_ref: (1,1) f32
    # o_ref: (1,1,1) f32; acc_ref: (1, HWp) f32 scratch. Grid: (N, K/tk).
    k = pl.program_id(1)

    @pl.when(k == 0)
    def _():
        acc_ref[...] = jnp.zeros_like(acc_ref)

    acc_ref[...] += jnp.dot(w_ref[...], p_ref[0],
                            preferred_element_type=jnp.float32)

    @pl.when(k == pl.num_programs(1) - 1)
    def _():
        s = acc_ref[...] + b_ref[...]
        y = jax.nn.sigmoid(s)                                       # (1, HWp)
        mask = jax.lax.broadcasted_iota(jnp.int32, y.shape, 1) < hw
        mean = jnp.sum(jnp.where(mask, y, 0.0)) / float(hw)
        o_ref[...] = mean.reshape(1, 1, 1)


# ------------------------------ JAX glue ----------------------------------

def _im2col(xp, k, s):
    """xp: padded NHWC input. Returns (N, Ho, Wo, k*k*C), (kh, kw, c) ordering."""
    N, Hp, Wp, C = xp.shape
    Ho = (Hp - k) // s + 1
    Wo = (Wp - k) // s + 1
    cols = []
    for kh in range(k):
        for kw in range(k):
            sl = jax.lax.slice(
                xp,
                (0, kh, kw, 0),
                (N, kh + (Ho - 1) * s + 1, kw + (Wo - 1) * s + 1, C),
                (1, s, s, 1),
            )
            cols.append(sl)
    return jnp.concatenate(cols, axis=-1), Ho, Wo


def _im2col_t(xp, k, s):
    """K-major patches: (N, k*k*C, Ho*Wo) with (kh, kw, c) ordering along K."""
    N, Hp, Wp, C = xp.shape
    Ho = (Hp - k) // s + 1
    Wo = (Wp - k) // s + 1
    cols = []
    for kh in range(k):
        for kw in range(k):
            sl = jax.lax.slice(
                xp,
                (0, kh, kw, 0),
                (N, kh + (Ho - 1) * s + 1, kw + (Wo - 1) * s + 1, C),
                (1, s, s, 1),
            )
            cols.append(jnp.transpose(sl, (0, 3, 1, 2)).reshape(N, C, Ho * Wo))
    return jnp.concatenate(cols, axis=1), Ho, Wo


def _conv_gemm(patches, w_mat, bias, act, out_dtype):
    M, K = patches.shape
    cout = w_mat.shape[1]
    # Pad K and cout to lane-dense multiples of 128 (zero rows/cols -> no-op).
    Kp = _round_up(K, 128)
    coutp = _round_up(cout, 128)
    # Tile sizes. tn=256 on wide layers (v6e/v7x MXU is 2x256); tk up to 512.
    tn = 256 if coutp % 256 == 0 else 128
    tk = 512 if Kp % 512 == 0 else 128
    if M <= 256:
        Mp = _round_up(M, 8)
        tm = Mp
    else:
        Mp = _round_up(M, 256)
        tm = 256

    if (Mp, Kp) != (M, K):
        patches = jnp.pad(patches, ((0, Mp - M), (0, Kp - K)))
    if (Kp, coutp) != (K, cout):
        w_mat = jnp.pad(w_mat, ((0, Kp - K), (0, coutp - cout)))
    if coutp != cout:
        bias = jnp.pad(bias, (0, coutp - cout))

    patches = patches.astype(jnp.bfloat16)
    w_mat = w_mat.astype(jnp.bfloat16)
    bias2d = bias.reshape(1, coutp).astype(jnp.float32)

    grid = (Mp // tm, coutp // tn, Kp // tk)
    out = pl.pallas_call(
        functools.partial(_conv_gemm_kernel, act=act),
        out_shape=jax.ShapeDtypeStruct((Mp, coutp), out_dtype),
        grid_spec=pltpu.PrefetchScalarGridSpec(
            num_scalar_prefetch=0,
            grid=grid,
            in_specs=[
                pl.BlockSpec((tm, tk), lambda i, j, k: (i, k)),
                pl.BlockSpec((tk, tn), lambda i, j, k: (k, j)),
                pl.BlockSpec((1, tn), lambda i, j, k: (0, j)),
            ],
            out_specs=pl.BlockSpec((tm, tn), lambda i, j, k: (i, j)),
            scratch_shapes=[pltpu.VMEM((tm, tn), jnp.float32)],
        ),
        compiler_params=pltpu.CompilerParams(
            dimension_semantics=("parallel", "parallel", "arbitrary"),
            vmem_limit_bytes=VMEM_LIMIT,
        ),
    )(patches, w_mat, bias2d)
    return out[:M, :cout]


def conv_layer(x, w, b, stride, act="none", out_dtype=jnp.bfloat16):
    """x: (N,H,W,Cin) NHWC; w: torch layout (Cout,Cin,4,4). Returns (N,Ho,Wo,Cout)."""
    N, H, W, Cin = x.shape
    k = w.shape[-1]
    xp = jnp.pad(x, ((0, 0), (1, 1), (1, 1), (0, 0)))              # padding=1
    # TODO(synk): build patch tiles in-kernel via manual DMA instead of an
    #   HBM-materialized im2col slab.
    patches, Ho, Wo = _im2col(xp, k, stride)
    patches = patches.reshape(N * Ho * Wo, k * k * Cin)
    w_mat = jnp.transpose(w, (2, 3, 1, 0)).reshape(k * k * Cin, -1)
    out = _conv_gemm(patches, w_mat, b, act, out_dtype)
    return out.reshape(N, Ho, Wo, -1)


def groupnorm_lrelu(x, gamma, beta, num_groups=32):
    N, Ho, Wo, C = x.shape
    HW = Ho * Wo
    cg = C // num_groups
    xf = x.reshape(N, HW, C)
    G = (jnp.arange(C)[:, None] // cg ==
         jnp.arange(num_groups)[None, :]).astype(jnp.float32)
    out = pl.pallas_call(
        functools.partial(_groupnorm_lrelu_kernel, cg=cg),
        out_shape=jax.ShapeDtypeStruct((N, HW, C), x.dtype),
        grid_spec=pltpu.PrefetchScalarGridSpec(
            num_scalar_prefetch=0,
            grid=(N,),
            in_specs=[
                pl.BlockSpec((1, HW, C), lambda n: (n, 0, 0)),
                pl.BlockSpec((C, num_groups), lambda n: (0, 0)),
                pl.BlockSpec((num_groups, C), lambda n: (0, 0)),
                pl.BlockSpec((1, C), lambda n: (0, 0)),
                pl.BlockSpec((1, C), lambda n: (0, 0)),
            ],
            out_specs=pl.BlockSpec((1, HW, C), lambda n: (n, 0, 0)),
        ),
        compiler_params=pltpu.CompilerParams(
            dimension_semantics=("parallel",),
            vmem_limit_bytes=VMEM_LIMIT,
        ),
    )(xf, G, G.T, gamma.reshape(1, C).astype(jnp.float32),
      beta.reshape(1, C).astype(jnp.float32))
    return out.reshape(N, Ho, Wo, C)


def conv5_sigmoid_mean(x, w, b):
    """Final conv (Cout=1) + sigmoid + mean over spatial dims, per sample."""
    N, H, W, Cin = x.shape
    k = w.shape[-1]
    xp = jnp.pad(x, ((0, 0), (1, 1), (1, 1), (0, 0)))
    pt, Ho, Wo = _im2col_t(xp, k, 1)                               # (N, K, HW)
    HW = Ho * Wo
    K = k * k * Cin
    HWp = _round_up(HW, 128)
    if HWp != HW:
        pt = jnp.pad(pt, ((0, 0), (0, 0), (0, HWp - HW)))
    pt = pt.astype(jnp.bfloat16)
    w_row = jnp.transpose(w, (2, 3, 1, 0)).reshape(K, 1).T.astype(jnp.bfloat16)
    b2d = b.reshape(1, 1).astype(jnp.float32)
    tk = 512 if K % 512 == 0 else (128 if K % 128 == 0 else K)

    out = pl.pallas_call(
        functools.partial(_conv5_head_kernel, hw=HW),
        out_shape=jax.ShapeDtypeStruct((N, 1, 1), jnp.float32),
        grid_spec=pltpu.PrefetchScalarGridSpec(
            num_scalar_prefetch=0,
            grid=(N, K // tk),
            in_specs=[
                pl.BlockSpec((1, tk, HWp), lambda n, kk: (n, kk, 0)),
                pl.BlockSpec((1, tk), lambda n, kk: (0, kk)),
                pl.BlockSpec((1, 1), lambda n, kk: (0, 0)),
            ],
            out_specs=pl.BlockSpec((1, 1, 1), lambda n, kk: (n, 0, 0)),
            scratch_shapes=[pltpu.VMEM((1, HWp), jnp.float32)],
        ),
        compiler_params=pltpu.CompilerParams(
            dimension_semantics=("parallel", "arbitrary"),
            vmem_limit_bytes=VMEM_LIMIT,
        ),
    )(pt, w_row, b2d)
    return out.reshape(N, 1)


# ------------------------ parameters (deterministic) -----------------------

def _spectral_normalize(w, key, n_iter=1, eps=1e-12):
    # torch.nn.utils.spectral_norm: one power iteration on the (Cout, -1) matrix.
    cout = w.shape[0]
    w2d = w.reshape(cout, -1)
    u = jax.random.normal(key, (cout,), jnp.float32)
    u = u / (jnp.linalg.norm(u) + eps)
    v = u
    for _ in range(n_iter):
        v = w2d.T @ u
        v = v / (jnp.linalg.norm(v) + eps)
        u = w2d @ v
        u = u / (jnp.linalg.norm(u) + eps)
    sigma = u @ (w2d @ v)
    return w / sigma


def init_params(key):
    keys = jax.random.split(key, 20)
    p = {}
    defs = [("1", 6, 64), ("2", 64, 128), ("3", 128, 256), ("4", 256, 512), ("5", 512, 1)]
    ki = 0
    for name, cin, cout in defs:
        w = 0.02 * jax.random.normal(keys[ki], (cout, cin, 4, 4), jnp.float32); ki += 1
        b = 0.02 * jax.random.normal(keys[ki], (cout,), jnp.float32); ki += 1
        w = _spectral_normalize(w, keys[ki]); ki += 1
        p[f"w{name}"], p[f"b{name}"] = w, b
    # GroupNorm params (weights_init: weight ~ N(1, 0.02), bias = 0). bn1 is
    # unused in the PyTorch forward, so it is omitted here as well.
    for name, c in [("2", 128), ("3", 256), ("4", 512)]:
        p[f"gn{name}_w"] = 1.0 + 0.02 * jax.random.normal(keys[ki], (c,), jnp.float32); ki += 1
        p[f"gn{name}_b"] = jnp.zeros((c,), jnp.float32)
    return p


# ------------------------------- forward -----------------------------------

def discriminator_forward(base, unknown, p):
    # base, unknown: NCHW (N, 3, H, W)
    x = jnp.concatenate([base, unknown], axis=1)        # (N, 6, H, W)
    x = jnp.transpose(x, (0, 2, 3, 1))                  # -> NHWC
    x = conv_layer(x, p["w1"], p["b1"], stride=2, act="lrelu")           # conv1 + lrelu
    x = conv_layer(x, p["w2"], p["b2"], stride=2, act="none")            # conv2
    x = groupnorm_lrelu(x, p["gn2_w"], p["gn2_b"])                       # bn2 + lrelu
    x = conv_layer(x, p["w3"], p["b3"], stride=2, act="none")            # conv3
    x = groupnorm_lrelu(x, p["gn3_w"], p["gn3_b"])                       # bn3 + lrelu
    x = conv_layer(x, p["w4"], p["b4"], stride=1, act="none")            # conv4
    x = groupnorm_lrelu(x, p["gn4_w"], p["gn4_b"])                       # bn4 + lrelu
    return conv5_sigmoid_mean(x, p["w5"], p["b5"])                       # (N, 1)


def reference_forward(base, unknown, p):
    """Pure-JAX f32 reference matching the PyTorch forward (NCHW)."""
    x = jnp.concatenate([base, unknown], axis=1)

    def conv(x, w, b, s):
        y = jax.lax.conv_general_dilated(
            x, w, (s, s), ((1, 1), (1, 1)),
            dimension_numbers=("NCHW", "OIHW", "NCHW"))
        return y + b[None, :, None, None]

    def lrelu(x):
        return jnp.where(x >= 0, x, LRELU_SLOPE * x)

    def gn(x, g, b, ng=32):
        N, C, H, W = x.shape
        xr = x.reshape(N, ng, (C // ng) * H * W)
        m = xr.mean(-1, keepdims=True)
        v = ((xr - m) ** 2).mean(-1, keepdims=True)
        xr = (xr - m) / jnp.sqrt(v + GN_EPS)
        return xr.reshape(N, C, H, W) * g[None, :, None, None] + b[None, :, None, None]

    x = lrelu(conv(x, p["w1"], p["b1"], 2))
    x = lrelu(gn(conv(x, p["w2"], p["b2"], 2), p["gn2_w"], p["gn2_b"]))
    x = lrelu(gn(conv(x, p["w3"], p["b3"], 2), p["gn3_w"], p["gn3_b"]))
    x = lrelu(gn(conv(x, p["w4"], p["b4"], 1), p["gn4_w"], p["gn4_b"]))
    x = jax.nn.sigmoid(conv(x, p["w5"], p["b5"], 1))
    return x.mean((2, 3))


if __name__ == "__main__":
    key = jax.random.PRNGKey(0)
    kp, kb, ku = jax.random.split(key, 3)
    params = init_params(kp)

    # H=W=32 keeps spatial sizes valid all the way through conv5 (output 2x2).
    N, H, W = 2, 32, 32
    base = jax.random.normal(kb, (N, 3, H, W), jnp.float32)
    unknown = jax.random.normal(ku, (N, 3, H, W), jnp.float32)

    fwd = jax.jit(discriminator_forward)
    out = jax.block_until_ready(fwd(base, unknown, params))
    ref = jax.block_until_ready(reference_forward(base, unknown, params))

    assert out.shape == (N, 1), out.shape
    # bf16 MXU operands / bf16 inter-layer activations (f32 accumulation):
    # tolerance loosened accordingly vs the pure-f32 reference.
    if not jnp.allclose(out, ref, rtol=2e-2, atol=2e-2):
        raise AssertionError(f"mismatch: pallas={out}, ref={ref}")
    print("KERNEL_OK")
</pallas_src>

<mosaic_0001>
module attributes {stable_mosaic.version = 11 : i64} {
  func.func @_conv_gemm_kernel(%arg0: i32, %arg1: i32, %arg2: i32, %arg3: memref<256x128xbf16, #tpu.memory_space<vmem>>, %arg4: memref<128x128xbf16, #tpu.memory_space<vmem>>, %arg5: memref<1x128xf32, #tpu.memory_space<vmem>>, %arg6: memref<256x128xbf16, #tpu.memory_space<vmem>>, %arg7: memref<256x128xf32, #tpu.memory_space<vmem>>) attributes {dimension_semantics = [#tpu.dimension_semantics<parallel>, #tpu.dimension_semantics<parallel>, #tpu.dimension_semantics<arbitrary>], iteration_bounds = array<i64: 2, 1, 1>, scalar_prefetch = 0 : i64, scratch_operands = 1 : i64, tpu.core_type = #tpu.core_type<tc>, window_params = [{transform_indices = @transform_0, window_bounds = array<i64: 256, 128>}, {transform_indices = @transform_1, window_bounds = array<i64: 128, 128>}, {transform_indices = @transform_2, window_bounds = array<i64: 1, 128>}, {transform_indices = @transform_3, window_bounds = array<i64: 256, 128>}]} {
    %c0_i32 = arith.constant 0 : i32
    %0 = arith.cmpi eq, %arg2, %c0_i32 : i32
    %1 = arith.extui %0 : i1 to i32
    %c0_i32_0 = arith.constant 0 : i32
    %2 = arith.cmpi ne, %1, %c0_i32_0 : i32
    scf.if %2 {
      %cst_10 = arith.constant 0.000000e+00 : f32
      %12 = vector.broadcast %cst_10 : f32 to vector<256x128xf32>
      %c0_11 = arith.constant 0 : index
      %c0_12 = arith.constant 0 : index
      %13 = vector.load %arg7[%c0_11, %c0_12] : memref<256x128xf32, #tpu.memory_space<vmem>>, vector<256x128xf32>
      tpu.vector_store %arg7[%c0_11, %c0_12], %12 {strides = array<i32>} : memref<256x128xf32, #tpu.memory_space<vmem>>, vector<256x128xf32>,
    } else {
    }
    %c0 = arith.constant 0 : index
    %c0_1 = arith.constant 0 : index
    %3 = vector.load %arg7[%c0, %c0_1] : memref<256x128xf32, #tpu.memory_space<vmem>>, vector<256x128xf32>
    %c0_2 = arith.constant 0 : index
    %c0_3 = arith.constant 0 : index
    %4 = vector.load %arg3[%c0_2, %c0_3] : memref<256x128xbf16, #tpu.memory_space<vmem>>, vector<256x128xbf16>
    %c0_4 = arith.constant 0 : index
    %c0_5 = arith.constant 0 : index
    %5 = vector.load %arg4[%c0_4, %c0_5] : memref<128x128xbf16, #tpu.memory_space<vmem>>, vector<128x128xbf16>
    %cst = arith.constant dense<0.000000e+00> : vector<256x128xf32>
    %6 = tpu.matmul %4, %5, %cst {dimension_numbers = #tpu.dot_dimension_numbers<[1], [0], [0], [1], [0, 0, 1, 1], [], []>} : vector<256x128xbf16>, vector<128x128xbf16>, vector<256x128xf32> -> vector<256x128xf32>
    %7 = arith.addf %3, %6 : vector<256x128xf32>
    %c0_6 = arith.constant 0 : index
    %c0_7 = arith.constant 0 : index
    %8 = vector.load %arg7[%c0_6, %c0_7] : memref<256x128xf32, #tpu.memory_space<vmem>>, vector<256x128xf32>
    tpu.vector_store %arg7[%c0_6, %c0_7], %7 {strides = array<i32>} : memref<256x128xf32, #tpu.memory_space<vmem>>, vector<256x128xf32>,
    %c0_i32_8 = arith.constant 0 : i32
    %9 = arith.cmpi eq, %arg2, %c0_i32_8 : i32
    %10 = arith.extui %9 : i1 to i32
    %c0_i32_9 = arith.constant 0 : i32
    %11 = arith.cmpi ne, %10, %c0_i32_9 : i32
    scf.if %11 {
      %c0_10 = arith.constant 0 : index
      %c0_11 = arith.constant 0 : index
      %12 = vector.load %arg7[%c0_10, %c0_11] : memref<256x128xf32, #tpu.memory_space<vmem>>, vector<256x128xf32>
      %c0_12 = arith.constant 0 : index
      %c0_13 = arith.constant 0 : index
      %13 = vector.load %arg5[%c0_12, %c0_13] : memref<1x128xf32, #tpu.memory_space<vmem>>, vector<1x128xf32>
      %14 = vector.broadcast %13 : vector<1x128xf32> to vector<256x128xf32>
      %15 = arith.addf %12, %14 : vector<256x128xf32>
      %cst_14 = arith.constant 2.000000e-01 : f32
      %16 = vector.broadcast %cst_14 : f32 to vector<256x128xf32>
      %17 = arith.mulf %16, %15 : vector<256x128xf32>
      %18 = arith.maximumf %15, %17 : vector<256x128xf32>
      %19 = arith.truncf %18 : vector<256x128xf32> to vector<256x128xbf16>
      %c0_15 = arith.constant 0 : index
      %c0_16 = arith.constant 0 : index
      %20 = vector.load %arg6[%c0_15, %c0_16] : memref<256x128xbf16, #tpu.memory_space<vmem>>, vector<256x128xbf16>
      tpu.vector_store %arg6[%c0_15, %c0_16], %19 {strides = array<i32>} : memref<256x128xbf16, #tpu.memory_space<vmem>>, vector<256x128xbf16>,
    } else {
    }
    return
  }
  func.func @transform_0(%arg0: i32, %arg1: i32, %arg2: i32) -> (i32, i32) {
    %c0_i32 = arith.constant 0 : i32
    return %arg0, %arg2 : i32, i32
  }
  func.func @transform_1(%arg0: i32, %arg1: i32, %arg2: i32) -> (i32, i32) {
    %c0_i32 = arith.constant 0 : i32
    return %arg2, %arg1 : i32, i32
  }
  func.func @transform_2(%arg0: i32, %arg1: i32, %arg2: i32) -> (i32, i32) {
    %c0_i32 = arith.constant 0 : i32
    %c0_i32_0 = arith.constant 0 : i32
    return %c0_i32, %arg1 : i32, i32
  }
  func.func @transform_3(%arg0: i32, %arg1: i32, %arg2: i32) -> (i32, i32) {
    %c0_i32 = arith.constant 0 : i32
    return %arg0, %arg1 : i32, i32
  }
}

module attributes {stable_mosaic.version = 11 : i64} {
  func.func @_conv_gemm_kernel(%arg0: i32, %arg1: i32, %arg2: i32, %arg3: memref<128x512xbf16, #tpu.memory_space<vmem>>, %arg4: memref<512x128xbf16, #tpu.memory_space<vmem>>, %arg5: memref<1x128xf32, #tpu.memory_space<vmem>>, %arg6: memref<128x128xbf16, #tpu.memory_space<vmem>>, %arg7: memref<128x128xf32, #tpu.memory_space<vmem>>) attributes {dimension_semantics = [#tpu.dimension_semantics<parallel>, #tpu.dimension_semantics<parallel>, #tpu.dimension_semantics<arbitrary>], iteration_bounds = array<i64: 1, 1, 2>, scalar_prefetch = 0 : i64, scratch_operands = 1 : i64, tpu.core_type = #tpu.core_type<tc>, window_params = [{transform_indices = @transform_0, window_bounds = array<i64: 128, 512>}, {transform_indices = @transform_1, window_bounds = array<i64: 512, 128>}, {transform_indices = @transform_2, window_bounds = array<i64: 1, 128>}, {transform_indices = @transform_3, window_bounds = array<i64: 128, 128>}]} {
    %c0_i32 = arith.constant 0 : i32
    %0 = arith.cmpi eq, %arg2, %c0_i32 : i32
    %1 = arith.extui %0 : i1 to i32
    %c0_i32_0 = arith.constant 0 : i32
    %2 = arith.cmpi ne, %1, %c0_i32_0 : i32
    scf.if %2 {
      %cst_9 = arith.constant 0.000000e+00 : f32
      %12 = vector.broadcast %cst_9 : f32 to vector<128x128xf32>
      %c0_10 = arith.constant 0 : index
      %c0_11 = arith.constant 0 : index
      %13 = vector.load %arg7[%c0_10, %c0_11] : memref<128x128xf32, #tpu.memory_space<vmem>>, vector<128x128xf32>
      tpu.vector_store %arg7[%c0_10, %c0_11], %12 {strides = array<i32>} : memref<128x128xf32, #tpu.memory_space<vmem>>, vector<128x128xf32>,
    } else {
    }
    %c0 = arith.constant 0 : index
    %c0_1 = arith.constant 0 : index
    %3 = vector.load %arg7[%c0, %c0_1] : memref<128x128xf32, #tpu.memory_space<vmem>>, vector<128x128xf32>
    %c0_2 = arith.constant 0 : index
    %c0_3 = arith.constant 0 : index
    %4 = vector.load %arg3[%c0_2, %c0_3] : memref<128x512xbf16, #tpu.memory_space<vmem>>, vector<128x512xbf16>
    %c0_4 = arith.constant 0 : index
    %c0_5 = arith.constant 0 : index
    %5 = vector.load %arg4[%c0_4, %c0_5] : memref<512x128xbf16, #tpu.memory_space<vmem>>, vector<512x128xbf16>
    %cst = arith.constant dense<0.000000e+00> : vector<128x128xf32>
    %6 = tpu.matmul %4, %5, %cst {dimension_numbers = #tpu.dot_dimension_numbers<[1], [0], [0], [1], [0, 0, 1, 1], [], []>} : vector<128x512xbf16>, vector<512x128xbf16>, vector<128x128xf32> -> vector<128x128xf32>
    %7 = arith.addf %3, %6 : vector<128x128xf32>
    %c0_6 = arith.constant 0 : index
    %c0_7 = arith.constant 0 : index
    %8 = vector.load %arg7[%c0_6, %c0_7] : memref<128x128xf32, #tpu.memory_space<vmem>>, vector<128x128xf32>
    tpu.vector_store %arg7[%c0_6, %c0_7], %7 {strides = array<i32>} : memref<128x128xf32, #tpu.memory_space<vmem>>, vector<128x128xf32>,
    %c1_i32 = arith.constant 1 : i32
    %9 = arith.cmpi eq, %arg2, %c1_i32 : i32
    %10 = arith.extui %9 : i1 to i32
    %c0_i32_8 = arith.constant 0 : i32
    %11 = arith.cmpi ne, %10, %c0_i32_8 : i32
    scf.if %11 {
      %c0_9 = arith.constant 0 : index
      %c0_10 = arith.constant 0 : index
      %12 = vector.load %arg7[%c0_9, %c0_10] : memref<128x128xf32, #tpu.memory_space<vmem>>, vector<128x128xf32>
      %c0_11 = arith.constant 0 : index
      %c0_12 = arith.constant 0 : index
      %13 = vector.load %arg5[%c0_11, %c0_12] : memref<1x128xf32, #tpu.memory_space<vmem>>, vector<1x128xf32>
      %14 = vector.broadcast %13 : vector<1x128xf32> to vector<128x128xf32>
      %15 = arith.addf %12, %14 : vector<128x128xf32>
      %16 = arith.truncf %15 : vector<128x128xf32> to vector<128x128xbf16>
      %c0_13 = arith.constant 0 : index
      %c0_14 = arith.constant 0 : index
      %17 = vector.load %arg6[%c0_13, %c0_14] : memref<128x128xbf16, #tpu.memory_space<vmem>>, vector<128x128xbf16>
      tpu.vector_store %arg6[%c0_13, %c0_14], %16 {strides = array<i32>} : memref<128x128xbf16, #tpu.memory_space<vmem>>, vector<128x128xbf16>,
    } else {
    }
    return
  }
  func.func @transform_0(%arg0: i32, %arg1: i32, %arg2: i32) -> (i32, i32) {
    %c0_i32 = arith.constant 0 : i32
    return %arg0, %arg2 : i32, i32
  }
  func.func @transform_1(%arg0: i32, %arg1: i32, %arg2: i32) -> (i32, i32) {
    %c0_i32 = arith.constant 0 : i32
    return %arg2, %arg1 : i32, i32
  }
  func.func @transform_2(%arg0: i32, %arg1: i32, %arg2: i32) -> (i32, i32) {
    %c0_i32 = arith.constant 0 : i32
    %c0_i32_0 = arith.constant 0 : i32
    return %c0_i32, %arg1 : i32, i32
  }
  func.func @transform_3(%arg0: i32, %arg1: i32, %arg2: i32) -> (i32, i32) {
    %c0_i32 = arith.constant 0 : i32
    return %arg0, %arg1 : i32, i32
  }
}

module attributes {stable_mosaic.version = 11 : i64} {
  func.func @_groupnorm_lrelu_kernel(%arg0: i32, %arg1: memref<1x64x128xbf16, #tpu.memory_space<vmem>>, %arg2: memref<128x32xf32, #tpu.memory_space<vmem>>, %arg3: memref<32x128xf32, #tpu.memory_space<vmem>>, %arg4: memref<1x128xf32, #tpu.memory_space<vmem>>, %arg5: memref<1x128xf32, #tpu.memory_space<vmem>>, %arg6: memref<1x64x128xbf16, #tpu.memory_space<vmem>>) attributes {dimension_semantics = [#tpu.dimension_semantics<parallel>], iteration_bounds = array<i64: 2>, scalar_prefetch = 0 : i64, scratch_operands = 0 : i64, tpu.core_type = #tpu.core_type<tc>, window_params = [{transform_indices = @transform_0, window_bounds = array<i64: 1, 64, 128>}, {pipeline_mode = #tpu.pipeline_mode<synchronous>, transform_indices = @transform_1, window_bounds = array<i64: 128, 32>}, {pipeline_mode = #tpu.pipeline_mode<synchronous>, transform_indices = @transform_2, window_bounds = array<i64: 32, 128>}, {pipeline_mode = #tpu.pipeline_mode<synchronous>, transform_indices = @transform_3, window_bounds = array<i64: 1, 128>}, {pipeline_mode = #tpu.pipeline_mode<synchronous>, transform_indices = @transform_4, window_bounds = array<i64: 1, 128>}, {transform_indices = @transform_5, window_bounds = array<i64: 1, 64, 128>}]} {
    %c0 = arith.constant 0 : index
    %c0_0 = arith.constant 0 : index
    %c0_1 = arith.constant 0 : index
    %0 = vector.load %arg1[%c0, %c0_0, %c0_1] : memref<1x64x128xbf16, #tpu.memory_space<vmem>>, vector<1x64x128xbf16>
    %1 = vector.shape_cast %0 : vector<1x64x128xbf16> to vector<64x128xbf16>
    %2 = arith.extf %1 : vector<64x128xbf16> to vector<64x128xf32>
    %cst = arith.constant dense<0.000000e+00> : vector<128xf32>
    %3 = vector.multi_reduction <add>, %2, %cst [0] : vector<64x128xf32> to vector<128xf32>
    %4 = vector.shape_cast %3 : vector<128xf32> to vector<1x128xf32>
    %c0_2 = arith.constant 0 : index
    %c0_3 = arith.constant 0 : index
    %5 = vector.load %arg2[%c0_2, %c0_3] : memref<128x32xf32, #tpu.memory_space<vmem>>, vector<128x32xf32>
    %cst_4 = arith.constant dense<0.000000e+00> : vector<1x32xf32>
    %6 = tpu.matmul %4, %5, %cst_4 {dimension_numbers = #tpu.dot_dimension_numbers<[1], [0], [0], [1], [0, 0, 1, 1], [], []>} : vector<1x128xf32>, vector<128x32xf32>, vector<1x32xf32> -> vector<1x32xf32>
    %cst_5 = arith.constant 2.560000e+02 : f32
    %7 = vector.broadcast %cst_5 : f32 to vector<1x32xf32>
    %8 = arith.divf %6, %7 : vector<1x32xf32>
    %c0_6 = arith.constant 0 : index
    %c0_7 = arith.constant 0 : index
    %9 = vector.load %arg3[%c0_6, %c0_7] : memref<32x128xf32, #tpu.memory_space<vmem>>, vector<32x128xf32>
    %cst_8 = arith.constant dense<0.000000e+00> : vector<1x128xf32>
    %10 = tpu.matmul %8, %9, %cst_8 {dimension_numbers = #tpu.dot_dimension_numbers<[1], [0], [0], [1], [0, 0, 1, 1], [], []>} : vector<1x32xf32>, vector<32x128xf32>, vector<1x128xf32> -> vector<1x128xf32>
    %11 = vector.broadcast %10 : vector<1x128xf32> to vector<64x128xf32>
    %12 = arith.subf %2, %11 : vector<64x128xf32>
    %13 = arith.mulf %12, %12 : vector<64x128xf32>
    %cst_9 = arith.constant dense<0.000000e+00> : vector<128xf32>
    %14 = vector.multi_reduction <add>, %13, %cst_9 [0] : vector<64x128xf32> to vector<128xf32>
    %15 = vector.shape_cast %14 : vector<128xf32> to vector<1x128xf32>
    %c0_10 = arith.constant 0 : index
    %c0_11 = arith.constant 0 : index
    %16 = vector.load %arg2[%c0_10, %c0_11] : memref<128x32xf32, #tpu.memory_space<vmem>>, vector<128x32xf32>
    %cst_12 = arith.constant dense<0.000000e+00> : vector<1x32xf32>
    %17 = tpu.matmul %15, %16, %cst_12 {dimension_numbers = #tpu.dot_dimension_numbers<[1], [0], [0], [1], [0, 0, 1, 1], [], []>} : vector<1x128xf32>, vector<128x32xf32>, vector<1x32xf32> -> vector<1x32xf32>
    %cst_13 = arith.constant 2.560000e+02 : f32
    %18 = vector.broadcast %cst_13 : f32 to vector<1x32xf32>
    %19 = arith.divf %17, %18 : vector<1x32xf32>
    %cst_14 = arith.constant 9.99999974E-6 : f32
    %20 = vector.broadcast %cst_14 : f32 to vector<1x32xf32>
    %21 = arith.addf %19, %20 : vector<1x32xf32>
    %22 = math.rsqrt %21 : vector<1x32xf32>
    %c0_15 = arith.constant 0 : index
    %c0_16 = arith.constant 0 : index
    %23 = vector.load %arg3[%c0_15, %c0_16] : memref<32x128xf32, #tpu.memory_space<vmem>>, vector<32x128xf32>
    %cst_17 = arith.constant dense<0.000000e+00> : vector<1x128xf32>
    %24 = tpu.matmul %22, %23, %cst_17 {dimension_numbers = #tpu.dot_dimension_numbers<[1], [0], [0], [1], [0, 0, 1, 1], [], []>} : vector<1x32xf32>, vector<32x128xf32>, vector<1x128xf32> -> vector<1x128xf32>
    %25 = vector.broadcast %24 : vector<1x128xf32> to vector<64x128xf32>
    %26 = arith.mulf %12, %25 : vector<64x128xf32>
    %c0_18 = arith.constant 0 : index
    %c0_19 = arith.constant 0 : index
    %27 = vector.load %arg4[%c0_18, %c0_19] : memref<1x128xf32, #tpu.memory_space<vmem>>, vector<1x128xf32>
    %28 = vector.broadcast %27 : vector<1x128xf32> to vector<64x128xf32>
    %29 = arith.mulf %26, %28 : vector<64x128xf32>
    %c0_20 = arith.constant 0 : index
    %c0_21 = arith.constant 0 : index
    %30 = vector.load %arg5[%c0_20, %c0_21] : memref<1x128xf32, #tpu.memory_space<vmem>>, vector<1x128xf32>
    %31 = vector.broadcast %30 : vector<1x128xf32> to vector<64x128xf32>
    %32 = arith.addf %29, %31 : vector<64x128xf32>
    %cst_22 = arith.constant 2.000000e-01 : f32
    %33 = vector.broadcast %cst_22 : f32 to vector<64x128xf32>
    %34 = arith.mulf %33, %32 : vector<64x128xf32>
    %35 = arith.maximumf %32, %34 : vector<64x128xf32>
    %36 = arith.truncf %35 : vector<64x128xf32> to vector<64x128xbf16>
    %c0_23 = arith.constant 0 : index
    %c0_24 = arith.constant 0 : index
    %c0_25 = arith.constant 0 : index
    %37 = vector.load %arg6[%c0_23, %c0_24, %c0_25] : memref<1x64x128xbf16, #tpu.memory_space<vmem>>, vector<1x64x128xbf16>
    %38 = vector.shape_cast %37 : vector<1x64x128xbf16> to vector<64x128xbf16>
    %39 = vector.shape_cast %36 : vector<64x128xbf16> to vector<1x64x128xbf16>
    tpu.vector_store %arg6[%c0_23, %c0_24, %c0_25], %39 {strides = array<i32>} : memref<1x64x128xbf16, #tpu.memory_space<vmem>>, vector<1x64x128xbf16>,
    return
  }
  func.func @transform_0(%arg0: i32) -> (i32, i32, i32) {
    %c0_i32 = arith.constant 0 : i32
    %c0_i32_0 = arith.constant 0 : i32
    %c0_i32_1 = arith.constant 0 : i32
    return %arg0, %c0_i32, %c0_i32_0 : i32, i32, i32
  }
  func.func @transform_1(%arg0: i32) -> (i32, i32) {
    %c0_i32 = arith.constant 0 : i32
    %c0_i32_0 = arith.constant 0 : i32
    %c0_i32_1 = arith.constant 0 : i32
    return %c0_i32, %c0_i32_0 : i32, i32
  }
  func.func @transform_2(%arg0: i32) -> (i32, i32) {
    %c0_i32 = arith.constant 0 : i32
    %c0_i32_0 = arith.constant 0 : i32
    %c0_i32_1 = arith.constant 0 : i32
    return %c0_i32, %c0_i32_0 : i32, i32
  }
  func.func @transform_3(%arg0: i32) -> (i32, i32) {
    %c0_i32 = arith.constant 0 : i32
    %c0_i32_0 = arith.constant 0 : i32
    %c0_i32_1 = arith.constant 0 : i32
    return %c0_i32, %c0_i32_0 : i32, i32
  }
  func.func @transform_4(%arg0: i32) -> (i32, i32) {
    %c0_i32 = arith.constant 0 : i32
    %c0_i32_0 = arith.constant 0 : i32
    %c0_i32_1 = arith.constant 0 : i32
    return %c0_i32, %c0_i32_0 : i32, i32
  }
  func.func @transform_5(%arg0: i32) -> (i32, i32, i32) {
    %c0_i32 = arith.constant 0 : i32
    %c0_i32_0 = arith.constant 0 : i32
    %c0_i32_1 = arith.constant 0 : i32
    return %arg0, %c0_i32, %c0_i32_0 : i32, i32, i32
  }
}

module attributes {stable_mosaic.version = 11 : i64} {
  func.func @_conv_gemm_kernel(%arg0: i32, %arg1: i32, %arg2: i32, %arg3: memref<32x512xbf16, #tpu.memory_space<vmem>>, %arg4: memref<512x256xbf16, #tpu.memory_space<vmem>>, %arg5: memref<1x256xf32, #tpu.memory_space<vmem>>, %arg6: memref<32x256xbf16, #tpu.memory_space<vmem>>, %arg7: memref<32x256xf32, #tpu.memory_space<vmem>>) attributes {dimension_semantics = [#tpu.dimension_semantics<parallel>, #tpu.dimension_semantics<parallel>, #tpu.dimension_semantics<arbitrary>], iteration_bounds = array<i64: 1, 1, 4>, scalar_prefetch = 0 : i64, scratch_operands = 1 : i64, tpu.core_type = #tpu.core_type<tc>, window_params = [{transform_indices = @transform_0, window_bounds = array<i64: 32, 512>}, {transform_indices = @transform_1, window_bounds = array<i64: 512, 256>}, {transform_indices = @transform_2, window_bounds = array<i64: 1, 256>}, {transform_indices = @transform_3, window_bounds = array<i64: 32, 256>}]} {
    %c0_i32 = arith.constant 0 : i32
    %0 = arith.cmpi eq, %arg2, %c0_i32 : i32
    %1 = arith.extui %0 : i1 to i32
    %c0_i32_0 = arith.constant 0 : i32
    %2 = arith.cmpi ne, %1, %c0_i32_0 : i32
    scf.if %2 {
      %cst_9 = arith.constant 0.000000e+00 : f32
      %12 = vector.broadcast %cst_9 : f32 to vector<32x256xf32>
      %c0_10 = arith.constant 0 : index
      %c0_11 = arith.constant 0 : index
      %13 = vector.load %arg7[%c0_10, %c0_11] : memref<32x256xf32, #tpu.memory_space<vmem>>, vector<32x256xf32>
      tpu.vector_store %arg7[%c0_10, %c0_11], %12 {strides = array<i32>} : memref<32x256xf32, #tpu.memory_space<vmem>>, vector<32x256xf32>,
    } else {
    }
    %c0 = arith.constant 0 : index
    %c0_1 = arith.constant 0 : index
    %3 = vector.load %arg7[%c0, %c0_1] : memref<32x256xf32, #tpu.memory_space<vmem>>, vector<32x256xf32>
    %c0_2 = arith.constant 0 : index
    %c0_3 = arith.constant 0 : index
    %4 = vector.load %arg3[%c0_2, %c0_3] : memref<32x512xbf16, #tpu.memory_space<vmem>>, vector<32x512xbf16>
    %c0_4 = arith.constant 0 : index
    %c0_5 = arith.constant 0 : index
    %5 = vector.load %arg4[%c0_4, %c0_5] : memref<512x256xbf16, #tpu.memory_space<vmem>>, vector<512x256xbf16>
    %cst = arith.constant dense<0.000000e+00> : vector<32x256xf32>
    %6 = tpu.matmul %4, %5, %cst {dimension_numbers = #tpu.dot_dimension_numbers<[1], [0], [0], [1], [0, 0, 1, 1], [], []>} : vector<32x512xbf16>, vector<512x256xbf16>, vector<32x256xf32> -> vector<32x256xf32>
    %7 = arith.addf %3, %6 : vector<32x256xf32>
    %c0_6 = arith.constant 0 : index
    %c0_7 = arith.constant 0 : index
    %8 = vector.load %arg7[%c0_6, %c0_7] : memref<32x256xf32, #tpu.memory_space<vmem>>, vector<32x256xf32>
    tpu.vector_store %arg7[%c0_6, %c0_7], %7 {strides = array<i32>} : memref<32x256xf32, #tpu.memory_space<vmem>>, vector<32x256xf32>,
    %c3_i32 = arith.constant 3 : i32
    %9 = arith.cmpi eq, %arg2, %c3_i32 : i32
    %10 = arith.extui %9 : i1 to i32
    %c0_i32_8 = arith.constant 0 : i32
    %11 = arith.cmpi ne, %10, %c0_i32_8 : i32
    scf.if %11 {
      %c0_9 = arith.constant 0 : index
      %c0_10 = arith.constant 0 : index
      %12 = vector.load %arg7[%c0_9, %c0_10] : memref<32x256xf32, #tpu.memory_space<vmem>>, vector<32x256xf32>
      %c0_11 = arith.constant 0 : index
      %c0_12 = arith.constant 0 : index
      %13 = vector.load %arg5[%c0_11, %c0_12] : memref<1x256xf32, #tpu.memory_space<vmem>>, vector<1x256xf32>
      %14 = vector.broadcast %13 : vector<1x256xf32> to vector<32x256xf32>
      %15 = arith.addf %12, %14 : vector<32x256xf32>
      %16 = arith.truncf %15 : vector<32x256xf32> to vector<32x256xbf16>
      %c0_13 = arith.constant 0 : index
      %c0_14 = arith.constant 0 : index
      %17 = vector.load %arg6[%c0_13, %c0_14] : memref<32x256xbf16, #tpu.memory_space<vmem>>, vector<32x256xbf16>
      tpu.vector_store %arg6[%c0_13, %c0_14], %16 {strides = array<i32>} : memref<32x256xbf16, #tpu.memory_space<vmem>>, vector<32x256xbf16>,
    } else {
    }
    return
  }
  func.func @transform_0(%arg0: i32, %arg1: i32, %arg2: i32) -> (i32, i32) {
    %c0_i32 = arith.constant 0 : i32
    return %arg0, %arg2 : i32, i32
  }
  func.func @transform_1(%arg0: i32, %arg1: i32, %arg2: i32) -> (i32, i32) {
    %c0_i32 = arith.constant 0 : i32
    return %arg2, %arg1 : i32, i32
  }
  func.func @transform_2(%arg0: i32, %arg1: i32, %arg2: i32) -> (i32, i32) {
    %c0_i32 = arith.constant 0 : i32
    %c0_i32_0 = arith.constant 0 : i32
    return %c0_i32, %arg1 : i32, i32
  }
  func.func @transform_3(%arg0: i32, %arg1: i32, %arg2: i32) -> (i32, i32) {
    %c0_i32 = arith.constant 0 : i32
    return %arg0, %arg1 : i32, i32
  }
}

module attributes {stable_mosaic.version = 11 : i64} {
  func.func @_groupnorm_lrelu_kernel(%arg0: i32, %arg1: memref<1x16x256xbf16, #tpu.memory_space<vmem>>, %arg2: memref<256x32xf32, #tpu.memory_space<vmem>>, %arg3: memref<32x256xf32, #tpu.memory_space<vmem>>, %arg4: memref<1x256xf32, #tpu.memory_space<vmem>>, %arg5: memref<1x256xf32, #tpu.memory_space<vmem>>, %arg6: memref<1x16x256xbf16, #tpu.memory_space<vmem>>) attributes {dimension_semantics = [#tpu.dimension_semantics<parallel>], iteration_bounds = array<i64: 2>, scalar_prefetch = 0 : i64, scratch_operands = 0 : i64, tpu.core_type = #tpu.core_type<tc>, window_params = [{transform_indices = @transform_0, window_bounds = array<i64: 1, 16, 256>}, {pipeline_mode = #tpu.pipeline_mode<synchronous>, transform_indices = @transform_1, window_bounds = array<i64: 256, 32>}, {pipeline_mode = #tpu.pipeline_mode<synchronous>, transform_indices = @transform_2, window_bounds = array<i64: 32, 256>}, {pipeline_mode = #tpu.pipeline_mode<synchronous>, transform_indices = @transform_3, window_bounds = array<i64: 1, 256>}, {pipeline_mode = #tpu.pipeline_mode<synchronous>, transform_indices = @transform_4, window_bounds = array<i64: 1, 256>}, {transform_indices = @transform_5, window_bounds = array<i64: 1, 16, 256>}]} {
    %c0 = arith.constant 0 : index
    %c0_0 = arith.constant 0 : index
    %c0_1 = arith.constant 0 : index
    %0 = vector.load %arg1[%c0, %c0_0, %c0_1] : memref<1x16x256xbf16, #tpu.memory_space<vmem>>, vector<1x16x256xbf16>
    %1 = vector.shape_cast %0 : vector<1x16x256xbf16> to vector<16x256xbf16>
    %2 = arith.extf %1 : vector<16x256xbf16> to vector<16x256xf32>
    %cst = arith.constant dense<0.000000e+00> : vector<256xf32>
    %3 = vector.multi_reduction <add>, %2, %cst [0] : vector<16x256xf32> to vector<256xf32>
    %4 = vector.shape_cast %3 : vector<256xf32> to vector<1x256xf32>
    %c0_2 = arith.constant 0 : index
    %c0_3 = arith.constant 0 : index
    %5 = vector.load %arg2[%c0_2, %c0_3] : memref<256x32xf32, #tpu.memory_space<vmem>>, vector<256x32xf32>
    %cst_4 = arith.constant dense<0.000000e+00> : vector<1x32xf32>
    %6 = tpu.matmul %4, %5, %cst_4 {dimension_numbers = #tpu.dot_dimension_numbers<[1], [0], [0], [1], [0, 0, 1, 1], [], []>} : vector<1x256xf32>, vector<256x32xf32>, vector<1x32xf32> -> vector<1x32xf32>
    %cst_5 = arith.constant 1.280000e+02 : f32
    %7 = vector.broadcast %cst_5 : f32 to vector<1x32xf32>
    %8 = arith.divf %6, %7 : vector<1x32xf32>
    %c0_6 = arith.constant 0 : index
    %c0_7 = arith.constant 0 : index
    %9 = vector.load %arg3[%c0_6, %c0_7] : memref<32x256xf32, #tpu.memory_space<vmem>>, vector<32x256xf32>
    %cst_8 = arith.constant dense<0.000000e+00> : vector<1x256xf32>
    %10 = tpu.matmul %8, %9, %cst_8 {dimension_numbers = #tpu.dot_dimension_numbers<[1], [0], [0], [1], [0, 0, 1, 1], [], []>} : vector<1x32xf32>, vector<32x256xf32>, vector<1x256xf32> -> vector<1x256xf32>
    %11 = vector.broadcast %10 : vector<1x256xf32> to vector<16x256xf32>
    %12 = arith.subf %2, %11 : vector<16x256xf32>
    %13 = arith.mulf %12, %12 : vector<16x256xf32>
    %cst_9 = arith.constant dense<0.000000e+00> : vector<256xf32>
    %14 = vector.multi_reduction <add>, %13, %cst_9 [0] : vector<16x256xf32> to vector<256xf32>
    %15 = vector.shape_cast %14 : vector<256xf32> to vector<1x256xf32>
    %c0_10 = arith.constant 0 : index
    %c0_11 = arith.constant 0 : index
    %16 = vector.load %arg2[%c0_10, %c0_11] : memref<256x32xf32, #tpu.memory_space<vmem>>, vector<256x32xf32>
    %cst_12 = arith.constant dense<0.000000e+00> : vector<1x32xf32>
    %17 = tpu.matmul %15, %16, %cst_12 {dimension_numbers = #tpu.dot_dimension_numbers<[1], [0], [0], [1], [0, 0, 1, 1], [], []>} : vector<1x256xf32>, vector<256x32xf32>, vector<1x32xf32> -> vector<1x32xf32>
    %cst_13 = arith.constant 1.280000e+02 : f32
    %18 = vector.broadcast %cst_13 : f32 to vector<1x32xf32>
    %19 = arith.divf %17, %18 : vector<1x32xf32>
    %cst_14 = arith.constant 9.99999974E-6 : f32
    %20 = vector.broadcast %cst_14 : f32 to vector<1x32xf32>
    %21 = arith.addf %19, %20 : vector<1x32xf32>
    %22 = math.rsqrt %21 : vector<1x32xf32>
    %c0_15 = arith.constant 0 : index
    %c0_16 = arith.constant 0 : index
    %23 = vector.load %arg3[%c0_15, %c0_16] : memref<32x256xf32, #tpu.memory_space<vmem>>, vector<32x256xf32>
    %cst_17 = arith.constant dense<0.000000e+00> : vector<1x256xf32>
    %24 = tpu.matmul %22, %23, %cst_17 {dimension_numbers = #tpu.dot_dimension_numbers<[1], [0], [0], [1], [0, 0, 1, 1], [], []>} : vector<1x32xf32>, vector<32x256xf32>, vector<1x256xf32> -> vector<1x256xf32>
    %25 = vector.broadcast %24 : vector<1x256xf32> to vector<16x256xf32>
    %26 = arith.mulf %12, %25 : vector<16x256xf32>
    %c0_18 = arith.constant 0 : index
    %c0_19 = arith.constant 0 : index
    %27 = vector.load %arg4[%c0_18, %c0_19] : memref<1x256xf32, #tpu.memory_space<vmem>>, vector<1x256xf32>
    %28 = vector.broadcast %27 : vector<1x256xf32> to vector<16x256xf32>
    %29 = arith.mulf %26, %28 : vector<16x256xf32>
    %c0_20 = arith.constant 0 : index
    %c0_21 = arith.constant 0 : index
    %30 = vector.load %arg5[%c0_20, %c0_21] : memref<1x256xf32, #tpu.memory_space<vmem>>, vector<1x256xf32>
    %31 = vector.broadcast %30 : vector<1x256xf32> to vector<16x256xf32>
    %32 = arith.addf %29, %31 : vector<16x256xf32>
    %cst_22 = arith.constant 2.000000e-01 : f32
    %33 = vector.broadcast %cst_22 : f32 to vector<16x256xf32>
    %34 = arith.mulf %33, %32 : vector<16x256xf32>
    %35 = arith.maximumf %32, %34 : vector<16x256xf32>
    %36 = arith.truncf %35 : vector<16x256xf32> to vector<16x256xbf16>
    %c0_23 = arith.constant 0 : index
    %c0_24 = arith.constant 0 : index
    %c0_25 = arith.constant 0 : index
    %37 = vector.load %arg6[%c0_23, %c0_24, %c0_25] : memref<1x16x256xbf16, #tpu.memory_space<vmem>>, vector<1x16x256xbf16>
    %38 = vector.shape_cast %37 : vector<1x16x256xbf16> to vector<16x256xbf16>
    %39 = vector.shape_cast %36 : vector<16x256xbf16> to vector<1x16x256xbf16>
    tpu.vector_store %arg6[%c0_23, %c0_24, %c0_25], %39 {strides = array<i32>} : memref<1x16x256xbf16, #tpu.memory_space<vmem>>, vector<1x16x256xbf16>,
    return
  }
  func.func @transform_0(%arg0: i32) -> (i32, i32, i32) {
    %c0_i32 = arith.constant 0 : i32
    %c0_i32_0 = arith.constant 0 : i32
    %c0_i32_1 = arith.constant 0 : i32
    return %arg0, %c0_i32, %c0_i32_0 : i32, i32, i32
  }
  func.func @transform_1(%arg0: i32) -> (i32, i32) {
    %c0_i32 = arith.constant 0 : i32
    %c0_i32_0 = arith.constant 0 : i32
    %c0_i32_1 = arith.constant 0 : i32
    return %c0_i32, %c0_i32_0 : i32, i32
  }
  func.func @transform_2(%arg0: i32) -> (i32, i32) {
    %c0_i32 = arith.constant 0 : i32
    %c0_i32_0 = arith.constant 0 : i32
    %c0_i32_1 = arith.constant 0 : i32
    return %c0_i32, %c0_i32_0 : i32, i32
  }
  func.func @transform_3(%arg0: i32) -> (i32, i32) {
    %c0_i32 = arith.constant 0 : i32
    %c0_i32_0 = arith.constant 0 : i32
    %c0_i32_1 = arith.constant 0 : i32
    return %c0_i32, %c0_i32_0 : i32, i32
  }
  func.func @transform_4(%arg0: i32) -> (i32, i32) {
    %c0_i32 = arith.constant 0 : i32
    %c0_i32_0 = arith.constant 0 : i32
    %c0_i32_1 = arith.constant 0 : i32
    return %c0_i32, %c0_i32_0 : i32, i32
  }
  func.func @transform_5(%arg0: i32) -> (i32, i32, i32) {
    %c0_i32 = arith.constant 0 : i32
    %c0_i32_0 = arith.constant 0 : i32
    %c0_i32_1 = arith.constant 0 : i32
    return %arg0, %c0_i32, %c0_i32_0 : i32, i32, i32
  }
}

module attributes {stable_mosaic.version = 11 : i64} {
  func.func @_conv_gemm_kernel(%arg0: i32, %arg1: i32, %arg2: i32, %arg3: memref<24x512xbf16, #tpu.memory_space<vmem>>, %arg4: memref<512x256xbf16, #tpu.memory_space<vmem>>, %arg5: memref<1x256xf32, #tpu.memory_space<vmem>>, %arg6: memref<24x256xbf16, #tpu.memory_space<vmem>>, %arg7: memref<24x256xf32, #tpu.memory_space<vmem>>) attributes {dimension_semantics = [#tpu.dimension_semantics<parallel>, #tpu.dimension_semantics<parallel>, #tpu.dimension_semantics<arbitrary>], iteration_bounds = array<i64: 1, 2, 8>, scalar_prefetch = 0 : i64, scratch_operands = 1 : i64, tpu.core_type = #tpu.core_type<tc>, window_params = [{transform_indices = @transform_0, window_bounds = array<i64: 24, 512>}, {transform_indices = @transform_1, window_bounds = array<i64: 512, 256>}, {transform_indices = @transform_2, window_bounds = array<i64: 1, 256>}, {transform_indices = @transform_3, window_bounds = array<i64: 24, 256>}]} {
    %c0_i32 = arith.constant 0 : i32
    %0 = arith.cmpi eq, %arg2, %c0_i32 : i32
    %1 = arith.extui %0 : i1 to i32
    %c0_i32_0 = arith.constant 0 : i32
    %2 = arith.cmpi ne, %1, %c0_i32_0 : i32
    scf.if %2 {
      %cst_9 = arith.constant 0.000000e+00 : f32
      %12 = vector.broadcast %cst_9 : f32 to vector<24x256xf32>
      %c0_10 = arith.constant 0 : index
      %c0_11 = arith.constant 0 : index
      %13 = vector.load %arg7[%c0_10, %c0_11] : memref<24x256xf32, #tpu.memory_space<vmem>>, vector<24x256xf32>
      tpu.vector_store %arg7[%c0_10, %c0_11], %12 {strides = array<i32>} : memref<24x256xf32, #tpu.memory_space<vmem>>, vector<24x256xf32>,
    } else {
    }
    %c0 = arith.constant 0 : index
    %c0_1 = arith.constant 0 : index
    %3 = vector.load %arg7[%c0, %c0_1] : memref<24x256xf32, #tpu.memory_space<vmem>>, vector<24x256xf32>
    %c0_2 = arith.constant 0 : index
    %c0_3 = arith.constant 0 : index
    %4 = vector.load %arg3[%c0_2, %c0_3] : memref<24x512xbf16, #tpu.memory_space<vmem>>, vector<24x512xbf16>
    %c0_4 = arith.constant 0 : index
    %c0_5 = arith.constant 0 : index
    %5 = vector.load %arg4[%c0_4, %c0_5] : memref<512x256xbf16, #tpu.memory_space<vmem>>, vector<512x256xbf16>
    %cst = arith.constant dense<0.000000e+00> : vector<24x256xf32>
    %6 = tpu.matmul %4, %5, %cst {dimension_numbers = #tpu.dot_dimension_numbers<[1], [0], [0], [1], [0, 0, 1, 1], [], []>} : vector<24x512xbf16>, vector<512x256xbf16>, vector<24x256xf32> -> vector<24x256xf32>
    %7 = arith.addf %3, %6 : vector<24x256xf32>
    %c0_6 = arith.constant 0 : index
    %c0_7 = arith.constant 0 : index
    %8 = vector.load %arg7[%c0_6, %c0_7] : memref<24x256xf32, #tpu.memory_space<vmem>>, vector<24x256xf32>
    tpu.vector_store %arg7[%c0_6, %c0_7], %7 {strides = array<i32>} : memref<24x256xf32, #tpu.memory_space<vmem>>, vector<24x256xf32>,
    %c7_i32 = arith.constant 7 : i32
    %9 = arith.cmpi eq, %arg2, %c7_i32 : i32
    %10 = arith.extui %9 : i1 to i32
    %c0_i32_8 = arith.constant 0 : i32
    %11 = arith.cmpi ne, %10, %c0_i32_8 : i32
    scf.if %11 {
      %c0_9 = arith.constant 0 : index
      %c0_10 = arith.constant 0 : index
      %12 = vector.load %arg7[%c0_9, %c0_10] : memref<24x256xf32, #tpu.memory_space<vmem>>, vector<24x256xf32>
      %c0_11 = arith.constant 0 : index
      %c0_12 = arith.constant 0 : index
      %13 = vector.load %arg5[%c0_11, %c0_12] : memref<1x256xf32, #tpu.memory_space<vmem>>, vector<1x256xf32>
      %14 = vector.broadcast %13 : vector<1x256xf32> to vector<24x256xf32>
      %15 = arith.addf %12, %14 : vector<24x256xf32>
      %16 = arith.truncf %15 : vector<24x256xf32> to vector<24x256xbf16>
      %c0_13 = arith.constant 0 : index
      %c0_14 = arith.constant 0 : index
      %17 = vector.load %arg6[%c0_13, %c0_14] : memref<24x256xbf16, #tpu.memory_space<vmem>>, vector<24x256xbf16>
      tpu.vector_store %arg6[%c0_13, %c0_14], %16 {strides = array<i32>} : memref<24x256xbf16, #tpu.memory_space<vmem>>, vector<24x256xbf16>,
    } else {
    }
    return
  }
  func.func @transform_0(%arg0: i32, %arg1: i32, %arg2: i32) -> (i32, i32) {
    %c0_i32 = arith.constant 0 : i32
    return %arg0, %arg2 : i32, i32
  }
  func.func @transform_1(%arg0: i32, %arg1: i32, %arg2: i32) -> (i32, i32) {
    %c0_i32 = arith.constant 0 : i32
    return %arg2, %arg1 : i32, i32
  }
  func.func @transform_2(%arg0: i32, %arg1: i32, %arg2: i32) -> (i32, i32) {
    %c0_i32 = arith.constant 0 : i32
    %c0_i32_0 = arith.constant 0 : i32
    return %c0_i32, %arg1 : i32, i32
  }
  func.func @transform_3(%arg0: i32, %arg1: i32, %arg2: i32) -> (i32, i32) {
    %c0_i32 = arith.constant 0 : i32
    return %arg0, %arg1 : i32, i32
  }
}

module attributes {stable_mosaic.version = 11 : i64} {
  func.func @_groupnorm_lrelu_kernel(%arg0: i32, %arg1: memref<1x9x512xbf16, #tpu.memory_space<vmem>>, %arg2: memref<512x32xf32, #tpu.memory_space<vmem>>, %arg3: memref<32x512xf32, #tpu.memory_space<vmem>>, %arg4: memref<1x512xf32, #tpu.memory_space<vmem>>, %arg5: memref<1x512xf32, #tpu.memory_space<vmem>>, %arg6: memref<1x9x512xbf16, #tpu.memory_space<vmem>>) attributes {dimension_semantics = [#tpu.dimension_semantics<parallel>], iteration_bounds = array<i64: 2>, scalar_prefetch = 0 : i64, scratch_operands = 0 : i64, tpu.core_type = #tpu.core_type<tc>, window_params = [{transform_indices = @transform_0, window_bounds = array<i64: 1, 9, 512>}, {pipeline_mode = #tpu.pipeline_mode<synchronous>, transform_indices = @transform_1, window_bounds = array<i64: 512, 32>}, {pipeline_mode = #tpu.pipeline_mode<synchronous>, transform_indices = @transform_2, window_bounds = array<i64: 32, 512>}, {pipeline_mode = #tpu.pipeline_mode<synchronous>, transform_indices = @transform_3, window_bounds = array<i64: 1, 512>}, {pipeline_mode = #tpu.pipeline_mode<synchronous>, transform_indices = @transform_4, window_bounds = array<i64: 1, 512>}, {transform_indices = @transform_5, window_bounds = array<i64: 1, 9, 512>}]} {
    %c0 = arith.constant 0 : index
    %c0_0 = arith.constant 0 : index
    %c0_1 = arith.constant 0 : index
    %0 = vector.load %arg1[%c0, %c0_0, %c0_1] : memref<1x9x512xbf16, #tpu.memory_space<vmem>>, vector<1x9x512xbf16>
    %1 = vector.shape_cast %0 : vector<1x9x512xbf16> to vector<9x512xbf16>
    %2 = arith.extf %1 : vector<9x512xbf16> to vector<9x512xf32>
    %cst = arith.constant dense<0.000000e+00> : vector<512xf32>
    %3 = vector.multi_reduction <add>, %2, %cst [0] : vector<9x512xf32> to vector<512xf32>
    %4 = vector.shape_cast %3 : vector<512xf32> to vector<1x512xf32>
    %c0_2 = arith.constant 0 : index
    %c0_3 = arith.constant 0 : index
    %5 = vector.load %arg2[%c0_2, %c0_3] : memref<512x32xf32, #tpu.memory_space<vmem>>, vector<512x32xf32>
    %cst_4 = arith.constant dense<0.000000e+00> : vector<1x32xf32>
    %6 = tpu.matmul %4, %5, %cst_4 {dimension_numbers = #tpu.dot_dimension_numbers<[1], [0], [0], [1], [0, 0, 1, 1], [], []>} : vector<1x512xf32>, vector<512x32xf32>, vector<1x32xf32> -> vector<1x32xf32>
    %cst_5 = arith.constant 1.440000e+02 : f32
    %7 = vector.broadcast %cst_5 : f32 to vector<1x32xf32>
    %8 = arith.divf %6, %7 : vector<1x32xf32>
    %c0_6 = arith.constant 0 : index
    %c0_7 = arith.constant 0 : index
    %9 = vector.load %arg3[%c0_6, %c0_7] : memref<32x512xf32, #tpu.memory_space<vmem>>, vector<32x512xf32>
    %cst_8 = arith.constant dense<0.000000e+00> : vector<1x512xf32>
    %10 = tpu.matmul %8, %9, %cst_8 {dimension_numbers = #tpu.dot_dimension_numbers<[1], [0], [0], [1], [0, 0, 1, 1], [], []>} : vector<1x32xf32>, vector<32x512xf32>, vector<1x512xf32> -> vector<1x512xf32>
    %11 = vector.broadcast %10 : vector<1x512xf32> to vector<9x512xf32>
    %12 = arith.subf %2, %11 : vector<9x512xf32>
    %13 = arith.mulf %12, %12 : vector<9x512xf32>
    %cst_9 = arith.constant dense<0.000000e+00> : vector<512xf32>
    %14 = vector.multi_reduction <add>, %13, %cst_9 [0] : vector<9x512xf32> to vector<512xf32>
    %15 = vector.shape_cast %14 : vector<512xf32> to vector<1x512xf32>
    %c0_10 = arith.constant 0 : index
    %c0_11 = arith.constant 0 : index
    %16 = vector.load %arg2[%c0_10, %c0_11] : memref<512x32xf32, #tpu.memory_space<vmem>>, vector<512x32xf32>
    %cst_12 = arith.constant dense<0.000000e+00> : vector<1x32xf32>
    %17 = tpu.matmul %15, %16, %cst_12 {dimension_numbers = #tpu.dot_dimension_numbers<[1], [0], [0], [1], [0, 0, 1, 1], [], []>} : vector<1x512xf32>, vector<512x32xf32>, vector<1x32xf32> -> vector<1x32xf32>
    %cst_13 = arith.constant 1.440000e+02 : f32
    %18 = vector.broadcast %cst_13 : f32 to vector<1x32xf32>
    %19 = arith.divf %17, %18 : vector<1x32xf32>
    %cst_14 = arith.constant 9.99999974E-6 : f32
    %20 = vector.broadcast %cst_14 : f32 to vector<1x32xf32>
    %21 = arith.addf %19, %20 : vector<1x32xf32>
    %22 = math.rsqrt %21 : vector<1x32xf32>
    %c0_15 = arith.constant 0 : index
    %c0_16 = arith.constant 0 : index
    %23 = vector.load %arg3[%c0_15, %c0_16] : memref<32x512xf32, #tpu.memory_space<vmem>>, vector<32x512xf32>
    %cst_17 = arith.constant dense<0.000000e+00> : vector<1x512xf32>
    %24 = tpu.matmul %22, %23, %cst_17 {dimension_numbers = #tpu.dot_dimension_numbers<[1], [0], [0], [1], [0, 0, 1, 1], [], []>} : vector<1x32xf32>, vector<32x512xf32>, vector<1x512xf32> -> vector<1x512xf32>
    %25 = vector.broadcast %24 : vector<1x512xf32> to vector<9x512xf32>
    %26 = arith.mulf %12, %25 : vector<9x512xf32>
    %c0_18 = arith.constant 0 : index
    %c0_19 = arith.constant 0 : index
    %27 = vector.load %arg4[%c0_18, %c0_19] : memref<1x512xf32, #tpu.memory_space<vmem>>, vector<1x512xf32>
    %28 = vector.broadcast %27 : vector<1x512xf32> to vector<9x512xf32>
    %29 = arith.mulf %26, %28 : vector<9x512xf32>
    %c0_20 = arith.constant 0 : index
    %c0_21 = arith.constant 0 : index
    %30 = vector.load %arg5[%c0_20, %c0_21] : memref<1x512xf32, #tpu.memory_space<vmem>>, vector<1x512xf32>
    %31 = vector.broadcast %30 : vector<1x512xf32> to vector<9x512xf32>
    %32 = arith.addf %29, %31 : vector<9x512xf32>
    %cst_22 = arith.constant 2.000000e-01 : f32
    %33 = vector.broadcast %cst_22 : f32 to vector<9x512xf32>
    %34 = arith.mulf %33, %32 : vector<9x512xf32>
    %35 = arith.maximumf %32, %34 : vector<9x512xf32>
    %36 = arith.truncf %35 : vector<9x512xf32> to vector<9x512xbf16>
    %c0_23 = arith.constant 0 : index
    %c0_24 = arith.constant 0 : index
    %c0_25 = arith.constant 0 : index
    %37 = vector.load %arg6[%c0_23, %c0_24, %c0_25] : memref<1x9x512xbf16, #tpu.memory_space<vmem>>, vector<1x9x512xbf16>
    %38 = vector.shape_cast %37 : vector<1x9x512xbf16> to vector<9x512xbf16>
    %39 = vector.shape_cast %36 : vector<9x512xbf16> to vector<1x9x512xbf16>
    tpu.vector_store %arg6[%c0_23, %c0_24, %c0_25], %39 {strides = array<i32>} : memref<1x9x512xbf16, #tpu.memory_space<vmem>>, vector<1x9x512xbf16>,
    return
  }
  func.func @transform_0(%arg0: i32) -> (i32, i32, i32) {
    %c0_i32 = arith.constant 0 : i32
    %c0_i32_0 = arith.constant 0 : i32
    %c0_i32_1 = arith.constant 0 : i32
    return %arg0, %c0_i32, %c0_i32_0 : i32, i32, i32
  }
  func.func @transform_1(%arg0: i32) -> (i32, i32) {
    %c0_i32 = arith.constant 0 : i32
    %c0_i32_0 = arith.constant 0 : i32
    %c0_i32_1 = arith.constant 0 : i32
    return %c0_i32, %c0_i32_0 : i32, i32
  }
  func.func @transform_2(%arg0: i32) -> (i32, i32) {
    %c0_i32 = arith.constant 0 : i32
    %c0_i32_0 = arith.constant 0 : i32
    %c0_i32_1 = arith.constant 0 : i32
    return %c0_i32, %c0_i32_0 : i32, i32
  }
  func.func @transform_3(%arg0: i32) -> (i32, i32) {
    %c0_i32 = arith.constant 0 : i32
    %c0_i32_0 = arith.constant 0 : i32
    %c0_i32_1 = arith.constant 0 : i32
    return %c0_i32, %c0_i32_0 : i32, i32
  }
  func.func @transform_4(%arg0: i32) -> (i32, i32) {
    %c0_i32 = arith.constant 0 : i32
    %c0_i32_0 = arith.constant 0 : i32
    %c0_i32_1 = arith.constant 0 : i32
    return %c0_i32, %c0_i32_0 : i32, i32
  }
  func.func @transform_5(%arg0: i32) -> (i32, i32, i32) {
    %c0_i32 = arith.constant 0 : i32
    %c0_i32_0 = arith.constant 0 : i32
    %c0_i32_1 = arith.constant 0 : i32
    return %arg0, %c0_i32, %c0_i32_0 : i32, i32, i32
  }
}

module attributes {stable_mosaic.version = 11 : i64} {
  func.func @_conv5_head_kernel(%arg0: i32, %arg1: i32, %arg2: memref<1x512x128xbf16, #tpu.memory_space<vmem>>, %arg3: memref<1x512xbf16, #tpu.memory_space<vmem>>, %arg4: memref<1x1xf32, #tpu.memory_space<vmem>>, %arg5: memref<1x1x1xf32, #tpu.memory_space<vmem>>, %arg6: memref<1x128xf32, #tpu.memory_space<vmem>>) attributes {dimension_semantics = [#tpu.dimension_semantics<parallel>, #tpu.dimension_semantics<arbitrary>], iteration_bounds = array<i64: 2, 16>, scalar_prefetch = 0 : i64, scratch_operands = 1 : i64, tpu.core_type = #tpu.core_type<tc>, window_params = [{transform_indices = @transform_0, window_bounds = array<i64: 1, 512, 128>}, {transform_indices = @transform_1, window_bounds = array<i64: 1, 512>}, {pipeline_mode = #tpu.pipeline_mode<synchronous>, transform_indices = @transform_2, window_bounds = array<i64: 1, 1>}, {transform_indices = @transform_3, window_bounds = array<i64: 1, 1, 1>}]} {
    %c0_i32 = arith.constant 0 : i32
    %0 = arith.cmpi eq, %arg1, %c0_i32 : i32
    %1 = arith.extui %0 : i1 to i32
    %c0_i32_0 = arith.constant 0 : i32
    %2 = arith.cmpi ne, %1, %c0_i32_0 : i32
    scf.if %2 {
      %cst_10 = arith.constant 0.000000e+00 : f32
      %13 = vector.broadcast %cst_10 : f32 to vector<1x128xf32>
      %c0_11 = arith.constant 0 : index
      %c0_12 = arith.constant 0 : index
      %14 = vector.load %arg6[%c0_11, %c0_12] : memref<1x128xf32, #tpu.memory_space<vmem>>, vector<1x128xf32>
      tpu.vector_store %arg6[%c0_11, %c0_12], %13 {strides = array<i32>} : memref<1x128xf32, #tpu.memory_space<vmem>>, vector<1x128xf32>,
    } else {
    }
    %c0 = arith.constant 0 : index
    %c0_1 = arith.constant 0 : index
    %3 = vector.load %arg6[%c0, %c0_1] : memref<1x128xf32, #tpu.memory_space<vmem>>, vector<1x128xf32>
    %c0_2 = arith.constant 0 : index
    %c0_3 = arith.constant 0 : index
    %4 = vector.load %arg3[%c0_2, %c0_3] : memref<1x512xbf16, #tpu.memory_space<vmem>>, vector<1x512xbf16>
    %c0_4 = arith.constant 0 : index
    %c0_5 = arith.constant 0 : index
    %c0_6 = arith.constant 0 : index
    %5 = vector.load %arg2[%c0_4, %c0_5, %c0_6] : memref<1x512x128xbf16, #tpu.memory_space<vmem>>, vector<1x512x128xbf16>
    %6 = vector.shape_cast %5 : vector<1x512x128xbf16> to vector<512x128xbf16>
    %cst = arith.constant dense<0.000000e+00> : vector<1x128xf32>
    %7 = tpu.matmul %4, %6, %cst {dimension_numbers = #tpu.dot_dimension_numbers<[1], [0], [0], [1], [0, 0, 1, 1], [], []>} : vector<1x512xbf16>, vector<512x128xbf16>, vector<1x128xf32> -> vector<1x128xf32>
    %8 = arith.addf %3, %7 : vector<1x128xf32>
    %c0_7 = arith.constant 0 : index
    %c0_8 = arith.constant 0 : index
    %9 = vector.load %arg6[%c0_7, %c0_8] : memref<1x128xf32, #tpu.memory_space<vmem>>, vector<1x128xf32>
    tpu.vector_store %arg6[%c0_7, %c0_8], %8 {strides = array<i32>} : memref<1x128xf32, #tpu.memory_space<vmem>>, vector<1x128xf32>,
    %c15_i32 = arith.constant 15 : i32
    %10 = arith.cmpi eq, %arg1, %c15_i32 : i32
    %11 = arith.extui %10 : i1 to i32
    %c0_i32_9 = arith.constant 0 : i32
    %12 = arith.cmpi ne, %11, %c0_i32_9 : i32
    scf.if %12 {
      %c0_10 = arith.constant 0 : index
      %c0_11 = arith.constant 0 : index
      %13 = vector.load %arg6[%c0_10, %c0_11] : memref<1x128xf32, #tpu.memory_space<vmem>>, vector<1x128xf32>
      %c0_12 = arith.constant 0 : index
      %c0_13 = arith.constant 0 : index
      %14 = vector.load %arg4[%c0_12, %c0_13] : memref<1x1xf32, #tpu.memory_space<vmem>>, vector<1x1xf32>
      %15 = vector.broadcast %14 : vector<1x1xf32> to vector<1x128xf32>
      %16 = arith.addf %13, %15 : vector<1x128xf32>
      %17 = arith.negf %16 : vector<1x128xf32>
      %18 = math.exp %17 : vector<1x128xf32>
      %cst_14 = arith.constant 1.000000e+00 : f32
      %19 = vector.broadcast %cst_14 : f32 to vector<1x128xf32>
      %20 = arith.addf %19, %18 : vector<1x128xf32>
      %21 = arith.divf %19, %20 : vector<1x128xf32>
      %22 = tpu.iota {dimensions = array<i32: 1>} : vector<1x128xi32>
      %c4_i32 = arith.constant 4 : i32
      %23 = vector.broadcast %c4_i32 : i32 to vector<1x128xi32>
      %24 = arith.cmpi slt, %22, %23 : vector<1x128xi32>
      %cst_15 = arith.constant 0.000000e+00 : f32
      %25 = vector.broadcast %cst_15 : f32 to vector<1x128xf32>
      %26 = arith.select %24, %21, %25 : vector<1x128xi1>, vector<1x128xf32>
      %27 = vector.shape_cast %26 : vector<1x128xf32> to vector<1x1x128xf32>
      %cst_16 = arith.constant dense<0.000000e+00> : vector<1xf32>
      %28 = vector.multi_reduction <add>, %27, %cst_16 [1, 2] : vector<1x1x128xf32> to vector<1xf32>
      %29 = vector.shape_cast %28 : vector<1xf32> to vector<1x1x1xf32>
      %30 = vector.extract %29[0, 0, 0] : f32 from vector<1x1x1xf32>
      %cst_17 = arith.constant 4.000000e+00 : f32
      %31 = arith.divf %30, %cst_17 : f32
      %32 = vector.broadcast %31 : f32 to vector<1x1x1xf32>
      %c0_18 = arith.constant 0 : index
      %c0_19 = arith.constant 0 : index
      %c0_20 = arith.constant 0 : index
      %33 = vector.load %arg5[%c0_18, %c0_19, %c0_20] : memref<1x1x1xf32, #tpu.memory_space<vmem>>, vector<1x1x1xf32>
      tpu.vector_store %arg5[%c0_18, %c0_19, %c0_20], %32 {strides = array<i32>} : memref<1x1x1xf32, #tpu.memory_space<vmem>>, vector<1x1x1xf32>,
    } else {
    }
    return
  }
  func.func @transform_0(%arg0: i32, %arg1: i32) -> (i32, i32, i32) {
    %c0_i32 = arith.constant 0 : i32
    %c0_i32_0 = arith.constant 0 : i32
    return %arg0, %arg1, %c0_i32 : i32, i32, i32
  }
  func.func @transform_1(%arg0: i32, %arg1: i32) -> (i32, i32) {
    %c0_i32 = arith.constant 0 : i32
    %c0_i32_0 = arith.constant 0 : i32
    return %c0_i32, %arg1 : i32, i32
  }
  func.func @transform_2(%arg0: i32, %arg1: i32) -> (i32, i32) {
    %c0_i32 = arith.constant 0 : i32
    %c0_i32_0 = arith.constant 0 : i32
    %c0_i32_1 = arith.constant 0 : i32
    return %c0_i32, %c0_i32_0 : i32, i32
  }
  func.func @transform_3(%arg0: i32, %arg1: i32) -> (i32, i32, i32) {
    %c0_i32 = arith.constant 0 : i32
    %c0_i32_0 = arith.constant 0 : i32
    %c0_i32_1 = arith.constant 0 : i32
    return %arg0, %c0_i32, %c0_i32_0 : i32, i32, i32
  }
}

</mosaic_0001>

<llo_original>
// kernel: discriminator_forward.8
$region0: #{discriminator_forward.8}
  #allocation0 [shape = 'u32[]', space=smem, size = 0x4, offset = 0x4, fixed_abs, tag = 'smem constant byte address 0x4 - core index']
  #allocation1 [shape = 'u32[144,128]{1,0:T(1,128)}', space=vmem, size = 0x12000, scoped, tag = 'internal scratch']
  #allocation2 [shape = 'f32[256,128]{1,0:T(8,128)}', space=vmem, size = 0x20000, scoped, tag = 'scratch operand']
  %s0 = inlined_call_operand.vmem [shape: bf16[512,128], index: 0, kind: input, shape index: {}]
  %s1 = inlined_call_operand.vmem [shape: bf16[128,128], index: 1, kind: input, shape index: {}]
  %s2 = inlined_call_operand.vmem [shape: f32[1,128], index: 2, kind: input, shape index: {}]
  %s3 = inlined_call_operand.vmem [shape: bf16[512,128], index: 3, kind: output, shape index: {}]
  %s4 = sld [smem:[#allocation0]]
  $region53: #{discriminator_forward.8} parent=0
    _
  %s6 = ssub.s32 1, %s4
  %s7 = scalar_select 0, %s6, %s4
  loop: start=0, step=1, limit=4
  $region2: #{discriminator_forward.8} parent=0 // loop_pre_header
    _
  $region3: #{discriminator_forward.8} parent=0 // loop_header
    %s9 = sphi 0, %s13
    %p10 = scmp.ge.s32.totalorder %s9, 4
    %s16 = sphi 0, %s35
    %s17 = sphi 0, %s31
    %s18 = sphi 0, %s27
    %s19 = sphi 0, %s16
    %s20 = sphi 0, %s17
    %s21 = sphi 0, %s18
    %s22 = sphi 0, %s19
    %s23 = sphi 0, %s20
    %s24 = sphi 0, %s21
    %s40 = sphi 0, %s42
    %s43 = sphi 0, %s40
    %s44 = sphi 0, %s43
    %s60 = sphi 0, %s44
    %s68 = sphi 0, %s70
    %s71 = sphi 0, %s68
    %s72 = sphi 0, %s71
    %s88 = sphi 0, %s72
    %s94 = sphi 0, %s96
    %s97 = sphi 0, %s94
    %s98 = sphi 0, %s97
    %s114 = sphi 0, %s98
    %s122 = sphi 0, %s124
    %s125 = sphi 0, %s122
    %s126 = sphi 0, %s125
    %s142 = sphi 0, %s126
  $region4: #{discriminator_forward.8} parent=0 // loop_header_branch
    %12 = sbr.rel (%p10) target = $region8
  $region5: #{discriminator_forward.8} parent=0 // loop_body
    %s14 = ssub.s32 %s9, 1
    %s15 = ssub.s32 %s9, 2
    %s25 = sadd.s32 1, %s18
    %p26 = scmp.ge.s32.totalorder %s25, 1
    %s27 = scalar_select %p26, 0, %s25
    %s28 = sadd.s32 1, %s17
    %s29 = scalar_select %p26, %s28, %s17
    %p30 = scmp.ge.s32.totalorder %s29, 1
    %s31 = scalar_select %p30, 0, %s29
    %s32 = sadd.s32 1, %s16
    %s33 = scalar_select %p30, %s32, %s16
    %p34 = scmp.ge.s32.totalorder %s33, 2
    %s35 = scalar_select %p34, 0, %s33
    %s36 = ssub.s32 %s16, %s35
    %s37 = ssub.s32 %s18, %s27
    %s38 = sor.u32 %s36, %s37
    %p39 = scmp.eq.s32.totalorder %s38, 0
    %s41 = sadd.s32 %s40, 1
    %s42 = scalar_select %p39, %s40, %s41
    %p45 = pneg %p39
    %p46 = scmp.eq.s32.totalorder %s9, 1
    %p47 = por %p45, %p46
    %p48 = scmp.ne.s32.totalorder %s40, %s43
    %p49 = scmp.eq.s32.totalorder %s9, 0
    %p50 = por %p48, %p49
    %p51 = scmp.ne.s32.totalorder %s40, %s43
    %p52 = scmp.eq.s32.totalorder %s14, 1
    %p53 = por %p51, %p52
    %p54 = scmp.ne.s32.totalorder %s43, %s44
    %p55 = scmp.eq.s32.totalorder %s14, 0
    %p56 = por %p54, %p55
    %p57 = scmp.ne.s32.totalorder %s43, %s44
    %p58 = scmp.eq.s32.totalorder %s15, 1
    %p59 = por %p57, %p58
    %p61 = scmp.ne.s32.totalorder %s44, %s60
    %p62 = scmp.eq.s32.totalorder %s15, 0
    %p63 = por %p61, %p62
    %s64 = ssub.s32 %s18, %s27
    %s65 = ssub.s32 %s17, %s31
    %s66 = sor.u32 %s64, %s65
    %p67 = scmp.eq.s32.totalorder %s66, 0
    %s69 = sadd.s32 %s68, 1
    %s70 = scalar_select %p67, %s68, %s69
    %p73 = pneg %p67
    %p74 = scmp.eq.s32.totalorder %s9, 1
    %p75 = por %p73, %p74
    %p76 = scmp.ne.s32.totalorder %s68, %s71
    %p77 = scmp.eq.s32.totalorder %s9, 0
    %p78 = por %p76, %p77
    %p79 = scmp.ne.s32.totalorder %s68, %s71
    %p80 = scmp.eq.s32.totalorder %s14, 1
    %p81 = por %p79, %p80
    %p82 = scmp.ne.s32.totalorder %s71, %s72
    %p83 = scmp.eq.s32.totalorder %s14, 0
    %p84 = por %p82, %p83
    %p85 = scmp.ne.s32.totalorder %s71, %s72
    %p86 = scmp.eq.s32.totalorder %s15, 1
    %p87 = por %p85, %p86
    %p89 = scmp.ne.s32.totalorder %s72, %s88
    %p90 = scmp.eq.s32.totalorder %s15, 0
    %p91 = por %p89, %p90
    %s92 = ssub.s32 %s17, %s31
    %p93 = scmp.eq.s32.totalorder %s92, 0
    %s95 = sadd.s32 %s94, 1
    %s96 = scalar_select %p93, %s94, %s95
    %p99 = pneg %p93
    %p100 = scmp.eq.s32.totalorder %s9, 1
    %p101 = por %p99, %p100
    %p102 = scmp.ne.s32.totalorder %s94, %s97
    %p103 = scmp.eq.s32.totalorder %s9, 0
    %p104 = por %p102, %p103
    %p105 = scmp.ne.s32.totalorder %s94, %s97
    %p106 = scmp.eq.s32.totalorder %s14, 1
    %p107 = por %p105, %p106
    %p108 = scmp.ne.s32.totalorder %s97, %s98
    %p109 = scmp.eq.s32.totalorder %s14, 0
    %p110 = por %p108, %p109
    %p111 = scmp.ne.s32.totalorder %s97, %s98
    %p112 = scmp.eq.s32.totalorder %s15, 1
    %p113 = por %p111, %p112
    %p115 = scmp.ne.s32.totalorder %s98, %s114
    %p116 = scmp.eq.s32.totalorder %s15, 0
    %p117 = por %p115, %p116
    %s118 = ssub.s32 %s16, %s35
    %s119 = ssub.s32 %s17, %s31
    %s120 = sor.u32 %s118, %s119
    %p121 = scmp.eq.s32.totalorder %s120, 0
    %s123 = sadd.s32 %s122, 1
    %s124 = scalar_select %p121, %s122, %s123
    %p127 = pneg %p121
    %p128 = scmp.eq.s32.totalorder %s9, 1
    %p129 = por %p127, %p128
    %p130 = scmp.ne.s32.totalorder %s122, %s125
    %p131 = scmp.eq.s32.totalorder %s9, 0
    %p132 = por %p130, %p131
    %p133 = scmp.ne.s32.totalorder %s122, %s125
    %p134 = scmp.eq.s32.totalorder %s14, 1
    %p135 = por %p133, %p134
    %p136 = scmp.ne.s32.totalorder %s125, %s126
    %p137 = scmp.eq.s32.totalorder %s14, 0
    %p138 = por %p136, %p137
    %p139 = scmp.ne.s32.totalorder %s125, %s126
    %p140 = scmp.eq.s32.totalorder %s15, 1
    %p141 = por %p139, %p140
    %p143 = scmp.ne.s32.totalorder %s126, %s142
    %p144 = scmp.eq.s32.totalorder %s15, 0
    %p145 = por %p143, %p144
    %p146 = scmp.le.s32.totalorder 1, %s9
    %p147 = scmp.lt.s32.totalorder %s9, 3
    %p148 = pnand %p146, %p147
    %p149 = pneg %p148
    // Predicated region
    $region9: #{discriminator_forward.8} parent=5 // pred_check
      _
    $region10: #{discriminator_forward.8} parent=5 // pred_check_branch
      %151 = sbr.rel (%p148) target = $region12
    $region11: #{discriminator_forward.8} parent=5 // pred_region
      %s152 = ssub.s32 %s9, 1
      // Predicated region
      $region13: #{discriminator_forward.8} parent=11 // pred_check
        %p153 = pneg %p84
      $region14: #{discriminator_forward.8} parent=11 // pred_check_branch
        %155 = sbr.rel (%p153) target = $region16
      $region15: #{discriminator_forward.8} parent=11 // pred_region
        %s156 = smul.u32 16, %s21
        %p157 = scmp.lt.s32.totalorder %s156, 15
        %s158 = scalar_select %p157, %s156, 15
        %p159 = scmp.lt.s32.totalorder %s20, 0
        %s160 = scalar_select %p159, %s20, 0
        %s161 = sadd.s32 %s160, %s158
        %s162 = smul.addr %s161, 4
        %s163 = scalar_lea.vmem %s1, %s162
        %s164 = smul.u32 16, %s21
      $region16: #{discriminator_forward.8} parent=11 // pred_fallthru
        _
      // Predicated region
      $region17: #{discriminator_forward.8} parent=11 // pred_check
        %p165 = pneg %p110
      $region18: #{discriminator_forward.8} parent=11 // pred_check_branch
        %167 = sbr.rel (%p165) target = $region20
      $region19: #{discriminator_forward.8} parent=11 // pred_region
        %p168 = scmp.lt.s32.totalorder %s20, 0
        %s169 = scalar_select %p168, %s20, 0
        %s170 = scalar_lea.vmem %s2, %s169
      $region20: #{discriminator_forward.8} parent=11 // pred_fallthru
        _
    $region12: #{discriminator_forward.8} parent=5 // pred_fallthru
      _
    %p171 = scmp.lt.s32.totalorder %s9, 2
    // Predicated region
    $region21: #{discriminator_forward.8} parent=5 // pred_check
      %p172 = pneg %p171
    $region22: #{discriminator_forward.8} parent=5 // pred_check_branch
      %174 = sbr.rel (%p172) target = $region24
    $region23: #{discriminator_forward.8} parent=5 // pred_region
      // Predicated region
      $region25: #{discriminator_forward.8} parent=23 // pred_check
        %p175 = pneg %p50
      $region26: #{discriminator_forward.8} parent=23 // pred_check_branch
        %177 = sbr.rel (%p175) target = $region28
      $region27: #{discriminator_forward.8} parent=23 // pred_region
        %s178 = smul.u32 32, %s16
        %p179 = scmp.lt.s32.totalorder %s178, 63
        %s180 = scalar_select %p179, %s178, 63
        %p181 = scmp.lt.s32.totalorder %s18, 0
        %s182 = scalar_select %p181, %s18, 0
        %s183 = sadd.s32 %s182, %s180
        %s184 = smul.addr %s183, 4
        %s185 = scalar_lea.vmem %s0, %s184
        %s186 = smul.u32 32, %s16
      $region28: #{discriminator_forward.8} parent=23 // pred_fallthru
        _
    $region24: #{discriminator_forward.8} parent=5 // pred_fallthru
      _
    %p187 = scmp.le.s32.totalorder 1, %s9
    %p188 = scmp.lt.s32.totalorder %s9, 3
    %p189 = pnand %p187, %p188
    %p190 = pneg %p189
    // Predicated region
    $region29: #{discriminator_forward.8} parent=5 // pred_check
      _
    $region30: #{discriminator_forward.8} parent=5 // pred_check_branch
      %192 = sbr.rel (%p189) target = $region32
    $region31: #{discriminator_forward.8} parent=5 // pred_region
      %s193 = ssub.s32 %s9, 1
      %s194 = smul.u32 32, %s19
      %p195 = scmp.lt.s32.totalorder %s194, 63
      %s196 = scalar_select %p195, %s194, 63
      %p197 = scmp.lt.s32.totalorder %s21, 0
      %s198 = scalar_select %p197, %s21, 0
      %s199 = sadd.s32 %s198, %s196
      %s200 = smul.addr %s199, 4
      %s201 = scalar_lea.vmem %s0, %s200
      %p202 = pneg %p56
      %p203 = pneg %p53
      %s204 = smul.u32 16, %s21
      %p205 = scmp.lt.s32.totalorder %s204, 15
      %s206 = scalar_select %p205, %s204, 15
      %p207 = scmp.lt.s32.totalorder %s20, 0
      %s208 = scalar_select %p207, %s20, 0
      %s209 = sadd.s32 %s208, %s206
      %s210 = smul.addr %s209, 4
      %s211 = scalar_lea.vmem %s1, %s210
      %p212 = pneg %p84
      %p213 = pneg %p81
      %p214 = scmp.lt.s32.totalorder %s20, 0
      %s215 = scalar_select %p214, %s20, 0
      %s216 = scalar_lea.vmem %s2, %s215
      %p217 = pneg %p110
      %p218 = pneg %p107
      %p219 = pneg %p138
      %p220 = pneg %p135
      %s221 = smul.u32 32, %s19
      %p222 = scmp.lt.s32.totalorder %s221, 63
      %s223 = scalar_select %p222, %s221, 63
      %p224 = scmp.lt.s32.totalorder %s20, 0
      %s225 = scalar_select %p224, %s20, 0
      %s226 = sadd.s32 %s225, %s223
      %s227 = smul.addr %s226, 4
      %s228 = scalar_lea.vmem %s3, %s227
      %s229 = smul.u32 32, %s19
      %p230 = scmp.lt.s32.totalorder %s229, 63
      %s231 = scalar_select %p230, %s229, 63
      %p232 = scmp.lt.s32.totalorder %s21, 0
      %s233 = scalar_select %p232, %s21, 0
      %s234 = sadd.s32 %s233, %s231
      %s235 = smul.addr %s234, 4
      %s236 = scalar_lea.vmem %s0, %s235
      %s237 = smul.u32 32, %s19
      %s238 = smul.u32 16, %s21
      %p239 = scmp.lt.s32.totalorder %s238, 15
      %s240 = scalar_select %p239, %s238, 15
      %p241 = scmp.lt.s32.totalorder %s20, 0
      %s242 = scalar_select %p241, %s20, 0
      %s243 = sadd.s32 %s242, %s240
      %s244 = smul.addr %s243, 4
      %s245 = scalar_lea.vmem %s1, %s244
      %s246 = smul.u32 16, %s21
      %p247 = scmp.lt.s32.totalorder %s20, 0
      %s248 = scalar_select %p247, %s20, 0
      %s249 = scalar_lea.vmem %s2, %s248
      %s250 = smul.u32 32, %s19
      %p251 = scmp.lt.s32.totalorder %s250, 63
      %s252 = scalar_select %p251, %s250, 63
      %p253 = scmp.lt.s32.totalorder %s20, 0
      %s254 = scalar_select %p253, %s20, 0
      %s255 = sadd.s32 %s254, %s252
      %s256 = smul.addr %s255, 4
      %s257 = scalar_lea.vmem %s3, %s256
      %s258 = smul.u32 32, %s19
      %p260 = scmp.eq.s32.totalorder %s21, 0
      // Predicated region
      $region33: #{discriminator_forward.8} parent=31 // pred_check
        %p261 = pneg %p260
      $region34: #{discriminator_forward.8} parent=31 // pred_check_branch
        %263 = sbr.rel (%p261) target = $region36
      $region35: #{discriminator_forward.8} parent=31 // pred_region
        %264 = vst [vmem:[#allocation2] sm:$0xff] 0.0
        %265 = vst [vmem:[#allocation2 + $0x8] sm:$0xff] 0.0
        %266 = vst [vmem:[#allocation2 + $0x10] sm:$0xff] 0.0
        %267 = vst [vmem:[#allocation2 + $0x18] sm:$0xff] 0.0
        %268 = vst [vmem:[#allocation2 + $0x20] sm:$0xff] 0.0
        %269 = vst [vmem:[#allocation2 + $0x28] sm:$0xff] 0.0
        %270 = vst [vmem:[#allocation2 + $0x30] sm:$0xff] 0.0
        %271 = vst [vmem:[#allocation2 + $0x38] sm:$0xff] 0.0
        %272 = vst [vmem:[#allocation2 + $0x40] sm:$0xff] 0.0
        %273 = vst [vmem:[#allocation2 + $0x48] sm:$0xff] 0.0
        %274 = vst [vmem:[#allocation2 + $0x50] sm:$0xff] 0.0
        %275 = vst [vmem:[#allocation2 + $0x58] sm:$0xff] 0.0
        %276 = vst [vmem:[#allocation2 + $0x60] sm:$0xff] 0.0
        %277 = vst [vmem:[#allocation2 + $0x68] sm:$0xff] 0.0
        %278 = vst [vmem:[#allocation2 + $0x70] sm:$0xff] 0.0
        %279 = vst [vmem:[#allocation2 + $0x78] sm:$0xff] 0.0
        %280 = vst [vmem:[#allocation2 + $0x80] sm:$0xff] 0.0
        %281 = vst [vmem:[#allocation2 + $0x88] sm:$0xff] 0.0
        %282 = vst [vmem:[#allocation2 + $0x90] sm:$0xff] 0.0
        %283 = vst [vmem:[#allocation2 + $0x98] sm:$0xff] 0.0
        %284 = vst [vmem:[#allocation2 + $0xa0] sm:$0xff] 0.0
        %285 = vst [vmem:[#allocation2 + $0xa8] sm:$0xff] 0.0
        %286 = vst [vmem:[#allocation2 + $0xb0] sm:$0xff] 0.0
        %287 = vst [vmem:[#allocation2 + $0xb8] sm:$0xff] 0.0
        %288 = vst [vmem:[#allocation2 + $0xc0] sm:$0xff] 0.0
        %289 = vst [vmem:[#allocation2 + $0xc8] sm:$0xff] 0.0
        %290 = vst [vmem:[#allocation2 + $0xd0] sm:$0xff] 0.0
        %291 = vst [vmem:[#allocation2 + $0xd8] sm:$0xff] 0.0
        %292 = vst [vmem:[#allocation2 + $0xe0] sm:$0xff] 0.0
        %293 = vst [vmem:[#allocation2 + $0xe8] sm:$0xff] 0.0
        %294 = vst [vmem:[#allocation2 + $0xf0] sm:$0xff] 0.0
        %295 = vst [vmem:[#allocation2 + $0xf8] sm:$0xff] 0.0
      $region36: #{discriminator_forward.8} parent=31 // pred_fallthru
        _
      %v296 = vld [vmem:[#allocation2] sm:$0xff]
      %v297 = vld [vmem:[#allocation2 + $0x8] sm:$0xff]
      %v298 = vld [vmem:[#allocation2 + $0x10] sm:$0xff]
      %v299 = vld [vmem:[#allocation2 + $0x18] sm:$0xff]
      %v300 = vld [vmem:[#allocation2 + $0x20] sm:$0xff]
      %v301 = vld [vmem:[#allocation2 + $0x28] sm:$0xff]
      %v302 = vld [vmem:[#allocation2 + $0x30] sm:$0xff]
      %v303 = vld [vmem:[#allocation2 + $0x38] sm:$0xff]
      %v304 = vld [vmem:[#allocation2 + $0x40] sm:$0xff]
      %v305 = vld [vmem:[#allocation2 + $0x48] sm:$0xff]
      %v306 = vld [vmem:[#allocation2 + $0x50] sm:$0xff]
      %v307 = vld [vmem:[#allocation2 + $0x58] sm:$0xff]
      %v308 = vld [vmem:[#allocation2 + $0x60] sm:$0xff]
      %v309 = vld [vmem:[#allocation2 + $0x68] sm:$0xff]
      %v310 = vld [vmem:[#allocation2 + $0x70] sm:$0xff]
      %v311 = vld [vmem:[#allocation2 + $0x78] sm:$0xff]
      %v312 = vld [vmem:[#allocation2 + $0x80] sm:$0xff]
      %v313 = vld [vmem:[#allocation2 + $0x88] sm:$0xff]
      %v314 = vld [vmem:[#allocation2 + $0x90] sm:$0xff]
      %v315 = vld [vmem:[#allocation2 + $0x98] sm:$0xff]
      %v316 = vld [vmem:[#allocation2 + $0xa0] sm:$0xff]
      %v317 = vld [vmem:[#allocation2 + $0xa8] sm:$0xff]
      %v318 = vld [vmem:[#allocation2 + $0xb0] sm:$0xff]
      %v319 = vld [vmem:[#allocation2 + $0xb8] sm:$0xff]
      %v320 = vld [vmem:[#allocation2 + $0xc0] sm:$0xff]
      %v321 = vld [vmem:[#allocation2 + $0xc8] sm:$0xff]
      %v322 = vld [vmem:[#allocation2 + $0xd0] sm:$0xff]
      %v323 = vld [vmem:[#allocation2 + $0xd8] sm:$0xff]
      %v324 = vld [vmem:[#allocation2 + $0xe0] sm:$0xff]
      %v325 = vld [vmem:[#allocation2 + $0xe8] sm:$0xff]
      %v326 = vld [vmem:[#allocation2 + $0xf0] sm:$0xff]
      %v327 = vld [vmem:[#allocation2 + $0xf8] sm:$0xff]
      %v328 = vld [vmem:[%s236] sm:$0xf]
      %v329 = vld [vmem:[%s236 + $0x4] sm:$0xf]
      %v330 = vld [vmem:[%s236 + $0x8] sm:$0xf]
      %v331 = vld [vmem:[%s236 + $0xc] sm:$0xf]
      %v332 = vld [vmem:[%s236 + $0x10] sm:$0xf]
      %v333 = vld [vmem:[%s236 + $0x14] sm:$0xf]
      %v334 = vld [vmem:[%s236 + $0x18] sm:$0xf]
      %v335 = vld [vmem:[%s236 + $0x1c] sm:$0xf]
      %v336 = vld [vmem:[%s236 + $0x20] sm:$0xf]
      %v337 = vld [vmem:[%s236 + $0x24] sm:$0xf]
      %v338 = vld [vmem:[%s236 + $0x28] sm:$0xf]
      %v339 = vld [vmem:[%s236 + $0x2c] sm:$0xf]
      %v340 = vld [vmem:[%s236 + $0x30] sm:$0xf]
      %v341 = vld [vmem:[%s236 + $0x34] sm:$0xf]
      %v342 = vld [vmem:[%s236 + $0x38] sm:$0xf]
      %v343 = vld [vmem:[%s236 + $0x3c] sm:$0xf]
      %v344 = vld [vmem:[%s236 + $0x40] sm:$0xf]
      %v345 = vld [vmem:[%s236 + $0x44] sm:$0xf]
      %v346 = vld [vmem:[%s236 + $0x48] sm:$0xf]
      %v347 = vld [vmem:[%s236 + $0x4c] sm:$0xf]
      %v348 = vld [vmem:[%s236 + $0x50] sm:$0xf]
      %v349 = vld [vmem:[%s236 + $0x54] sm:$0xf]
      %v350 = vld [vmem:[%s236 + $0x58] sm:$0xf]
      %v351 = vld [vmem:[%s236 + $0x5c] sm:$0xf]
      %v352 = vld [vmem:[%s236 + $0x60] sm:$0xf]
      %v353 = vld [vmem:[%s236 + $0x64] sm:$0xf]
      %v354 = vld [vmem:[%s236 + $0x68] sm:$0xf]
      %v355 = vld [vmem:[%s236 + $0x6c] sm:$0xf]
      %v356 = vld [vmem:[%s236 + $0x70] sm:$0xf]
      %v357 = vld [vmem:[%s236 + $0x74] sm:$0xf]
      %v358 = vld [vmem:[%s236 + $0x78] sm:$0xf]
      %v359 = vld [vmem:[%s236 + $0x7c] sm:$0xf]
      %v360 = vld [vmem:[%s245] sm:$0xf]
      %v361 = vld [vmem:[%s245 + $0x4] sm:$0xf]
      %v362 = vld [vmem:[%s245 + $0x8] sm:$0xf]
      %v363 = vld [vmem:[%s245 + $0xc] sm:$0xf]
      %v364 = vld [vmem:[%s245 + $0x10] sm:$0xf]
      %v365 = vld [vmem:[%s245 + $0x14] sm:$0xf]
      %v366 = vld [vmem:[%s245 + $0x18] sm:$0xf]
      %v367 = vld [vmem:[%s245 + $0x1c] sm:$0xf]
      %v368 = vld [vmem:[%s245 + $0x20] sm:$0xf]
      %v369 = vld [vmem:[%s245 + $0x24] sm:$0xf]
      %v370 = vld [vmem:[%s245 + $0x28] sm:$0xf]
      %v371 = vld [vmem:[%s245 + $0x2c] sm:$0xf]
      %v372 = vld [vmem:[%s245 + $0x30] sm:$0xf]
      %v373 = vld [vmem:[%s245 + $0x34] sm:$0xf]
      %v374 = vld [vmem:[%s245 + $0x38] sm:$0xf]
      %v375 = vld [vmem:[%s245 + $0x3c] sm:$0xf]
      %v408 = vunpack.c.l.b16 %v328
      %v409 = vunpack.c.l.b16 %v329
      %v410 = vunpack.c.l.b16 %v330
      %v411 = vunpack.c.l.b16 %v331
      %v412 = vunpack.c.l.b16 %v332
      %v413 = vunpack.c.l.b16 %v333
      %v414 = vunpack.c.l.b16 %v334
      %v415 = vunpack.c.l.b16 %v335
      %v416 = vunpack.c.l.b16 %v336
      %v417 = vunpack.c.l.b16 %v337
      %v418 = vunpack.c.l.b16 %v338
      %v419 = vunpack.c.l.b16 %v339
      %v420 = vunpack.c.l.b16 %v340
      %v421 = vunpack.c.l.b16 %v341
      %v422 = vunpack.c.l.b16 %v342
      %v423 = vunpack.c.l.b16 %v343
      %v424 = vunpack.c.l.b16 %v344
      %v425 = vunpack.c.l.b16 %v345
      %v426 = vunpack.c.l.b16 %v346
      %v427 = vunpack.c.l.b16 %v347
      %v428 = vunpack.c.l.b16 %v348
      %v429 = vunpack.c.l.b16 %v349
      %v430 = vunpack.c.l.b16 %v350
      %v431 = vunpack.c.l.b16 %v351
      %v432 = vunpack.c.l.b16 %v352
      %v433 = vunpack.c.l.b16 %v353
      %v434 = vunpack.c.l.b16 %v354
      %v435 = vunpack.c.l.b16 %v355
      %v436 = vunpack.c.l.b16 %v356
      %v437 = vunpack.c.l.b16 %v357
      %v438 = vunpack.c.l.b16 %v358
      %v439 = vunpack.c.l.b16 %v359
      %v440 = vpack.c.b16 %v409, %v408
      %v441 = vpack.c.b16 %v411, %v410
      %v442 = vpack.c.b16 %v413, %v412
      %v443 = vpack.c.b16 %v415, %v414
      %v444 = vpack.c.b16 %v417, %v416
      %v445 = vpack.c.b16 %v419, %v418
      %v446 = vpack.c.b16 %v421, %v420
      %v447 = vpack.c.b16 %v423, %v422
      %v448 = vpack.c.b16 %v425, %v424
      %v449 = vpack.c.b16 %v427, %v426
      %v450 = vpack.c.b16 %v429, %v428
      %v451 = vpack.c.b16 %v431, %v430
      %v452 = vpack.c.b16 %v433, %v432
      %v453 = vpack.c.b16 %v435, %v434
      %v454 = vpack.c.b16 %v437, %v436
      %v455 = vpack.c.b16 %v439, %v438
      %v488 = vunpack.c.l.b16 %v360
      %v489 = vunpack.c.l.b16 %v361
      %v490 = vunpack.c.l.b16 %v362
      %v491 = vunpack.c.l.b16 %v363
      %v492 = vunpack.c.l.b16 %v364
      %v493 = vunpack.c.l.b16 %v365
      %v494 = vunpack.c.l.b16 %v366
      %v495 = vunpack.c.l.b16 %v367
      %v496 = vunpack.c.l.b16 %v368
      %v497 = vunpack.c.l.b16 %v369
      %v498 = vunpack.c.l.b16 %v370
      %v499 = vunpack.c.l.b16 %v371
      %v500 = vunpack.c.l.b16 %v372
      %v501 = vunpack.c.l.b16 %v373
      %v502 = vunpack.c.l.b16 %v374
      %v503 = vunpack.c.l.b16 %v375
      %v504 = vpack.c.b16 %v489, %v488
      %v505 = vpack.c.b16 %v491, %v490
      %v506 = vpack.c.b16 %v493, %v492
      %v507 = vpack.c.b16 %v495, %v494
      %v508 = vpack.c.b16 %v497, %v496
      %v509 = vpack.c.b16 %v499, %v498
      %v510 = vpack.c.b16 %v501, %v500
      %v511 = vpack.c.b16 %v503, %v502
      %520 = vmatprep.subr.bf16.mxu0 0
      %521 = vmatpush1.bf16.msra.mxu0 %v504
      %522 = vmatprep.subr.bf16.mxu0 0
      %523 = vmatpush1.bf16.msra.mxu0 %v505
      %524 = vmatprep.subr.bf16.mxu0 0
      %525 = vmatpush1.bf16.msra.mxu0 %v506
      %526 = vmatprep.subr.bf16.mxu0 0
      %527 = vmatpush1.bf16.msra.mxu0 %v507
      %528 = vmatprep.subr.bf16.mxu0 0
      %529 = vmatpush1.bf16.msra.mxu0 %v508
      %530 = vmatprep.subr.bf16.mxu0 0
      %531 = vmatpush1.bf16.msra.mxu0 %v509
      %532 = vmatprep.subr.bf16.mxu0 0
      %533 = vmatpush1.bf16.msra.mxu0 %v510
      %534 = vmatprep.subr.bf16.mxu0 0
      %535 = vmatpush1.bf16.msra.mxu0 %v511
      %536 = vmatprep.subr.bf16.mxu0 0
      %537 = vmatpush1.bf16.msra.mxu0 0
      %538 = vmatprep.subr.bf16.mxu0 0
      %539 = vmatpush1.bf16.msra.mxu0 0
      %540 = vmatprep.subr.bf16.mxu0 0
      %541 = vmatpush1.bf16.msra.mxu0 0
      %542 = vmatprep.subr.bf16.mxu0 0
      %543 = vmatpush1.bf16.msra.mxu0 0
      %544 = vmatprep.subr.bf16.mxu0 0
      %545 = vmatpush1.bf16.msra.mxu0 0
      %546 = vmatprep.subr.bf16.mxu0 0
      %547 = vmatpush1.bf16.msra.mxu0 0
      %548 = vmatprep.subr.bf16.mxu0 0
      %549 = vmatpush1.bf16.msra.mxu0 0
      %550 = vmatprep.subr.bf16.mxu0 0
      %551 = vmatpush1.bf16.msra.mxu0 0
      %552 = vmatprep.mubr.bf16.mxu0 0
      %553 = vmatmul.mubr.bf16.gmra.mrb[0].mxu0 %v440
      %v554 = vpop.f32.mrb[0].mxu0
      %v555 = vadd.f32 0.0, %v554
      %v556 = vpop.f32.mrb[0].mxu0
      %v557 = vpop.f32.mrb[0].mxu0
      %v558 = vadd.f32 0.0, %v557
      %v559 = vpop.f32.mrb[0].mxu0
      %560 = vmatprep.mubr.bf16.mxu0 0
      %561 = vmatmul.mubr.bf16.gmra.mrb[0].mxu0 %v441
      %v562 = vpop.f32.mrb[0].mxu0
      %v563 = vadd.f32 0.0, %v562
      %v564 = vpop.f32.mrb[0].mxu0
      %v565 = vpop.f32.mrb[0].mxu0
      %v566 = vadd.f32 0.0, %v565
      %v567 = vpop.f32.mrb[0].mxu0
      %568 = vmatprep.mubr.bf16.mxu0 0
      %569 = vmatmul.mubr.bf16.gmra.mrb[0].mxu0 %v442
      %v570 = vpop.f32.mrb[0].mxu0
      %v571 = vadd.f32 0.0, %v570
      %v572 = vpop.f32.mrb[0].mxu0
      %v573 = vpop.f32.mrb[0].mxu0
      %v574 = vadd.f32 0.0, %v573
      %v575 = vpop.f32.mrb[0].mxu0
      %576 = vmatprep.mubr.bf16.mxu0 0
      %577 = vmatmul.mubr.bf16.gmra.mrb[0].mxu0 %v443
      %v578 = vpop.f32.mrb[0].mxu0
      %v579 = vadd.f32 0.0, %v578
      %v580 = vpop.f32.mrb[0].mxu0
      %v581 = vpop.f32.mrb[0].mxu0
      %v582 = vadd.f32 0.0, %v581
      %v583 = vpop.f32.mrb[0].mxu0
      %584 = vmatprep.mubr.bf16.mxu0 0
      %585 = vmatmul.mubr.bf16.gmra.mrb[0].mxu0 %v444
      %v586 = vpop.f32.mrb[0].mxu0
      %v587 = vadd.f32 0.0, %v586
      %v588 = vpop.f32.mrb[0].mxu0
      %v589 = vpop.f32.mrb[0].mxu0
      %v590 = vadd.f32 0.0, %v589
      %v591 = vpop.f32.mrb[0].mxu0
      %592 = vmatprep.mubr.bf16.mxu0 0
      %593 = vmatmul.mubr.bf16.gmra.mrb[0].mxu0 %v445
      %v594 = vpop.f32.mrb[0].mxu0
      %v595 = vadd.f32 0.0, %v594
      %v596 = vpop.f32.mrb[0].mxu0
      %v597 = vpop.f32.mrb[0].mxu0
      %v598 = vadd.f32 0.0, %v597
      %v599 = vpop.f32.mrb[0].mxu0
      %600 = vmatprep.mubr.bf16.mxu0 0
      %601 = vmatmul.mubr.bf16.gmra.mrb[0].mxu0 %v446
      %v602 = vpop.f32.mrb[0].mxu0
      %v603 = vadd.f32 0.0, %v602
      %v604 = vpop.f32.mrb[0].mxu0
      %v605 = vpop.f32.mrb[0].mxu0
      %v606 = vadd.f32 0.0, %v605
      %v607 = vpop.f32.mrb[0].mxu0
      %608 = vmatprep.mubr.bf16.mxu0 0
      %609 = vmatmul.mubr.bf16.gmra.mrb[0].mxu0 %v447
      %v610 = vpop.f32.mrb[0].mxu0
      %v611 = vadd.f32 0.0, %v610
      %v612 = vpop.f32.mrb[0].mxu0
      %v613 = vpop.f32.mrb[0].mxu0
      %v614 = vadd.f32 0.0, %v613
      %v615 = vpop.f32.mrb[0].mxu0
      %616 = vmatprep.mubr.bf16.mxu0 0
      %617 = vmatmul.mubr.bf16.gmra.mrb[0].mxu0 %v448
      %v618 = vpop.f32.mrb[0].mxu0
      %v619 = vadd.f32 0.0, %v618
      %v620 = vpop.f32.mrb[0].mxu0
      %v621 = vpop.f32.mrb[0].mxu0
      %v622 = vadd.f32 0.0, %v621
      %v623 = vpop.f32.mrb[0].mxu0
      %624 = vmatprep.mubr.bf16.mxu0 0
      %625 = vmatmul.mubr.bf16.gmra.mrb[0].mxu0 %v449
      %v626 = vpop.f32.mrb[0].mxu0
      %v627 = vadd.f32 0.0, %v626
      %v628 = vpop.f32.mrb[0].mxu0
      %v629 = vpop.f32.mrb[0].mxu0
      %v630 = vadd.f32 0.0, %v629
      %v631 = vpop.f32.mrb[0].mxu0
      %632 = vmatprep.mubr.bf16.mxu0 0
      %633 = vmatmul.mubr.bf16.gmra.mrb[0].mxu0 %v450
      %v634 = vpop.f32.mrb[0].mxu0
      %v635 = vadd.f32 0.0, %v634
      %v636 = vpop.f32.mrb[0].mxu0
      %v637 = vpop.f32.mrb[0].mxu0
      %v638 = vadd.f32 0.0, %v637
      %v639 = vpop.f32.mrb[0].mxu0
      %640 = vmatprep.mubr.bf16.mxu0 0
      %641 = vmatmul.mubr.bf16.gmra.mrb[0].mxu0 %v451
      %v642 = vpop.f32.mrb[0].mxu0
      %v643 = vadd.f32 0.0, %v642
      %v644 = vpop.f32.mrb[0].mxu0
      %v645 = vpop.f32.mrb[0].mxu0
      %v646 = vadd.f32 0.0, %v645
      %v647 = vpop.f32.mrb[0].mxu0
      %648 = vmatprep.mubr.bf16.mxu0 0
      %649 = vmatmul.mubr.bf16.gmra.mrb[0].mxu0 %v452
      %v650 = vpop.f32.mrb[0].mxu0
      %v651 = vadd.f32 0.0, %v650
      %v652 = vpop.f32.mrb[0].mxu0
      %v653 = vpop.f32.mrb[0].mxu0
      %v654 = vadd.f32 0.0, %v653
      %v655 = vpop.f32.mrb[0].mxu0
      %656 = vmatprep.mubr.bf16.mxu0 0
      %657 = vmatmul.mubr.bf16.gmra.mrb[0].mxu0 %v453
      %v658 = vpop.f32.mrb[0].mxu0
      %v659 = vadd.f32 0.0, %v658
      %v660 = vpop.f32.mrb[0].mxu0
      %v661 = vpop.f32.mrb[0].mxu0
      %v662 = vadd.f32 0.0, %v661
      %v663 = vpop.f32.mrb[0].mxu0
      %664 = vmatprep.mubr.bf16.mxu0 0
      %665 = vmatmul.mubr.bf16.gmra.mrb[0].mxu0 %v454
      %v666 = vpop.f32.mrb[0].mxu0
      %v667 = vadd.f32 0.0, %v666
      %v668 = vpop.f32.mrb[0].mxu0
      %v669 = vpop.f32.mrb[0].mxu0
      %v670 = vadd.f32 0.0, %v669
      %v671 = vpop.f32.mrb[0].mxu0
      %672 = vmatprep.mubr.bf16.mxu0 0
      %673 = vmatmul.mubr.bf16.gmra.mrb[0].mxu0 %v455
      %v674 = vpop.f32.mrb[0].mxu0
      %v675 = vadd.f32 0.0, %v674
      %v676 = vpop.f32.mrb[0].mxu0
      %v677 = vpop.f32.mrb[0].mxu0
      %v678 = vadd.f32 0.0, %v677
      %v679 = vpop.f32.mrb[0].mxu0
      %680 = vdwg.mxu0
      %v681 = vadd.f32 %v296, %v555
      %v682 = vadd.f32 %v297, %v558
      %v683 = vadd.f32 %v298, %v563
      %v684 = vadd.f32 %v299, %v566
      %v685 = vadd.f32 %v300, %v571
      %v686 = vadd.f32 %v301, %v574
      %v687 = vadd.f32 %v302, %v579
      %v688 = vadd.f32 %v303, %v582
      %v689 = vadd.f32 %v304, %v587
      %v690 = vadd.f32 %v305, %v590
      %v691 = vadd.f32 %v306, %v595
      %v692 = vadd.f32 %v307, %v598
      %v693 = vadd.f32 %v308, %v603
      %v694 = vadd.f32 %v309, %v606
      %v695 = vadd.f32 %v310, %v611
      %v696 = vadd.f32 %v311, %v614
      %v697 = vadd.f32 %v312, %v619
      %v698 = vadd.f32 %v313, %v622
      %v699 = vadd.f32 %v314, %v627
      %v700 = vadd.f32 %v315, %v630
      %v701 = vadd.f32 %v316, %v635
      %v702 = vadd.f32 %v317, %v638
      %v703 = vadd.f32 %v318, %v643
      %v704 = vadd.f32 %v319, %v646
      %v705 = vadd.f32 %v320, %v651
      %v706 = vadd.f32 %v321, %v654
      %v707 = vadd.f32 %v322, %v659
      %v708 = vadd.f32 %v323, %v662
      %v709 = vadd.f32 %v324, %v667
      %v710 = vadd.f32 %v325, %v670
      %v711 = vadd.f32 %v326, %v675
      %v712 = vadd.f32 %v327, %v678
      %713 = vst [vmem:[#allocation2] sm:$0xff] %v681
      %714 = vst [vmem:[#allocation2 + $0x8] sm:$0xff] %v682
      %715 = vst [vmem:[#allocation2 + $0x10] sm:$0xff] %v683
      %716 = vst [vmem:[#allocation2 + $0x18] sm:$0xff] %v684
      %717 = vst [vmem:[#allocation2 + $0x20] sm:$0xff] %v685
      %718 = vst [vmem:[#allocation2 + $0x28] sm:$0xff] %v686
      %719 = vst [vmem:[#allocation2 + $0x30] sm:$0xff] %v687
      %720 = vst [vmem:[#allocation2 + $0x38] sm:$0xff] %v688
      %721 = vst [vmem:[#allocation2 + $0x40] sm:$0xff] %v689
      %722 = vst [vmem:[#allocation2 + $0x48] sm:$0xff] %v690
      %723 = vst [vmem:[#allocation2 + $0x50] sm:$0xff] %v691
      %724 = vst [vmem:[#allocation2 + $0x58] sm:$0xff] %v692
      %725 = vst [vmem:[#allocation2 + $0x60] sm:$0xff] %v693
      %726 = vst [vmem:[#allocation2 + $0x68] sm:$0xff] %v694
      %727 = vst [vmem:[#allocation2 + $0x70] sm:$0xff] %v695
      %728 = vst [vmem:[#allocation2 + $0x78] sm:$0xff] %v696
      %729 = vst [vmem:[#allocation2 + $0x80] sm:$0xff] %v697
      %730 = vst [vmem:[#allocation2 + $0x88] sm:$0xff] %v698
      %731 = vst [vmem:[#allocation2 + $0x90] sm:$0xff] %v699
      %732 = vst [vmem:[#allocation2 + $0x98] sm:$0xff] %v700
      %733 = vst [vmem:[#allocation2 + $0xa0] sm:$0xff] %v701
      %734 = vst [vmem:[#allocation2 + $0xa8] sm:$0xff] %v702
      %735 = vst [vmem:[#allocation2 + $0xb0] sm:$0xff] %v703
      %736 = vst [vmem:[#allocation2 + $0xb8] sm:$0xff] %v704
      %737 = vst [vmem:[#allocation2 + $0xc0] sm:$0xff] %v705
      %738 = vst [vmem:[#allocation2 + $0xc8] sm:$0xff] %v706
      %739 = vst [vmem:[#allocation2 + $0xd0] sm:$0xff] %v707
      %740 = vst [vmem:[#allocation2 + $0xd8] sm:$0xff] %v708
      %741 = vst [vmem:[#allocation2 + $0xe0] sm:$0xff] %v709
      %742 = vst [vmem:[#allocation2 + $0xe8] sm:$0xff] %v710
      %743 = vst [vmem:[#allocation2 + $0xf0] sm:$0xff] %v711
      %744 = vst [vmem:[#allocation2 + $0xf8] sm:$0xff] %v712
      // Predicated region
      $region37: #{discriminator_forward.8} parent=31 // pred_check
        %p745 = pneg %p260
      $region38: #{discriminator_forward.8} parent=31 // pred_check_branch
        %747 = sbr.rel (%p745) target = $region40
      $region39: #{discriminator_forward.8} parent=31 // pred_region
        %v748 = vld [vmem:[#allocation2] sm:$0xff]
        %v749 = vld [vmem:[#allocation2 + $0x8] sm:$0xff]
        %v750 = vld [vmem:[#allocation2 + $0x10] sm:$0xff]
        %v751 = vld [vmem:[#allocation2 + $0x18] sm:$0xff]
        %v752 = vld [vmem:[#allocation2 + $0x20] sm:$0xff]
        %v753 = vld [vmem:[#allocation2 + $0x28] sm:$0xff]
        %v754 = vld [vmem:[#allocation2 + $0x30] sm:$0xff]
        %v755 = vld [vmem:[#allocation2 + $0x38] sm:$0xff]
        %v756 = vld [vmem:[#allocation2 + $0x40] sm:$0xff]
        %v757 = vld [vmem:[#allocation2 + $0x48] sm:$0xff]
        %v758 = vld [vmem:[#allocation2 + $0x50] sm:$0xff]
        %v759 = vld [vmem:[#allocation2 + $0x58] sm:$0xff]
        %v760 = vld [vmem:[#allocation2 + $0x60] sm:$0xff]
        %v761 = vld [vmem:[#allocation2 + $0x68] sm:$0xff]
        %v762 = vld [vmem:[#allocation2 + $0x70] sm:$0xff]
        %v763 = vld [vmem:[#allocation2 + $0x78] sm:$0xff]
        %v764 = vld [vmem:[#allocation2 + $0x80] sm:$0xff]
        %v765 = vld [vmem:[#allocation2 + $0x88] sm:$0xff]
        %v766 = vld [vmem:[#allocation2 + $0x90] sm:$0xff]
        %v767 = vld [vmem:[#allocation2 + $0x98] sm:$0xff]
        %v768 = vld [vmem:[#allocation2 + $0xa0] sm:$0xff]
        %v769 = vld [vmem:[#allocation2 + $0xa8] sm:$0xff]
        %v770 = vld [vmem:[#allocation2 + $0xb0] sm:$0xff]
        %v771 = vld [vmem:[#allocation2 + $0xb8] sm:$0xff]
        %v772 = vld [vmem:[#allocation2 + $0xc0] sm:$0xff]
        %v773 = vld [vmem:[#allocation2 + $0xc8] sm:$0xff]
        %v774 = vld [vmem:[#allocation2 + $0xd0] sm:$0xff]
        %v775 = vld [vmem:[#allocation2 + $0xd8] sm:$0xff]
        %v776 = vld [vmem:[#allocation2 + $0xe0] sm:$0xff]
        %v777 = vld [vmem:[#allocation2 + $0xe8] sm:$0xff]
        %v778 = vld [vmem:[#allocation2 + $0xf0] sm:$0xff]
        %v779 = vld [vmem:[#allocation2 + $0xf8] sm:$0xff]
        %v780 = vld [vmem:[%s249] sm:$0x1]
        %v782 = vlaneseq
        %v783 = vshrl.u32 %v782, 7
        %v784 = vsub.s32 0, %v783
        %v785 = vrot.slane %v780, %v784
        %v787 = vadd.f32 %v748, %v785
        %v788 = vadd.f32 %v749, %v785
        %v789 = vadd.f32 %v750, %v785
        %v790 = vadd.f32 %v751, %v785
        %v791 = vadd.f32 %v752, %v785
        %v792 = vadd.f32 %v753, %v785
        %v793 = vadd.f32 %v754, %v785
        %v794 = vadd.f32 %v755, %v785
        %v795 = vadd.f32 %v756, %v785
        %v796 = vadd.f32 %v757, %v785
        %v797 = vadd.f32 %v758, %v785
        %v798 = vadd.f32 %v759, %v785
        %v799 = vadd.f32 %v760, %v785
        %v800 = vadd.f32 %v761, %v785
        %v801 = vadd.f32 %v762, %v785
        %v802 = vadd.f32 %v763, %v785
        %v803 = vadd.f32 %v764, %v785
        %v804 = vadd.f32 %v765, %v785
        %v805 = vadd.f32 %v766, %v785
        %v806 = vadd.f32 %v767, %v785
        %v807 = vadd.f32 %v768, %v785
        %v808 = vadd.f32 %v769, %v785
        %v809 = vadd.f32 %v770, %v785
        %v810 = vadd.f32 %v771, %v785
        %v811 = vadd.f32 %v772, %v785
        %v812 = vadd.f32 %v773, %v785
        %v813 = vadd.f32 %v774, %v785
        %v814 = vadd.f32 %v775, %v785
        %v815 = vadd.f32 %v776, %v785
        %v816 = vadd.f32 %v777, %v785
        %v817 = vadd.f32 %v778, %v785
        %v818 = vadd.f32 %v779, %v785
        %v819 = vmul.f32 %v787, 0.2
        %v820 = vmul.f32 %v788, 0.2
        %v821 = vmul.f32 %v789, 0.2
        %v822 = vmul.f32 %v790, 0.2
        %v823 = vmul.f32 %v791, 0.2
        %v824 = vmul.f32 %v792, 0.2
        %v825 = vmul.f32 %v793, 0.2
        %v826 = vmul.f32 %v794, 0.2
        %v827 = vmul.f32 %v795, 0.2
        %v828 = vmul.f32 %v796, 0.2
        %v829 = vmul.f32 %v797, 0.2
        %v830 = vmul.f32 %v798, 0.2
        %v831 = vmul.f32 %v799, 0.2
        %v832 = vmul.f32 %v800, 0.2
        %v833 = vmul.f32 %v801, 0.2
        %v834 = vmul.f32 %v802, 0.2
        %v835 = vmul.f32 %v803, 0.2
        %v836 = vmul.f32 %v804, 0.2
        %v837 = vmul.f32 %v805, 0.2
        %v838 = vmul.f32 %v806, 0.2
        %v839 = vmul.f32 %v807, 0.2
        %v840 = vmul.f32 %v808, 0.2
        %v841 = vmul.f32 %v809, 0.2
        %v842 = vmul.f32 %v810, 0.2
        %v843 = vmul.f32 %v811, 0.2
        %v844 = vmul.f32 %v812, 0.2
        %v845 = vmul.f32 %v813, 0.2
        %v846 = vmul.f32 %v814, 0.2
        %v847 = vmul.f32 %v815, 0.2
        %v848 = vmul.f32 %v816, 0.2
        %v849 = vmul.f32 %v817, 0.2
        %v850 = vmul.f32 %v818, 0.2
        %v851 = vmax.f32 %v787, %v819
        %v852 = vmax.f32 %v788, %v820
        %v853 = vmax.f32 %v789, %v821
        %v854 = vmax.f32 %v790, %v822
        %v855 = vmax.f32 %v791, %v823
        %v856 = vmax.f32 %v792, %v824
        %v857 = vmax.f32 %v793, %v825
        %v858 = vmax.f32 %v794, %v826
        %v859 = vmax.f32 %v795, %v827
        %v860 = vmax.f32 %v796, %v828
        %v861 = vmax.f32 %v797, %v829
        %v862 = vmax.f32 %v798, %v830
        %v863 = vmax.f32 %v799, %v831
        %v864 = vmax.f32 %v800, %v832
        %v865 = vmax.f32 %v801, %v833
        %v866 = vmax.f32 %v802, %v834
        %v867 = vmax.f32 %v803, %v835
        %v868 = vmax.f32 %v804, %v836
        %v869 = vmax.f32 %v805, %v837
        %v870 = vmax.f32 %v806, %v838
        %v871 = vmax.f32 %v807, %v839
        %v872 = vmax.f32 %v808, %v840
        %v873 = vmax.f32 %v809, %v841
        %v874 = vmax.f32 %v810, %v842
        %v875 = vmax.f32 %v811, %v843
        %v876 = vmax.f32 %v812, %v844
        %v877 = vmax.f32 %v813, %v845
        %v878 = vmax.f32 %v814, %v846
        %v879 = vmax.f32 %v815, %v847
        %v880 = vmax.f32 %v816, %v848
        %v881 = vmax.f32 %v817, %v849
        %v882 = vmax.f32 %v818, %v850
        %v883 = vpack.c.bf16 %v852, %v851
        %v884 = vpack.c.bf16 %v854, %v853
        %v885 = vpack.c.bf16 %v856, %v855
        %v886 = vpack.c.bf16 %v858, %v857
        %v887 = vpack.c.bf16 %v860, %v859
        %v888 = vpack.c.bf16 %v862, %v861
        %v889 = vpack.c.bf16 %v864, %v863
        %v890 = vpack.c.bf16 %v866, %v865
        %v891 = vpack.c.bf16 %v868, %v867
        %v892 = vpack.c.bf16 %v870, %v869
        %v893 = vpack.c.bf16 %v872, %v871
        %v894 = vpack.c.bf16 %v874, %v873
        %v895 = vpack.c.bf16 %v876, %v875
        %v896 = vpack.c.bf16 %v878, %v877
        %v897 = vpack.c.bf16 %v880, %v879
        %v898 = vpack.c.bf16 %v882, %v881
        %v915 = vunpack.c.l.b16 %v883
        %v916 = vunpack.c.h.b16 %v883
        %v917 = vunpack.c.l.b16 %v884
        %v918 = vunpack.c.h.b16 %v884
        %v919 = vunpack.c.l.b16 %v885
        %v920 = vunpack.c.h.b16 %v885
        %v921 = vunpack.c.l.b16 %v886
        %v922 = vunpack.c.h.b16 %v886
        %v923 = vunpack.c.l.b16 %v887
        %v924 = vunpack.c.h.b16 %v887
        %v925 = vunpack.c.l.b16 %v888
        %v926 = vunpack.c.h.b16 %v888
        %v927 = vunpack.c.l.b16 %v889
        %v928 = vunpack.c.h.b16 %v889
        %v929 = vunpack.c.l.b16 %v890
        %v930 = vunpack.c.h.b16 %v890
        %v931 = vunpack.c.l.b16 %v891
        %v932 = vunpack.c.h.b16 %v891
        %v933 = vunpack.c.l.b16 %v892
        %v934 = vunpack.c.h.b16 %v892
        %v935 = vunpack.c.l.b16 %v893
        %v936 = vunpack.c.h.b16 %v893
        %v937 = vunpack.c.l.b16 %v894
        %v938 = vunpack.c.h.b16 %v894
        %v939 = vunpack.c.l.b16 %v895
        %v940 = vunpack.c.h.b16 %v895
        %v941 = vunpack.c.l.b16 %v896
        %v942 = vunpack.c.h.b16 %v896
        %v943 = vunpack.c.l.b16 %v897
        %v944 = vunpack.c.h.b16 %v897
        %v945 = vunpack.c.l.b16 %v898
        %v946 = vunpack.c.h.b16 %v898
        %v947 = vpack.c.b16 %v915, %v915
        %v948 = vpack.c.b16 %v916, %v916
        %v949 = vpack.c.b16 %v917, %v917
        %v950 = vpack.c.b16 %v918, %v918
        %v951 = vpack.c.b16 %v919, %v919
        %v952 = vpack.c.b16 %v920, %v920
        %v953 = vpack.c.b16 %v921, %v921
        %v954 = vpack.c.b16 %v922, %v922
        %v955 = vpack.c.b16 %v923, %v923
        %v956 = vpack.c.b16 %v924, %v924
        %v957 = vpack.c.b16 %v925, %v925
        %v958 = vpack.c.b16 %v926, %v926
        %v959 = vpack.c.b16 %v927, %v927
        %v960 = vpack.c.b16 %v928, %v928
        %v961 = vpack.c.b16 %v929, %v929
        %v962 = vpack.c.b16 %v930, %v930
        %v963 = vpack.c.b16 %v931, %v931
        %v964 = vpack.c.b16 %v932, %v932
        %v965 = vpack.c.b16 %v933, %v933
        %v966 = vpack.c.b16 %v934, %v934
        %v967 = vpack.c.b16 %v935, %v935
        %v968 = vpack.c.b16 %v936, %v936
        %v969 = vpack.c.b16 %v937, %v937
        %v970 = vpack.c.b16 %v938, %v938
        %v971 = vpack.c.b16 %v939, %v939
        %v972 = vpack.c.b16 %v940, %v940
        %v973 = vpack.c.b16 %v941, %v941
        %v974 = vpack.c.b16 %v942, %v942
        %v975 = vpack.c.b16 %v943, %v943
        %v976 = vpack.c.b16 %v944, %v944
        %v977 = vpack.c.b16 %v945, %v945
        %v978 = vpack.c.b16 %v946, %v946
        %1011 = vst [vmem:[%s257] sm:$0xf] %v947
        %1012 = vst [vmem:[%s257 + $0x4] sm:$0xf] %v948
        %1013 = vst [vmem:[%s257 + $0x8] sm:$0xf] %v949
        %1014 = vst [vmem:[%s257 + $0xc] sm:$0xf] %v950
        %1015 = vst [vmem:[%s257 + $0x10] sm:$0xf] %v951
        %1016 = vst [vmem:[%s257 + $0x14] sm:$0xf] %v952
        %1017 = vst [vmem:[%s257 + $0x18] sm:$0xf] %v953
        %1018 = vst [vmem:[%s257 + $0x1c] sm:$0xf] %v954
        %1019 = vst [vmem:[%s257 + $0x20] sm:$0xf] %v955
        %1020 = vst [vmem:[%s257 + $0x24] sm:$0xf] %v956
        %1021 = vst [vmem:[%s257 + $0x28] sm:$0xf] %v957
        %1022 = vst [vmem:[%s257 + $0x2c] sm:$0xf] %v958
        %1023 = vst [vmem:[%s257 + $0x30] sm:$0xf] %v959
        %1024 = vst [vmem:[%s257 + $0x34] sm:$0xf] %v960
        %1025 = vst [vmem:[%s257 + $0x38] sm:$0xf] %v961
        %1026 = vst [vmem:[%s257 + $0x3c] sm:$0xf] %v962
        %1027 = vst [vmem:[%s257 + $0x40] sm:$0xf] %v963
        %1028 = vst [vmem:[%s257 + $0x44] sm:$0xf] %v964
        %1029 = vst [vmem:[%s257 + $0x48] sm:$0xf] %v965
        %1030 = vst [vmem:[%s257 + $0x4c] sm:$0xf] %v966
        %1031 = vst [vmem:[%s257 + $0x50] sm:$0xf] %v967
        %1032 = vst [vmem:[%s257 + $0x54] sm:$0xf] %v968
        %1033 = vst [vmem:[%s257 + $0x58] sm:$0xf] %v969
        %1034 = vst [vmem:[%s257 + $0x5c] sm:$0xf] %v970
        %1035 = vst [vmem:[%s257 + $0x60] sm:$0xf] %v971
        %1036 = vst [vmem:[%s257 + $0x64] sm:$0xf] %v972
        %1037 = vst [vmem:[%s257 + $0x68] sm:$0xf] %v973
        %1038 = vst [vmem:[%s257 + $0x6c] sm:$0xf] %v974
        %1039 = vst [vmem:[%s257 + $0x70] sm:$0xf] %v975
        %1040 = vst [vmem:[%s257 + $0x74] sm:$0xf] %v976
        %1041 = vst [vmem:[%s257 + $0x78] sm:$0xf] %v977
        %1042 = vst [vmem:[%s257 + $0x7c] sm:$0xf] %v978
      $region40: #{discriminator_forward.8} parent=31 // pred_fallthru
        _
      %s1043 = smul.u32 32, %s19
      %p1044 = scmp.lt.s32.totalorder %s1043, 63
      %s1045 = scalar_select %p1044, %s1043, 63
      %p1046 = scmp.lt.s32.totalorder %s20, 0
      %s1047 = scalar_select %p1046, %s20, 0
      %s1048 = sadd.s32 %s1047, %s1045
      %s1049 = smul.addr %s1048, 4
      %s1050 = scalar_lea.vmem %s3, %s1049
      // Predicated region
      $region41: #{discriminator_forward.8} parent=31 // pred_check
        %p1051 = pneg %p135
      $region42: #{discriminator_forward.8} parent=31 // pred_check_branch
        %1053 = sbr.rel (%p1051) target = $region44
      $region43: #{discriminator_forward.8} parent=31 // pred_region
        %s1054 = smul.u32 32, %s19
      $region44: #{discriminator_forward.8} parent=31 // pred_fallthru
        _
    $region32: #{discriminator_forward.8} parent=5 // pred_fallthru
      _
    %p1055 = scmp.le.s32.totalorder 2, %s9
    // Predicated region
    $region45: #{discriminator_forward.8} parent=5 // pred_check
      %p1056 = pneg %p1055
    $region46: #{discriminator_forward.8} parent=5 // pred_check_branch
      %1058 = sbr.rel (%p1056) target = $region48
    $region47: #{discriminator_forward.8} parent=5 // pred_region
      %s1059 = ssub.s32 %s9, 2
      // Predicated region
      $region49: #{discriminator_forward.8} parent=47 // pred_check
        %p1060 = pneg %p141
      $region50: #{discriminator_forward.8} parent=47 // pred_check_branch
        %1062 = sbr.rel (%p1060) target = $region52
      $region51: #{discriminator_forward.8} parent=47 // pred_region
        %s1063 = smul.u32 32, %s22
        %p1064 = scmp.lt.s32.totalorder %s1063, 63
        %s1065 = scalar_select %p1064, %s1063, 63
        %p1066 = scmp.lt.s32.totalorder %s23, 0
        %s1067 = scalar_select %p1066, %s23, 0
        %s1068 = sadd.s32 %s1067, %s1065
        %s1069 = smul.addr %s1068, 4
        %s1070 = scalar_lea.vmem %s3, %s1069
      $region52: #{discriminator_forward.8} parent=47 // pred_fallthru
        _
    $region48: #{discriminator_forward.8} parent=5 // pred_fallthru
      _
  $region6: #{discriminator_forward.8} parent=0 // loop_footer
    %s13 = sadd.s32 1, %s9
  $region7: #{discriminator_forward.8} parent=0 // loop_footer_branch
    %8 = sbr.rel target = $region3
  $region8: #{discriminator_forward.8} parent=0 // loop_exit
    _

// kernel: discriminator_forward.10
$region0: #{discriminator_forward.10}
  #allocation0 [shape = 'u32[]', space=smem, size = 0x4, offset = 0x4, fixed_abs, tag = 'smem constant byte address 0x4 - core index']
  #allocation1 [shape = 'u32[144,128]{1,0:T(1,128)}', space=vmem, size = 0x12000, scoped, tag = 'internal scratch']
  %s0 = inlined_call_operand.vmem [shape: bf16[2,64,128], index: 0, kind: input, shape index: {}]
  %s1 = inlined_call_operand.vmem [shape: f32[128,32], index: 1, kind: input, shape index: {}]
  %s2 = inlined_call_operand.vmem [shape: f32[32,128], index: 2, kind: input, shape index: {}]
  %s3 = inlined_call_operand.vmem [shape: f32[1,128], index: 3, kind: input, shape index: {}]
  %s4 = inlined_call_operand.vmem [shape: f32[1,128], index: 4, kind: input, shape index: {}]
  %s5 = inlined_call_operand.vmem [shape: bf16[2,64,128], index: 5, kind: output, shape index: {}]
  %s6 = sld [smem:[#allocation0]]
  $region53: #{discriminator_forward.10} parent=0
    _
  %s8 = ssub.s32 1, %s6
  %s9 = scalar_select 0, %s8, %s6
  loop: start=0, step=1, limit=4
  $region2: #{discriminator_forward.10} parent=0 // loop_pre_header
    _
  $region3: #{discriminator_forward.10} parent=0 // loop_header
    %s11 = sphi 0, %s15
    %p12 = scmp.ge.s32.totalorder %s11, 4
    %s21 = sphi 0, %s23
    %s24 = sphi 0, %s21
    %s25 = sphi 0, %s24
    %s41 = sphi 0, %s25
    %s45 = sphi 0, %s45
    %s47 = sphi 0, %s45
    %s48 = sphi 0, %s47
    %s62 = sphi 0, %s48
    %s66 = sphi 0, %s66
    %s68 = sphi 0, %s66
    %s69 = sphi 0, %s68
    %s83 = sphi 0, %s69
    %s87 = sphi 0, %s87
    %s89 = sphi 0, %s87
    %s90 = sphi 0, %s89
    %s104 = sphi 0, %s90
    %s108 = sphi 0, %s108
    %s110 = sphi 0, %s108
    %s111 = sphi 0, %s110
    %s125 = sphi 0, %s111
    %s131 = sphi 0, %s133
    %s134 = sphi 0, %s131
    %s135 = sphi 0, %s134
    %s151 = sphi 0, %s135
  $region4: #{discriminator_forward.10} parent=0 // loop_header_branch
    %14 = sbr.rel (%p12) target = $region8
  $region5: #{discriminator_forward.10} parent=0 // loop_body
    %s16 = ssub.s32 %s11, 1
    %s17 = ssub.s32 %s11, 2
    %s18 = sadd.s32 %s11, 1
    %s19 = ssub.s32 %s11, %s18
    %p20 = scmp.eq.s32.totalorder %s19, 0
    %s22 = sadd.s32 %s21, 1
    %s23 = scalar_select %p20, %s21, %s22
    %p26 = pneg %p20
    %p27 = scmp.eq.s32.totalorder %s11, 1
    %p28 = por %p26, %p27
    %p29 = scmp.ne.s32.totalorder %s21, %s24
    %p30 = scmp.eq.s32.totalorder %s11, 0
    %p31 = por %p29, %p30
    %p32 = scmp.ne.s32.totalorder %s21, %s24
    %p33 = scmp.eq.s32.totalorder %s16, 1
    %p34 = por %p32, %p33
    %p35 = scmp.ne.s32.totalorder %s24, %s25
    %p36 = scmp.eq.s32.totalorder %s16, 0
    %p37 = por %p35, %p36
    %p38 = scmp.ne.s32.totalorder %s24, %s25
    %p39 = scmp.eq.s32.totalorder %s17, 1
    %p40 = por %p38, %p39
    %p42 = scmp.ne.s32.totalorder %s25, %s41
    %p43 = scmp.eq.s32.totalorder %s17, 0
    %p44 = por %p42, %p43
    %s46 = sadd.s32 %s45, 1
    %p49 = scmp.eq.s32.totalorder %s11, 1
    %p50 = scmp.ne.s32.totalorder %s45, %s47
    %p51 = scmp.eq.s32.totalorder %s11, 0
    %p52 = por %p50, %p51
    %p53 = scmp.ne.s32.totalorder %s45, %s47
    %p54 = scmp.eq.s32.totalorder %s16, 1
    %p55 = por %p53, %p54
    %p56 = scmp.ne.s32.totalorder %s47, %s48
    %p57 = scmp.eq.s32.totalorder %s16, 0
    %p58 = por %p56, %p57
    %p59 = scmp.ne.s32.totalorder %s47, %s48
    %p60 = scmp.eq.s32.totalorder %s17, 1
    %p61 = por %p59, %p60
    %p63 = scmp.ne.s32.totalorder %s48, %s62
    %p64 = scmp.eq.s32.totalorder %s17, 0
    %p65 = por %p63, %p64
    %s67 = sadd.s32 %s66, 1
    %p70 = scmp.eq.s32.totalorder %s11, 1
    %p71 = scmp.ne.s32.totalorder %s66, %s68
    %p72 = scmp.eq.s32.totalorder %s11, 0
    %p73 = por %p71, %p72
    %p74 = scmp.ne.s32.totalorder %s66, %s68
    %p75 = scmp.eq.s32.totalorder %s16, 1
    %p76 = por %p74, %p75
    %p77 = scmp.ne.s32.totalorder %s68, %s69
    %p78 = scmp.eq.s32.totalorder %s16, 0
    %p79 = por %p77, %p78
    %p80 = scmp.ne.s32.totalorder %s68, %s69
    %p81 = scmp.eq.s32.totalorder %s17, 1
    %p82 = por %p80, %p81
    %p84 = scmp.ne.s32.totalorder %s69, %s83
    %p85 = scmp.eq.s32.totalorder %s17, 0
    %p86 = por %p84, %p85
    %s88 = sadd.s32 %s87, 1
    %p91 = scmp.eq.s32.totalorder %s11, 1
    %p92 = scmp.ne.s32.totalorder %s87, %s89
    %p93 = scmp.eq.s32.totalorder %s11, 0
    %p94 = por %p92, %p93
    %p95 = scmp.ne.s32.totalorder %s87, %s89
    %p96 = scmp.eq.s32.totalorder %s16, 1
    %p97 = por %p95, %p96
    %p98 = scmp.ne.s32.totalorder %s89, %s90
    %p99 = scmp.eq.s32.totalorder %s16, 0
    %p100 = por %p98, %p99
    %p101 = scmp.ne.s32.totalorder %s89, %s90
    %p102 = scmp.eq.s32.totalorder %s17, 1
    %p103 = por %p101, %p102
    %p105 = scmp.ne.s32.totalorder %s90, %s104
    %p106 = scmp.eq.s32.totalorder %s17, 0
    %p107 = por %p105, %p106
    %s109 = sadd.s32 %s108, 1
    %p112 = scmp.eq.s32.totalorder %s11, 1
    %p113 = scmp.ne.s32.totalorder %s108, %s110
    %p114 = scmp.eq.s32.totalorder %s11, 0
    %p115 = por %p113, %p114
    %p116 = scmp.ne.s32.totalorder %s108, %s110
    %p117 = scmp.eq.s32.totalorder %s16, 1
    %p118 = por %p116, %p117
    %p119 = scmp.ne.s32.totalorder %s110, %s111
    %p120 = scmp.eq.s32.totalorder %s16, 0
    %p121 = por %p119, %p120
    %p122 = scmp.ne.s32.totalorder %s110, %s111
    %p123 = scmp.eq.s32.totalorder %s17, 1
    %p124 = por %p122, %p123
    %p126 = scmp.ne.s32.totalorder %s111, %s125
    %p127 = scmp.eq.s32.totalorder %s17, 0
    %p128 = por %p126, %p127
    %s129 = ssub.s32 %s11, %s18
    %p130 = scmp.eq.s32.totalorder %s129, 0
    %s132 = sadd.s32 %s131, 1
    %s133 = scalar_select %p130, %s131, %s132
    %p136 = pneg %p130
    %p137 = scmp.eq.s32.totalorder %s11, 1
    %p138 = por %p136, %p137
    %p139 = scmp.ne.s32.totalorder %s131, %s134
    %p140 = scmp.eq.s32.totalorder %s11, 0
    %p141 = por %p139, %p140
    %p142 = scmp.ne.s32.totalorder %s131, %s134
    %p143 = scmp.eq.s32.totalorder %s16, 1
    %p144 = por %p142, %p143
    %p145 = scmp.ne.s32.totalorder %s134, %s135
    %p146 = scmp.eq.s32.totalorder %s16, 0
    %p147 = por %p145, %p146
    %p148 = scmp.ne.s32.totalorder %s134, %s135
    %p149 = scmp.eq.s32.totalorder %s17, 1
    %p150 = por %p148, %p149
    %p152 = scmp.ne.s32.totalorder %s135, %s151
    %p153 = scmp.eq.s32.totalorder %s17, 0
    %p154 = por %p152, %p153
    %p155 = scmp.le.s32.totalorder 1, %s11
    %p156 = scmp.lt.s32.totalorder %s11, 3
    %p157 = pnand %p155, %p156
    %p158 = pneg %p157
    // Predicated region
    $region9: #{discriminator_forward.10} parent=5 // pred_check
      _
    $region10: #{discriminator_forward.10} parent=5 // pred_check_branch
      %160 = sbr.rel (%p157) target = $region12
    $region11: #{discriminator_forward.10} parent=5 // pred_region
      %s161 = ssub.s32 %s11, 1
      // Predicated region
      $region13: #{discriminator_forward.10} parent=11 // pred_check
        %p162 = pneg %p58
      $region14: #{discriminator_forward.10} parent=11 // pred_check_branch
        %164 = sbr.rel (%p162) target = $region16
      $region15: #{discriminator_forward.10} parent=11 // pred_region
        _
      $region16: #{discriminator_forward.10} parent=11 // pred_fallthru
        _
      // Predicated region
      $region17: #{discriminator_forward.10} parent=11 // pred_check
        %p165 = pneg %p79
      $region18: #{discriminator_forward.10} parent=11 // pred_check_branch
        %167 = sbr.rel (%p165) target = $region20
      $region19: #{discriminator_forward.10} parent=11 // pred_region
        _
      $region20: #{discriminator_forward.10} parent=11 // pred_fallthru
        _
      // Predicated region
      $region21: #{discriminator_forward.10} parent=11 // pred_check
        %p168 = pneg %p100
      $region22: #{discriminator_forward.10} parent=11 // pred_check_branch
        %170 = sbr.rel (%p168) target = $region24
      $region23: #{discriminator_forward.10} parent=11 // pred_region
        _
      $region24: #{discriminator_forward.10} parent=11 // pred_fallthru
        _
      // Predicated region
      $region25: #{discriminator_forward.10} parent=11 // pred_check
        %p171 = pneg %p121
      $region26: #{discriminator_forward.10} parent=11 // pred_check_branch
        %173 = sbr.rel (%p171) target = $region28
      $region27: #{discriminator_forward.10} parent=11 // pred_region
        _
      $region28: #{discriminator_forward.10} parent=11 // pred_fallthru
        _
    $region12: #{discriminator_forward.10} parent=5 // pred_fallthru
      _
    %p174 = scmp.lt.s32.totalorder %s11, 2
    // Predicated region
    $region29: #{discriminator_forward.10} parent=5 // pred_check
      %p175 = pneg %p174
    $region30: #{discriminator_forward.10} parent=5 // pred_check_branch
      %177 = sbr.rel (%p175) target = $region32
    $region31: #{discriminator_forward.10} parent=5 // pred_region
      // Predicated region
      $region33: #{discriminator_forward.10} parent=31 // pred_check
        %p178 = pneg %p31
      $region34: #{discriminator_forward.10} parent=31 // pred_check_branch
        %180 = sbr.rel (%p178) target = $region36
      $region35: #{discriminator_forward.10} parent=31 // pred_region
        %p181 = scmp.lt.s32.totalorder %s11, 1
        %s182 = scalar_select %p181, %s11, 1
        %s183 = smul.addr %s182, 8
        %s184 = smul.addr %s183, 4
        %s185 = scalar_lea.vmem %s0, %s184
      $region36: #{discriminator_forward.10} parent=31 // pred_fallthru
        _
    $region32: #{discriminator_forward.10} parent=5 // pred_fallthru
      _
    %p186 = scmp.le.s32.totalorder 1, %s11
    %p187 = scmp.lt.s32.totalorder %s11, 3
    %p188 = pnand %p186, %p187
    %p189 = pneg %p188
    // Predicated region
    $region37: #{discriminator_forward.10} parent=5 // pred_check
      _
    $region38: #{discriminator_forward.10} parent=5 // pred_check_branch
      %191 = sbr.rel (%p188) target = $region40
    $region39: #{discriminator_forward.10} parent=5 // pred_region
      %s192 = ssub.s32 %s11, 1
      %p193 = scmp.lt.s32.totalorder %s16, 1
      %s194 = scalar_select %p193, %s16, 1
      %s195 = smul.addr %s194, 8
      %s196 = smul.addr %s195, 4
      %s197 = scalar_lea.vmem %s0, %s196
      %p198 = pneg %p37
      %p199 = pneg %p34
      %p200 = pneg %p58
      %p201 = pneg %p55
      %p202 = pneg %p79
      %p203 = pneg %p76
      %p204 = pneg %p100
      %p205 = pneg %p97
      %p206 = pneg %p121
      %p207 = pneg %p118
      %p208 = pneg %p147
      %p209 = pneg %p144
      %p210 = scmp.lt.s32.totalorder %s16, 1
      %s211 = scalar_select %p210, %s16, 1
      %s212 = smul.addr %s211, 8
      %s213 = smul.addr %s212, 4
      %s214 = scalar_lea.vmem %s5, %s213
      %p215 = scmp.lt.s32.totalorder %s16, 1
      %s216 = scalar_select %p215, %s16, 1
      %s217 = smul.addr %s216, 8
      %s218 = smul.addr %s217, 4
      %s219 = scalar_lea.vmem %s0, %s218
      %p220 = scmp.lt.s32.totalorder %s16, 1
      %s221 = scalar_select %p220, %s16, 1
      %s222 = smul.addr %s221, 8
      %s223 = smul.addr %s222, 4
      %s224 = scalar_lea.vmem %s5, %s223
      %v225 = vld [vmem:[%s219] sm:$0xf]
      %v226 = vld [vmem:[%s219 + $0x4] sm:$0xf]
      %v227 = vld [vmem:[%s219 + $0x8] sm:$0xf]
      %v228 = vld [vmem:[%s219 + $0xc] sm:$0xf]
      %v229 = vld [vmem:[%s219 + $0x10] sm:$0xf]
      %v230 = vld [vmem:[%s219 + $0x14] sm:$0xf]
      %v231 = vld [vmem:[%s219 + $0x18] sm:$0xf]
      %v232 = vld [vmem:[%s219 + $0x1c] sm:$0xf]
      %v233 = vunpack.c.l.bf16 %v225
      %v234 = vunpack.c.l.bf16 %v226
      %v235 = vunpack.c.l.bf16 %v227
      %v236 = vunpack.c.l.bf16 %v228
      %v237 = vunpack.c.l.bf16 %v229
      %v238 = vunpack.c.l.bf16 %v230
      %v239 = vunpack.c.l.bf16 %v231
      %v240 = vunpack.c.l.bf16 %v232
      %v241 = vadd.f32 %v233, %v234
      %v242 = vadd.f32 %v241, %v235
      %v243 = vadd.f32 %v242, %v236
      %v244 = vadd.f32 %v243, %v237
      %v245 = vadd.f32 %v244, %v238
      %v246 = vadd.f32 %v245, %v239
      %v247 = vadd.f32 %v246, %v240
      %v248 = vrot.slane %v247, 4
      %v249 = vadd.f32 %v247, %v248
      %v250 = vrot.slane %v249, 2
      %v251 = vadd.f32 %v249, %v250
      %v252 = vrot.slane %v251, 1
      %v253 = vadd.f32 %v251, %v252
      %v254 = vld [vmem:[%s1] sm:$0xff]
      %v255 = vld [vmem:[%s1 + $0x8] sm:$0xff]
      %v256 = vld [vmem:[%s1 + $0x10] sm:$0xff]
      %v257 = vld [vmem:[%s1 + $0x18] sm:$0xff]
      %v258 = vld [vmem:[%s1 + $0x20] sm:$0xff]
      %v259 = vld [vmem:[%s1 + $0x28] sm:$0xff]
      %v260 = vld [vmem:[%s1 + $0x30] sm:$0xff]
      %v261 = vld [vmem:[%s1 + $0x38] sm:$0xff]
      %v262 = vld [vmem:[%s1 + $0x40] sm:$0xff]
      %v263 = vld [vmem:[%s1 + $0x48] sm:$0xff]
      %v264 = vld [vmem:[%s1 + $0x50] sm:$0xff]
      %v265 = vld [vmem:[%s1 + $0x58] sm:$0xff]
      %v266 = vld [vmem:[%s1 + $0x60] sm:$0xff]
      %v267 = vld [vmem:[%s1 + $0x68] sm:$0xff]
      %v268 = vld [vmem:[%s1 + $0x70] sm:$0xff]
      %v269 = vld [vmem:[%s1 + $0x78] sm:$0xff]
      %270 = vmatprep.subr.mxu0 0.0
      %271 = vmatpush1.msra.mxu0 %v254
      %272 = vmatprep.subr.mxu0 0.0
      %273 = vmatpush1.msra.mxu0 %v255
      %274 = vmatprep.subr.mxu0 0.0
      %275 = vmatpush1.msra.mxu0 %v256
      %276 = vmatprep.subr.mxu0 0.0
      %277 = vmatpush1.msra.mxu0 %v257
      %278 = vmatprep.subr.mxu0 0.0
      %279 = vmatpush1.msra.mxu0 %v258
      %280 = vmatprep.subr.mxu0 0.0
      %281 = vmatpush1.msra.mxu0 %v259
      %282 = vmatprep.subr.mxu0 0.0
      %283 = vmatpush1.msra.mxu0 %v260
      %284 = vmatprep.subr.mxu0 0.0
      %285 = vmatpush1.msra.mxu0 %v261
      %286 = vmatprep.subr.mxu0 0.0
      %287 = vmatpush1.msra.mxu0 %v262
      %288 = vmatprep.subr.mxu0 0.0
      %289 = vmatpush1.msra.mxu0 %v263
      %290 = vmatprep.subr.mxu0 0.0
      %291 = vmatpush1.msra.mxu0 %v264
      %292 = vmatprep.subr.mxu0 0.0
      %293 = vmatpush1.msra.mxu0 %v265
      %294 = vmatprep.subr.mxu0 0.0
      %295 = vmatpush1.msra.mxu0 %v266
      %296 = vmatprep.subr.mxu0 0.0
      %297 = vmatpush1.msra.mxu0 %v267
      %298 = vmatprep.subr.mxu0 0.0
      %299 = vmatpush1.msra.mxu0 %v268
      %300 = vmatprep.subr.mxu0 0.0
      %301 = vmatpush1.msra.mxu0 %v269
      %302 = vmatprep.subr.mxu0 0.0
      %303 = vmatpush1.msra.mxu0 0.0
      %304 = vmatprep.subr.mxu0 0.0
      %305 = vmatpush1.msra.mxu0 0.0
      %306 = vmatprep.subr.mxu0 0.0
      %307 = vmatpush1.msra.mxu0 0.0
      %308 = vmatprep.subr.mxu0 0.0
      %309 = vmatpush1.msra.mxu0 0.0
      %310 = vmatprep.subr.mxu0 0.0
      %311 = vmatpush1.msra.mxu0 0.0
      %312 = vmatprep.subr.mxu0 0.0
      %313 = vmatpush1.msra.mxu0 0.0
      %314 = vmatprep.subr.mxu0 0.0
      %315 = vmatpush1.msra.mxu0 0.0
      %316 = vmatprep.subr.mxu0 0.0
      %317 = vmatpush1.msra.mxu0 0.0
      %318 = vmatprep.subr.mxu0 0.0
      %319 = vmatpush1.msra.mxu0 0.0
      %320 = vmatprep.subr.mxu0 0.0
      %321 = vmatpush1.msra.mxu0 0.0
      %322 = vmatprep.subr.mxu0 0.0
      %323 = vmatpush1.msra.mxu0 0.0
      %324 = vmatprep.subr.mxu0 0.0
      %325 = vmatpush1.msra.mxu0 0.0
      %326 = vmatprep.subr.mxu0 0.0
      %327 = vmatpush1.msra.mxu0 0.0
      %328 = vmatprep.subr.mxu0 0.0
      %329 = vmatpush1.msra.mxu0 0.0
      %330 = vmatprep.subr.mxu0 0.0
      %331 = vmatpush1.msra.mxu0 0.0
      %332 = vmatprep.subr.mxu0 0.0
      %333 = vmatpush1.msra.mxu0 0.0
      %334 = vmatprep.mubr.f32.mxu0 0.0
      %335 = vmatmul.mubr.f32.gmra.mrb[0].mxu0 %v253
      %v336 = vpop.f32.mrb[0].mxu0
      %v337 = vadd.f32 0.0, %v336
      %v338 = vpop.f32.mrb[0].mxu0
      %339 = vdwg.mxu0
      %v340 = vrcp.pop 256.0
      %v341 = vmul.f32 %v337, %v340
      %v342 = vld [vmem:[%s2] sm:$0xff]
      %v343 = vld [vmem:[%s2 + $0x8] sm:$0xff]
      %v344 = vld [vmem:[%s2 + $0x10] sm:$0xff]
      %v345 = vld [vmem:[%s2 + $0x18] sm:$0xff]
      %vm346 = vcmask 261120
      %v348 = vsel %vm346, %v341, 0
      %350 = vmatprep.subr.mxu0 0.0
      %351 = vmatpush1.msra.mxu0 %v342
      %352 = vmatprep.subr.mxu0 0.0
      %353 = vmatpush1.msra.mxu0 %v343
      %354 = vmatprep.subr.mxu0 0.0
      %355 = vmatpush1.msra.mxu0 %v344
      %356 = vmatprep.subr.mxu0 0.0
      %357 = vmatpush1.msra.mxu0 %v345
      %358 = vmatprep.subr.mxu0 0.0
      %359 = vmatpush1.msra.mxu0 0.0
      %360 = vmatprep.subr.mxu0 0.0
      %361 = vmatpush1.msra.mxu0 0.0
      %362 = vmatprep.subr.mxu0 0.0
      %363 = vmatpush1.msra.mxu0 0.0
      %364 = vmatprep.subr.mxu0 0.0
      %365 = vmatpush1.msra.mxu0 0.0
      %366 = vmatprep.subr.mxu0 0.0
      %367 = vmatpush1.msra.mxu0 0.0
      %368 = vmatprep.subr.mxu0 0.0
      %369 = vmatpush1.msra.mxu0 0.0
      %370 = vmatprep.subr.mxu0 0.0
      %371 = vmatpush1.msra.mxu0 0.0
      %372 = vmatprep.subr.mxu0 0.0
      %373 = vmatpush1.msra.mxu0 0.0
      %374 = vmatprep.subr.mxu0 0.0
      %375 = vmatpush1.msra.mxu0 0.0
      %376 = vmatprep.subr.mxu0 0.0
      %377 = vmatpush1.msra.mxu0 0.0
      %378 = vmatprep.subr.mxu0 0.0
      %379 = vmatpush1.msra.mxu0 0.0
      %380 = vmatprep.subr.mxu0 0.0
      %381 = vmatpush1.msra.mxu0 0.0
      %382 = vmatprep.subr.mxu0 0.0
      %383 = vmatpush1.msra.mxu0 0.0
      %384 = vmatprep.subr.mxu0 0.0
      %385 = vmatpush1.msra.mxu0 0.0
      %386 = vmatprep.subr.mxu0 0.0
      %387 = vmatpush1.msra.mxu0 0.0
      %388 = vmatprep.subr.mxu0 0.0
      %389 = vmatpush1.msra.mxu0 0.0
      %390 = vmatprep.subr.mxu0 0.0
      %391 = vmatpush1.msra.mxu0 0.0
      %392 = vmatprep.subr.mxu0 0.0
      %393 = vmatpush1.msra.mxu0 0.0
      %394 = vmatprep.subr.mxu0 0.0
      %395 = vmatpush1.msra.mxu0 0.0
      %396 = vmatprep.subr.mxu0 0.0
      %397 = vmatpush1.msra.mxu0 0.0
      %398 = vmatprep.subr.mxu0 0.0
      %399 = vmatpush1.msra.mxu0 0.0
      %400 = vmatprep.subr.mxu0 0.0
      %401 = vmatpush1.msra.mxu0 0.0
      %402 = vmatprep.subr.mxu0 0.0
      %403 = vmatpush1.msra.mxu0 0.0
      %404 = vmatprep.subr.mxu0 0.0
      %405 = vmatpush1.msra.mxu0 0.0
      %406 = vmatprep.subr.mxu0 0.0
      %407 = vmatpush1.msra.mxu0 0.0
      %408 = vmatprep.subr.mxu0 0.0
      %409 = vmatpush1.msra.mxu0 0.0
      %410 = vmatprep.subr.mxu0 0.0
      %411 = vmatpush1.msra.mxu0 0.0
      %412 = vmatprep.subr.mxu0 0.0
      %413 = vmatpush1.msra.mxu0 0.0
      %414 = vmatprep.mubr.f32.mxu0 0.0
      %415 = vmatmul.mubr.f32.gmra.mrb[0].mxu0 %v348
      %v416 = vpop.f32.mrb[0].mxu0
      %v417 = vadd.f32 0.0, %v416
      %v418 = vpop.f32.mrb[0].mxu0
      %419 = vdwg.mxu0
      %v420 = vlaneseq
      %v421 = vshrl.u32 %v420, 7
      %v422 = vsub.s32 0, %v421
      %v423 = vrot.slane %v417, %v422
      %v424 = vsub.f32 %v233, %v423
      %v425 = vsub.f32 %v234, %v423
      %v426 = vsub.f32 %v235, %v423
      %v427 = vsub.f32 %v236, %v423
      %v428 = vsub.f32 %v237, %v423
      %v429 = vsub.f32 %v238, %v423
      %v430 = vsub.f32 %v239, %v423
      %v431 = vsub.f32 %v240, %v423
      %v432 = vmul.f32 %v424, %v424
      %v433 = vmul.f32 %v425, %v425
      %v434 = vmul.f32 %v426, %v426
      %v435 = vmul.f32 %v427, %v427
      %v436 = vmul.f32 %v428, %v428
      %v437 = vmul.f32 %v429, %v429
      %v438 = vmul.f32 %v430, %v430
      %v439 = vmul.f32 %v431, %v431
      %v440 = vadd.f32 %v432, %v433
      %v441 = vadd.f32 %v440, %v434
      %v442 = vadd.f32 %v441, %v435
      %v443 = vadd.f32 %v442, %v436
      %v444 = vadd.f32 %v443, %v437
      %v445 = vadd.f32 %v444, %v438
      %v446 = vadd.f32 %v445, %v439
      %v447 = vrot.slane %v446, 4
      %v448 = vadd.f32 %v446, %v447
      %v449 = vrot.slane %v448, 2
      %v450 = vadd.f32 %v448, %v449
      %v451 = vrot.slane %v450, 1
      %v452 = vadd.f32 %v450, %v451
      %453 = vmatprep.subr.mxu0 0.0
      %454 = vmatpush1.msra.mxu0 %v254
      %455 = vmatprep.subr.mxu0 0.0
      %456 = vmatpush1.msra.mxu0 %v255
      %457 = vmatprep.subr.mxu0 0.0
      %458 = vmatpush1.msra.mxu0 %v256
      %459 = vmatprep.subr.mxu0 0.0
      %460 = vmatpush1.msra.mxu0 %v257
      %461 = vmatprep.subr.mxu0 0.0
      %462 = vmatpush1.msra.mxu0 %v258
      %463 = vmatprep.subr.mxu0 0.0
      %464 = vmatpush1.msra.mxu0 %v259
      %465 = vmatprep.subr.mxu0 0.0
      %466 = vmatpush1.msra.mxu0 %v260
      %467 = vmatprep.subr.mxu0 0.0
      %468 = vmatpush1.msra.mxu0 %v261
      %469 = vmatprep.subr.mxu0 0.0
      %470 = vmatpush1.msra.mxu0 %v262
      %471 = vmatprep.subr.mxu0 0.0
      %472 = vmatpush1.msra.mxu0 %v263
      %473 = vmatprep.subr.mxu0 0.0
      %474 = vmatpush1.msra.mxu0 %v264
      %475 = vmatprep.subr.mxu0 0.0
      %476 = vmatpush1.msra.mxu0 %v265
      %477 = vmatprep.subr.mxu0 0.0
      %478 = vmatpush1.msra.mxu0 %v266
      %479 = vmatprep.subr.mxu0 0.0
      %480 = vmatpush1.msra.mxu0 %v267
      %481 = vmatprep.subr.mxu0 0.0
      %482 = vmatpush1.msra.mxu0 %v268
      %483 = vmatprep.subr.mxu0 0.0
      %484 = vmatpush1.msra.mxu0 %v269
      %485 = vmatprep.subr.mxu0 0.0
      %486 = vmatpush1.msra.mxu0 0.0
      %487 = vmatprep.subr.mxu0 0.0
      %488 = vmatpush1.msra.mxu0 0.0
      %489 = vmatprep.subr.mxu0 0.0
      %490 = vmatpush1.msra.mxu0 0.0
      %491 = vmatprep.subr.mxu0 0.0
      %492 = vmatpush1.msra.mxu0 0.0
      %493 = vmatprep.subr.mxu0 0.0
      %494 = vmatpush1.msra.mxu0 0.0
      %495 = vmatprep.subr.mxu0 0.0
      %496 = vmatpush1.msra.mxu0 0.0
      %497 = vmatprep.subr.mxu0 0.0
      %498 = vmatpush1.msra.mxu0 0.0
      %499 = vmatprep.subr.mxu0 0.0
      %500 = vmatpush1.msra.mxu0 0.0
      %501 = vmatprep.subr.mxu0 0.0
      %502 = vmatpush1.msra.mxu0 0.0
      %503 = vmatprep.subr.mxu0 0.0
      %504 = vmatpush1.msra.mxu0 0.0
      %505 = vmatprep.subr.mxu0 0.0
      %506 = vmatpush1.msra.mxu0 0.0
      %507 = vmatprep.subr.mxu0 0.0
      %508 = vmatpush1.msra.mxu0 0.0
      %509 = vmatprep.subr.mxu0 0.0
      %510 = vmatpush1.msra.mxu0 0.0
      %511 = vmatprep.subr.mxu0 0.0
      %512 = vmatpush1.msra.mxu0 0.0
      %513 = vmatprep.subr.mxu0 0.0
      %514 = vmatpush1.msra.mxu0 0.0
      %515 = vmatprep.subr.mxu0 0.0
      %516 = vmatpush1.msra.mxu0 0.0
      %517 = vmatprep.mubr.f32.mxu0 0.0
      %518 = vmatmul.mubr.f32.gmra.mrb[0].mxu0 %v452
      %v519 = vpop.f32.mrb[0].mxu0
      %v520 = vadd.f32 0.0, %v519
      %v521 = vpop.f32.mrb[0].mxu0
      %522 = vdwg.mxu0
      %v523 = vmul.f32 %v520, %v340
      %v524 = vadd.f32 %v523, 1e-05
      %v525 = vrsqrt.pop %v524
      %v527 = vsel %vm346, %v525, 0
      %529 = vmatprep.subr.mxu0 0.0
      %530 = vmatpush1.msra.mxu0 %v342
      %531 = vmatprep.subr.mxu0 0.0
      %532 = vmatpush1.msra.mxu0 %v343
      %533 = vmatprep.subr.mxu0 0.0
      %534 = vmatpush1.msra.mxu0 %v344
      %535 = vmatprep.subr.mxu0 0.0
      %536 = vmatpush1.msra.mxu0 %v345
      %537 = vmatprep.subr.mxu0 0.0
      %538 = vmatpush1.msra.mxu0 0.0
      %539 = vmatprep.subr.mxu0 0.0
      %540 = vmatpush1.msra.mxu0 0.0
      %541 = vmatprep.subr.mxu0 0.0
      %542 = vmatpush1.msra.mxu0 0.0
      %543 = vmatprep.subr.mxu0 0.0
      %544 = vmatpush1.msra.mxu0 0.0
      %545 = vmatprep.subr.mxu0 0.0
      %546 = vmatpush1.msra.mxu0 0.0
      %547 = vmatprep.subr.mxu0 0.0
      %548 = vmatpush1.msra.mxu0 0.0
      %549 = vmatprep.subr.mxu0 0.0
      %550 = vmatpush1.msra.mxu0 0.0
      %551 = vmatprep.subr.mxu0 0.0
      %552 = vmatpush1.msra.mxu0 0.0
      %553 = vmatprep.subr.mxu0 0.0
      %554 = vmatpush1.msra.mxu0 0.0
      %555 = vmatprep.subr.mxu0 0.0
      %556 = vmatpush1.msra.mxu0 0.0
      %557 = vmatprep.subr.mxu0 0.0
      %558 = vmatpush1.msra.mxu0 0.0
      %559 = vmatprep.subr.mxu0 0.0
      %560 = vmatpush1.msra.mxu0 0.0
      %561 = vmatprep.subr.mxu0 0.0
      %562 = vmatpush1.msra.mxu0 0.0
      %563 = vmatprep.subr.mxu0 0.0
      %564 = vmatpush1.msra.mxu0 0.0
      %565 = vmatprep.subr.mxu0 0.0
      %566 = vmatpush1.msra.mxu0 0.0
      %567 = vmatprep.subr.mxu0 0.0
      %568 = vmatpush1.msra.mxu0 0.0
      %569 = vmatprep.subr.mxu0 0.0
      %570 = vmatpush1.msra.mxu0 0.0
      %571 = vmatprep.subr.mxu0 0.0
      %572 = vmatpush1.msra.mxu0 0.0
      %573 = vmatprep.subr.mxu0 0.0
      %574 = vmatpush1.msra.mxu0 0.0
      %575 = vmatprep.subr.mxu0 0.0
      %576 = vmatpush1.msra.mxu0 0.0
      %577 = vmatprep.subr.mxu0 0.0
      %578 = vmatpush1.msra.mxu0 0.0
      %579 = vmatprep.subr.mxu0 0.0
      %580 = vmatpush1.msra.mxu0 0.0
      %581 = vmatprep.subr.mxu0 0.0
      %582 = vmatpush1.msra.mxu0 0.0
      %583 = vmatprep.subr.mxu0 0.0
      %584 = vmatpush1.msra.mxu0 0.0
      %585 = vmatprep.subr.mxu0 0.0
      %586 = vmatpush1.msra.mxu0 0.0
      %587 = vmatprep.subr.mxu0 0.0
      %588 = vmatpush1.msra.mxu0 0.0
      %589 = vmatprep.subr.mxu0 0.0
      %590 = vmatpush1.msra.mxu0 0.0
      %591 = vmatprep.subr.mxu0 0.0
      %592 = vmatpush1.msra.mxu0 0.0
      %593 = vmatprep.mubr.f32.mxu0 0.0
      %594 = vmatmul.mubr.f32.gmra.mrb[0].mxu0 %v527
      %v595 = vpop.f32.mrb[0].mxu0
      %v596 = vadd.f32 0.0, %v595
      %v597 = vpop.f32.mrb[0].mxu0
      %598 = vdwg.mxu0
      %v599 = vlaneseq
      %v600 = vshrl.u32 %v599, 7
      %v601 = vsub.s32 0, %v600
      %v602 = vrot.slane %v596, %v601
      %v603 = vmul.f32 %v424, %v602
      %v604 = vmul.f32 %v425, %v602
      %v605 = vmul.f32 %v426, %v602
      %v606 = vmul.f32 %v427, %v602
      %v607 = vmul.f32 %v428, %v602
      %v608 = vmul.f32 %v429, %v602
      %v609 = vmul.f32 %v430, %v602
      %v610 = vmul.f32 %v431, %v602
      %v611 = vld [vmem:[%s3] sm:$0x1]
      %v613 = vlaneseq
      %v614 = vshrl.u32 %v613, 7
      %v615 = vsub.s32 0, %v614
      %v616 = vrot.slane %v611, %v615
      %v618 = vmul.f32 %v603, %v616
      %v619 = vmul.f32 %v604, %v616
      %v620 = vmul.f32 %v605, %v616
      %v621 = vmul.f32 %v606, %v616
      %v622 = vmul.f32 %v607, %v616
      %v623 = vmul.f32 %v608, %v616
      %v624 = vmul.f32 %v609, %v616
      %v625 = vmul.f32 %v610, %v616
      %v626 = vld [vmem:[%s4] sm:$0x1]
      %v628 = vlaneseq
      %v629 = vshrl.u32 %v628, 7
      %v630 = vsub.s32 0, %v629
      %v631 = vrot.slane %v626, %v630
      %v633 = vadd.f32 %v618, %v631
      %v634 = vadd.f32 %v619, %v631
      %v635 = vadd.f32 %v620, %v631
      %v636 = vadd.f32 %v621, %v631
      %v637 = vadd.f32 %v622, %v631
      %v638 = vadd.f32 %v623, %v631
      %v639 = vadd.f32 %v624, %v631
      %v640 = vadd.f32 %v625, %v631
      %v641 = vmul.f32 %v633, 0.2
      %v642 = vmul.f32 %v634, 0.2
      %v643 = vmul.f32 %v635, 0.2
      %v644 = vmul.f32 %v636, 0.2
      %v645 = vmul.f32 %v637, 0.2
      %v646 = vmul.f32 %v638, 0.2
      %v647 = vmul.f32 %v639, 0.2
      %v648 = vmul.f32 %v640, 0.2
      %v649 = vmax.f32 %v633, %v641
      %v650 = vmax.f32 %v634, %v642
      %v651 = vmax.f32 %v635, %v643
      %v652 = vmax.f32 %v636, %v644
      %v653 = vmax.f32 %v637, %v645
      %v654 = vmax.f32 %v638, %v646
      %v655 = vmax.f32 %v639, %v647
      %v656 = vmax.f32 %v640, %v648
      %v657 = vpack.c.bf16 %v650, %v649
      %v658 = vpack.c.bf16 %v652, %v651
      %v659 = vpack.c.bf16 %v654, %v653
      %v660 = vpack.c.bf16 %v656, %v655
      %v665 = vunpack.c.l.b16 %v657
      %v666 = vunpack.c.h.b16 %v657
      %v667 = vunpack.c.l.b16 %v658
      %v668 = vunpack.c.h.b16 %v658
      %v669 = vunpack.c.l.b16 %v659
      %v670 = vunpack.c.h.b16 %v659
      %v671 = vunpack.c.l.b16 %v660
      %v672 = vunpack.c.h.b16 %v660
      %v673 = vpack.c.b16 %v665, %v665
      %v674 = vpack.c.b16 %v666, %v666
      %v675 = vpack.c.b16 %v667, %v667
      %v676 = vpack.c.b16 %v668, %v668
      %v677 = vpack.c.b16 %v669, %v669
      %v678 = vpack.c.b16 %v670, %v670
      %v679 = vpack.c.b16 %v671, %v671
      %v680 = vpack.c.b16 %v672, %v672
      %689 = vst [vmem:[%s224] sm:$0xf] %v673
      %690 = vst [vmem:[%s224 + $0x4] sm:$0xf] %v674
      %691 = vst [vmem:[%s224 + $0x8] sm:$0xf] %v675
      %692 = vst [vmem:[%s224 + $0xc] sm:$0xf] %v676
      %693 = vst [vmem:[%s224 + $0x10] sm:$0xf] %v677
      %694 = vst [vmem:[%s224 + $0x14] sm:$0xf] %v678
      %695 = vst [vmem:[%s224 + $0x18] sm:$0xf] %v679
      %696 = vst [vmem:[%s224 + $0x1c] sm:$0xf] %v680
      %p697 = scmp.lt.s32.totalorder %s16, 1
      %s698 = scalar_select %p697, %s16, 1
      %s699 = smul.addr %s698, 8
      %s700 = smul.addr %s699, 4
      %s701 = scalar_lea.vmem %s5, %s700
      // Predicated region
      $region41: #{discriminator_forward.10} parent=39 // pred_check
        %p702 = pneg %p144
      $region42: #{discriminator_forward.10} parent=39 // pred_check_branch
        %704 = sbr.rel (%p702) target = $region44
      $region43: #{discriminator_forward.10} parent=39 // pred_region
        _
      $region44: #{discriminator_forward.10} parent=39 // pred_fallthru
        _
    $region40: #{discriminator_forward.10} parent=5 // pred_fallthru
      _
    %p705 = scmp.le.s32.totalorder 2, %s11
    // Predicated region
    $region45: #{discriminator_forward.10} parent=5 // pred_check
      %p706 = pneg %p705
    $region46: #{discriminator_forward.10} parent=5 // pred_check_branch
      %708 = sbr.rel (%p706) target = $region48
    $region47: #{discriminator_forward.10} parent=5 // pred_region
      %s709 = ssub.s32 %s11, 2
      // Predicated region
      $region49: #{discriminator_forward.10} parent=47 // pred_check
        %p710 = pneg %p150
      $region50: #{discriminator_forward.10} parent=47 // pred_check_branch
        %712 = sbr.rel (%p710) target = $region52
      $region51: #{discriminator_forward.10} parent=47 // pred_region
        %p713 = scmp.lt.s32.totalorder %s17, 1
        %s714 = scalar_select %p713, %s17, 1
        %s715 = smul.addr %s714, 8
        %s716 = smul.addr %s715, 4
        %s717 = scalar_lea.vmem %s5, %s716
      $region52: #{discriminator_forward.10} parent=47 // pred_fallthru
        _
    $region48: #{discriminator_forward.10} parent=5 // pred_fallthru
      _
  $region6: #{discriminator_forward.10} parent=0 // loop_footer
    %s15 = sadd.s32 1, %s11
  $region7: #{discriminator_forward.10} parent=0 // loop_footer_branch
    %10 = sbr.rel target = $region3
  $region8: #{discriminator_forward.10} parent=0 // loop_exit
    _

// kernel: discriminator_forward.9
$region0: #{discriminator_forward.9}
  #allocation0 [shape = 'u32[]', space=smem, size = 0x4, offset = 0x4, fixed_abs, tag = 'smem constant byte address 0x4 - core index']
  #allocation1 [shape = 'u32[144,128]{1,0:T(1,128)}', space=vmem, size = 0x12000, scoped, tag = 'internal scratch']
  #allocation2 [shape = 'f32[128,128]{1,0:T(8,128)}', space=vmem, size = 0x10000, scoped, tag = 'scratch operand']
  %s0 = inlined_call_operand.vmem [shape: bf16[128,1024], index: 0, kind: input, shape index: {}]
  %s1 = inlined_call_operand.vmem [shape: bf16[1024,128], index: 1, kind: input, shape index: {}]
  %s2 = inlined_call_operand.vmem [shape: f32[1,128], index: 2, kind: input, shape index: {}]
  %s3 = inlined_call_operand.vmem [shape: bf16[128,128], index: 3, kind: output, shape index: {}]
  %s4 = sld [smem:[#allocation0]]
  $region76: #{discriminator_forward.9} parent=0
    _
  %s6 = ssub.s32 1, %s4
  %s7 = scalar_select 0, %s6, %s4
  $region1: #{discriminator_forward.9} parent=0
    #allocation3 [shape = 'u8[262144]{0}', space=vmem, size = 0x40000, scoped, tag = 'input window, operand 0']
    loop: start=0, step=1, limit=4
    $region2: #{discriminator_forward.9} parent=1 // loop_pre_header
      _
    $region3: #{discriminator_forward.9} parent=1 // loop_header
      %s9 = sphi 0, %s13
      %p10 = scmp.ge.s32.totalorder %s9, 4
      %s16 = sphi 0, %s35
      %s17 = sphi 0, %s31
      %s18 = sphi 0, %s27
      %s19 = sphi 0, %s16
      %s20 = sphi 0, %s17
      %s21 = sphi 0, %s18
      %s22 = sphi 0, %s19
      %s23 = sphi 0, %s20
      %s24 = sphi 0, %s21
      %s40 = sphi 0, %s42
      %s43 = sphi 0, %s40
      %s44 = sphi 0, %s43
      %s60 = sphi 0, %s44
      %s68 = sphi 0, %s70
      %s71 = sphi 0, %s68
      %s72 = sphi 0, %s71
      %s88 = sphi 0, %s72
      %s94 = sphi 0, %s96
      %s97 = sphi 0, %s94
      %s98 = sphi 0, %s97
      %s114 = sphi 0, %s98
      %s122 = sphi 0, %s124
      %s125 = sphi 0, %s122
      %s126 = sphi 0, %s125
      %s142 = sphi 0, %s126
    $region4: #{discriminator_forward.9} parent=1 // loop_header_branch
      %12 = sbr.rel (%p10) target = $region8
    $region5: #{discriminator_forward.9} parent=1 // loop_body
      %s14 = ssub.s32 %s9, 1
      %s15 = ssub.s32 %s9, 2
      %s25 = sadd.s32 1, %s18
      %p26 = scmp.ge.s32.totalorder %s25, 2
      %s27 = scalar_select %p26, 0, %s25
      %s28 = sadd.s32 1, %s17
      %s29 = scalar_select %p26, %s28, %s17
      %p30 = scmp.ge.s32.totalorder %s29, 1
      %s31 = scalar_select %p30, 0, %s29
      %s32 = sadd.s32 1, %s16
      %s33 = scalar_select %p30, %s32, %s16
      %p34 = scmp.ge.s32.totalorder %s33, 1
      %s35 = scalar_select %p34, 0, %s33
      %s36 = ssub.s32 %s16, %s35
      %s37 = ssub.s32 %s18, %s27
      %s38 = sor.u32 %s36, %s37
      %p39 = scmp.eq.s32.totalorder %s38, 0
      %s41 = sadd.s32 %s40, 1
      %s42 = scalar_select %p39, %s40, %s41
      %p45 = pneg %p39
      %p46 = scmp.eq.s32.totalorder %s9, 1
      %p47 = por %p45, %p46
      %p48 = scmp.ne.s32.totalorder %s40, %s43
      %p49 = scmp.eq.s32.totalorder %s9, 0
      %p50 = por %p48, %p49
      %p51 = scmp.ne.s32.totalorder %s40, %s43
      %p52 = scmp.eq.s32.totalorder %s14, 1
      %p53 = por %p51, %p52
      %p54 = scmp.ne.s32.totalorder %s43, %s44
      %p55 = scmp.eq.s32.totalorder %s14, 0
      %p56 = por %p54, %p55
      %p57 = scmp.ne.s32.totalorder %s43, %s44
      %p58 = scmp.eq.s32.totalorder %s15, 1
      %p59 = por %p57, %p58
      %p61 = scmp.ne.s32.totalorder %s44, %s60
      %p62 = scmp.eq.s32.totalorder %s15, 0
      %p63 = por %p61, %p62
      %s64 = ssub.s32 %s18, %s27
      %s65 = ssub.s32 %s17, %s31
      %s66 = sor.u32 %s64, %s65
      %p67 = scmp.eq.s32.totalorder %s66, 0
      %s69 = sadd.s32 %s68, 1
      %s70 = scalar_select %p67, %s68, %s69
      %p73 = pneg %p67
      %p74 = scmp.eq.s32.totalorder %s9, 1
      %p75 = por %p73, %p74
      %p76 = scmp.ne.s32.totalorder %s68, %s71
      %p77 = scmp.eq.s32.totalorder %s9, 0
      %p78 = por %p76, %p77
      %p79 = scmp.ne.s32.totalorder %s68, %s71
      %p80 = scmp.eq.s32.totalorder %s14, 1
      %p81 = por %p79, %p80
      %p82 = scmp.ne.s32.totalorder %s71, %s72
      %p83 = scmp.eq.s32.totalorder %s14, 0
      %p84 = por %p82, %p83
      %p85 = scmp.ne.s32.totalorder %s71, %s72
      %p86 = scmp.eq.s32.totalorder %s15, 1
      %p87 = por %p85, %p86
      %p89 = scmp.ne.s32.totalorder %s72, %s88
      %p90 = scmp.eq.s32.totalorder %s15, 0
      %p91 = por %p89, %p90
      %s92 = ssub.s32 %s17, %s31
      %p93 = scmp.eq.s32.totalorder %s92, 0
      %s95 = sadd.s32 %s94, 1
      %s96 = scalar_select %p93, %s94, %s95
      %p99 = pneg %p93
      %p100 = scmp.eq.s32.totalorder %s9, 1
      %p101 = por %p99, %p100
      %p102 = scmp.ne.s32.totalorder %s94, %s97
      %p103 = scmp.eq.s32.totalorder %s9, 0
      %p104 = por %p102, %p103
      %p105 = scmp.ne.s32.totalorder %s94, %s97
      %p106 = scmp.eq.s32.totalorder %s14, 1
      %p107 = por %p105, %p106
      %p108 = scmp.ne.s32.totalorder %s97, %s98
      %p109 = scmp.eq.s32.totalorder %s14, 0
      %p110 = por %p108, %p109
      %p111 = scmp.ne.s32.totalorder %s97, %s98
      %p112 = scmp.eq.s32.totalorder %s15, 1
      %p113 = por %p111, %p112
      %p115 = scmp.ne.s32.totalorder %s98, %s114
      %p116 = scmp.eq.s32.totalorder %s15, 0
      %p117 = por %p115, %p116
      %s118 = ssub.s32 %s16, %s35
      %s119 = ssub.s32 %s17, %s31
      %s120 = sor.u32 %s118, %s119
      %p121 = scmp.eq.s32.totalorder %s120, 0
      %s123 = sadd.s32 %s122, 1
      %s124 = scalar_select %p121, %s122, %s123
      %p127 = pneg %p121
      %p128 = scmp.eq.s32.totalorder %s9, 1
      %p129 = por %p127, %p128
      %p130 = scmp.ne.s32.totalorder %s122, %s125
      %p131 = scmp.eq.s32.totalorder %s9, 0
      %p132 = por %p130, %p131
      %p133 = scmp.ne.s32.totalorder %s122, %s125
      %p134 = scmp.eq.s32.totalorder %s14, 1
      %p135 = por %p133, %p134
      %p136 = scmp.ne.s32.totalorder %s125, %s126
      %p137 = scmp.eq.s32.totalorder %s14, 0
      %p138 = por %p136, %p137
      %p139 = scmp.ne.s32.totalorder %s125, %s126
      %p140 = scmp.eq.s32.totalorder %s15, 1
      %p141 = por %p139, %p140
      %p143 = scmp.ne.s32.totalorder %s126, %s142
      %p144 = scmp.eq.s32.totalorder %s15, 0
      %p145 = por %p143, %p144
      %p146 = scmp.le.s32.totalorder 1, %s9
      %p147 = scmp.lt.s32.totalorder %s9, 3
      %p148 = pnand %p146, %p147
      %p149 = pneg %p148
      // Predicated region
      $region9: #{discriminator_forward.9} parent=5 // pred_check
        _
      $region10: #{discriminator_forward.9} parent=5 // pred_check_branch
        %151 = sbr.rel (%p148) target = $region12
      $region11: #{discriminator_forward.9} parent=5 // pred_region
        %s152 = ssub.s32 %s9, 1
        // Predicated region
        $region13: #{discriminator_forward.9} parent=11 // pred_check
          %p153 = pneg %p110
        $region14: #{discriminator_forward.9} parent=11 // pred_check_branch
          %155 = sbr.rel (%p153) target = $region16
        $region15: #{discriminator_forward.9} parent=11 // pred_region
          %p156 = scmp.lt.s32.totalorder %s20, 0
          %s157 = scalar_select %p156, %s20, 0
          %s158 = scalar_lea.vmem %s2, %s157
        $region16: #{discriminator_forward.9} parent=11 // pred_fallthru
          _
      $region12: #{discriminator_forward.9} parent=5 // pred_fallthru
        _
      %p159 = scmp.lt.s32.totalorder %s9, 2
      // Predicated region
      $region17: #{discriminator_forward.9} parent=5 // pred_check
        %p160 = pneg %p159
      $region18: #{discriminator_forward.9} parent=5 // pred_check_branch
        %162 = sbr.rel (%p160) target = $region20
      $region19: #{discriminator_forward.9} parent=5 // pred_region
        // Predicated region
        $region21: #{discriminator_forward.9} parent=19 // pred_check
          %p163 = pneg %p50
        $region22: #{discriminator_forward.9} parent=19 // pred_check_branch
          %165 = sbr.rel (%p163) target = $region24
        $region23: #{discriminator_forward.9} parent=19 // pred_region
          %s166 = sand.u32 %s40, 1
          %s167 = sand.u32 %s40, 1
          %s168 = smul.addr %s167, 256
          %s169 = scalar_lea.vmem [#allocation3], %s168
          %s170 = smul.u32 16, %s16
          %s171 = smul.u32 4, %s18
          %s172 = smul.addr %s170, 8
          %s173 = sadd.s32 %s171, %s172
          %s174 = smul.addr %s173, 4
          %s175 = scalar_lea.vmem %s0, %s174
          // Predicated region
          $region25: #{discriminator_forward.9} parent=23 // pred_check
            _
          $region26: #{discriminator_forward.9} parent=23 // pred_check_branch
            %177 = sbr.rel (0) target = $region28
          $region27: #{discriminator_forward.9} parent=23 // pred_region
            // Predicated region
            $region29: #{discriminator_forward.9} parent=27 // pred_check
              _
            $region30: #{discriminator_forward.9} parent=27 // pred_check_branch
              %179 = sbr.rel (0) target = $region32
            $region31: #{discriminator_forward.9} parent=27 // pred_region
              loop: start=0, step=1, limit=1
              $region33: #{discriminator_forward.9} parent=31 // loop_pre_header
                _
              $region34: #{discriminator_forward.9} parent=31 // loop_header
                %s181 = sphi 0, %s185
                %p182 = scmp.ge.s32.totalorder %s181, 1
                %s186 = sphi %s175, %s175
                %s187 = sphi %s169, %s169
              $region35: #{discriminator_forward.9} parent=31 // loop_header_branch
                %184 = sbr.rel (%p182) target = $region39
              $region36: #{discriminator_forward.9} parent=31 // loop_body
                %v188 = vld [vmem:[%s186] sm:$0xff]
                %189 = vst [vmem:[%s187] sm:$0xff] %v188
                %v190 = vld [vmem:[%s186 + $0x8] sm:$0xff]
                %191 = vst [vmem:[%s187 + $0x8] sm:$0xff] %v190
                %v192 = vld [vmem:[%s186 + $0x20] sm:$0xff]
                %193 = vst [vmem:[%s187 + $0x10] sm:$0xff] %v192
                %v194 = vld [vmem:[%s186 + $0x28] sm:$0xff]
                %195 = vst [vmem:[%s187 + $0x18] sm:$0xff] %v194
                %v196 = vld [vmem:[%s186 + $0x40] sm:$0xff]
                %197 = vst [vmem:[%s187 + $0x20] sm:$0xff] %v196
                %v198 = vld [vmem:[%s186 + $0x48] sm:$0xff]
                %199 = vst [vmem:[%s187 + $0x28] sm:$0xff] %v198
                %v200 = vld [vmem:[%s186 + $0x60] sm:$0xff]
                %201 = vst [vmem:[%s187 + $0x30] sm:$0xff] %v200
                %v202 = vld [vmem:[%s186 + $0x68] sm:$0xff]
                %203 = vst [vmem:[%s187 + $0x38] sm:$0xff] %v202
                %v204 = vld [vmem:[%s186 + $0x80] sm:$0xff]
                %205 = vst [vmem:[%s187 + $0x40] sm:$0xff] %v204
                %v206 = vld [vmem:[%s186 + $0x88] sm:$0xff]
                %207 = vst [vmem:[%s187 + $0x48] sm:$0xff] %v206
                %v208 = vld [vmem:[%s186 + $0xa0] sm:$0xff]
                %209 = vst [vmem:[%s187 + $0x50] sm:$0xff] %v208
                %v210 = vld [vmem:[%s186 + $0xa8] sm:$0xff]
                %211 = vst [vmem:[%s187 + $0x58] sm:$0xff] %v210
                %v212 = vld [vmem:[%s186 + $0xc0] sm:$0xff]
                %213 = vst [vmem:[%s187 + $0x60] sm:$0xff] %v212
                %v214 = vld [vmem:[%s186 + $0xc8] sm:$0xff]
                %215 = vst [vmem:[%s187 + $0x68] sm:$0xff] %v214
                %v216 = vld [vmem:[%s186 + $0xe0] sm:$0xff]
                %217 = vst [vmem:[%s187 + $0x70] sm:$0xff] %v216
                %v218 = vld [vmem:[%s186 + $0xe8] sm:$0xff]
                %219 = vst [vmem:[%s187 + $0x78] sm:$0xff] %v218
                %v220 = vld [vmem:[%s186 + $0x100] sm:$0xff]
                %221 = vst [vmem:[%s187 + $0x80] sm:$0xff] %v220
                %v222 = vld [vmem:[%s186 + $0x108] sm:$0xff]
                %223 = vst [vmem:[%s187 + $0x88] sm:$0xff] %v222
                %v224 = vld [vmem:[%s186 + $0x120] sm:$0xff]
                %225 = vst [vmem:[%s187 + $0x90] sm:$0xff] %v224
                %v226 = vld [vmem:[%s186 + $0x128] sm:$0xff]
                %227 = vst [vmem:[%s187 + $0x98] sm:$0xff] %v226
                %v228 = vld [vmem:[%s186 + $0x140] sm:$0xff]
                %229 = vst [vmem:[%s187 + $0xa0] sm:$0xff] %v228
                %v230 = vld [vmem:[%s186 + $0x148] sm:$0xff]
                %231 = vst [vmem:[%s187 + $0xa8] sm:$0xff] %v230
                %v232 = vld [vmem:[%s186 + $0x160] sm:$0xff]
                %233 = vst [vmem:[%s187 + $0xb0] sm:$0xff] %v232
                %v234 = vld [vmem:[%s186 + $0x168] sm:$0xff]
                %235 = vst [vmem:[%s187 + $0xb8] sm:$0xff] %v234
                %v236 = vld [vmem:[%s186 + $0x180] sm:$0xff]
                %237 = vst [vmem:[%s187 + $0xc0] sm:$0xff] %v236
                %v238 = vld [vmem:[%s186 + $0x188] sm:$0xff]
                %239 = vst [vmem:[%s187 + $0xc8] sm:$0xff] %v238
                %v240 = vld [vmem:[%s186 + $0x1a0] sm:$0xff]
                %241 = vst [vmem:[%s187 + $0xd0] sm:$0xff] %v240
                %v242 = vld [vmem:[%s186 + $0x1a8] sm:$0xff]
                %243 = vst [vmem:[%s187 + $0xd8] sm:$0xff] %v242
                %v244 = vld [vmem:[%s186 + $0x1c0] sm:$0xff]
                %245 = vst [vmem:[%s187 + $0xe0] sm:$0xff] %v244
                %v246 = vld [vmem:[%s186 + $0x1c8] sm:$0xff]
                %247 = vst [vmem:[%s187 + $0xe8] sm:$0xff] %v246
                %v248 = vld [vmem:[%s186 + $0x1e0] sm:$0xff]
                %249 = vst [vmem:[%s187 + $0xf0] sm:$0xff] %v248
                %v250 = vld [vmem:[%s186 + $0x1e8] sm:$0xff]
                %251 = vst [vmem:[%s187 + $0xf8] sm:$0xff] %v250
              $region37: #{discriminator_forward.9} parent=31 // loop_footer
                %s185 = sadd.s32 1, %s181
              $region38: #{discriminator_forward.9} parent=31 // loop_footer_branch
                %180 = sbr.rel target = $region34
              $region39: #{discriminator_forward.9} parent=31 // loop_exit
                _
            $region32: #{discriminator_forward.9} parent=27 // pred_fallthru
              _
            // Predicated region
            $region40: #{discriminator_forward.9} parent=27 // pred_check
              _
            $region41: #{discriminator_forward.9} parent=27 // pred_check_branch
              %253 = sbr.rel target = $region43
            $region42: #{discriminator_forward.9} parent=27 // pred_region
              _
            $region43: #{discriminator_forward.9} parent=27 // pred_fallthru
              _
          $region28: #{discriminator_forward.9} parent=23 // pred_fallthru
            _
          %254 = vnop
        $region24: #{discriminator_forward.9} parent=19 // pred_fallthru
          _
        // Predicated region
        $region44: #{discriminator_forward.9} parent=19 // pred_check
          %p255 = pneg %p78
        $region45: #{discriminator_forward.9} parent=19 // pred_check_branch
          %257 = sbr.rel (%p255) target = $region47
        $region46: #{discriminator_forward.9} parent=19 // pred_region
          %s258 = smul.u32 64, %s18
          %p259 = scmp.lt.s32.totalorder %s258, 127
          %s260 = scalar_select %p259, %s258, 127
          %p261 = scmp.lt.s32.totalorder %s17, 0
          %s262 = scalar_select %p261, %s17, 0
          %s263 = sadd.s32 %s262, %s260
          %s264 = smul.addr %s263, 4
          %s265 = scalar_lea.vmem %s1, %s264
          %s266 = smul.u32 64, %s18
        $region47: #{discriminator_forward.9} parent=19 // pred_fallthru
          _
      $region20: #{discriminator_forward.9} parent=5 // pred_fallthru
        _
      %p267 = scmp.le.s32.totalorder 1, %s9
      %p268 = scmp.lt.s32.totalorder %s9, 3
      %p269 = pnand %p267, %p268
      %p270 = pneg %p269
      // Predicated region
      $region48: #{discriminator_forward.9} parent=5 // pred_check
        _
      $region49: #{discriminator_forward.9} parent=5 // pred_check_branch
        %272 = sbr.rel (%p269) target = $region51
      $region50: #{discriminator_forward.9} parent=5 // pred_region
        %s273 = ssub.s32 %s9, 1
        %s274 = sand.u32 %s43, 1
        %s275 = sand.u32 %s43, 1
        %s276 = smul.addr %s275, 256
        %s277 = scalar_lea.vmem [#allocation3], %s276
        // Predicated region
        $region52: #{discriminator_forward.9} parent=50 // pred_check
          %p278 = pneg %p56
        $region53: #{discriminator_forward.9} parent=50 // pred_check_branch
          %280 = sbr.rel (%p278) target = $region55
        $region54: #{discriminator_forward.9} parent=50 // pred_region
          _
        $region55: #{discriminator_forward.9} parent=50 // pred_fallthru
          _
        %s281 = sand.u32 %s43, 1
        %s282 = sand.u32 %s43, 1
        %s283 = smul.addr %s282, 256
        %s284 = scalar_lea.vmem [#allocation3], %s283
        %p285 = pneg %p56
        %p286 = pneg %p53
        %s287 = smul.u32 64, %s21
        %p288 = scmp.lt.s32.totalorder %s287, 127
        %s289 = scalar_select %p288, %s287, 127
        %p290 = scmp.lt.s32.totalorder %s20, 0
        %s291 = scalar_select %p290, %s20, 0
        %s292 = sadd.s32 %s291, %s289
        %s293 = smul.addr %s292, 4
        %s294 = scalar_lea.vmem %s1, %s293
        %p295 = pneg %p84
        %p296 = pneg %p81
        %p297 = scmp.lt.s32.totalorder %s20, 0
        %s298 = scalar_select %p297, %s20, 0
        %s299 = scalar_lea.vmem %s2, %s298
        %p300 = pneg %p110
        %p301 = pneg %p107
        %p302 = pneg %p138
        %p303 = pneg %p135
        %s304 = smul.u32 16, %s19
        %p305 = scmp.lt.s32.totalorder %s304, 15
        %s306 = scalar_select %p305, %s304, 15
        %p307 = scmp.lt.s32.totalorder %s20, 0
        %s308 = scalar_select %p307, %s20, 0
        %s309 = sadd.s32 %s308, %s306
        %s310 = smul.addr %s309, 4
        %s311 = scalar_lea.vmem %s3, %s310
        %s312 = smul.u32 16, %s19
        %s313 = smul.u32 4, %s21
        %s314 = smul.u32 64, %s21
        %p315 = scmp.lt.s32.totalorder %s314, 127
        %s316 = scalar_select %p315, %s314, 127
        %p317 = scmp.lt.s32.totalorder %s20, 0
        %s318 = scalar_select %p317, %s20, 0
        %s319 = sadd.s32 %s318, %s316
        %s320 = smul.addr %s319, 4
        %s321 = scalar_lea.vmem %s1, %s320
        %s322 = smul.u32 64, %s21
        %p323 = scmp.lt.s32.totalorder %s20, 0
        %s324 = scalar_select %p323, %s20, 0
        %s325 = scalar_lea.vmem %s2, %s324
        %s326 = smul.u32 16, %s19
        %p327 = scmp.lt.s32.totalorder %s326, 15
        %s328 = scalar_select %p327, %s326, 15
        %p329 = scmp.lt.s32.totalorder %s20, 0
        %s330 = scalar_select %p329, %s20, 0
        %s331 = sadd.s32 %s330, %s328
        %s332 = smul.addr %s331, 4
        %s333 = scalar_lea.vmem %s3, %s332
        %s334 = smul.u32 16, %s19
        %p336 = scmp.eq.s32.totalorder %s21, 0
        // Predicated region
        $region56: #{discriminator_forward.9} parent=50 // pred_check
          %p337 = pneg %p336
        $region57: #{discriminator_forward.9} parent=50 // pred_check_branch
          %339 = sbr.rel (%p337) target = $region59
        $region58: #{discriminator_forward.9} parent=50 // pred_region
          %340 = vst [vmem:[#allocation2] sm:$0xff] 0.0
          %341 = vst [vmem:[#allocation2 + $0x8] sm:$0xff] 0.0
          %342 = vst [vmem:[#allocation2 + $0x10] sm:$0xff] 0.0
          %343 = vst [vmem:[#allocation2 + $0x18] sm:$0xff] 0.0
          %344 = vst [vmem:[#allocation2 + $0x20] sm:$0xff] 0.0
          %345 = vst [vmem:[#allocation2 + $0x28] sm:$0xff] 0.0
          %346 = vst [vmem:[#allocation2 + $0x30] sm:$0xff] 0.0
          %347 = vst [vmem:[#allocation2 + $0x38] sm:$0xff] 0.0
          %348 = vst [vmem:[#allocation2 + $0x40] sm:$0xff] 0.0
          %349 = vst [vmem:[#allocation2 + $0x48] sm:$0xff] 0.0
          %350 = vst [vmem:[#allocation2 + $0x50] sm:$0xff] 0.0
          %351 = vst [vmem:[#allocation2 + $0x58] sm:$0xff] 0.0
          %352 = vst [vmem:[#allocation2 + $0x60] sm:$0xff] 0.0
          %353 = vst [vmem:[#allocation2 + $0x68] sm:$0xff] 0.0
          %354 = vst [vmem:[#allocation2 + $0x70] sm:$0xff] 0.0
          %355 = vst [vmem:[#allocation2 + $0x78] sm:$0xff] 0.0
        $region59: #{discriminator_forward.9} parent=50 // pred_fallthru
          _
        %v356 = vld [vmem:[#allocation2] sm:$0xff]
        %v357 = vld [vmem:[#allocation2 + $0x8] sm:$0xff]
        %v358 = vld [vmem:[#allocation2 + $0x10] sm:$0xff]
        %v359 = vld [vmem:[#allocation2 + $0x18] sm:$0xff]
        %v360 = vld [vmem:[#allocation2 + $0x20] sm:$0xff]
        %v361 = vld [vmem:[#allocation2 + $0x28] sm:$0xff]
        %v362 = vld [vmem:[#allocation2 + $0x30] sm:$0xff]
        %v363 = vld [vmem:[#allocation2 + $0x38] sm:$0xff]
        %v364 = vld [vmem:[#allocation2 + $0x40] sm:$0xff]
        %v365 = vld [vmem:[#allocation2 + $0x48] sm:$0xff]
        %v366 = vld [vmem:[#allocation2 + $0x50] sm:$0xff]
        %v367 = vld [vmem:[#allocation2 + $0x58] sm:$0xff]
        %v368 = vld [vmem:[#allocation2 + $0x60] sm:$0xff]
        %v369 = vld [vmem:[#allocation2 + $0x68] sm:$0xff]
        %v370 = vld [vmem:[#allocation2 + $0x70] sm:$0xff]
        %v371 = vld [vmem:[#allocation2 + $0x78] sm:$0xff]
        %v372 = vld [vmem:[%s277] sm:$0xff]
        %v373 = vld [vmem:[%s277 + $0x8] sm:$0xff]
        %v374 = vld [vmem:[%s277 + $0x10] sm:$0xff]
        %v375 = vld [vmem:[%s277 + $0x18] sm:$0xff]
        %v376 = vld [vmem:[%s277 + $0x20] sm:$0xff]
        %v377 = vld [vmem:[%s277 + $0x28] sm:$0xff]
        %v378 = vld [vmem:[%s277 + $0x30] sm:$0xff]
        %v379 = vld [vmem:[%s277 + $0x38] sm:$0xff]
        %v380 = vld [vmem:[%s277 + $0x40] sm:$0xff]
        %v381 = vld [vmem:[%s277 + $0x48] sm:$0xff]
        %v382 = vld [vmem:[%s277 + $0x50] sm:$0xff]
        %v383 = vld [vmem:[%s277 + $0x58] sm:$0xff]
        %v384 = vld [vmem:[%s277 + $0x60] sm:$0xff]
        %v385 = vld [vmem:[%s277 + $0x68] sm:$0xff]
        %v386 = vld [vmem:[%s277 + $0x70] sm:$0xff]
        %v387 = vld [vmem:[%s277 + $0x78] sm:$0xff]
        %v388 = vld [vmem:[%s277 + $0x80] sm:$0xff]
        %v389 = vld [vmem:[%s277 + $0x88] sm:$0xff]
        %v390 = vld [vmem:[%s277 + $0x90] sm:$0xff]
        %v391 = vld [vmem:[%s277 + $0x98] sm:$0xff]
        %v392 = vld [vmem:[%s277 + $0xa0] sm:$0xff]
        %v393 = vld [vmem:[%s277 + $0xa8] sm:$0xff]
        %v394 = vld [vmem:[%s277 + $0xb0] sm:$0xff]
        %v395 = vld [vmem:[%s277 + $0xb8] sm:$0xff]
        %v396 = vld [vmem:[%s277 + $0xc0] sm:$0xff]
        %v397 = vld [vmem:[%s277 + $0xc8] sm:$0xff]
        %v398 = vld [vmem:[%s277 + $0xd0] sm:$0xff]
        %v399 = vld [vmem:[%s277 + $0xd8] sm:$0xff]
        %v400 = vld [vmem:[%s277 + $0xe0] sm:$0xff]
        %v401 = vld [vmem:[%s277 + $0xe8] sm:$0xff]
        %v402 = vld [vmem:[%s277 + $0xf0] sm:$0xff]
        %v403 = vld [vmem:[%s277 + $0xf8] sm:$0xff]
        %v404 = vld [vmem:[%s321] sm:$0xf]
        %v405 = vld [vmem:[%s321 + $0x4] sm:$0xf]
        %v406 = vld [vmem:[%s321 + $0x8] sm:$0xf]
        %v407 = vld [vmem:[%s321 + $0xc] sm:$0xf]
        %v408 = vld [vmem:[%s321 + $0x10] sm:$0xf]
        %v409 = vld [vmem:[%s321 + $0x14] sm:$0xf]
        %v410 = vld [vmem:[%s321 + $0x18] sm:$0xf]
        %v411 = vld [vmem:[%s321 + $0x1c] sm:$0xf]
        %v412 = vld [vmem:[%s321 + $0x20] sm:$0xf]
        %v413 = vld [vmem:[%s321 + $0x24] sm:$0xf]
        %v414 = vld [vmem:[%s321 + $0x28] sm:$0xf]
        %v415 = vld [vmem:[%s321 + $0x2c] sm:$0xf]
        %v416 = vld [vmem:[%s321 + $0x30] sm:$0xf]
        %v417 = vld [vmem:[%s321 + $0x34] sm:$0xf]
        %v418 = vld [vmem:[%s321 + $0x38] sm:$0xf]
        %v419 = vld [vmem:[%s321 + $0x3c] sm:$0xf]
        %v420 = vld [vmem:[%s321 + $0x40] sm:$0xf]
        %v421 = vld [vmem:[%s321 + $0x44] sm:$0xf]
        %v422 = vld [vmem:[%s321 + $0x48] sm:$0xf]
        %v423 = vld [vmem:[%s321 + $0x4c] sm:$0xf]
        %v424 = vld [vmem:[%s321 + $0x50] sm:$0xf]
        %v425 = vld [vmem:[%s321 + $0x54] sm:$0xf]
        %v426 = vld [vmem:[%s321 + $0x58] sm:$0xf]
        %v427 = vld [vmem:[%s321 + $0x5c] sm:$0xf]
        %v428 = vld [vmem:[%s321 + $0x60] sm:$0xf]
        %v429 = vld [vmem:[%s321 + $0x64] sm:$0xf]
        %v430 = vld [vmem:[%s321 + $0x68] sm:$0xf]
        %v431 = vld [vmem:[%s321 + $0x6c] sm:$0xf]
        %v432 = vld [vmem:[%s321 + $0x70] sm:$0xf]
        %v433 = vld [vmem:[%s321 + $0x74] sm:$0xf]
        %v434 = vld [vmem:[%s321 + $0x78] sm:$0xf]
        %v435 = vld [vmem:[%s321 + $0x7c] sm:$0xf]
        %v436 = vld [vmem:[%s321 + $0x80] sm:$0xf]
        %v437 = vld [vmem:[%s321 + $0x84] sm:$0xf]
        %v438 = vld [vmem:[%s321 + $0x88] sm:$0xf]
        %v439 = vld [vmem:[%s321 + $0x8c] sm:$0xf]
        %v440 = vld [vmem:[%s321 + $0x90] sm:$0xf]
        %v441 = vld [vmem:[%s321 + $0x94] sm:$0xf]
        %v442 = vld [vmem:[%s321 + $0x98] sm:$0xf]
        %v443 = vld [vmem:[%s321 + $0x9c] sm:$0xf]
        %v444 = vld [vmem:[%s321 + $0xa0] sm:$0xf]
        %v445 = vld [vmem:[%s321 + $0xa4] sm:$0xf]
        %v446 = vld [vmem:[%s321 + $0xa8] sm:$0xf]
        %v447 = vld [vmem:[%s321 + $0xac] sm:$0xf]
        %v448 = vld [vmem:[%s321 + $0xb0] sm:$0xf]
        %v449 = vld [vmem:[%s321 + $0xb4] sm:$0xf]
        %v450 = vld [vmem:[%s321 + $0xb8] sm:$0xf]
        %v451 = vld [vmem:[%s321 + $0xbc] sm:$0xf]
        %v452 = vld [vmem:[%s321 + $0xc0] sm:$0xf]
        %v453 = vld [vmem:[%s321 + $0xc4] sm:$0xf]
        %v454 = vld [vmem:[%s321 + $0xc8] sm:$0xf]
        %v455 = vld [vmem:[%s321 + $0xcc] sm:$0xf]
        %v456 = vld [vmem:[%s321 + $0xd0] sm:$0xf]
        %v457 = vld [vmem:[%s321 + $0xd4] sm:$0xf]
        %v458 = vld [vmem:[%s321 + $0xd8] sm:$0xf]
        %v459 = vld [vmem:[%s321 + $0xdc] sm:$0xf]
        %v460 = vld [vmem:[%s321 + $0xe0] sm:$0xf]
        %v461 = vld [vmem:[%s321 + $0xe4] sm:$0xf]
        %v462 = vld [vmem:[%s321 + $0xe8] sm:$0xf]
        %v463 = vld [vmem:[%s321 + $0xec] sm:$0xf]
        %v464 = vld [vmem:[%s321 + $0xf0] sm:$0xf]
        %v465 = vld [vmem:[%s321 + $0xf4] sm:$0xf]
        %v466 = vld [vmem:[%s321 + $0xf8] sm:$0xf]
        %v467 = vld [vmem:[%s321 + $0xfc] sm:$0xf]
        %v500 = vunpack.c.l.b16 %v372
        %v501 = vunpack.c.h.b16 %v372
        %v502 = vunpack.c.l.b16 %v373
        %v503 = vunpack.c.h.b16 %v373
        %v504 = vunpack.c.l.b16 %v374
        %v505 = vunpack.c.h.b16 %v374
        %v506 = vunpack.c.l.b16 %v375
        %v507 = vunpack.c.h.b16 %v375
        %v508 = vunpack.c.l.b16 %v376
        %v509 = vunpack.c.h.b16 %v376
        %v510 = vunpack.c.l.b16 %v377
        %v511 = vunpack.c.h.b16 %v377
        %v512 = vunpack.c.l.b16 %v378
        %v513 = vunpack.c.h.b16 %v378
        %v514 = vunpack.c.l.b16 %v379
        %v515 = vunpack.c.h.b16 %v379
        %v516 = vunpack.c.l.b16 %v380
        %v517 = vunpack.c.h.b16 %v380
        %v518 = vunpack.c.l.b16 %v381
        %v519 = vunpack.c.h.b16 %v381
        %v520 = vunpack.c.l.b16 %v382
        %v521 = vunpack.c.h.b16 %v382
        %v522 = vunpack.c.l.b16 %v383
        %v523 = vunpack.c.h.b16 %v383
        %v524 = vunpack.c.l.b16 %v384
        %v525 = vunpack.c.h.b16 %v384
        %v526 = vunpack.c.l.b16 %v385
        %v527 = vunpack.c.h.b16 %v385
        %v528 = vunpack.c.l.b16 %v386
        %v529 = vunpack.c.h.b16 %v386
        %v530 = vunpack.c.l.b16 %v387
        %v531 = vunpack.c.h.b16 %v387
        %v532 = vunpack.c.l.b16 %v388
        %v533 = vunpack.c.h.b16 %v388
        %v534 = vunpack.c.l.b16 %v389
        %v535 = vunpack.c.h.b16 %v389
        %v536 = vunpack.c.l.b16 %v390
        %v537 = vunpack.c.h.b16 %v390
        %v538 = vunpack.c.l.b16 %v391
        %v539 = vunpack.c.h.b16 %v391
        %v540 = vunpack.c.l.b16 %v392
        %v541 = vunpack.c.h.b16 %v392
        %v542 = vunpack.c.l.b16 %v393
        %v543 = vunpack.c.h.b16 %v393
        %v544 = vunpack.c.l.b16 %v394
        %v545 = vunpack.c.h.b16 %v394
        %v546 = vunpack.c.l.b16 %v395
        %v547 = vunpack.c.h.b16 %v395
        %v548 = vunpack.c.l.b16 %v396
        %v549 = vunpack.c.h.b16 %v396
        %v550 = vunpack.c.l.b16 %v397
        %v551 = vunpack.c.h.b16 %v397
        %v552 = vunpack.c.l.b16 %v398
        %v553 = vunpack.c.h.b16 %v398
        %v554 = vunpack.c.l.b16 %v399
        %v555 = vunpack.c.h.b16 %v399
        %v556 = vunpack.c.l.b16 %v400
        %v557 = vunpack.c.h.b16 %v400
        %v558 = vunpack.c.l.b16 %v401
        %v559 = vunpack.c.h.b16 %v401
        %v560 = vunpack.c.l.b16 %v402
        %v561 = vunpack.c.h.b16 %v402
        %v562 = vunpack.c.l.b16 %v403
        %v563 = vunpack.c.h.b16 %v403
        %v564 = vpack.c.b16 %v504, %v500
        %v565 = vpack.c.b16 %v505, %v501
        %v566 = vpack.c.b16 %v506, %v502
        %v567 = vpack.c.b16 %v507, %v503
        %v568 = vpack.c.b16 %v512, %v508
        %v569 = vpack.c.b16 %v513, %v509
        %v570 = vpack.c.b16 %v514, %v510
        %v571 = vpack.c.b16 %v515, %v511
        %v572 = vpack.c.b16 %v520, %v516
        %v573 = vpack.c.b16 %v521, %v517
        %v574 = vpack.c.b16 %v522, %v518
        %v575 = vpack.c.b16 %v523, %v519
        %v576 = vpack.c.b16 %v528, %v524
        %v577 = vpack.c.b16 %v529, %v525
        %v578 = vpack.c.b16 %v530, %v526
        %v579 = vpack.c.b16 %v531, %v527
        %v580 = vpack.c.b16 %v536, %v532
        %v581 = vpack.c.b16 %v537, %v533
        %v582 = vpack.c.b16 %v538, %v534
        %v583 = vpack.c.b16 %v539, %v535
        %v584 = vpack.c.b16 %v544, %v540
        %v585 = vpack.c.b16 %v545, %v541
        %v586 = vpack.c.b16 %v546, %v542
        %v587 = vpack.c.b16 %v547, %v543
        %v588 = vpack.c.b16 %v552, %v548
        %v589 = vpack.c.b16 %v553, %v549
        %v590 = vpack.c.b16 %v554, %v550
        %v591 = vpack.c.b16 %v555, %v551
        %v592 = vpack.c.b16 %v560, %v556
        %v593 = vpack.c.b16 %v561, %v557
        %v594 = vpack.c.b16 %v562, %v558
        %v595 = vpack.c.b16 %v563, %v559
        %v692 = vunpack.c.l.b16 %v404
        %v693 = vunpack.c.l.b16 %v405
        %v694 = vunpack.c.l.b16 %v406
        %v695 = vunpack.c.l.b16 %v407
        %v696 = vunpack.c.l.b16 %v408
        %v697 = vunpack.c.l.b16 %v409
        %v698 = vunpack.c.l.b16 %v410
        %v699 = vunpack.c.l.b16 %v411
        %v700 = vunpack.c.l.b16 %v412
        %v701 = vunpack.c.l.b16 %v413
        %v702 = vunpack.c.l.b16 %v414
        %v703 = vunpack.c.l.b16 %v415
        %v704 = vunpack.c.l.b16 %v416
        %v705 = vunpack.c.l.b16 %v417
        %v706 = vunpack.c.l.b16 %v418
        %v707 = vunpack.c.l.b16 %v419
        %v708 = vunpack.c.l.b16 %v420
        %v709 = vunpack.c.l.b16 %v421
        %v710 = vunpack.c.l.b16 %v422
        %v711 = vunpack.c.l.b16 %v423
        %v712 = vunpack.c.l.b16 %v424
        %v713 = vunpack.c.l.b16 %v425
        %v714 = vunpack.c.l.b16 %v426
        %v715 = vunpack.c.l.b16 %v427
        %v716 = vunpack.c.l.b16 %v428
        %v717 = vunpack.c.l.b16 %v429
        %v718 = vunpack.c.l.b16 %v430
        %v719 = vunpack.c.l.b16 %v431
        %v720 = vunpack.c.l.b16 %v432
        %v721 = vunpack.c.l.b16 %v433
        %v722 = vunpack.c.l.b16 %v434
        %v723 = vunpack.c.l.b16 %v435
        %v724 = vunpack.c.l.b16 %v436
        %v725 = vunpack.c.l.b16 %v437
        %v726 = vunpack.c.l.b16 %v438
        %v727 = vunpack.c.l.b16 %v439
        %v728 = vunpack.c.l.b16 %v440
        %v729 = vunpack.c.l.b16 %v441
        %v730 = vunpack.c.l.b16 %v442
        %v731 = vunpack.c.l.b16 %v443
        %v732 = vunpack.c.l.b16 %v444
        %v733 = vunpack.c.l.b16 %v445
        %v734 = vunpack.c.l.b16 %v446
        %v735 = vunpack.c.l.b16 %v447
        %v736 = vunpack.c.l.b16 %v448
        %v737 = vunpack.c.l.b16 %v449
        %v738 = vunpack.c.l.b16 %v450
        %v739 = vunpack.c.l.b16 %v451
        %v740 = vunpack.c.l.b16 %v452
        %v741 = vunpack.c.l.b16 %v453
        %v742 = vunpack.c.l.b16 %v454
        %v743 = vunpack.c.l.b16 %v455
        %v744 = vunpack.c.l.b16 %v456
        %v745 = vunpack.c.l.b16 %v457
        %v746 = vunpack.c.l.b16 %v458
        %v747 = vunpack.c.l.b16 %v459
        %v748 = vunpack.c.l.b16 %v460
        %v749 = vunpack.c.l.b16 %v461
        %v750 = vunpack.c.l.b16 %v462
        %v751 = vunpack.c.l.b16 %v463
        %v752 = vunpack.c.l.b16 %v464
        %v753 = vunpack.c.l.b16 %v465
        %v754 = vunpack.c.l.b16 %v466
        %v755 = vunpack.c.l.b16 %v467
        %v756 = vpack.c.b16 %v693, %v692
        %v757 = vpack.c.b16 %v695, %v694
        %v758 = vpack.c.b16 %v697, %v696
        %v759 = vpack.c.b16 %v699, %v698
        %v760 = vpack.c.b16 %v701, %v700
        %v761 = vpack.c.b16 %v703, %v702
        %v762 = vpack.c.b16 %v705, %v704
        %v763 = vpack.c.b16 %v707, %v706
        %v764 = vpack.c.b16 %v709, %v708
        %v765 = vpack.c.b16 %v711, %v710
        %v766 = vpack.c.b16 %v713, %v712
        %v767 = vpack.c.b16 %v715, %v714
        %v768 = vpack.c.b16 %v717, %v716
        %v769 = vpack.c.b16 %v719, %v718
        %v770 = vpack.c.b16 %v721, %v720
        %v771 = vpack.c.b16 %v723, %v722
        %v772 = vpack.c.b16 %v725, %v724
        %v773 = vpack.c.b16 %v727, %v726
        %v774 = vpack.c.b16 %v729, %v728
        %v775 = vpack.c.b16 %v731, %v730
        %v776 = vpack.c.b16 %v733, %v732
        %v777 = vpack.c.b16 %v735, %v734
        %v778 = vpack.c.b16 %v737, %v736
        %v779 = vpack.c.b16 %v739, %v738
        %v780 = vpack.c.b16 %v741, %v740
        %v781 = vpack.c.b16 %v743, %v742
        %v782 = vpack.c.b16 %v745, %v744
        %v783 = vpack.c.b16 %v747, %v746
        %v784 = vpack.c.b16 %v749, %v748
        %v785 = vpack.c.b16 %v751, %v750
        %v786 = vpack.c.b16 %v753, %v752
        %v787 = vpack.c.b16 %v755, %v754
        %820 = vmatprep.subr.bf16.mxu0 0
        %821 = vmatpush1.bf16.msra.mxu0 %v756
        %822 = vmatprep.subr.bf16.mxu0 0
        %823 = vmatpush1.bf16.msra.mxu0 %v757
        %824 = vmatprep.subr.bf16.mxu0 0
        %825 = vmatpush1.bf16.msra.mxu0 %v758
        %826 = vmatprep.subr.bf16.mxu0 0
        %827 = vmatpush1.bf16.msra.mxu0 %v759
        %828 = vmatprep.subr.bf16.mxu0 0
        %829 = vmatpush1.bf16.msra.mxu0 %v760
        %830 = vmatprep.subr.bf16.mxu0 0
        %831 = vmatpush1.bf16.msra.mxu0 %v761
        %832 = vmatprep.subr.bf16.mxu0 0
        %833 = vmatpush1.bf16.msra.mxu0 %v762
        %834 = vmatprep.subr.bf16.mxu0 0
        %835 = vmatpush1.bf16.msra.mxu0 %v763
        %836 = vmatprep.subr.bf16.mxu0 0
        %837 = vmatpush1.bf16.msra.mxu0 %v764
        %838 = vmatprep.subr.bf16.mxu0 0
        %839 = vmatpush1.bf16.msra.mxu0 %v765
        %840 = vmatprep.subr.bf16.mxu0 0
        %841 = vmatpush1.bf16.msra.mxu0 %v766
        %842 = vmatprep.subr.bf16.mxu0 0
        %843 = vmatpush1.bf16.msra.mxu0 %v767
        %844 = vmatprep.subr.bf16.mxu0 0
        %845 = vmatpush1.bf16.msra.mxu0 %v768
        %846 = vmatprep.subr.bf16.mxu0 0
        %847 = vmatpush1.bf16.msra.mxu0 %v769
        %848 = vmatprep.subr.bf16.mxu0 0
        %849 = vmatpush1.bf16.msra.mxu0 %v770
        %850 = vmatprep.subr.bf16.mxu0 0
        %851 = vmatpush1.bf16.msra.mxu0 %v771
        %852 = vmatprep.mubr.bf16.mxu0 %v565
        %853 = vmatmul.mubr.bf16.gmra.mrb[0].mxu0 %v564
        %v854 = vpop.f32.mrb[0].mxu0
        %v855 = vadd.f32 0.0, %v854
        %v856 = vpop.f32.mrb[0].mxu0
        %v857 = vpop.f32.mrb[0].mxu0
        %v858 = vadd.f32 0.0, %v857
        %v859 = vpop.f32.mrb[0].mxu0
        %860 = vmatprep.mubr.bf16.mxu0 %v569
        %861 = vmatmul.mubr.bf16.gmra.mrb[0].mxu0 %v568
        %v862 = vpop.f32.mrb[0].mxu0
        %v863 = vadd.f32 0.0, %v862
        %v864 = vpop.f32.mrb[0].mxu0
        %v865 = vpop.f32.mrb[0].mxu0
        %v866 = vadd.f32 0.0, %v865
        %v867 = vpop.f32.mrb[0].mxu0
        %868 = vmatprep.mubr.bf16.mxu0 %v573
        %869 = vmatmul.mubr.bf16.gmra.mrb[0].mxu0 %v572
        %v870 = vpop.f32.mrb[0].mxu0
        %v871 = vadd.f32 0.0, %v870
        %v872 = vpop.f32.mrb[0].mxu0
        %v873 = vpop.f32.mrb[0].mxu0
        %v874 = vadd.f32 0.0, %v873
        %v875 = vpop.f32.mrb[0].mxu0
        %876 = vmatprep.mubr.bf16.mxu0 %v577
        %877 = vmatmul.mubr.bf16.gmra.mrb[0].mxu0 %v576
        %v878 = vpop.f32.mrb[0].mxu0
        %v879 = vadd.f32 0.0, %v878
        %v880 = vpop.f32.mrb[0].mxu0
        %v881 = vpop.f32.mrb[0].mxu0
        %v882 = vadd.f32 0.0, %v881
        %v883 = vpop.f32.mrb[0].mxu0
        %884 = vmatprep.mubr.bf16.mxu0 %v581
        %885 = vmatmul.mubr.bf16.gmra.mrb[0].mxu0 %v580
        %v886 = vpop.f32.mrb[0].mxu0
        %v887 = vadd.f32 0.0, %v886
        %v888 = vpop.f32.mrb[0].mxu0
        %v889 = vpop.f32.mrb[0].mxu0
        %v890 = vadd.f32 0.0, %v889
        %v891 = vpop.f32.mrb[0].mxu0
        %892 = vmatprep.mubr.bf16.mxu0 %v585
        %893 = vmatmul.mubr.bf16.gmra.mrb[0].mxu0 %v584
        %v894 = vpop.f32.mrb[0].mxu0
        %v895 = vadd.f32 0.0, %v894
        %v896 = vpop.f32.mrb[0].mxu0
        %v897 = vpop.f32.mrb[0].mxu0
        %v898 = vadd.f32 0.0, %v897
        %v899 = vpop.f32.mrb[0].mxu0
        %900 = vmatprep.mubr.bf16.mxu0 %v589
        %901 = vmatmul.mubr.bf16.gmra.mrb[0].mxu0 %v588
        %v902 = vpop.f32.mrb[0].mxu0
        %v903 = vadd.f32 0.0, %v902
        %v904 = vpop.f32.mrb[0].mxu0
        %v905 = vpop.f32.mrb[0].mxu0
        %v906 = vadd.f32 0.0, %v905
        %v907 = vpop.f32.mrb[0].mxu0
        %908 = vmatprep.mubr.bf16.mxu0 %v593
        %909 = vmatmul.mubr.bf16.gmra.mrb[0].mxu0 %v592
        %v910 = vpop.f32.mrb[0].mxu0
        %v911 = vadd.f32 0.0, %v910
        %v912 = vpop.f32.mrb[0].mxu0
        %v913 = vpop.f32.mrb[0].mxu0
        %v914 = vadd.f32 0.0, %v913
        %v915 = vpop.f32.mrb[0].mxu0
        %916 = vdwg.mxu0
        %917 = vmatprep.subr.bf16.mxu0 0
        %918 = vmatpush1.bf16.msra.mxu0 %v772
        %919 = vmatprep.subr.bf16.mxu0 0
        %920 = vmatpush1.bf16.msra.mxu0 %v773
        %921 = vmatprep.subr.bf16.mxu0 0
        %922 = vmatpush1.bf16.msra.mxu0 %v774
        %923 = vmatprep.subr.bf16.mxu0 0
        %924 = vmatpush1.bf16.msra.mxu0 %v775
        %925 = vmatprep.subr.bf16.mxu0 0
        %926 = vmatpush1.bf16.msra.mxu0 %v776
        %927 = vmatprep.subr.bf16.mxu0 0
        %928 = vmatpush1.bf16.msra.mxu0 %v777
        %929 = vmatprep.subr.bf16.mxu0 0
        %930 = vmatpush1.bf16.msra.mxu0 %v778
        %931 = vmatprep.subr.bf16.mxu0 0
        %932 = vmatpush1.bf16.msra.mxu0 %v779
        %933 = vmatprep.subr.bf16.mxu0 0
        %934 = vmatpush1.bf16.msra.mxu0 %v780
        %935 = vmatprep.subr.bf16.mxu0 0
        %936 = vmatpush1.bf16.msra.mxu0 %v781
        %937 = vmatprep.subr.bf16.mxu0 0
        %938 = vmatpush1.bf16.msra.mxu0 %v782
        %939 = vmatprep.subr.bf16.mxu0 0
        %940 = vmatpush1.bf16.msra.mxu0 %v783
        %941 = vmatprep.subr.bf16.mxu0 0
        %942 = vmatpush1.bf16.msra.mxu0 %v784
        %943 = vmatprep.subr.bf16.mxu0 0
        %944 = vmatpush1.bf16.msra.mxu0 %v785
        %945 = vmatprep.subr.bf16.mxu0 0
        %946 = vmatpush1.bf16.msra.mxu0 %v786
        %947 = vmatprep.subr.bf16.mxu0 0
        %948 = vmatpush1.bf16.msra.mxu0 %v787
        %949 = vmatprep.mubr.bf16.mxu0 %v567
        %950 = vmatmul.mubr.bf16.gmra.mrb[0].mxu0 %v566
        %v951 = vpop.f32.mrb[0].mxu0
        %v952 = vadd.f32 %v855, %v951
        %v953 = vpop.f32.mrb[0].mxu0
        %v954 = vpop.f32.mrb[0].mxu0
        %v955 = vadd.f32 %v858, %v954
        %v956 = vpop.f32.mrb[0].mxu0
        %957 = vmatprep.mubr.bf16.mxu0 %v571
        %958 = vmatmul.mubr.bf16.gmra.mrb[0].mxu0 %v570
        %v959 = vpop.f32.mrb[0].mxu0
        %v960 = vadd.f32 %v863, %v959
        %v961 = vpop.f32.mrb[0].mxu0
        %v962 = vpop.f32.mrb[0].mxu0
        %v963 = vadd.f32 %v866, %v962
        %v964 = vpop.f32.mrb[0].mxu0
        %965 = vmatprep.mubr.bf16.mxu0 %v575
        %966 = vmatmul.mubr.bf16.gmra.mrb[0].mxu0 %v574
        %v967 = vpop.f32.mrb[0].mxu0
        %v968 = vadd.f32 %v871, %v967
        %v969 = vpop.f32.mrb[0].mxu0
        %v970 = vpop.f32.mrb[0].mxu0
        %v971 = vadd.f32 %v874, %v970
        %v972 = vpop.f32.mrb[0].mxu0
        %973 = vmatprep.mubr.bf16.mxu0 %v579
        %974 = vmatmul.mubr.bf16.gmra.mrb[0].mxu0 %v578
        %v975 = vpop.f32.mrb[0].mxu0
        %v976 = vadd.f32 %v879, %v975
        %v977 = vpop.f32.mrb[0].mxu0
        %v978 = vpop.f32.mrb[0].mxu0
        %v979 = vadd.f32 %v882, %v978
        %v980 = vpop.f32.mrb[0].mxu0
        %981 = vmatprep.mubr.bf16.mxu0 %v583
        %982 = vmatmul.mubr.bf16.gmra.mrb[0].mxu0 %v582
        %v983 = vpop.f32.mrb[0].mxu0
        %v984 = vadd.f32 %v887, %v983
        %v985 = vpop.f32.mrb[0].mxu0
        %v986 = vpop.f32.mrb[0].mxu0
        %v987 = vadd.f32 %v890, %v986
        %v988 = vpop.f32.mrb[0].mxu0
        %989 = vmatprep.mubr.bf16.mxu0 %v587
        %990 = vmatmul.mubr.bf16.gmra.mrb[0].mxu0 %v586
        %v991 = vpop.f32.mrb[0].mxu0
        %v992 = vadd.f32 %v895, %v991
        %v993 = vpop.f32.mrb[0].mxu0
        %v994 = vpop.f32.mrb[0].mxu0
        %v995 = vadd.f32 %v898, %v994
        %v996 = vpop.f32.mrb[0].mxu0
        %997 = vmatprep.mubr.bf16.mxu0 %v591
        %998 = vmatmul.mubr.bf16.gmra.mrb[0].mxu0 %v590
        %v999 = vpop.f32.mrb[0].mxu0
        %v1000 = vadd.f32 %v903, %v999
        %v1001 = vpop.f32.mrb[0].mxu0
        %v1002 = vpop.f32.mrb[0].mxu0
        %v1003 = vadd.f32 %v906, %v1002
        %v1004 = vpop.f32.mrb[0].mxu0
        %1005 = vmatprep.mubr.bf16.mxu0 %v595
        %1006 = vmatmul.mubr.bf16.gmra.mrb[0].mxu0 %v594
        %v1007 = vpop.f32.mrb[0].mxu0
        %v1008 = vadd.f32 %v911, %v1007
        %v1009 = vpop.f32.mrb[0].mxu0
        %v1010 = vpop.f32.mrb[0].mxu0
        %v1011 = vadd.f32 %v914, %v1010
        %v1012 = vpop.f32.mrb[0].mxu0
        %1013 = vdwg.mxu0
        %v1014 = vadd.f32 %v356, %v952
        %v1015 = vadd.f32 %v357, %v955
        %v1016 = vadd.f32 %v358, %v960
        %v1017 = vadd.f32 %v359, %v963
        %v1018 = vadd.f32 %v360, %v968
        %v1019 = vadd.f32 %v361, %v971
        %v1020 = vadd.f32 %v362, %v976
        %v1021 = vadd.f32 %v363, %v979
        %v1022 = vadd.f32 %v364, %v984
        %v1023 = vadd.f32 %v365, %v987
        %v1024 = vadd.f32 %v366, %v992
        %v1025 = vadd.f32 %v367, %v995
        %v1026 = vadd.f32 %v368, %v1000
        %v1027 = vadd.f32 %v369, %v1003
        %v1028 = vadd.f32 %v370, %v1008
        %v1029 = vadd.f32 %v371, %v1011
        %1030 = vst [vmem:[#allocation2] sm:$0xff] %v1014
        %1031 = vst [vmem:[#allocation2 + $0x8] sm:$0xff] %v1015
        %1032 = vst [vmem:[#allocation2 + $0x10] sm:$0xff] %v1016
        %1033 = vst [vmem:[#allocation2 + $0x18] sm:$0xff] %v1017
        %1034 = vst [vmem:[#allocation2 + $0x20] sm:$0xff] %v1018
        %1035 = vst [vmem:[#allocation2 + $0x28] sm:$0xff] %v1019
        %1036 = vst [vmem:[#allocation2 + $0x30] sm:$0xff] %v1020
        %1037 = vst [vmem:[#allocation2 + $0x38] sm:$0xff] %v1021
        %1038 = vst [vmem:[#allocation2 + $0x40] sm:$0xff] %v1022
        %1039 = vst [vmem:[#allocation2 + $0x48] sm:$0xff] %v1023
        %1040 = vst [vmem:[#allocation2 + $0x50] sm:$0xff] %v1024
        %1041 = vst [vmem:[#allocation2 + $0x58] sm:$0xff] %v1025
        %1042 = vst [vmem:[#allocation2 + $0x60] sm:$0xff] %v1026
        %1043 = vst [vmem:[#allocation2 + $0x68] sm:$0xff] %v1027
        %1044 = vst [vmem:[#allocation2 + $0x70] sm:$0xff] %v1028
        %1045 = vst [vmem:[#allocation2 + $0x78] sm:$0xff] %v1029
        %p1046 = scmp.eq.s32.totalorder %s21, 1
        // Predicated region
        $region60: #{discriminator_forward.9} parent=50 // pred_check
          %p1047 = pneg %p1046
        $region61: #{discriminator_forward.9} parent=50 // pred_check_branch
          %1049 = sbr.rel (%p1047) target = $region63
        $region62: #{discriminator_forward.9} parent=50 // pred_region
          %v1050 = vld [vmem:[#allocation2] sm:$0xff]
          %v1051 = vld [vmem:[#allocation2 + $0x8] sm:$0xff]
          %v1052 = vld [vmem:[#allocation2 + $0x10] sm:$0xff]
          %v1053 = vld [vmem:[#allocation2 + $0x18] sm:$0xff]
          %v1054 = vld [vmem:[#allocation2 + $0x20] sm:$0xff]
          %v1055 = vld [vmem:[#allocation2 + $0x28] sm:$0xff]
          %v1056 = vld [vmem:[#allocation2 + $0x30] sm:$0xff]
          %v1057 = vld [vmem:[#allocation2 + $0x38] sm:$0xff]
          %v1058 = vld [vmem:[#allocation2 + $0x40] sm:$0xff]
          %v1059 = vld [vmem:[#allocation2 + $0x48] sm:$0xff]
          %v1060 = vld [vmem:[#allocation2 + $0x50] sm:$0xff]
          %v1061 = vld [vmem:[#allocation2 + $0x58] sm:$0xff]
          %v1062 = vld [vmem:[#allocation2 + $0x60] sm:$0xff]
          %v1063 = vld [vmem:[#allocation2 + $0x68] sm:$0xff]
          %v1064 = vld [vmem:[#allocation2 + $0x70] sm:$0xff]
          %v1065 = vld [vmem:[#allocation2 + $0x78] sm:$0xff]
          %v1066 = vld [vmem:[%s325] sm:$0x1]
          %v1068 = vlaneseq
          %v1069 = vshrl.u32 %v1068, 7
          %v1070 = vsub.s32 0, %v1069
          %v1071 = vrot.slane %v1066, %v1070
          %v1073 = vadd.f32 %v1050, %v1071
          %v1074 = vadd.f32 %v1051, %v1071
          %v1075 = vadd.f32 %v1052, %v1071
          %v1076 = vadd.f32 %v1053, %v1071
          %v1077 = vadd.f32 %v1054, %v1071
          %v1078 = vadd.f32 %v1055, %v1071
          %v1079 = vadd.f32 %v1056, %v1071
          %v1080 = vadd.f32 %v1057, %v1071
          %v1081 = vadd.f32 %v1058, %v1071
          %v1082 = vadd.f32 %v1059, %v1071
          %v1083 = vadd.f32 %v1060, %v1071
          %v1084 = vadd.f32 %v1061, %v1071
          %v1085 = vadd.f32 %v1062, %v1071
          %v1086 = vadd.f32 %v1063, %v1071
          %v1087 = vadd.f32 %v1064, %v1071
          %v1088 = vadd.f32 %v1065, %v1071
          %v1089 = vpack.c.bf16 %v1074, %v1073
          %v1090 = vpack.c.bf16 %v1076, %v1075
          %v1091 = vpack.c.bf16 %v1078, %v1077
          %v1092 = vpack.c.bf16 %v1080, %v1079
          %v1093 = vpack.c.bf16 %v1082, %v1081
          %v1094 = vpack.c.bf16 %v1084, %v1083
          %v1095 = vpack.c.bf16 %v1086, %v1085
          %v1096 = vpack.c.bf16 %v1088, %v1087
          %v1105 = vunpack.c.l.b16 %v1089
          %v1106 = vunpack.c.h.b16 %v1089
          %v1107 = vunpack.c.l.b16 %v1090
          %v1108 = vunpack.c.h.b16 %v1090
          %v1109 = vunpack.c.l.b16 %v1091
          %v1110 = vunpack.c.h.b16 %v1091
          %v1111 = vunpack.c.l.b16 %v1092
          %v1112 = vunpack.c.h.b16 %v1092
          %v1113 = vunpack.c.l.b16 %v1093
          %v1114 = vunpack.c.h.b16 %v1093
          %v1115 = vunpack.c.l.b16 %v1094
          %v1116 = vunpack.c.h.b16 %v1094
          %v1117 = vunpack.c.l.b16 %v1095
          %v1118 = vunpack.c.h.b16 %v1095
          %v1119 = vunpack.c.l.b16 %v1096
          %v1120 = vunpack.c.h.b16 %v1096
          %v1121 = vpack.c.b16 %v1105, %v1105
          %v1122 = vpack.c.b16 %v1106, %v1106
          %v1123 = vpack.c.b16 %v1107, %v1107
          %v1124 = vpack.c.b16 %v1108, %v1108
          %v1125 = vpack.c.b16 %v1109, %v1109
          %v1126 = vpack.c.b16 %v1110, %v1110
          %v1127 = vpack.c.b16 %v1111, %v1111
          %v1128 = vpack.c.b16 %v1112, %v1112
          %v1129 = vpack.c.b16 %v1113, %v1113
          %v1130 = vpack.c.b16 %v1114, %v1114
          %v1131 = vpack.c.b16 %v1115, %v1115
          %v1132 = vpack.c.b16 %v1116, %v1116
          %v1133 = vpack.c.b16 %v1117, %v1117
          %v1134 = vpack.c.b16 %v1118, %v1118
          %v1135 = vpack.c.b16 %v1119, %v1119
          %v1136 = vpack.c.b16 %v1120, %v1120
          %1153 = vst [vmem:[%s333] sm:$0xf] %v1121
          %1154 = vst [vmem:[%s333 + $0x4] sm:$0xf] %v1122
          %1155 = vst [vmem:[%s333 + $0x8] sm:$0xf] %v1123
          %1156 = vst [vmem:[%s333 + $0xc] sm:$0xf] %v1124
          %1157 = vst [vmem:[%s333 + $0x10] sm:$0xf] %v1125
          %1158 = vst [vmem:[%s333 + $0x14] sm:$0xf] %v1126
          %1159 = vst [vmem:[%s333 + $0x18] sm:$0xf] %v1127
          %1160 = vst [vmem:[%s333 + $0x1c] sm:$0xf] %v1128
          %1161 = vst [vmem:[%s333 + $0x20] sm:$0xf] %v1129
          %1162 = vst [vmem:[%s333 + $0x24] sm:$0xf] %v1130
          %1163 = vst [vmem:[%s333 + $0x28] sm:$0xf] %v1131
          %1164 = vst [vmem:[%s333 + $0x2c] sm:$0xf] %v1132
          %1165 = vst [vmem:[%s333 + $0x30] sm:$0xf] %v1133
          %1166 = vst [vmem:[%s333 + $0x34] sm:$0xf] %v1134
          %1167 = vst [vmem:[%s333 + $0x38] sm:$0xf] %v1135
          %1168 = vst [vmem:[%s333 + $0x3c] sm:$0xf] %v1136
        $region63: #{discriminator_forward.9} parent=50 // pred_fallthru
          _
        %s1169 = smul.u32 16, %s19
        %p1170 = scmp.lt.s32.totalorder %s1169, 15
        %s1171 = scalar_select %p1170, %s1169, 15
        %p1172 = scmp.lt.s32.totalorder %s20, 0
        %s1173 = scalar_select %p1172, %s20, 0
        %s1174 = sadd.s32 %s1173, %s1171
        %s1175 = smul.addr %s1174, 4
        %s1176 = scalar_lea.vmem %s3, %s1175
        // Predicated region
        $region64: #{discriminator_forward.9} parent=50 // pred_check
          %p1177 = pneg %p135
        $region65: #{discriminator_forward.9} parent=50 // pred_check_branch
          %1179 = sbr.rel (%p1177) target = $region67
        $region66: #{discriminator_forward.9} parent=50 // pred_region
          %s1180 = smul.u32 16, %s19
        $region67: #{discriminator_forward.9} parent=50 // pred_fallthru
          _
        // Predicated region
        $region68: #{discriminator_forward.9} parent=50 // pred_check
          %p1181 = pneg %p135
        $region69: #{discriminator_forward.9} parent=50 // pred_check_branch
          %1183 = sbr.rel (%p1181) target = $region71
        $region70: #{discriminator_forward.9} parent=50 // pred_region
          %s1184 = smul.u32 16, %s19
          %p1185 = scmp.lt.s32.totalorder %s1184, 15
          %s1186 = scalar_select %p1185, %s1184, 15
          %p1187 = scmp.lt.s32.totalorder %s20, 0
          %s1188 = scalar_select %p1187, %s20, 0
          %s1189 = sadd.s32 %s1188, %s1186
          %s1190 = smul.addr %s1189, 4
          %s1191 = scalar_lea.vmem %s3, %s1190
        $region71: #{discriminator_forward.9} parent=50 // pred_fallthru
          _
      $region51: #{discriminator_forward.9} parent=5 // pred_fallthru
        _
      %p1192 = scmp.le.s32.totalorder 2, %s9
      // Predicated region
      $region72: #{discriminator_forward.9} parent=5 // pred_check
        %p1193 = pneg %p1192
      $region73: #{discriminator_forward.9} parent=5 // pred_check_branch
        %1195 = sbr.rel (%p1193) target = $region75
      $region74: #{discriminator_forward.9} parent=5 // pred_region
        %s1196 = ssub.s32 %s9, 2
      $region75: #{discriminator_forward.9} parent=5 // pred_fallthru
        _
    $region6: #{discriminator_forward.9} parent=1 // loop_footer
      %s13 = sadd.s32 1, %s9
    $region7: #{discriminator_forward.9} parent=1 // loop_footer_branch
      %8 = sbr.rel target = $region3
    $region8: #{discriminator_forward.9} parent=1 // loop_exit
      _

// kernel: discriminator_forward.11
$region0: #{discriminator_forward.11}
  #allocation0 [shape = 'u32[]', space=smem, size = 0x4, offset = 0x4, fixed_abs, tag = 'smem constant byte address 0x4 - core index']
  #allocation1 [shape = 'u32[144,128]{1,0:T(1,128)}', space=vmem, size = 0x12000, scoped, tag = 'internal scratch']
  #allocation2 [shape = 'f32[32,256]{1,0:T(8,128)}', space=vmem, size = 0x8000, scoped, tag = 'scratch operand']
  %s0 = inlined_call_operand.vmem [shape: bf16[32,2048], index: 0, kind: input, shape index: {}]
  %s1 = inlined_call_operand.vmem [shape: bf16[2048,256], index: 1, kind: input, shape index: {}]
  %s2 = inlined_call_operand.vmem [shape: f32[1,256], index: 2, kind: input, shape index: {}]
  %s3 = inlined_call_operand.vmem [shape: bf16[32,256], index: 3, kind: output, shape index: {}]
  %s4 = sld [smem:[#allocation0]]
  $region76: #{discriminator_forward.11} parent=0
    _
  %s6 = ssub.s32 1, %s4
  %s7 = scalar_select 0, %s6, %s4
  $region1: #{discriminator_forward.11} parent=0
    #allocation3 [shape = 'u8[65536]{0}', space=vmem, size = 0x10000, scoped, tag = 'input window, operand 0']
    loop: start=0, step=1, limit=6
    $region2: #{discriminator_forward.11} parent=1 // loop_pre_header
      _
    $region3: #{discriminator_forward.11} parent=1 // loop_header
      %s9 = sphi 0, %s13
      %p10 = scmp.ge.s32.totalorder %s9, 6
      %s16 = sphi 0, %s35
      %s17 = sphi 0, %s31
      %s18 = sphi 0, %s27
      %s19 = sphi 0, %s16
      %s20 = sphi 0, %s17
      %s21 = sphi 0, %s18
      %s22 = sphi 0, %s19
      %s23 = sphi 0, %s20
      %s24 = sphi 0, %s21
      %s40 = sphi 0, %s42
      %s43 = sphi 0, %s40
      %s44 = sphi 0, %s43
      %s60 = sphi 0, %s44
      %s68 = sphi 0, %s70
      %s71 = sphi 0, %s68
      %s72 = sphi 0, %s71
      %s88 = sphi 0, %s72
      %s94 = sphi 0, %s96
      %s97 = sphi 0, %s94
      %s98 = sphi 0, %s97
      %s114 = sphi 0, %s98
      %s122 = sphi 0, %s124
      %s125 = sphi 0, %s122
      %s126 = sphi 0, %s125
      %s142 = sphi 0, %s126
    $region4: #{discriminator_forward.11} parent=1 // loop_header_branch
      %12 = sbr.rel (%p10) target = $region8
    $region5: #{discriminator_forward.11} parent=1 // loop_body
      %s14 = ssub.s32 %s9, 1
      %s15 = ssub.s32 %s9, 2
      %s25 = sadd.s32 1, %s18
      %p26 = scmp.ge.s32.totalorder %s25, 4
      %s27 = scalar_select %p26, 0, %s25
      %s28 = sadd.s32 1, %s17
      %s29 = scalar_select %p26, %s28, %s17
      %p30 = scmp.ge.s32.totalorder %s29, 1
      %s31 = scalar_select %p30, 0, %s29
      %s32 = sadd.s32 1, %s16
      %s33 = scalar_select %p30, %s32, %s16
      %p34 = scmp.ge.s32.totalorder %s33, 1
      %s35 = scalar_select %p34, 0, %s33
      %s36 = ssub.s32 %s16, %s35
      %s37 = ssub.s32 %s18, %s27
      %s38 = sor.u32 %s36, %s37
      %p39 = scmp.eq.s32.totalorder %s38, 0
      %s41 = sadd.s32 %s40, 1
      %s42 = scalar_select %p39, %s40, %s41
      %p45 = pneg %p39
      %p46 = scmp.eq.s32.totalorder %s9, 3
      %p47 = por %p45, %p46
      %p48 = scmp.ne.s32.totalorder %s40, %s43
      %p49 = scmp.eq.s32.totalorder %s9, 0
      %p50 = por %p48, %p49
      %p51 = scmp.ne.s32.totalorder %s40, %s43
      %p52 = scmp.eq.s32.totalorder %s14, 3
      %p53 = por %p51, %p52
      %p54 = scmp.ne.s32.totalorder %s43, %s44
      %p55 = scmp.eq.s32.totalorder %s14, 0
      %p56 = por %p54, %p55
      %p57 = scmp.ne.s32.totalorder %s43, %s44
      %p58 = scmp.eq.s32.totalorder %s15, 3
      %p59 = por %p57, %p58
      %p61 = scmp.ne.s32.totalorder %s44, %s60
      %p62 = scmp.eq.s32.totalorder %s15, 0
      %p63 = por %p61, %p62
      %s64 = ssub.s32 %s18, %s27
      %s65 = ssub.s32 %s17, %s31
      %s66 = sor.u32 %s64, %s65
      %p67 = scmp.eq.s32.totalorder %s66, 0
      %s69 = sadd.s32 %s68, 1
      %s70 = scalar_select %p67, %s68, %s69
      %p73 = pneg %p67
      %p74 = scmp.eq.s32.totalorder %s9, 3
      %p75 = por %p73, %p74
      %p76 = scmp.ne.s32.totalorder %s68, %s71
      %p77 = scmp.eq.s32.totalorder %s9, 0
      %p78 = por %p76, %p77
      %p79 = scmp.ne.s32.totalorder %s68, %s71
      %p80 = scmp.eq.s32.totalorder %s14, 3
      %p81 = por %p79, %p80
      %p82 = scmp.ne.s32.totalorder %s71, %s72
      %p83 = scmp.eq.s32.totalorder %s14, 0
      %p84 = por %p82, %p83
      %p85 = scmp.ne.s32.totalorder %s71, %s72
      %p86 = scmp.eq.s32.totalorder %s15, 3
      %p87 = por %p85, %p86
      %p89 = scmp.ne.s32.totalorder %s72, %s88
      %p90 = scmp.eq.s32.totalorder %s15, 0
      %p91 = por %p89, %p90
      %s92 = ssub.s32 %s17, %s31
      %p93 = scmp.eq.s32.totalorder %s92, 0
      %s95 = sadd.s32 %s94, 1
      %s96 = scalar_select %p93, %s94, %s95
      %p99 = pneg %p93
      %p100 = scmp.eq.s32.totalorder %s9, 3
      %p101 = por %p99, %p100
      %p102 = scmp.ne.s32.totalorder %s94, %s97
      %p103 = scmp.eq.s32.totalorder %s9, 0
      %p104 = por %p102, %p103
      %p105 = scmp.ne.s32.totalorder %s94, %s97
      %p106 = scmp.eq.s32.totalorder %s14, 3
      %p107 = por %p105, %p106
      %p108 = scmp.ne.s32.totalorder %s97, %s98
      %p109 = scmp.eq.s32.totalorder %s14, 0
      %p110 = por %p108, %p109
      %p111 = scmp.ne.s32.totalorder %s97, %s98
      %p112 = scmp.eq.s32.totalorder %s15, 3
      %p113 = por %p111, %p112
      %p115 = scmp.ne.s32.totalorder %s98, %s114
      %p116 = scmp.eq.s32.totalorder %s15, 0
      %p117 = por %p115, %p116
      %s118 = ssub.s32 %s16, %s35
      %s119 = ssub.s32 %s17, %s31
      %s120 = sor.u32 %s118, %s119
      %p121 = scmp.eq.s32.totalorder %s120, 0
      %s123 = sadd.s32 %s122, 1
      %s124 = scalar_select %p121, %s122, %s123
      %p127 = pneg %p121
      %p128 = scmp.eq.s32.totalorder %s9, 3
      %p129 = por %p127, %p128
      %p130 = scmp.ne.s32.totalorder %s122, %s125
      %p131 = scmp.eq.s32.totalorder %s9, 0
      %p132 = por %p130, %p131
      %p133 = scmp.ne.s32.totalorder %s122, %s125
      %p134 = scmp.eq.s32.totalorder %s14, 3
      %p135 = por %p133, %p134
      %p136 = scmp.ne.s32.totalorder %s125, %s126
      %p137 = scmp.eq.s32.totalorder %s14, 0
      %p138 = por %p136, %p137
      %p139 = scmp.ne.s32.totalorder %s125, %s126
      %p140 = scmp.eq.s32.totalorder %s15, 3
      %p141 = por %p139, %p140
      %p143 = scmp.ne.s32.totalorder %s126, %s142
      %p144 = scmp.eq.s32.totalorder %s15, 0
      %p145 = por %p143, %p144
      %p146 = scmp.le.s32.totalorder 1, %s9
      %p147 = scmp.lt.s32.totalorder %s9, 5
      %p148 = pnand %p146, %p147
      %p149 = pneg %p148
      // Predicated region
      $region9: #{discriminator_forward.11} parent=5 // pred_check
        _
      $region10: #{discriminator_forward.11} parent=5 // pred_check_branch
        %151 = sbr.rel (%p148) target = $region12
      $region11: #{discriminator_forward.11} parent=5 // pred_region
        %s152 = ssub.s32 %s9, 1
        // Predicated region
        $region13: #{discriminator_forward.11} parent=11 // pred_check
          %p153 = pneg %p110
        $region14: #{discriminator_forward.11} parent=11 // pred_check_branch
          %155 = sbr.rel (%p153) target = $region16
        $region15: #{discriminator_forward.11} parent=11 // pred_region
          %s156 = smul.u32 2, %s20
          %p157 = scmp.lt.s32.totalorder %s156, 1
          %s158 = scalar_select %p157, %s156, 1
          %s159 = scalar_lea.vmem %s2, %s158
          %s160 = smul.u32 2, %s20
        $region16: #{discriminator_forward.11} parent=11 // pred_fallthru
          _
      $region12: #{discriminator_forward.11} parent=5 // pred_fallthru
        _
      %p161 = scmp.lt.s32.totalorder %s9, 4
      // Predicated region
      $region17: #{discriminator_forward.11} parent=5 // pred_check
        %p162 = pneg %p161
      $region18: #{discriminator_forward.11} parent=5 // pred_check_branch
        %164 = sbr.rel (%p162) target = $region20
      $region19: #{discriminator_forward.11} parent=5 // pred_region
        // Predicated region
        $region21: #{discriminator_forward.11} parent=19 // pred_check
          %p165 = pneg %p50
        $region22: #{discriminator_forward.11} parent=19 // pred_check_branch
          %167 = sbr.rel (%p165) target = $region24
        $region23: #{discriminator_forward.11} parent=19 // pred_region
          %s168 = sand.u32 %s40, 1
          %s169 = sand.u32 %s40, 1
          %s170 = smul.addr %s169, 64
          %s171 = scalar_lea.vmem [#allocation3], %s170
          %s172 = smul.u32 4, %s16
          %s173 = smul.u32 4, %s18
          %s174 = smul.addr %s172, 16
          %s175 = sadd.s32 %s173, %s174
          %s176 = smul.addr %s175, 4
          %s177 = scalar_lea.vmem %s0, %s176
          // Predicated region
          $region25: #{discriminator_forward.11} parent=23 // pred_check
            _
          $region26: #{discriminator_forward.11} parent=23 // pred_check_branch
            %179 = sbr.rel (0) target = $region28
          $region27: #{discriminator_forward.11} parent=23 // pred_region
            // Predicated region
            $region29: #{discriminator_forward.11} parent=27 // pred_check
              _
            $region30: #{discriminator_forward.11} parent=27 // pred_check_branch
              %181 = sbr.rel (0) target = $region32
            $region31: #{discriminator_forward.11} parent=27 // pred_region
              loop: start=0, step=1, limit=1
              $region33: #{discriminator_forward.11} parent=31 // loop_pre_header
                _
              $region34: #{discriminator_forward.11} parent=31 // loop_header
                %s183 = sphi 0, %s187
                %p184 = scmp.ge.s32.totalorder %s183, 1
                %s188 = sphi %s177, %s177
                %s189 = sphi %s171, %s171
              $region35: #{discriminator_forward.11} parent=31 // loop_header_branch
                %186 = sbr.rel (%p184) target = $region39
              $region36: #{discriminator_forward.11} parent=31 // loop_body
                %v190 = vld [vmem:[%s188] sm:$0xff]
                %191 = vst [vmem:[%s189] sm:$0xff] %v190
                %v192 = vld [vmem:[%s188 + $0x8] sm:$0xff]
                %193 = vst [vmem:[%s189 + $0x8] sm:$0xff] %v192
                %v194 = vld [vmem:[%s188 + $0x40] sm:$0xff]
                %195 = vst [vmem:[%s189 + $0x10] sm:$0xff] %v194
                %v196 = vld [vmem:[%s188 + $0x48] sm:$0xff]
                %197 = vst [vmem:[%s189 + $0x18] sm:$0xff] %v196
                %v198 = vld [vmem:[%s188 + $0x80] sm:$0xff]
                %199 = vst [vmem:[%s189 + $0x20] sm:$0xff] %v198
                %v200 = vld [vmem:[%s188 + $0x88] sm:$0xff]
                %201 = vst [vmem:[%s189 + $0x28] sm:$0xff] %v200
                %v202 = vld [vmem:[%s188 + $0xc0] sm:$0xff]
                %203 = vst [vmem:[%s189 + $0x30] sm:$0xff] %v202
                %v204 = vld [vmem:[%s188 + $0xc8] sm:$0xff]
                %205 = vst [vmem:[%s189 + $0x38] sm:$0xff] %v204
              $region37: #{discriminator_forward.11} parent=31 // loop_footer
                %s187 = sadd.s32 1, %s183
              $region38: #{discriminator_forward.11} parent=31 // loop_footer_branch
                %182 = sbr.rel target = $region34
              $region39: #{discriminator_forward.11} parent=31 // loop_exit
                _
            $region32: #{discriminator_forward.11} parent=27 // pred_fallthru
              _
            // Predicated region
            $region40: #{discriminator_forward.11} parent=27 // pred_check
              _
            $region41: #{discriminator_forward.11} parent=27 // pred_check_branch
              %207 = sbr.rel target = $region43
            $region42: #{discriminator_forward.11} parent=27 // pred_region
              _
            $region43: #{discriminator_forward.11} parent=27 // pred_fallthru
              _
          $region28: #{discriminator_forward.11} parent=23 // pred_fallthru
            _
          %208 = vnop
        $region24: #{discriminator_forward.11} parent=19 // pred_fallthru
          _
        // Predicated region
        $region44: #{discriminator_forward.11} parent=19 // pred_check
          %p209 = pneg %p78
        $region45: #{discriminator_forward.11} parent=19 // pred_check_branch
          %211 = sbr.rel (%p209) target = $region47
        $region46: #{discriminator_forward.11} parent=19 // pred_region
          %s212 = smul.u32 64, %s18
          %s213 = smul.u32 2, %s17
          %p214 = scmp.lt.s32.totalorder %s212, 255
          %s215 = scalar_select %p214, %s212, 255
          %p216 = scmp.lt.s32.totalorder %s213, 1
          %s217 = scalar_select %p216, %s213, 1
          %s218 = smul.addr %s215, 2
          %s219 = sadd.s32 %s217, %s218
          %s220 = smul.addr %s219, 4
          %s221 = scalar_lea.vmem %s1, %s220
          %s222 = smul.u32 64, %s18
          %s223 = smul.u32 2, %s17
        $region47: #{discriminator_forward.11} parent=19 // pred_fallthru
          _
      $region20: #{discriminator_forward.11} parent=5 // pred_fallthru
        _
      %p224 = scmp.le.s32.totalorder 1, %s9
      %p225 = scmp.lt.s32.totalorder %s9, 5
      %p226 = pnand %p224, %p225
      %p227 = pneg %p226
      // Predicated region
      $region48: #{discriminator_forward.11} parent=5 // pred_check
        _
      $region49: #{discriminator_forward.11} parent=5 // pred_check_branch
        %229 = sbr.rel (%p226) target = $region51
      $region50: #{discriminator_forward.11} parent=5 // pred_region
        %s230 = ssub.s32 %s9, 1
        %s231 = sand.u32 %s43, 1
        %s232 = sand.u32 %s43, 1
        %s233 = smul.addr %s232, 64
        %s234 = scalar_lea.vmem [#allocation3], %s233
        // Predicated region
        $region52: #{discriminator_forward.11} parent=50 // pred_check
          %p235 = pneg %p56
        $region53: #{discriminator_forward.11} parent=50 // pred_check_branch
          %237 = sbr.rel (%p235) target = $region55
        $region54: #{discriminator_forward.11} parent=50 // pred_region
          _
        $region55: #{discriminator_forward.11} parent=50 // pred_fallthru
          _
        %s238 = sand.u32 %s43, 1
        %s239 = sand.u32 %s43, 1
        %s240 = smul.addr %s239, 64
        %s241 = scalar_lea.vmem [#allocation3], %s240
        %p242 = pneg %p56
        %p243 = pneg %p53
        %s244 = smul.u32 64, %s21
        %s245 = smul.u32 2, %s20
        %p246 = scmp.lt.s32.totalorder %s244, 255
        %s247 = scalar_select %p246, %s244, 255
        %p248 = scmp.lt.s32.totalorder %s245, 1
        %s249 = scalar_select %p248, %s245, 1
        %s250 = smul.addr %s247, 2
        %s251 = sadd.s32 %s249, %s250
        %s252 = smul.addr %s251, 4
        %s253 = scalar_lea.vmem %s1, %s252
        %p254 = pneg %p84
        %p255 = pneg %p81
        %s256 = smul.u32 2, %s20
        %p257 = scmp.lt.s32.totalorder %s256, 1
        %s258 = scalar_select %p257, %s256, 1
        %s259 = scalar_lea.vmem %s2, %s258
        %p260 = pneg %p110
        %p261 = pneg %p107
        %p262 = pneg %p138
        %p263 = pneg %p135
        %s264 = smul.u32 4, %s19
        %s265 = smul.u32 2, %s20
        %p266 = scmp.lt.s32.totalorder %s264, 3
        %s267 = scalar_select %p266, %s264, 3
        %p268 = scmp.lt.s32.totalorder %s265, 1
        %s269 = scalar_select %p268, %s265, 1
        %s270 = smul.addr %s267, 2
        %s271 = sadd.s32 %s269, %s270
        %s272 = smul.addr %s271, 4
        %s273 = scalar_lea.vmem %s3, %s272
        %s274 = smul.u32 4, %s19
        %s275 = smul.u32 4, %s21
        %s276 = smul.u32 64, %s21
        %s277 = smul.u32 2, %s20
        %p278 = scmp.lt.s32.totalorder %s276, 255
        %s279 = scalar_select %p278, %s276, 255
        %p280 = scmp.lt.s32.totalorder %s277, 1
        %s281 = scalar_select %p280, %s277, 1
        %s282 = smul.addr %s279, 2
        %s283 = sadd.s32 %s281, %s282
        %s284 = smul.addr %s283, 4
        %s285 = scalar_lea.vmem %s1, %s284
        %s286 = smul.u32 64, %s21
        %s287 = smul.u32 2, %s20
        %s288 = smul.u32 2, %s20
        %p289 = scmp.lt.s32.totalorder %s288, 1
        %s290 = scalar_select %p289, %s288, 1
        %s291 = scalar_lea.vmem %s2, %s290
        %s292 = smul.u32 2, %s20
        %s293 = smul.u32 4, %s19
        %s294 = smul.u32 2, %s20
        %p295 = scmp.lt.s32.totalorder %s293, 3
        %s296 = scalar_select %p295, %s293, 3
        %p297 = scmp.lt.s32.totalorder %s294, 1
        %s298 = scalar_select %p297, %s294, 1
        %s299 = smul.addr %s296, 2
        %s300 = sadd.s32 %s298, %s299
        %s301 = smul.addr %s300, 4
        %s302 = scalar_lea.vmem %s3, %s301
        %s303 = smul.u32 4, %s19
        %s304 = smul.u32 2, %s20
        %p305 = scmp.eq.s32.totalorder %s21, 0
        // Predicated region
        $region56: #{discriminator_forward.11} parent=50 // pred_check
          %p306 = pneg %p305
        $region57: #{discriminator_forward.11} parent=50 // pred_check_branch
          %308 = sbr.rel (%p306) target = $region59
        $region58: #{discriminator_forward.11} parent=50 // pred_region
          %309 = vst [vmem:[#allocation2] sm:$0xff] 0.0
          %310 = vst [vmem:[#allocation2 + $0x8] sm:$0xff] 0.0
          %311 = vst [vmem:[#allocation2 + $0x10] sm:$0xff] 0.0
          %312 = vst [vmem:[#allocation2 + $0x18] sm:$0xff] 0.0
          %313 = vst [vmem:[#allocation2 + $0x20] sm:$0xff] 0.0
          %314 = vst [vmem:[#allocation2 + $0x28] sm:$0xff] 0.0
          %315 = vst [vmem:[#allocation2 + $0x30] sm:$0xff] 0.0
          %316 = vst [vmem:[#allocation2 + $0x38] sm:$0xff] 0.0
        $region59: #{discriminator_forward.11} parent=50 // pred_fallthru
          _
        %v317 = vld [vmem:[#allocation2] sm:$0xff]
        %v318 = vld [vmem:[#allocation2 + $0x8] sm:$0xff]
        %v319 = vld [vmem:[#allocation2 + $0x10] sm:$0xff]
        %v320 = vld [vmem:[#allocation2 + $0x18] sm:$0xff]
        %v321 = vld [vmem:[#allocation2 + $0x20] sm:$0xff]
        %v322 = vld [vmem:[#allocation2 + $0x28] sm:$0xff]
        %v323 = vld [vmem:[#allocation2 + $0x30] sm:$0xff]
        %v324 = vld [vmem:[#allocation2 + $0x38] sm:$0xff]
        %v325 = vld [vmem:[%s234] sm:$0xff]
        %v326 = vld [vmem:[%s234 + $0x8] sm:$0xff]
        %v327 = vld [vmem:[%s234 + $0x10] sm:$0xff]
        %v328 = vld [vmem:[%s234 + $0x18] sm:$0xff]
        %v329 = vld [vmem:[%s234 + $0x20] sm:$0xff]
        %v330 = vld [vmem:[%s234 + $0x28] sm:$0xff]
        %v331 = vld [vmem:[%s234 + $0x30] sm:$0xff]
        %v332 = vld [vmem:[%s234 + $0x38] sm:$0xff]
        %v333 = vld [vmem:[%s285] sm:$0xff]
        %v334 = vld [vmem:[%s285 + $0x8] sm:$0xff]
        %v335 = vld [vmem:[%s285 + $0x10] sm:$0xff]
        %v336 = vld [vmem:[%s285 + $0x18] sm:$0xff]
        %v337 = vld [vmem:[%s285 + $0x20] sm:$0xff]
        %v338 = vld [vmem:[%s285 + $0x28] sm:$0xff]
        %v339 = vld [vmem:[%s285 + $0x30] sm:$0xff]
        %v340 = vld [vmem:[%s285 + $0x38] sm:$0xff]
        %v341 = vld [vmem:[%s285 + $0x40] sm:$0xff]
        %v342 = vld [vmem:[%s285 + $0x48] sm:$0xff]
        %v343 = vld [vmem:[%s285 + $0x50] sm:$0xff]
        %v344 = vld [vmem:[%s285 + $0x58] sm:$0xff]
        %v345 = vld [vmem:[%s285 + $0x60] sm:$0xff]
        %v346 = vld [vmem:[%s285 + $0x68] sm:$0xff]
        %v347 = vld [vmem:[%s285 + $0x70] sm:$0xff]
        %v348 = vld [vmem:[%s285 + $0x78] sm:$0xff]
        %v349 = vld [vmem:[%s285 + $0x80] sm:$0xff]
        %v350 = vld [vmem:[%s285 + $0x88] sm:$0xff]
        %v351 = vld [vmem:[%s285 + $0x90] sm:$0xff]
        %v352 = vld [vmem:[%s285 + $0x98] sm:$0xff]
        %v353 = vld [vmem:[%s285 + $0xa0] sm:$0xff]
        %v354 = vld [vmem:[%s285 + $0xa8] sm:$0xff]
        %v355 = vld [vmem:[%s285 + $0xb0] sm:$0xff]
        %v356 = vld [vmem:[%s285 + $0xb8] sm:$0xff]
        %v357 = vld [vmem:[%s285 + $0xc0] sm:$0xff]
        %v358 = vld [vmem:[%s285 + $0xc8] sm:$0xff]
        %v359 = vld [vmem:[%s285 + $0xd0] sm:$0xff]
        %v360 = vld [vmem:[%s285 + $0xd8] sm:$0xff]
        %v361 = vld [vmem:[%s285 + $0xe0] sm:$0xff]
        %v362 = vld [vmem:[%s285 + $0xe8] sm:$0xff]
        %v363 = vld [vmem:[%s285 + $0xf0] sm:$0xff]
        %v364 = vld [vmem:[%s285 + $0xf8] sm:$0xff]
        %v365 = vld [vmem:[%s285 + $0x100] sm:$0xff]
        %v366 = vld [vmem:[%s285 + $0x108] sm:$0xff]
        %v367 = vld [vmem:[%s285 + $0x110] sm:$0xff]
        %v368 = vld [vmem:[%s285 + $0x118] sm:$0xff]
        %v369 = vld [vmem:[%s285 + $0x120] sm:$0xff]
        %v370 = vld [vmem:[%s285 + $0x128] sm:$0xff]
        %v371 = vld [vmem:[%s285 + $0x130] sm:$0xff]
        %v372 = vld [vmem:[%s285 + $0x138] sm:$0xff]
        %v373 = vld [vmem:[%s285 + $0x140] sm:$0xff]
        %v374 = vld [vmem:[%s285 + $0x148] sm:$0xff]
        %v375 = vld [vmem:[%s285 + $0x150] sm:$0xff]
        %v376 = vld [vmem:[%s285 + $0x158] sm:$0xff]
        %v377 = vld [vmem:[%s285 + $0x160] sm:$0xff]
        %v378 = vld [vmem:[%s285 + $0x168] sm:$0xff]
        %v379 = vld [vmem:[%s285 + $0x170] sm:$0xff]
        %v380 = vld [vmem:[%s285 + $0x178] sm:$0xff]
        %v381 = vld [vmem:[%s285 + $0x180] sm:$0xff]
        %v382 = vld [vmem:[%s285 + $0x188] sm:$0xff]
        %v383 = vld [vmem:[%s285 + $0x190] sm:$0xff]
        %v384 = vld [vmem:[%s285 + $0x198] sm:$0xff]
        %v385 = vld [vmem:[%s285 + $0x1a0] sm:$0xff]
        %v386 = vld [vmem:[%s285 + $0x1a8] sm:$0xff]
        %v387 = vld [vmem:[%s285 + $0x1b0] sm:$0xff]
        %v388 = vld [vmem:[%s285 + $0x1b8] sm:$0xff]
        %v389 = vld [vmem:[%s285 + $0x1c0] sm:$0xff]
        %v390 = vld [vmem:[%s285 + $0x1c8] sm:$0xff]
        %v391 = vld [vmem:[%s285 + $0x1d0] sm:$0xff]
        %v392 = vld [vmem:[%s285 + $0x1d8] sm:$0xff]
        %v393 = vld [vmem:[%s285 + $0x1e0] sm:$0xff]
        %v394 = vld [vmem:[%s285 + $0x1e8] sm:$0xff]
        %v395 = vld [vmem:[%s285 + $0x1f0] sm:$0xff]
        %v396 = vld [vmem:[%s285 + $0x1f8] sm:$0xff]
        %v405 = vunpack.c.l.b16 %v325
        %v406 = vunpack.c.h.b16 %v325
        %v407 = vunpack.c.l.b16 %v326
        %v408 = vunpack.c.h.b16 %v326
        %v409 = vunpack.c.l.b16 %v327
        %v410 = vunpack.c.h.b16 %v327
        %v411 = vunpack.c.l.b16 %v328
        %v412 = vunpack.c.h.b16 %v328
        %v413 = vunpack.c.l.b16 %v329
        %v414 = vunpack.c.h.b16 %v329
        %v415 = vunpack.c.l.b16 %v330
        %v416 = vunpack.c.h.b16 %v330
        %v417 = vunpack.c.l.b16 %v331
        %v418 = vunpack.c.h.b16 %v331
        %v419 = vunpack.c.l.b16 %v332
        %v420 = vunpack.c.h.b16 %v332
        %v421 = vpack.c.b16 %v409, %v405
        %v422 = vpack.c.b16 %v410, %v406
        %v423 = vpack.c.b16 %v411, %v407
        %v424 = vpack.c.b16 %v412, %v408
        %v425 = vpack.c.b16 %v417, %v413
        %v426 = vpack.c.b16 %v418, %v414
        %v427 = vpack.c.b16 %v419, %v415
        %v428 = vpack.c.b16 %v420, %v416
        %v501 = vunpack.c.l.b16 %v333
        %v502 = vunpack.c.h.b16 %v333
        %v503 = vunpack.c.l.b16 %v334
        %v504 = vunpack.c.h.b16 %v334
        %v505 = vunpack.c.l.b16 %v335
        %v506 = vunpack.c.h.b16 %v335
        %v507 = vunpack.c.l.b16 %v336
        %v508 = vunpack.c.h.b16 %v336
        %v509 = vunpack.c.l.b16 %v337
        %v510 = vunpack.c.h.b16 %v337
        %v511 = vunpack.c.l.b16 %v338
        %v512 = vunpack.c.h.b16 %v338
        %v513 = vunpack.c.l.b16 %v339
        %v514 = vunpack.c.h.b16 %v339
        %v515 = vunpack.c.l.b16 %v340
        %v516 = vunpack.c.h.b16 %v340
        %v517 = vunpack.c.l.b16 %v341
        %v518 = vunpack.c.h.b16 %v341
        %v519 = vunpack.c.l.b16 %v342
        %v520 = vunpack.c.h.b16 %v342
        %v521 = vunpack.c.l.b16 %v343
        %v522 = vunpack.c.h.b16 %v343
        %v523 = vunpack.c.l.b16 %v344
        %v524 = vunpack.c.h.b16 %v344
        %v525 = vunpack.c.l.b16 %v345
        %v526 = vunpack.c.h.b16 %v345
        %v527 = vunpack.c.l.b16 %v346
        %v528 = vunpack.c.h.b16 %v346
        %v529 = vunpack.c.l.b16 %v347
        %v530 = vunpack.c.h.b16 %v347
        %v531 = vunpack.c.l.b16 %v348
        %v532 = vunpack.c.h.b16 %v348
        %v533 = vunpack.c.l.b16 %v349
        %v534 = vunpack.c.h.b16 %v349
        %v535 = vunpack.c.l.b16 %v350
        %v536 = vunpack.c.h.b16 %v350
        %v537 = vunpack.c.l.b16 %v351
        %v538 = vunpack.c.h.b16 %v351
        %v539 = vunpack.c.l.b16 %v352
        %v540 = vunpack.c.h.b16 %v352
        %v541 = vunpack.c.l.b16 %v353
        %v542 = vunpack.c.h.b16 %v353
        %v543 = vunpack.c.l.b16 %v354
        %v544 = vunpack.c.h.b16 %v354
        %v545 = vunpack.c.l.b16 %v355
        %v546 = vunpack.c.h.b16 %v355
        %v547 = vunpack.c.l.b16 %v356
        %v548 = vunpack.c.h.b16 %v356
        %v549 = vunpack.c.l.b16 %v357
        %v550 = vunpack.c.h.b16 %v357
        %v551 = vunpack.c.l.b16 %v358
        %v552 = vunpack.c.h.b16 %v358
        %v553 = vunpack.c.l.b16 %v359
        %v554 = vunpack.c.h.b16 %v359
        %v555 = vunpack.c.l.b16 %v360
        %v556 = vunpack.c.h.b16 %v360
        %v557 = vunpack.c.l.b16 %v361
        %v558 = vunpack.c.h.b16 %v361
        %v559 = vunpack.c.l.b16 %v362
        %v560 = vunpack.c.h.b16 %v362
        %v561 = vunpack.c.l.b16 %v363
        %v562 = vunpack.c.h.b16 %v363
        %v563 = vunpack.c.l.b16 %v364
        %v564 = vunpack.c.h.b16 %v364
        %v565 = vunpack.c.l.b16 %v365
        %v566 = vunpack.c.h.b16 %v365
        %v567 = vunpack.c.l.b16 %v366
        %v568 = vunpack.c.h.b16 %v366
        %v569 = vunpack.c.l.b16 %v367
        %v570 = vunpack.c.h.b16 %v367
        %v571 = vunpack.c.l.b16 %v368
        %v572 = vunpack.c.h.b16 %v368
        %v573 = vunpack.c.l.b16 %v369
        %v574 = vunpack.c.h.b16 %v369
        %v575 = vunpack.c.l.b16 %v370
        %v576 = vunpack.c.h.b16 %v370
        %v577 = vunpack.c.l.b16 %v371
        %v578 = vunpack.c.h.b16 %v371
        %v579 = vunpack.c.l.b16 %v372
        %v580 = vunpack.c.h.b16 %v372
        %v581 = vunpack.c.l.b16 %v373
        %v582 = vunpack.c.h.b16 %v373
        %v583 = vunpack.c.l.b16 %v374
        %v584 = vunpack.c.h.b16 %v374
        %v585 = vunpack.c.l.b16 %v375
        %v586 = vunpack.c.h.b16 %v375
        %v587 = vunpack.c.l.b16 %v376
        %v588 = vunpack.c.h.b16 %v376
        %v589 = vunpack.c.l.b16 %v377
        %v590 = vunpack.c.h.b16 %v377
        %v591 = vunpack.c.l.b16 %v378
        %v592 = vunpack.c.h.b16 %v378
        %v593 = vunpack.c.l.b16 %v379
        %v594 = vunpack.c.h.b16 %v379
        %v595 = vunpack.c.l.b16 %v380
        %v596 = vunpack.c.h.b16 %v380
        %v597 = vunpack.c.l.b16 %v381
        %v598 = vunpack.c.h.b16 %v381
        %v599 = vunpack.c.l.b16 %v382
        %v600 = vunpack.c.h.b16 %v382
        %v601 = vunpack.c.l.b16 %v383
        %v602 = vunpack.c.h.b16 %v383
        %v603 = vunpack.c.l.b16 %v384
        %v604 = vunpack.c.h.b16 %v384
        %v605 = vunpack.c.l.b16 %v385
        %v606 = vunpack.c.h.b16 %v385
        %v607 = vunpack.c.l.b16 %v386
        %v608 = vunpack.c.h.b16 %v386
        %v609 = vunpack.c.l.b16 %v387
        %v610 = vunpack.c.h.b16 %v387
        %v611 = vunpack.c.l.b16 %v388
        %v612 = vunpack.c.h.b16 %v388
        %v613 = vunpack.c.l.b16 %v389
        %v614 = vunpack.c.h.b16 %v389
        %v615 = vunpack.c.l.b16 %v390
        %v616 = vunpack.c.h.b16 %v390
        %v617 = vunpack.c.l.b16 %v391
        %v618 = vunpack.c.h.b16 %v391
        %v619 = vunpack.c.l.b16 %v392
        %v620 = vunpack.c.h.b16 %v392
        %v621 = vunpack.c.l.b16 %v393
        %v622 = vunpack.c.h.b16 %v393
        %v623 = vunpack.c.l.b16 %v394
        %v624 = vunpack.c.h.b16 %v394
        %v625 = vunpack.c.l.b16 %v395
        %v626 = vunpack.c.h.b16 %v395
        %v627 = vunpack.c.l.b16 %v396
        %v628 = vunpack.c.h.b16 %v396
        %v629 = vpack.c.b16 %v503, %v501
        %v630 = vpack.c.b16 %v504, %v502
        %v631 = vpack.c.b16 %v507, %v505
        %v632 = vpack.c.b16 %v508, %v506
        %v633 = vpack.c.b16 %v511, %v509
        %v634 = vpack.c.b16 %v512, %v510
        %v635 = vpack.c.b16 %v515, %v513
        %v636 = vpack.c.b16 %v516, %v514
        %v637 = vpack.c.b16 %v519, %v517
        %v638 = vpack.c.b16 %v520, %v518
        %v639 = vpack.c.b16 %v523, %v521
        %v640 = vpack.c.b16 %v524, %v522
        %v641 = vpack.c.b16 %v527, %v525
        %v642 = vpack.c.b16 %v528, %v526
        %v643 = vpack.c.b16 %v531, %v529
        %v644 = vpack.c.b16 %v532, %v530
        %v645 = vpack.c.b16 %v535, %v533
        %v646 = vpack.c.b16 %v536, %v534
        %v647 = vpack.c.b16 %v539, %v537
        %v648 = vpack.c.b16 %v540, %v538
        %v649 = vpack.c.b16 %v543, %v541
        %v650 = vpack.c.b16 %v544, %v542
        %v651 = vpack.c.b16 %v547, %v545
        %v652 = vpack.c.b16 %v548, %v546
        %v653 = vpack.c.b16 %v551, %v549
        %v654 = vpack.c.b16 %v552, %v550
        %v655 = vpack.c.b16 %v555, %v553
        %v656 = vpack.c.b16 %v556, %v554
        %v657 = vpack.c.b16 %v559, %v557
        %v658 = vpack.c.b16 %v560, %v558
        %v659 = vpack.c.b16 %v563, %v561
        %v660 = vpack.c.b16 %v564, %v562
        %v661 = vpack.c.b16 %v567, %v565
        %v662 = vpack.c.b16 %v568, %v566
        %v663 = vpack.c.b16 %v571, %v569
        %v664 = vpack.c.b16 %v572, %v570
        %v665 = vpack.c.b16 %v575, %v573
        %v666 = vpack.c.b16 %v576, %v574
        %v667 = vpack.c.b16 %v579, %v577
        %v668 = vpack.c.b16 %v580, %v578
        %v669 = vpack.c.b16 %v583, %v581
        %v670 = vpack.c.b16 %v584, %v582
        %v671 = vpack.c.b16 %v587, %v585
        %v672 = vpack.c.b16 %v588, %v586
        %v673 = vpack.c.b16 %v591, %v589
        %v674 = vpack.c.b16 %v592, %v590
        %v675 = vpack.c.b16 %v595, %v593
        %v676 = vpack.c.b16 %v596, %v594
        %v677 = vpack.c.b16 %v599, %v597
        %v678 = vpack.c.b16 %v600, %v598
        %v679 = vpack.c.b16 %v603, %v601
        %v680 = vpack.c.b16 %v604, %v602
        %v681 = vpack.c.b16 %v607, %v605
        %v682 = vpack.c.b16 %v608, %v606
        %v683 = vpack.c.b16 %v611, %v609
        %v684 = vpack.c.b16 %v612, %v610
        %v685 = vpack.c.b16 %v615, %v613
        %v686 = vpack.c.b16 %v616, %v614
        %v687 = vpack.c.b16 %v619, %v617
        %v688 = vpack.c.b16 %v620, %v618
        %v689 = vpack.c.b16 %v623, %v621
        %v690 = vpack.c.b16 %v624, %v622
        %v691 = vpack.c.b16 %v627, %v625
        %v692 = vpack.c.b16 %v628, %v626
        %757 = vmatprep.subr.bf16.mxu0 %v630
        %758 = vmatpush1.bf16.msra.mxu0 %v629
        %759 = vmatprep.subr.bf16.mxu0 %v632
        %760 = vmatpush1.bf16.msra.mxu0 %v631
        %761 = vmatprep.subr.bf16.mxu0 %v634
        %762 = vmatpush1.bf16.msra.mxu0 %v633
        %763 = vmatprep.subr.bf16.mxu0 %v636
        %764 = vmatpush1.bf16.msra.mxu0 %v635
        %765 = vmatprep.subr.bf16.mxu0 %v638
        %766 = vmatpush1.bf16.msra.mxu0 %v637
        %767 = vmatprep.subr.bf16.mxu0 %v640
        %768 = vmatpush1.bf16.msra.mxu0 %v639
        %769 = vmatprep.subr.bf16.mxu0 %v642
        %770 = vmatpush1.bf16.msra.mxu0 %v641
        %771 = vmatprep.subr.bf16.mxu0 %v644
        %772 = vmatpush1.bf16.msra.mxu0 %v643
        %773 = vmatprep.subr.bf16.mxu0 %v646
        %774 = vmatpush1.bf16.msra.mxu0 %v645
        %775 = vmatprep.subr.bf16.mxu0 %v648
        %776 = vmatpush1.bf16.msra.mxu0 %v647
        %777 = vmatprep.subr.bf16.mxu0 %v650
        %778 = vmatpush1.bf16.msra.mxu0 %v649
        %779 = vmatprep.subr.bf16.mxu0 %v652
        %780 = vmatpush1.bf16.msra.mxu0 %v651
        %781 = vmatprep.subr.bf16.mxu0 %v654
        %782 = vmatpush1.bf16.msra.mxu0 %v653
        %783 = vmatprep.subr.bf16.mxu0 %v656
        %784 = vmatpush1.bf16.msra.mxu0 %v655
        %785 = vmatprep.subr.bf16.mxu0 %v658
        %786 = vmatpush1.bf16.msra.mxu0 %v657
        %787 = vmatprep.subr.bf16.mxu0 %v660
        %788 = vmatpush1.bf16.msra.mxu0 %v659
        %789 = vmatprep.mubr.bf16.mxu0 %v422
        %790 = vmatmul.mubr.bf16.gmra.mrb[0].mxu0 %v421
        %v791 = vpop.f32.mrb[0].mxu0
        %v792 = vadd.f32 0.0, %v791
        %v793 = vpop.f32.mrb[0].mxu0
        %v794 = vadd.f32 0.0, %v793
        %v795 = vpop.f32.mrb[0].mxu0
        %v796 = vadd.f32 0.0, %v795
        %v797 = vpop.f32.mrb[0].mxu0
        %v798 = vadd.f32 0.0, %v797
        %799 = vmatprep.mubr.bf16.mxu0 %v426
        %800 = vmatmul.mubr.bf16.gmra.mrb[0].mxu0 %v425
        %v801 = vpop.f32.mrb[0].mxu0
        %v802 = vadd.f32 0.0, %v801
        %v803 = vpop.f32.mrb[0].mxu0
        %v804 = vadd.f32 0.0, %v803
        %v805 = vpop.f32.mrb[0].mxu0
        %v806 = vadd.f32 0.0, %v805
        %v807 = vpop.f32.mrb[0].mxu0
        %v808 = vadd.f32 0.0, %v807
        %809 = vdwg.mxu0
        %810 = vmatprep.subr.bf16.mxu0 %v662
        %811 = vmatpush1.bf16.msra.mxu0 %v661
        %812 = vmatprep.subr.bf16.mxu0 %v664
        %813 = vmatpush1.bf16.msra.mxu0 %v663
        %814 = vmatprep.subr.bf16.mxu0 %v666
        %815 = vmatpush1.bf16.msra.mxu0 %v665
        %816 = vmatprep.subr.bf16.mxu0 %v668
        %817 = vmatpush1.bf16.msra.mxu0 %v667
        %818 = vmatprep.subr.bf16.mxu0 %v670
        %819 = vmatpush1.bf16.msra.mxu0 %v669
        %820 = vmatprep.subr.bf16.mxu0 %v672
        %821 = vmatpush1.bf16.msra.mxu0 %v671
        %822 = vmatprep.subr.bf16.mxu0 %v674
        %823 = vmatpush1.bf16.msra.mxu0 %v673
        %824 = vmatprep.subr.bf16.mxu0 %v676
        %825 = vmatpush1.bf16.msra.mxu0 %v675
        %826 = vmatprep.subr.bf16.mxu0 %v678
        %827 = vmatpush1.bf16.msra.mxu0 %v677
        %828 = vmatprep.subr.bf16.mxu0 %v680
        %829 = vmatpush1.bf16.msra.mxu0 %v679
        %830 = vmatprep.subr.bf16.mxu0 %v682
        %831 = vmatpush1.bf16.msra.mxu0 %v681
        %832 = vmatprep.subr.bf16.mxu0 %v684
        %833 = vmatpush1.bf16.msra.mxu0 %v683
        %834 = vmatprep.subr.bf16.mxu0 %v686
        %835 = vmatpush1.bf16.msra.mxu0 %v685
        %836 = vmatprep.subr.bf16.mxu0 %v688
        %837 = vmatpush1.bf16.msra.mxu0 %v687
        %838 = vmatprep.subr.bf16.mxu0 %v690
        %839 = vmatpush1.bf16.msra.mxu0 %v689
        %840 = vmatprep.subr.bf16.mxu0 %v692
        %841 = vmatpush1.bf16.msra.mxu0 %v691
        %842 = vmatprep.mubr.bf16.mxu0 %v424
        %843 = vmatmul.mubr.bf16.gmra.mrb[0].mxu0 %v423
        %v844 = vpop.f32.mrb[0].mxu0
        %v845 = vadd.f32 %v792, %v844
        %v846 = vpop.f32.mrb[0].mxu0
        %v847 = vadd.f32 %v794, %v846
        %v848 = vpop.f32.mrb[0].mxu0
        %v849 = vadd.f32 %v796, %v848
        %v850 = vpop.f32.mrb[0].mxu0
        %v851 = vadd.f32 %v798, %v850
        %852 = vmatprep.mubr.bf16.mxu0 %v428
        %853 = vmatmul.mubr.bf16.gmra.mrb[0].mxu0 %v427
        %v854 = vpop.f32.mrb[0].mxu0
        %v855 = vadd.f32 %v802, %v854
        %v856 = vpop.f32.mrb[0].mxu0
        %v857 = vadd.f32 %v804, %v856
        %v858 = vpop.f32.mrb[0].mxu0
        %v859 = vadd.f32 %v806, %v858
        %v860 = vpop.f32.mrb[0].mxu0
        %v861 = vadd.f32 %v808, %v860
        %862 = vdwg.mxu0
        %v863 = vadd.f32 %v317, %v845
        %v864 = vadd.f32 %v318, %v847
        %v865 = vadd.f32 %v319, %v849
        %v866 = vadd.f32 %v320, %v851
        %v867 = vadd.f32 %v321, %v855
        %v868 = vadd.f32 %v322, %v857
        %v869 = vadd.f32 %v323, %v859
        %v870 = vadd.f32 %v324, %v861
        %871 = vst [vmem:[#allocation2] sm:$0xff] %v863
        %872 = vst [vmem:[#allocation2 + $0x8] sm:$0xff] %v864
        %873 = vst [vmem:[#allocation2 + $0x10] sm:$0xff] %v865
        %874 = vst [vmem:[#allocation2 + $0x18] sm:$0xff] %v866
        %875 = vst [vmem:[#allocation2 + $0x20] sm:$0xff] %v867
        %876 = vst [vmem:[#allocation2 + $0x28] sm:$0xff] %v868
        %877 = vst [vmem:[#allocation2 + $0x30] sm:$0xff] %v869
        %878 = vst [vmem:[#allocation2 + $0x38] sm:$0xff] %v870
        %p879 = scmp.eq.s32.totalorder %s21, 3
        // Predicated region
        $region60: #{discriminator_forward.11} parent=50 // pred_check
          %p880 = pneg %p879
        $region61: #{discriminator_forward.11} parent=50 // pred_check_branch
          %882 = sbr.rel (%p880) target = $region63
        $region62: #{discriminator_forward.11} parent=50 // pred_region
          %v883 = vld [vmem:[#allocation2] sm:$0xff]
          %v884 = vld [vmem:[#allocation2 + $0x8] sm:$0xff]
          %v885 = vld [vmem:[#allocation2 + $0x10] sm:$0xff]
          %v886 = vld [vmem:[#allocation2 + $0x18] sm:$0xff]
          %v887 = vld [vmem:[#allocation2 + $0x20] sm:$0xff]
          %v888 = vld [vmem:[#allocation2 + $0x28] sm:$0xff]
          %v889 = vld [vmem:[#allocation2 + $0x30] sm:$0xff]
          %v890 = vld [vmem:[#allocation2 + $0x38] sm:$0xff]
          %v891 = vld [vmem:[%s291] sm:$0x3]
          %v893 = vlaneseq
          %v894 = vshrl.u32 %v893, 7
          %v895 = vsub.s32 0, %v894
          %v896 = vrot.slane %v891, %v895
          %v897 = vlaneseq
          %v898 = vshrl.u32 %v897, 7
          %v899 = vsub.s32 1, %v898
          %v900 = vrot.slane %v891, %v899
          %v903 = vadd.f32 %v883, %v896
          %v904 = vadd.f32 %v884, %v900
          %v905 = vadd.f32 %v885, %v896
          %v906 = vadd.f32 %v886, %v900
          %v907 = vadd.f32 %v887, %v896
          %v908 = vadd.f32 %v888, %v900
          %v909 = vadd.f32 %v889, %v896
          %v910 = vadd.f32 %v890, %v900
          %v911 = vpack.c.bf16 %v905, %v903
          %v912 = vpack.c.bf16 %v906, %v904
          %v913 = vpack.c.bf16 %v909, %v907
          %v914 = vpack.c.bf16 %v910, %v908
          %v919 = vunpack.c.l.b16 %v911
          %v920 = vunpack.c.l.b16 %v912
          %v921 = vunpack.c.h.b16 %v911
          %v922 = vunpack.c.h.b16 %v912
          %v923 = vunpack.c.l.b16 %v913
          %v924 = vunpack.c.l.b16 %v914
          %v925 = vunpack.c.h.b16 %v913
          %v926 = vunpack.c.h.b16 %v914
          %v927 = vpack.c.b16 %v920, %v919
          %v928 = vpack.c.b16 %v922, %v921
          %v929 = vpack.c.b16 %v924, %v923
          %v930 = vpack.c.b16 %v926, %v925
          %935 = vst [vmem:[%s302] sm:$0xff] %v927
          %936 = vst [vmem:[%s302 + $0x8] sm:$0xff] %v928
          %937 = vst [vmem:[%s302 + $0x10] sm:$0xff] %v929
          %938 = vst [vmem:[%s302 + $0x18] sm:$0xff] %v930
        $region63: #{discriminator_forward.11} parent=50 // pred_fallthru
          _
        %s939 = smul.u32 4, %s19
        %s940 = smul.u32 2, %s20
        %p941 = scmp.lt.s32.totalorder %s939, 3
        %s942 = scalar_select %p941, %s939, 3
        %p943 = scmp.lt.s32.totalorder %s940, 1
        %s944 = scalar_select %p943, %s940, 1
        %s945 = smul.addr %s942, 2
        %s946 = sadd.s32 %s944, %s945
        %s947 = smul.addr %s946, 4
        %s948 = scalar_lea.vmem %s3, %s947
        // Predicated region
        $region64: #{discriminator_forward.11} parent=50 // pred_check
          %p949 = pneg %p135
        $region65: #{discriminator_forward.11} parent=50 // pred_check_branch
          %951 = sbr.rel (%p949) target = $region67
        $region66: #{discriminator_forward.11} parent=50 // pred_region
          %s952 = smul.u32 4, %s19
          %s953 = smul.u32 2, %s20
        $region67: #{discriminator_forward.11} parent=50 // pred_fallthru
          _
        // Predicated region
        $region68: #{discriminator_forward.11} parent=50 // pred_check
          %p954 = pneg %p135
        $region69: #{discriminator_forward.11} parent=50 // pred_check_branch
          %956 = sbr.rel (%p954) target = $region71
        $region70: #{discriminator_forward.11} parent=50 // pred_region
          %s957 = smul.u32 4, %s19
          %s958 = smul.u32 2, %s20
          %p959 = scmp.lt.s32.totalorder %s957, 3
          %s960 = scalar_select %p959, %s957, 3
          %p961 = scmp.lt.s32.totalorder %s958, 1
          %s962 = scalar_select %p961, %s958, 1
          %s963 = smul.addr %s960, 2
          %s964 = sadd.s32 %s962, %s963
          %s965 = smul.addr %s964, 4
          %s966 = scalar_lea.vmem %s3, %s965
        $region71: #{discriminator_forward.11} parent=50 // pred_fallthru
          _
      $region51: #{discriminator_forward.11} parent=5 // pred_fallthru
        _
      %p967 = scmp.le.s32.totalorder 2, %s9
      // Predicated region
      $region72: #{discriminator_forward.11} parent=5 // pred_check
        %p968 = pneg %p967
      $region73: #{discriminator_forward.11} parent=5 // pred_check_branch
        %970 = sbr.rel (%p968) target = $region75
      $region74: #{discriminator_forward.11} parent=5 // pred_region
        %s971 = ssub.s32 %s9, 2
      $region75: #{discriminator_forward.11} parent=5 // pred_fallthru
        _
    $region6: #{discriminator_forward.11} parent=1 // loop_footer
      %s13 = sadd.s32 1, %s9
    $region7: #{discriminator_forward.11} parent=1 // loop_footer_branch
      %8 = sbr.rel target = $region3
    $region8: #{discriminator_forward.11} parent=1 // loop_exit
      _

// kernel: discriminator_forward.12
$region0: #{discriminator_forward.12}
  #allocation0 [shape = 'u32[]', space=smem, size = 0x4, offset = 0x4, fixed_abs, tag = 'smem constant byte address 0x4 - core index']
  #allocation1 [shape = 'u32[144,128]{1,0:T(1,128)}', space=vmem, size = 0x12000, scoped, tag = 'internal scratch']
  %s0 = inlined_call_operand.vmem [shape: bf16[2,16,256], index: 0, kind: input, shape index: {}]
  %s1 = inlined_call_operand.vmem [shape: f32[256,32], index: 1, kind: input, shape index: {}]
  %s2 = inlined_call_operand.vmem [shape: f32[32,256], index: 2, kind: input, shape index: {}]
  %s3 = inlined_call_operand.vmem [shape: f32[1,256], index: 3, kind: input, shape index: {}]
  %s4 = inlined_call_operand.vmem [shape: f32[1,256], index: 4, kind: input, shape index: {}]
  %s5 = inlined_call_operand.vmem [shape: bf16[2,16,256], index: 5, kind: output, shape index: {}]
  %s6 = sld [smem:[#allocation0]]
  $region53: #{discriminator_forward.12} parent=0
    _
  %s8 = ssub.s32 1, %s6
  %s9 = scalar_select 0, %s8, %s6
  loop: start=0, step=1, limit=4
  $region2: #{discriminator_forward.12} parent=0 // loop_pre_header
    _
  $region3: #{discriminator_forward.12} parent=0 // loop_header
    %s11 = sphi 0, %s15
    %p12 = scmp.ge.s32.totalorder %s11, 4
    %s21 = sphi 0, %s23
    %s24 = sphi 0, %s21
    %s25 = sphi 0, %s24
    %s41 = sphi 0, %s25
    %s45 = sphi 0, %s45
    %s47 = sphi 0, %s45
    %s48 = sphi 0, %s47
    %s62 = sphi 0, %s48
    %s66 = sphi 0, %s66
    %s68 = sphi 0, %s66
    %s69 = sphi 0, %s68
    %s83 = sphi 0, %s69
    %s87 = sphi 0, %s87
    %s89 = sphi 0, %s87
    %s90 = sphi 0, %s89
    %s104 = sphi 0, %s90
    %s108 = sphi 0, %s108
    %s110 = sphi 0, %s108
    %s111 = sphi 0, %s110
    %s125 = sphi 0, %s111
    %s131 = sphi 0, %s133
    %s134 = sphi 0, %s131
    %s135 = sphi 0, %s134
    %s151 = sphi 0, %s135
  $region4: #{discriminator_forward.12} parent=0 // loop_header_branch
    %14 = sbr.rel (%p12) target = $region8
  $region5: #{discriminator_forward.12} parent=0 // loop_body
    %s16 = ssub.s32 %s11, 1
    %s17 = ssub.s32 %s11, 2
    %s18 = sadd.s32 %s11, 1
    %s19 = ssub.s32 %s11, %s18
    %p20 = scmp.eq.s32.totalorder %s19, 0
    %s22 = sadd.s32 %s21, 1
    %s23 = scalar_select %p20, %s21, %s22
    %p26 = pneg %p20
    %p27 = scmp.eq.s32.totalorder %s11, 1
    %p28 = por %p26, %p27
    %p29 = scmp.ne.s32.totalorder %s21, %s24
    %p30 = scmp.eq.s32.totalorder %s11, 0
    %p31 = por %p29, %p30
    %p32 = scmp.ne.s32.totalorder %s21, %s24
    %p33 = scmp.eq.s32.totalorder %s16, 1
    %p34 = por %p32, %p33
    %p35 = scmp.ne.s32.totalorder %s24, %s25
    %p36 = scmp.eq.s32.totalorder %s16, 0
    %p37 = por %p35, %p36
    %p38 = scmp.ne.s32.totalorder %s24, %s25
    %p39 = scmp.eq.s32.totalorder %s17, 1
    %p40 = por %p38, %p39
    %p42 = scmp.ne.s32.totalorder %s25, %s41
    %p43 = scmp.eq.s32.totalorder %s17, 0
    %p44 = por %p42, %p43
    %s46 = sadd.s32 %s45, 1
    %p49 = scmp.eq.s32.totalorder %s11, 1
    %p50 = scmp.ne.s32.totalorder %s45, %s47
    %p51 = scmp.eq.s32.totalorder %s11, 0
    %p52 = por %p50, %p51
    %p53 = scmp.ne.s32.totalorder %s45, %s47
    %p54 = scmp.eq.s32.totalorder %s16, 1
    %p55 = por %p53, %p54
    %p56 = scmp.ne.s32.totalorder %s47, %s48
    %p57 = scmp.eq.s32.totalorder %s16, 0
    %p58 = por %p56, %p57
    %p59 = scmp.ne.s32.totalorder %s47, %s48
    %p60 = scmp.eq.s32.totalorder %s17, 1
    %p61 = por %p59, %p60
    %p63 = scmp.ne.s32.totalorder %s48, %s62
    %p64 = scmp.eq.s32.totalorder %s17, 0
    %p65 = por %p63, %p64
    %s67 = sadd.s32 %s66, 1
    %p70 = scmp.eq.s32.totalorder %s11, 1
    %p71 = scmp.ne.s32.totalorder %s66, %s68
    %p72 = scmp.eq.s32.totalorder %s11, 0
    %p73 = por %p71, %p72
    %p74 = scmp.ne.s32.totalorder %s66, %s68
    %p75 = scmp.eq.s32.totalorder %s16, 1
    %p76 = por %p74, %p75
    %p77 = scmp.ne.s32.totalorder %s68, %s69
    %p78 = scmp.eq.s32.totalorder %s16, 0
    %p79 = por %p77, %p78
    %p80 = scmp.ne.s32.totalorder %s68, %s69
    %p81 = scmp.eq.s32.totalorder %s17, 1
    %p82 = por %p80, %p81
    %p84 = scmp.ne.s32.totalorder %s69, %s83
    %p85 = scmp.eq.s32.totalorder %s17, 0
    %p86 = por %p84, %p85
    %s88 = sadd.s32 %s87, 1
    %p91 = scmp.eq.s32.totalorder %s11, 1
    %p92 = scmp.ne.s32.totalorder %s87, %s89
    %p93 = scmp.eq.s32.totalorder %s11, 0
    %p94 = por %p92, %p93
    %p95 = scmp.ne.s32.totalorder %s87, %s89
    %p96 = scmp.eq.s32.totalorder %s16, 1
    %p97 = por %p95, %p96
    %p98 = scmp.ne.s32.totalorder %s89, %s90
    %p99 = scmp.eq.s32.totalorder %s16, 0
    %p100 = por %p98, %p99
    %p101 = scmp.ne.s32.totalorder %s89, %s90
    %p102 = scmp.eq.s32.totalorder %s17, 1
    %p103 = por %p101, %p102
    %p105 = scmp.ne.s32.totalorder %s90, %s104
    %p106 = scmp.eq.s32.totalorder %s17, 0
    %p107 = por %p105, %p106
    %s109 = sadd.s32 %s108, 1
    %p112 = scmp.eq.s32.totalorder %s11, 1
    %p113 = scmp.ne.s32.totalorder %s108, %s110
    %p114 = scmp.eq.s32.totalorder %s11, 0
    %p115 = por %p113, %p114
    %p116 = scmp.ne.s32.totalorder %s108, %s110
    %p117 = scmp.eq.s32.totalorder %s16, 1
    %p118 = por %p116, %p117
    %p119 = scmp.ne.s32.totalorder %s110, %s111
    %p120 = scmp.eq.s32.totalorder %s16, 0
    %p121 = por %p119, %p120
    %p122 = scmp.ne.s32.totalorder %s110, %s111
    %p123 = scmp.eq.s32.totalorder %s17, 1
    %p124 = por %p122, %p123
    %p126 = scmp.ne.s32.totalorder %s111, %s125
    %p127 = scmp.eq.s32.totalorder %s17, 0
    %p128 = por %p126, %p127
    %s129 = ssub.s32 %s11, %s18
    %p130 = scmp.eq.s32.totalorder %s129, 0
    %s132 = sadd.s32 %s131, 1
    %s133 = scalar_select %p130, %s131, %s132
    %p136 = pneg %p130
    %p137 = scmp.eq.s32.totalorder %s11, 1
    %p138 = por %p136, %p137
    %p139 = scmp.ne.s32.totalorder %s131, %s134
    %p140 = scmp.eq.s32.totalorder %s11, 0
    %p141 = por %p139, %p140
    %p142 = scmp.ne.s32.totalorder %s131, %s134
    %p143 = scmp.eq.s32.totalorder %s16, 1
    %p144 = por %p142, %p143
    %p145 = scmp.ne.s32.totalorder %s134, %s135
    %p146 = scmp.eq.s32.totalorder %s16, 0
    %p147 = por %p145, %p146
    %p148 = scmp.ne.s32.totalorder %s134, %s135
    %p149 = scmp.eq.s32.totalorder %s17, 1
    %p150 = por %p148, %p149
    %p152 = scmp.ne.s32.totalorder %s135, %s151
    %p153 = scmp.eq.s32.totalorder %s17, 0
    %p154 = por %p152, %p153
    %p155 = scmp.le.s32.totalorder 1, %s11
    %p156 = scmp.lt.s32.totalorder %s11, 3
    %p157 = pnand %p155, %p156
    %p158 = pneg %p157
    // Predicated region
    $region9: #{discriminator_forward.12} parent=5 // pred_check
      _
    $region10: #{discriminator_forward.12} parent=5 // pred_check_branch
      %160 = sbr.rel (%p157) target = $region12
    $region11: #{discriminator_forward.12} parent=5 // pred_region
      %s161 = ssub.s32 %s11, 1
      // Predicated region
      $region13: #{discriminator_forward.12} parent=11 // pred_check
        %p162 = pneg %p58
      $region14: #{discriminator_forward.12} parent=11 // pred_check_branch
        %164 = sbr.rel (%p162) target = $region16
      $region15: #{discriminator_forward.12} parent=11 // pred_region
        _
      $region16: #{discriminator_forward.12} parent=11 // pred_fallthru
        _
      // Predicated region
      $region17: #{discriminator_forward.12} parent=11 // pred_check
        %p165 = pneg %p79
      $region18: #{discriminator_forward.12} parent=11 // pred_check_branch
        %167 = sbr.rel (%p165) target = $region20
      $region19: #{discriminator_forward.12} parent=11 // pred_region
        _
      $region20: #{discriminator_forward.12} parent=11 // pred_fallthru
        _
      // Predicated region
      $region21: #{discriminator_forward.12} parent=11 // pred_check
        %p168 = pneg %p100
      $region22: #{discriminator_forward.12} parent=11 // pred_check_branch
        %170 = sbr.rel (%p168) target = $region24
      $region23: #{discriminator_forward.12} parent=11 // pred_region
        _
      $region24: #{discriminator_forward.12} parent=11 // pred_fallthru
        _
      // Predicated region
      $region25: #{discriminator_forward.12} parent=11 // pred_check
        %p171 = pneg %p121
      $region26: #{discriminator_forward.12} parent=11 // pred_check_branch
        %173 = sbr.rel (%p171) target = $region28
      $region27: #{discriminator_forward.12} parent=11 // pred_region
        _
      $region28: #{discriminator_forward.12} parent=11 // pred_fallthru
        _
    $region12: #{discriminator_forward.12} parent=5 // pred_fallthru
      _
    %p174 = scmp.lt.s32.totalorder %s11, 2
    // Predicated region
    $region29: #{discriminator_forward.12} parent=5 // pred_check
      %p175 = pneg %p174
    $region30: #{discriminator_forward.12} parent=5 // pred_check_branch
      %177 = sbr.rel (%p175) target = $region32
    $region31: #{discriminator_forward.12} parent=5 // pred_region
      // Predicated region
      $region33: #{discriminator_forward.12} parent=31 // pred_check
        %p178 = pneg %p31
      $region34: #{discriminator_forward.12} parent=31 // pred_check_branch
        %180 = sbr.rel (%p178) target = $region36
      $region35: #{discriminator_forward.12} parent=31 // pred_region
        %p181 = scmp.lt.s32.totalorder %s11, 1
        %s182 = scalar_select %p181, %s11, 1
        %s183 = smul.addr %s182, 4
        %s184 = smul.addr %s183, 4
        %s185 = scalar_lea.vmem %s0, %s184
      $region36: #{discriminator_forward.12} parent=31 // pred_fallthru
        _
    $region32: #{discriminator_forward.12} parent=5 // pred_fallthru
      _
    %p186 = scmp.le.s32.totalorder 1, %s11
    %p187 = scmp.lt.s32.totalorder %s11, 3
    %p188 = pnand %p186, %p187
    %p189 = pneg %p188
    // Predicated region
    $region37: #{discriminator_forward.12} parent=5 // pred_check
      _
    $region38: #{discriminator_forward.12} parent=5 // pred_check_branch
      %191 = sbr.rel (%p188) target = $region40
    $region39: #{discriminator_forward.12} parent=5 // pred_region
      %s192 = ssub.s32 %s11, 1
      %p193 = scmp.lt.s32.totalorder %s16, 1
      %s194 = scalar_select %p193, %s16, 1
      %s195 = smul.addr %s194, 4
      %s196 = smul.addr %s195, 4
      %s197 = scalar_lea.vmem %s0, %s196
      %p198 = pneg %p37
      %p199 = pneg %p34
      %p200 = pneg %p58
      %p201 = pneg %p55
      %p202 = pneg %p79
      %p203 = pneg %p76
      %p204 = pneg %p100
      %p205 = pneg %p97
      %p206 = pneg %p121
      %p207 = pneg %p118
      %p208 = pneg %p147
      %p209 = pneg %p144
      %p210 = scmp.lt.s32.totalorder %s16, 1
      %s211 = scalar_select %p210, %s16, 1
      %s212 = smul.addr %s211, 4
      %s213 = smul.addr %s212, 4
      %s214 = scalar_lea.vmem %s5, %s213
      %p215 = scmp.lt.s32.totalorder %s16, 1
      %s216 = scalar_select %p215, %s16, 1
      %s217 = smul.addr %s216, 4
      %s218 = smul.addr %s217, 4
      %s219 = scalar_lea.vmem %s0, %s218
      %p220 = scmp.lt.s32.totalorder %s16, 1
      %s221 = scalar_select %p220, %s16, 1
      %s222 = smul.addr %s221, 4
      %s223 = smul.addr %s222, 4
      %s224 = scalar_lea.vmem %s5, %s223
      %v225 = vld [vmem:[%s219] sm:$0xff]
      %v226 = vld [vmem:[%s219 + $0x8] sm:$0xff]
      %v227 = vunpack.c.l.bf16 %v225
      %v228 = vunpack.c.h.bf16 %v225
      %v229 = vunpack.c.l.bf16 %v226
      %v230 = vunpack.c.h.bf16 %v226
      %v231 = vadd.f32 %v227, %v229
      %v232 = vrot.slane %v231, 4
      %v233 = vadd.f32 %v231, %v232
      %v234 = vrot.slane %v233, 2
      %v235 = vadd.f32 %v233, %v234
      %v236 = vrot.slane %v235, 1
      %v237 = vadd.f32 %v235, %v236
      %v238 = vadd.f32 %v228, %v230
      %v239 = vrot.slane %v238, 4
      %v240 = vadd.f32 %v238, %v239
      %v241 = vrot.slane %v240, 2
      %v242 = vadd.f32 %v240, %v241
      %v243 = vrot.slane %v242, 1
      %v244 = vadd.f32 %v242, %v243
      %v245 = vld [vmem:[%s1] sm:$0xff]
      %v246 = vld [vmem:[%s1 + $0x8] sm:$0xff]
      %v247 = vld [vmem:[%s1 + $0x10] sm:$0xff]
      %v248 = vld [vmem:[%s1 + $0x18] sm:$0xff]
      %v249 = vld [vmem:[%s1 + $0x20] sm:$0xff]
      %v250 = vld [vmem:[%s1 + $0x28] sm:$0xff]
      %v251 = vld [vmem:[%s1 + $0x30] sm:$0xff]
      %v252 = vld [vmem:[%s1 + $0x38] sm:$0xff]
      %v253 = vld [vmem:[%s1 + $0x40] sm:$0xff]
      %v254 = vld [vmem:[%s1 + $0x48] sm:$0xff]
      %v255 = vld [vmem:[%s1 + $0x50] sm:$0xff]
      %v256 = vld [vmem:[%s1 + $0x58] sm:$0xff]
      %v257 = vld [vmem:[%s1 + $0x60] sm:$0xff]
      %v258 = vld [vmem:[%s1 + $0x68] sm:$0xff]
      %v259 = vld [vmem:[%s1 + $0x70] sm:$0xff]
      %v260 = vld [vmem:[%s1 + $0x78] sm:$0xff]
      %v261 = vld [vmem:[%s1 + $0x80] sm:$0xff]
      %v262 = vld [vmem:[%s1 + $0x88] sm:$0xff]
      %v263 = vld [vmem:[%s1 + $0x90] sm:$0xff]
      %v264 = vld [vmem:[%s1 + $0x98] sm:$0xff]
      %v265 = vld [vmem:[%s1 + $0xa0] sm:$0xff]
      %v266 = vld [vmem:[%s1 + $0xa8] sm:$0xff]
      %v267 = vld [vmem:[%s1 + $0xb0] sm:$0xff]
      %v268 = vld [vmem:[%s1 + $0xb8] sm:$0xff]
      %v269 = vld [vmem:[%s1 + $0xc0] sm:$0xff]
      %v270 = vld [vmem:[%s1 + $0xc8] sm:$0xff]
      %v271 = vld [vmem:[%s1 + $0xd0] sm:$0xff]
      %v272 = vld [vmem:[%s1 + $0xd8] sm:$0xff]
      %v273 = vld [vmem:[%s1 + $0xe0] sm:$0xff]
      %v274 = vld [vmem:[%s1 + $0xe8] sm:$0xff]
      %v275 = vld [vmem:[%s1 + $0xf0] sm:$0xff]
      %v276 = vld [vmem:[%s1 + $0xf8] sm:$0xff]
      %277 = vmatprep.subr.mxu0 0.0
      %278 = vmatpush1.msra.mxu0 %v245
      %279 = vmatprep.subr.mxu0 0.0
      %280 = vmatpush1.msra.mxu0 %v246
      %281 = vmatprep.subr.mxu0 0.0
      %282 = vmatpush1.msra.mxu0 %v247
      %283 = vmatprep.subr.mxu0 0.0
      %284 = vmatpush1.msra.mxu0 %v248
      %285 = vmatprep.subr.mxu0 0.0
      %286 = vmatpush1.msra.mxu0 %v249
      %287 = vmatprep.subr.mxu0 0.0
      %288 = vmatpush1.msra.mxu0 %v250
      %289 = vmatprep.subr.mxu0 0.0
      %290 = vmatpush1.msra.mxu0 %v251
      %291 = vmatprep.subr.mxu0 0.0
      %292 = vmatpush1.msra.mxu0 %v252
      %293 = vmatprep.subr.mxu0 0.0
      %294 = vmatpush1.msra.mxu0 %v253
      %295 = vmatprep.subr.mxu0 0.0
      %296 = vmatpush1.msra.mxu0 %v254
      %297 = vmatprep.subr.mxu0 0.0
      %298 = vmatpush1.msra.mxu0 %v255
      %299 = vmatprep.subr.mxu0 0.0
      %300 = vmatpush1.msra.mxu0 %v256
      %301 = vmatprep.subr.mxu0 0.0
      %302 = vmatpush1.msra.mxu0 %v257
      %303 = vmatprep.subr.mxu0 0.0
      %304 = vmatpush1.msra.mxu0 %v258
      %305 = vmatprep.subr.mxu0 0.0
      %306 = vmatpush1.msra.mxu0 %v259
      %307 = vmatprep.subr.mxu0 0.0
      %308 = vmatpush1.msra.mxu0 %v260
      %309 = vmatprep.subr.mxu0 0.0
      %310 = vmatpush1.msra.mxu0 %v261
      %311 = vmatprep.subr.mxu0 0.0
      %312 = vmatpush1.msra.mxu0 %v262
      %313 = vmatprep.subr.mxu0 0.0
      %314 = vmatpush1.msra.mxu0 %v263
      %315 = vmatprep.subr.mxu0 0.0
      %316 = vmatpush1.msra.mxu0 %v264
      %317 = vmatprep.subr.mxu0 0.0
      %318 = vmatpush1.msra.mxu0 %v265
      %319 = vmatprep.subr.mxu0 0.0
      %320 = vmatpush1.msra.mxu0 %v266
      %321 = vmatprep.subr.mxu0 0.0
      %322 = vmatpush1.msra.mxu0 %v267
      %323 = vmatprep.subr.mxu0 0.0
      %324 = vmatpush1.msra.mxu0 %v268
      %325 = vmatprep.subr.mxu0 0.0
      %326 = vmatpush1.msra.mxu0 %v269
      %327 = vmatprep.subr.mxu0 0.0
      %328 = vmatpush1.msra.mxu0 %v270
      %329 = vmatprep.subr.mxu0 0.0
      %330 = vmatpush1.msra.mxu0 %v271
      %331 = vmatprep.subr.mxu0 0.0
      %332 = vmatpush1.msra.mxu0 %v272
      %333 = vmatprep.subr.mxu0 0.0
      %334 = vmatpush1.msra.mxu0 %v273
      %335 = vmatprep.subr.mxu0 0.0
      %336 = vmatpush1.msra.mxu0 %v274
      %337 = vmatprep.subr.mxu0 0.0
      %338 = vmatpush1.msra.mxu0 %v275
      %339 = vmatprep.subr.mxu0 0.0
      %340 = vmatpush1.msra.mxu0 %v276
      %341 = vmatprep.mubr.f32.mxu0 %v244
      %342 = vmatmul.mubr.f32.gmra.mrb[0].mxu0 %v237
      %v343 = vpop.f32.mrb[0].mxu0
      %v344 = vadd.f32 0.0, %v343
      %v345 = vpop.f32.mrb[0].mxu0
      %346 = vdwg.mxu0
      %v347 = vrcp.pop 128.0
      %v348 = vmul.f32 %v344, %v347
      %v349 = vld [vmem:[%s2] sm:$0xff]
      %v350 = vld [vmem:[%s2 + $0x8] sm:$0xff]
      %v351 = vld [vmem:[%s2 + $0x10] sm:$0xff]
      %v352 = vld [vmem:[%s2 + $0x18] sm:$0xff]
      %v353 = vld [vmem:[%s2 + $0x20] sm:$0xff]
      %v354 = vld [vmem:[%s2 + $0x28] sm:$0xff]
      %v355 = vld [vmem:[%s2 + $0x30] sm:$0xff]
      %v356 = vld [vmem:[%s2 + $0x38] sm:$0xff]
      %vm357 = vcmask 261120
      %v359 = vsel %vm357, %v348, 0
      %361 = vmatprep.subr.mxu0 %v350
      %362 = vmatpush1.msra.mxu0 %v349
      %363 = vmatprep.subr.mxu0 %v352
      %364 = vmatpush1.msra.mxu0 %v351
      %365 = vmatprep.subr.mxu0 %v354
      %366 = vmatpush1.msra.mxu0 %v353
      %367 = vmatprep.subr.mxu0 %v356
      %368 = vmatpush1.msra.mxu0 %v355
      %369 = vmatprep.subr.mxu0 0.0
      %370 = vmatpush1.msra.mxu0 0.0
      %371 = vmatprep.subr.mxu0 0.0
      %372 = vmatpush1.msra.mxu0 0.0
      %373 = vmatprep.subr.mxu0 0.0
      %374 = vmatpush1.msra.mxu0 0.0
      %375 = vmatprep.subr.mxu0 0.0
      %376 = vmatpush1.msra.mxu0 0.0
      %377 = vmatprep.subr.mxu0 0.0
      %378 = vmatpush1.msra.mxu0 0.0
      %379 = vmatprep.subr.mxu0 0.0
      %380 = vmatpush1.msra.mxu0 0.0
      %381 = vmatprep.subr.mxu0 0.0
      %382 = vmatpush1.msra.mxu0 0.0
      %383 = vmatprep.subr.mxu0 0.0
      %384 = vmatpush1.msra.mxu0 0.0
      %385 = vmatprep.subr.mxu0 0.0
      %386 = vmatpush1.msra.mxu0 0.0
      %387 = vmatprep.subr.mxu0 0.0
      %388 = vmatpush1.msra.mxu0 0.0
      %389 = vmatprep.subr.mxu0 0.0
      %390 = vmatpush1.msra.mxu0 0.0
      %391 = vmatprep.subr.mxu0 0.0
      %392 = vmatpush1.msra.mxu0 0.0
      %393 = vmatprep.subr.mxu0 0.0
      %394 = vmatpush1.msra.mxu0 0.0
      %395 = vmatprep.subr.mxu0 0.0
      %396 = vmatpush1.msra.mxu0 0.0
      %397 = vmatprep.subr.mxu0 0.0
      %398 = vmatpush1.msra.mxu0 0.0
      %399 = vmatprep.subr.mxu0 0.0
      %400 = vmatpush1.msra.mxu0 0.0
      %401 = vmatprep.subr.mxu0 0.0
      %402 = vmatpush1.msra.mxu0 0.0
      %403 = vmatprep.subr.mxu0 0.0
      %404 = vmatpush1.msra.mxu0 0.0
      %405 = vmatprep.subr.mxu0 0.0
      %406 = vmatpush1.msra.mxu0 0.0
      %407 = vmatprep.subr.mxu0 0.0
      %408 = vmatpush1.msra.mxu0 0.0
      %409 = vmatprep.subr.mxu0 0.0
      %410 = vmatpush1.msra.mxu0 0.0
      %411 = vmatprep.subr.mxu0 0.0
      %412 = vmatpush1.msra.mxu0 0.0
      %413 = vmatprep.subr.mxu0 0.0
      %414 = vmatpush1.msra.mxu0 0.0
      %415 = vmatprep.subr.mxu0 0.0
      %416 = vmatpush1.msra.mxu0 0.0
      %417 = vmatprep.subr.mxu0 0.0
      %418 = vmatpush1.msra.mxu0 0.0
      %419 = vmatprep.subr.mxu0 0.0
      %420 = vmatpush1.msra.mxu0 0.0
      %421 = vmatprep.subr.mxu0 0.0
      %422 = vmatpush1.msra.mxu0 0.0
      %423 = vmatprep.subr.mxu0 0.0
      %424 = vmatpush1.msra.mxu0 0.0
      %425 = vmatprep.mubr.f32.mxu0 0.0
      %426 = vmatmul.mubr.f32.gmra.mrb[0].mxu0 %v359
      %v427 = vpop.f32.mrb[0].mxu0
      %v428 = vadd.f32 0.0, %v427
      %v429 = vpop.f32.mrb[0].mxu0
      %v430 = vadd.f32 0.0, %v429
      %431 = vdwg.mxu0
      %v432 = vlaneseq
      %v433 = vshrl.u32 %v432, 7
      %v434 = vsub.s32 0, %v433
      %v435 = vrot.slane %v428, %v434
      %v436 = vlaneseq
      %v437 = vshrl.u32 %v436, 7
      %v438 = vsub.s32 0, %v437
      %v439 = vrot.slane %v430, %v438
      %v440 = vsub.f32 %v227, %v435
      %v441 = vsub.f32 %v228, %v439
      %v442 = vsub.f32 %v229, %v435
      %v443 = vsub.f32 %v230, %v439
      %v444 = vmul.f32 %v440, %v440
      %v445 = vmul.f32 %v441, %v441
      %v446 = vmul.f32 %v442, %v442
      %v447 = vmul.f32 %v443, %v443
      %v448 = vadd.f32 %v444, %v446
      %v449 = vrot.slane %v448, 4
      %v450 = vadd.f32 %v448, %v449
      %v451 = vrot.slane %v450, 2
      %v452 = vadd.f32 %v450, %v451
      %v453 = vrot.slane %v452, 1
      %v454 = vadd.f32 %v452, %v453
      %v455 = vadd.f32 %v445, %v447
      %v456 = vrot.slane %v455, 4
      %v457 = vadd.f32 %v455, %v456
      %v458 = vrot.slane %v457, 2
      %v459 = vadd.f32 %v457, %v458
      %v460 = vrot.slane %v459, 1
      %v461 = vadd.f32 %v459, %v460
      %462 = vmatprep.subr.mxu0 0.0
      %463 = vmatpush1.msra.mxu0 %v245
      %464 = vmatprep.subr.mxu0 0.0
      %465 = vmatpush1.msra.mxu0 %v246
      %466 = vmatprep.subr.mxu0 0.0
      %467 = vmatpush1.msra.mxu0 %v247
      %468 = vmatprep.subr.mxu0 0.0
      %469 = vmatpush1.msra.mxu0 %v248
      %470 = vmatprep.subr.mxu0 0.0
      %471 = vmatpush1.msra.mxu0 %v249
      %472 = vmatprep.subr.mxu0 0.0
      %473 = vmatpush1.msra.mxu0 %v250
      %474 = vmatprep.subr.mxu0 0.0
      %475 = vmatpush1.msra.mxu0 %v251
      %476 = vmatprep.subr.mxu0 0.0
      %477 = vmatpush1.msra.mxu0 %v252
      %478 = vmatprep.subr.mxu0 0.0
      %479 = vmatpush1.msra.mxu0 %v253
      %480 = vmatprep.subr.mxu0 0.0
      %481 = vmatpush1.msra.mxu0 %v254
      %482 = vmatprep.subr.mxu0 0.0
      %483 = vmatpush1.msra.mxu0 %v255
      %484 = vmatprep.subr.mxu0 0.0
      %485 = vmatpush1.msra.mxu0 %v256
      %486 = vmatprep.subr.mxu0 0.0
      %487 = vmatpush1.msra.mxu0 %v257
      %488 = vmatprep.subr.mxu0 0.0
      %489 = vmatpush1.msra.mxu0 %v258
      %490 = vmatprep.subr.mxu0 0.0
      %491 = vmatpush1.msra.mxu0 %v259
      %492 = vmatprep.subr.mxu0 0.0
      %493 = vmatpush1.msra.mxu0 %v260
      %494 = vmatprep.subr.mxu0 0.0
      %495 = vmatpush1.msra.mxu0 %v261
      %496 = vmatprep.subr.mxu0 0.0
      %497 = vmatpush1.msra.mxu0 %v262
      %498 = vmatprep.subr.mxu0 0.0
      %499 = vmatpush1.msra.mxu0 %v263
      %500 = vmatprep.subr.mxu0 0.0
      %501 = vmatpush1.msra.mxu0 %v264
      %502 = vmatprep.subr.mxu0 0.0
      %503 = vmatpush1.msra.mxu0 %v265
      %504 = vmatprep.subr.mxu0 0.0
      %505 = vmatpush1.msra.mxu0 %v266
      %506 = vmatprep.subr.mxu0 0.0
      %507 = vmatpush1.msra.mxu0 %v267
      %508 = vmatprep.subr.mxu0 0.0
      %509 = vmatpush1.msra.mxu0 %v268
      %510 = vmatprep.subr.mxu0 0.0
      %511 = vmatpush1.msra.mxu0 %v269
      %512 = vmatprep.subr.mxu0 0.0
      %513 = vmatpush1.msra.mxu0 %v270
      %514 = vmatprep.subr.mxu0 0.0
      %515 = vmatpush1.msra.mxu0 %v271
      %516 = vmatprep.subr.mxu0 0.0
      %517 = vmatpush1.msra.mxu0 %v272
      %518 = vmatprep.subr.mxu0 0.0
      %519 = vmatpush1.msra.mxu0 %v273
      %520 = vmatprep.subr.mxu0 0.0
      %521 = vmatpush1.msra.mxu0 %v274
      %522 = vmatprep.subr.mxu0 0.0
      %523 = vmatpush1.msra.mxu0 %v275
      %524 = vmatprep.subr.mxu0 0.0
      %525 = vmatpush1.msra.mxu0 %v276
      %526 = vmatprep.mubr.f32.mxu0 %v461
      %527 = vmatmul.mubr.f32.gmra.mrb[0].mxu0 %v454
      %v528 = vpop.f32.mrb[0].mxu0
      %v529 = vadd.f32 0.0, %v528
      %v530 = vpop.f32.mrb[0].mxu0
      %531 = vdwg.mxu0
      %v532 = vmul.f32 %v529, %v347
      %v533 = vadd.f32 %v532, 1e-05
      %v534 = vrsqrt.pop %v533
      %v536 = vsel %vm357, %v534, 0
      %538 = vmatprep.subr.mxu0 %v350
      %539 = vmatpush1.msra.mxu0 %v349
      %540 = vmatprep.subr.mxu0 %v352
      %541 = vmatpush1.msra.mxu0 %v351
      %542 = vmatprep.subr.mxu0 %v354
      %543 = vmatpush1.msra.mxu0 %v353
      %544 = vmatprep.subr.mxu0 %v356
      %545 = vmatpush1.msra.mxu0 %v355
      %546 = vmatprep.subr.mxu0 0.0
      %547 = vmatpush1.msra.mxu0 0.0
      %548 = vmatprep.subr.mxu0 0.0
      %549 = vmatpush1.msra.mxu0 0.0
      %550 = vmatprep.subr.mxu0 0.0
      %551 = vmatpush1.msra.mxu0 0.0
      %552 = vmatprep.subr.mxu0 0.0
      %553 = vmatpush1.msra.mxu0 0.0
      %554 = vmatprep.subr.mxu0 0.0
      %555 = vmatpush1.msra.mxu0 0.0
      %556 = vmatprep.subr.mxu0 0.0
      %557 = vmatpush1.msra.mxu0 0.0
      %558 = vmatprep.subr.mxu0 0.0
      %559 = vmatpush1.msra.mxu0 0.0
      %560 = vmatprep.subr.mxu0 0.0
      %561 = vmatpush1.msra.mxu0 0.0
      %562 = vmatprep.subr.mxu0 0.0
      %563 = vmatpush1.msra.mxu0 0.0
      %564 = vmatprep.subr.mxu0 0.0
      %565 = vmatpush1.msra.mxu0 0.0
      %566 = vmatprep.subr.mxu0 0.0
      %567 = vmatpush1.msra.mxu0 0.0
      %568 = vmatprep.subr.mxu0 0.0
      %569 = vmatpush1.msra.mxu0 0.0
      %570 = vmatprep.subr.mxu0 0.0
      %571 = vmatpush1.msra.mxu0 0.0
      %572 = vmatprep.subr.mxu0 0.0
      %573 = vmatpush1.msra.mxu0 0.0
      %574 = vmatprep.subr.mxu0 0.0
      %575 = vmatpush1.msra.mxu0 0.0
      %576 = vmatprep.subr.mxu0 0.0
      %577 = vmatpush1.msra.mxu0 0.0
      %578 = vmatprep.subr.mxu0 0.0
      %579 = vmatpush1.msra.mxu0 0.0
      %580 = vmatprep.subr.mxu0 0.0
      %581 = vmatpush1.msra.mxu0 0.0
      %582 = vmatprep.subr.mxu0 0.0
      %583 = vmatpush1.msra.mxu0 0.0
      %584 = vmatprep.subr.mxu0 0.0
      %585 = vmatpush1.msra.mxu0 0.0
      %586 = vmatprep.subr.mxu0 0.0
      %587 = vmatpush1.msra.mxu0 0.0
      %588 = vmatprep.subr.mxu0 0.0
      %589 = vmatpush1.msra.mxu0 0.0
      %590 = vmatprep.subr.mxu0 0.0
      %591 = vmatpush1.msra.mxu0 0.0
      %592 = vmatprep.subr.mxu0 0.0
      %593 = vmatpush1.msra.mxu0 0.0
      %594 = vmatprep.subr.mxu0 0.0
      %595 = vmatpush1.msra.mxu0 0.0
      %596 = vmatprep.subr.mxu0 0.0
      %597 = vmatpush1.msra.mxu0 0.0
      %598 = vmatprep.subr.mxu0 0.0
      %599 = vmatpush1.msra.mxu0 0.0
      %600 = vmatprep.subr.mxu0 0.0
      %601 = vmatpush1.msra.mxu0 0.0
      %602 = vmatprep.mubr.f32.mxu0 0.0
      %603 = vmatmul.mubr.f32.gmra.mrb[0].mxu0 %v536
      %v604 = vpop.f32.mrb[0].mxu0
      %v605 = vadd.f32 0.0, %v604
      %v606 = vpop.f32.mrb[0].mxu0
      %v607 = vadd.f32 0.0, %v606
      %608 = vdwg.mxu0
      %v609 = vlaneseq
      %v610 = vshrl.u32 %v609, 7
      %v611 = vsub.s32 0, %v610
      %v612 = vrot.slane %v605, %v611
      %v613 = vlaneseq
      %v614 = vshrl.u32 %v613, 7
      %v615 = vsub.s32 0, %v614
      %v616 = vrot.slane %v607, %v615
      %v617 = vmul.f32 %v440, %v612
      %v618 = vmul.f32 %v441, %v616
      %v619 = vmul.f32 %v442, %v612
      %v620 = vmul.f32 %v443, %v616
      %v621 = vld [vmem:[%s3] sm:$0x3]
      %v623 = vlaneseq
      %v624 = vshrl.u32 %v623, 7
      %v625 = vsub.s32 0, %v624
      %v626 = vrot.slane %v621, %v625
      %v627 = vlaneseq
      %v628 = vshrl.u32 %v627, 7
      %v629 = vsub.s32 1, %v628
      %v630 = vrot.slane %v621, %v629
      %v633 = vmul.f32 %v617, %v626
      %v634 = vmul.f32 %v618, %v630
      %v635 = vmul.f32 %v619, %v626
      %v636 = vmul.f32 %v620, %v630
      %v637 = vld [vmem:[%s4] sm:$0x3]
      %v639 = vlaneseq
      %v640 = vshrl.u32 %v639, 7
      %v641 = vsub.s32 0, %v640
      %v642 = vrot.slane %v637, %v641
      %v643 = vlaneseq
      %v644 = vshrl.u32 %v643, 7
      %v645 = vsub.s32 1, %v644
      %v646 = vrot.slane %v637, %v645
      %v649 = vadd.f32 %v633, %v642
      %v650 = vadd.f32 %v634, %v646
      %v651 = vadd.f32 %v635, %v642
      %v652 = vadd.f32 %v636, %v646
      %v653 = vmul.f32 %v649, 0.2
      %v654 = vmul.f32 %v650, 0.2
      %v655 = vmul.f32 %v651, 0.2
      %v656 = vmul.f32 %v652, 0.2
      %v657 = vmax.f32 %v649, %v653
      %v658 = vmax.f32 %v650, %v654
      %v659 = vmax.f32 %v651, %v655
      %v660 = vmax.f32 %v652, %v656
      %v661 = vpack.c.bf16 %v659, %v657
      %v662 = vpack.c.bf16 %v660, %v658
      %v665 = vunpack.c.l.b16 %v661
      %v666 = vunpack.c.l.b16 %v662
      %v667 = vunpack.c.h.b16 %v661
      %v668 = vunpack.c.h.b16 %v662
      %v669 = vpack.c.b16 %v666, %v665
      %v670 = vpack.c.b16 %v668, %v667
      %673 = vst [vmem:[%s224] sm:$0xff] %v669
      %674 = vst [vmem:[%s224 + $0x8] sm:$0xff] %v670
      %p675 = scmp.lt.s32.totalorder %s16, 1
      %s676 = scalar_select %p675, %s16, 1
      %s677 = smul.addr %s676, 4
      %s678 = smul.addr %s677, 4
      %s679 = scalar_lea.vmem %s5, %s678
      // Predicated region
      $region41: #{discriminator_forward.12} parent=39 // pred_check
        %p680 = pneg %p144
      $region42: #{discriminator_forward.12} parent=39 // pred_check_branch
        %682 = sbr.rel (%p680) target = $region44
      $region43: #{discriminator_forward.12} parent=39 // pred_region
        _
      $region44: #{discriminator_forward.12} parent=39 // pred_fallthru
        _
    $region40: #{discriminator_forward.12} parent=5 // pred_fallthru
      _
    %p683 = scmp.le.s32.totalorder 2, %s11
    // Predicated region
    $region45: #{discriminator_forward.12} parent=5 // pred_check
      %p684 = pneg %p683
    $region46: #{discriminator_forward.12} parent=5 // pred_check_branch
      %686 = sbr.rel (%p684) target = $region48
    $region47: #{discriminator_forward.12} parent=5 // pred_region
      %s687 = ssub.s32 %s11, 2
      // Predicated region
      $region49: #{discriminator_forward.12} parent=47 // pred_check
        %p688 = pneg %p150
      $region50: #{discriminator_forward.12} parent=47 // pred_check_branch
        %690 = sbr.rel (%p688) target = $region52
      $region51: #{discriminator_forward.12} parent=47 // pred_region
        %p691 = scmp.lt.s32.totalorder %s17, 1
        %s692 = scalar_select %p691, %s17, 1
        %s693 = smul.addr %s692, 4
        %s694 = smul.addr %s693, 4
        %s695 = scalar_lea.vmem %s5, %s694
      $region52: #{discriminator_forward.12} parent=47 // pred_fallthru
        _
    $region48: #{discriminator_forward.12} parent=5 // pred_fallthru
      _
  $region6: #{discriminator_forward.12} parent=0 // loop_footer
    %s15 = sadd.s32 1, %s11
  $region7: #{discriminator_forward.12} parent=0 // loop_footer_branch
    %10 = sbr.rel target = $region3
  $region8: #{discriminator_forward.12} parent=0 // loop_exit
    _

// kernel: discriminator_forward.13
$region0: #{discriminator_forward.13}
  #allocation0 [shape = 'u32[]', space=smem, size = 0x4, offset = 0x4, fixed_abs, tag = 'smem constant byte address 0x4 - core index']
  #allocation1 [shape = 'u32[144,128]{1,0:T(1,128)}', space=vmem, size = 0x12000, scoped, tag = 'internal scratch']
  #allocation2 [shape = 'f32[24,256]{1,0:T(8,128)}', space=vmem, size = 0x6000, scoped, tag = 'scratch operand']
  %s0 = inlined_call_operand.vmem [shape: bf16[24,4096], index: 0, kind: input, shape index: {}]
  %s1 = inlined_call_operand.vmem [shape: bf16[4096,512], index: 1, kind: input, shape index: {}]
  %s2 = inlined_call_operand.vmem [shape: f32[1,512], index: 2, kind: input, shape index: {}]
  %s3 = inlined_call_operand.vmem [shape: bf16[24,512], index: 3, kind: output, shape index: {}]
  %s4 = sld [smem:[#allocation0]]
  $region148: #{discriminator_forward.13} parent=0
    _
  %s6 = ssub.s32 1, %s4
  %s7 = scalar_select 0, %s6, %s4
  $region1: #{discriminator_forward.13} parent=0
    #allocation3 [shape = 'u8[49152]{0}', space=vmem, size = 0xc000, scoped, tag = 'input window, operand 0']
    #allocation4 [shape = 'u8[524288]{0}', space=vmem, size = 0x80000, scoped, tag = 'input window, operand 1']
    #allocation5 [shape = 'u8[24576]{0}', space=vmem, size = 0x6000, scoped, tag = 'output window, operand 0']
    loop: start=0, step=1, limit=18
    $region2: #{discriminator_forward.13} parent=1 // loop_pre_header
      _
    $region3: #{discriminator_forward.13} parent=1 // loop_header
      %s9 = sphi 0, %s13
      %p10 = scmp.ge.s32.totalorder %s9, 18
      %s16 = sphi 0, %s35
      %s17 = sphi 0, %s31
      %s18 = sphi 0, %s27
      %s19 = sphi 0, %s16
      %s20 = sphi 0, %s17
      %s21 = sphi 0, %s18
      %s22 = sphi 0, %s19
      %s23 = sphi 0, %s20
      %s24 = sphi 0, %s21
      %s40 = sphi 0, %s42
      %s43 = sphi 0, %s40
      %s44 = sphi 0, %s43
      %s60 = sphi 0, %s44
      %s68 = sphi 0, %s70
      %s71 = sphi 0, %s68
      %s72 = sphi 0, %s71
      %s88 = sphi 0, %s72
      %s94 = sphi 0, %s96
      %s97 = sphi 0, %s94
      %s98 = sphi 0, %s97
      %s114 = sphi 0, %s98
      %s122 = sphi 0, %s124
      %s125 = sphi 0, %s122
      %s126 = sphi 0, %s125
      %s142 = sphi 0, %s126
    $region4: #{discriminator_forward.13} parent=1 // loop_header_branch
      %12 = sbr.rel (%p10) target = $region8
    $region5: #{discriminator_forward.13} parent=1 // loop_body
      %s14 = ssub.s32 %s9, 1
      %s15 = ssub.s32 %s9, 2
      %s25 = sadd.s32 1, %s18
      %p26 = scmp.ge.s32.totalorder %s25, 8
      %s27 = scalar_select %p26, 0, %s25
      %s28 = sadd.s32 1, %s17
      %s29 = scalar_select %p26, %s28, %s17
      %p30 = scmp.ge.s32.totalorder %s29, 2
      %s31 = scalar_select %p30, 0, %s29
      %s32 = sadd.s32 1, %s16
      %s33 = scalar_select %p30, %s32, %s16
      %p34 = scmp.ge.s32.totalorder %s33, 1
      %s35 = scalar_select %p34, 0, %s33
      %s36 = ssub.s32 %s16, %s35
      %s37 = ssub.s32 %s18, %s27
      %s38 = sor.u32 %s36, %s37
      %p39 = scmp.eq.s32.totalorder %s38, 0
      %s41 = sadd.s32 %s40, 1
      %s42 = scalar_select %p39, %s40, %s41
      %p45 = pneg %p39
      %p46 = scmp.eq.s32.totalorder %s9, 15
      %p47 = por %p45, %p46
      %p48 = scmp.ne.s32.totalorder %s40, %s43
      %p49 = scmp.eq.s32.totalorder %s9, 0
      %p50 = por %p48, %p49
      %p51 = scmp.ne.s32.totalorder %s40, %s43
      %p52 = scmp.eq.s32.totalorder %s14, 15
      %p53 = por %p51, %p52
      %p54 = scmp.ne.s32.totalorder %s43, %s44
      %p55 = scmp.eq.s32.totalorder %s14, 0
      %p56 = por %p54, %p55
      %p57 = scmp.ne.s32.totalorder %s43, %s44
      %p58 = scmp.eq.s32.totalorder %s15, 15
      %p59 = por %p57, %p58
      %p61 = scmp.ne.s32.totalorder %s44, %s60
      %p62 = scmp.eq.s32.totalorder %s15, 0
      %p63 = por %p61, %p62
      %s64 = ssub.s32 %s18, %s27
      %s65 = ssub.s32 %s17, %s31
      %s66 = sor.u32 %s64, %s65
      %p67 = scmp.eq.s32.totalorder %s66, 0
      %s69 = sadd.s32 %s68, 1
      %s70 = scalar_select %p67, %s68, %s69
      %p73 = pneg %p67
      %p74 = scmp.eq.s32.totalorder %s9, 15
      %p75 = por %p73, %p74
      %p76 = scmp.ne.s32.totalorder %s68, %s71
      %p77 = scmp.eq.s32.totalorder %s9, 0
      %p78 = por %p76, %p77
      %p79 = scmp.ne.s32.totalorder %s68, %s71
      %p80 = scmp.eq.s32.totalorder %s14, 15
      %p81 = por %p79, %p80
      %p82 = scmp.ne.s32.totalorder %s71, %s72
      %p83 = scmp.eq.s32.totalorder %s14, 0
      %p84 = por %p82, %p83
      %p85 = scmp.ne.s32.totalorder %s71, %s72
      %p86 = scmp.eq.s32.totalorder %s15, 15
      %p87 = por %p85, %p86
      %p89 = scmp.ne.s32.totalorder %s72, %s88
      %p90 = scmp.eq.s32.totalorder %s15, 0
      %p91 = por %p89, %p90
      %s92 = ssub.s32 %s17, %s31
      %p93 = scmp.eq.s32.totalorder %s92, 0
      %s95 = sadd.s32 %s94, 1
      %s96 = scalar_select %p93, %s94, %s95
      %p99 = pneg %p93
      %p100 = scmp.eq.s32.totalorder %s9, 15
      %p101 = por %p99, %p100
      %p102 = scmp.ne.s32.totalorder %s94, %s97
      %p103 = scmp.eq.s32.totalorder %s9, 0
      %p104 = por %p102, %p103
      %p105 = scmp.ne.s32.totalorder %s94, %s97
      %p106 = scmp.eq.s32.totalorder %s14, 15
      %p107 = por %p105, %p106
      %p108 = scmp.ne.s32.totalorder %s97, %s98
      %p109 = scmp.eq.s32.totalorder %s14, 0
      %p110 = por %p108, %p109
      %p111 = scmp.ne.s32.totalorder %s97, %s98
      %p112 = scmp.eq.s32.totalorder %s15, 15
      %p113 = por %p111, %p112
      %p115 = scmp.ne.s32.totalorder %s98, %s114
      %p116 = scmp.eq.s32.totalorder %s15, 0
      %p117 = por %p115, %p116
      %s118 = ssub.s32 %s16, %s35
      %s119 = ssub.s32 %s17, %s31
      %s120 = sor.u32 %s118, %s119
      %p121 = scmp.eq.s32.totalorder %s120, 0
      %s123 = sadd.s32 %s122, 1
      %s124 = scalar_select %p121, %s122, %s123
      %p127 = pneg %p121
      %p128 = scmp.eq.s32.totalorder %s9, 15
      %p129 = por %p127, %p128
      %p130 = scmp.ne.s32.totalorder %s122, %s125
      %p131 = scmp.eq.s32.totalorder %s9, 0
      %p132 = por %p130, %p131
      %p133 = scmp.ne.s32.totalorder %s122, %s125
      %p134 = scmp.eq.s32.totalorder %s14, 15
      %p135 = por %p133, %p134
      %p136 = scmp.ne.s32.totalorder %s125, %s126
      %p137 = scmp.eq.s32.totalorder %s14, 0
      %p138 = por %p136, %p137
      %p139 = scmp.ne.s32.totalorder %s125, %s126
      %p140 = scmp.eq.s32.totalorder %s15, 15
      %p141 = por %p139, %p140
      %p143 = scmp.ne.s32.totalorder %s126, %s142
      %p144 = scmp.eq.s32.totalorder %s15, 0
      %p145 = por %p143, %p144
      %p146 = scmp.le.s32.totalorder 1, %s9
      %p147 = scmp.lt.s32.totalorder %s9, 17
      %p148 = pnand %p146, %p147
      %p149 = pneg %p148
      // Predicated region
      $region9: #{discriminator_forward.13} parent=5 // pred_check
        _
      $region10: #{discriminator_forward.13} parent=5 // pred_check_branch
        %151 = sbr.rel (%p148) target = $region12
      $region11: #{discriminator_forward.13} parent=5 // pred_region
        %s152 = ssub.s32 %s9, 1
      $region12: #{discriminator_forward.13} parent=5 // pred_fallthru
        _
      %p153 = scmp.lt.s32.totalorder %s9, 16
      // Predicated region
      $region13: #{discriminator_forward.13} parent=5 // pred_check
        %p154 = pneg %p153
      $region14: #{discriminator_forward.13} parent=5 // pred_check_branch
        %156 = sbr.rel (%p154) target = $region16
      $region15: #{discriminator_forward.13} parent=5 // pred_region
        // Predicated region
        $region17: #{discriminator_forward.13} parent=15 // pred_check
          %p157 = pneg %p50
        $region18: #{discriminator_forward.13} parent=15 // pred_check_branch
          %159 = sbr.rel (%p157) target = $region20
        $region19: #{discriminator_forward.13} parent=15 // pred_region
          %s160 = sand.u32 %s40, 1
          %s161 = sand.u32 %s40, 1
          %s162 = smul.addr %s161, 48
          %s163 = scalar_lea.vmem [#allocation3], %s162
          %s164 = smul.u32 3, %s16
          %s165 = smul.u32 4, %s18
          %s166 = smul.addr %s164, 32
          %s167 = sadd.s32 %s165, %s166
          %s168 = smul.addr %s167, 4
          %s169 = scalar_lea.vmem %s0, %s168
          // Predicated region
          $region21: #{discriminator_forward.13} parent=19 // pred_check
            _
          $region22: #{discriminator_forward.13} parent=19 // pred_check_branch
            %171 = sbr.rel (0) target = $region24
          $region23: #{discriminator_forward.13} parent=19 // pred_region
            // Predicated region
            $region25: #{discriminator_forward.13} parent=23 // pred_check
              _
            $region26: #{discriminator_forward.13} parent=23 // pred_check_branch
              %173 = sbr.rel (0) target = $region28
            $region27: #{discriminator_forward.13} parent=23 // pred_region
              loop: start=0, step=1, limit=1
              $region29: #{discriminator_forward.13} parent=27 // loop_pre_header
                _
              $region30: #{discriminator_forward.13} parent=27 // loop_header
                %s175 = sphi 0, %s179
                %p176 = scmp.ge.s32.totalorder %s175, 1
                %s180 = sphi %s169, %s169
                %s181 = sphi %s163, %s163
              $region31: #{discriminator_forward.13} parent=27 // loop_header_branch
                %178 = sbr.rel (%p176) target = $region35
              $region32: #{discriminator_forward.13} parent=27 // loop_body
                %v182 = vld [vmem:[%s180] sm:$0xff]
                %183 = vst [vmem:[%s181] sm:$0xff] %v182
                %v184 = vld [vmem:[%s180 + $0x8] sm:$0xff]
                %185 = vst [vmem:[%s181 + $0x8] sm:$0xff] %v184
                %v186 = vld [vmem:[%s180 + $0x80] sm:$0xff]
                %187 = vst [vmem:[%s181 + $0x10] sm:$0xff] %v186
                %v188 = vld [vmem:[%s180 + $0x88] sm:$0xff]
                %189 = vst [vmem:[%s181 + $0x18] sm:$0xff] %v188
                %v190 = vld [vmem:[%s180 + $0x100] sm:$0xff]
                %191 = vst [vmem:[%s181 + $0x20] sm:$0xff] %v190
                %v192 = vld [vmem:[%s180 + $0x108] sm:$0xff]
                %193 = vst [vmem:[%s181 + $0x28] sm:$0xff] %v192
              $region33: #{discriminator_forward.13} parent=27 // loop_footer
                %s179 = sadd.s32 1, %s175
              $region34: #{discriminator_forward.13} parent=27 // loop_footer_branch
                %174 = sbr.rel target = $region30
              $region35: #{discriminator_forward.13} parent=27 // loop_exit
                _
            $region28: #{discriminator_forward.13} parent=23 // pred_fallthru
              _
            // Predicated region
            $region36: #{discriminator_forward.13} parent=23 // pred_check
              _
            $region37: #{discriminator_forward.13} parent=23 // pred_check_branch
              %195 = sbr.rel target = $region39
            $region38: #{discriminator_forward.13} parent=23 // pred_region
              _
            $region39: #{discriminator_forward.13} parent=23 // pred_fallthru
              _
          $region24: #{discriminator_forward.13} parent=19 // pred_fallthru
            _
          %196 = vnop
        $region20: #{discriminator_forward.13} parent=15 // pred_fallthru
          _
        // Predicated region
        $region40: #{discriminator_forward.13} parent=15 // pred_check
          %p197 = pneg %p78
        $region41: #{discriminator_forward.13} parent=15 // pred_check_branch
          %199 = sbr.rel (%p197) target = $region43
        $region42: #{discriminator_forward.13} parent=15 // pred_region
          %s200 = sand.u32 %s68, 1
          %s201 = sand.u32 %s68, 1
          %s202 = smul.addr %s201, 512
          %s203 = scalar_lea.vmem [#allocation4], %s202
          %s204 = smul.u32 64, %s18
          %s205 = smul.u32 2, %s17
          %s206 = smul.addr %s204, 4
          %s207 = sadd.s32 %s205, %s206
          %s208 = smul.addr %s207, 4
          %s209 = scalar_lea.vmem %s1, %s208
          // Predicated region
          $region44: #{discriminator_forward.13} parent=42 // pred_check
            _
          $region45: #{discriminator_forward.13} parent=42 // pred_check_branch
            %211 = sbr.rel (0) target = $region47
          $region46: #{discriminator_forward.13} parent=42 // pred_region
            // Predicated region
            $region48: #{discriminator_forward.13} parent=46 // pred_check
              _
            $region49: #{discriminator_forward.13} parent=46 // pred_check_branch
              %213 = sbr.rel (0) target = $region51
            $region50: #{discriminator_forward.13} parent=46 // pred_region
              // Predicated region
              $region63: #{discriminator_forward.13} parent=50 // pred_check
                _
              $region64: #{discriminator_forward.13} parent=50 // pred_check_branch
                %354 = sbr.rel (0) target = $region66
              $region65: #{discriminator_forward.13} parent=50 // pred_region
                loop: start=0, step=1, limit=1
                $region67: #{discriminator_forward.13} parent=65 // loop_pre_header
                  _
                $region68: #{discriminator_forward.13} parent=65 // loop_header
                  %s356 = sphi 0, %s360
                  %p357 = scmp.ge.s32.totalorder %s356, 1
                  %s361 = sphi %s209, %s209
                  %s362 = sphi %s203, %s203
                $region69: #{discriminator_forward.13} parent=65 // loop_header_branch
                  %359 = sbr.rel (%p357) target = $region73
                $region70: #{discriminator_forward.13} parent=65 // loop_body
                  %v363 = vld [vmem:[%s361] sm:$0xff]
                  %364 = vst [vmem:[%s362] sm:$0xff] %v363
                  %v365 = vld [vmem:[%s361 + $0x10] sm:$0xff]
                  %366 = vst [vmem:[%s362 + $0x8] sm:$0xff] %v365
                  %v367 = vld [vmem:[%s361 + $0x20] sm:$0xff]
                  %368 = vst [vmem:[%s362 + $0x10] sm:$0xff] %v367
                  %v369 = vld [vmem:[%s361 + $0x30] sm:$0xff]
                  %370 = vst [vmem:[%s362 + $0x18] sm:$0xff] %v369
                  %v371 = vld [vmem:[%s361 + $0x40] sm:$0xff]
                  %372 = vst [vmem:[%s362 + $0x20] sm:$0xff] %v371
                  %v373 = vld [vmem:[%s361 + $0x50] sm:$0xff]
                  %374 = vst [vmem:[%s362 + $0x28] sm:$0xff] %v373
                  %v375 = vld [vmem:[%s361 + $0x60] sm:$0xff]
                  %376 = vst [vmem:[%s362 + $0x30] sm:$0xff] %v375
                  %v377 = vld [vmem:[%s361 + $0x70] sm:$0xff]
                  %378 = vst [vmem:[%s362 + $0x38] sm:$0xff] %v377
                  %v379 = vld [vmem:[%s361 + $0x80] sm:$0xff]
                  %380 = vst [vmem:[%s362 + $0x40] sm:$0xff] %v379
                  %v381 = vld [vmem:[%s361 + $0x90] sm:$0xff]
                  %382 = vst [vmem:[%s362 + $0x48] sm:$0xff] %v381
                  %v383 = vld [vmem:[%s361 + $0xa0] sm:$0xff]
                  %384 = vst [vmem:[%s362 + $0x50] sm:$0xff] %v383
                  %v385 = vld [vmem:[%s361 + $0xb0] sm:$0xff]
                  %386 = vst [vmem:[%s362 + $0x58] sm:$0xff] %v385
                  %v387 = vld [vmem:[%s361 + $0xc0] sm:$0xff]
                  %388 = vst [vmem:[%s362 + $0x60] sm:$0xff] %v387
                  %v389 = vld [vmem:[%s361 + $0xd0] sm:$0xff]
                  %390 = vst [vmem:[%s362 + $0x68] sm:$0xff] %v389
                  %v391 = vld [vmem:[%s361 + $0xe0] sm:$0xff]
                  %392 = vst [vmem:[%s362 + $0x70] sm:$0xff] %v391
                  %v393 = vld [vmem:[%s361 + $0xf0] sm:$0xff]
                  %394 = vst [vmem:[%s362 + $0x78] sm:$0xff] %v393
                  %v395 = vld [vmem:[%s361 + $0x100] sm:$0xff]
                  %396 = vst [vmem:[%s362 + $0x80] sm:$0xff] %v395
                  %v397 = vld [vmem:[%s361 + $0x110] sm:$0xff]
                  %398 = vst [vmem:[%s362 + $0x88] sm:$0xff] %v397
                  %v399 = vld [vmem:[%s361 + $0x120] sm:$0xff]
                  %400 = vst [vmem:[%s362 + $0x90] sm:$0xff] %v399
                  %v401 = vld [vmem:[%s361 + $0x130] sm:$0xff]
                  %402 = vst [vmem:[%s362 + $0x98] sm:$0xff] %v401
                  %v403 = vld [vmem:[%s361 + $0x140] sm:$0xff]
                  %404 = vst [vmem:[%s362 + $0xa0] sm:$0xff] %v403
                  %v405 = vld [vmem:[%s361 + $0x150] sm:$0xff]
                  %406 = vst [vmem:[%s362 + $0xa8] sm:$0xff] %v405
                  %v407 = vld [vmem:[%s361 + $0x160] sm:$0xff]
                  %408 = vst [vmem:[%s362 + $0xb0] sm:$0xff] %v407
                  %v409 = vld [vmem:[%s361 + $0x170] sm:$0xff]
                  %410 = vst [vmem:[%s362 + $0xb8] sm:$0xff] %v409
                  %v411 = vld [vmem:[%s361 + $0x180] sm:$0xff]
                  %412 = vst [vmem:[%s362 + $0xc0] sm:$0xff] %v411
                  %v413 = vld [vmem:[%s361 + $0x190] sm:$0xff]
                  %414 = vst [vmem:[%s362 + $0xc8] sm:$0xff] %v413
                  %v415 = vld [vmem:[%s361 + $0x1a0] sm:$0xff]
                  %416 = vst [vmem:[%s362 + $0xd0] sm:$0xff] %v415
                  %v417 = vld [vmem:[%s361 + $0x1b0] sm:$0xff]
                  %418 = vst [vmem:[%s362 + $0xd8] sm:$0xff] %v417
                  %v419 = vld [vmem:[%s361 + $0x1c0] sm:$0xff]
                  %420 = vst [vmem:[%s362 + $0xe0] sm:$0xff] %v419
                  %v421 = vld [vmem:[%s361 + $0x1d0] sm:$0xff]
                  %422 = vst [vmem:[%s362 + $0xe8] sm:$0xff] %v421
                  %v423 = vld [vmem:[%s361 + $0x1e0] sm:$0xff]
                  %424 = vst [vmem:[%s362 + $0xf0] sm:$0xff] %v423
                  %v425 = vld [vmem:[%s361 + $0x1f0] sm:$0xff]
                  %426 = vst [vmem:[%s362 + $0xf8] sm:$0xff] %v425
                  %v427 = vld [vmem:[%s361 + $0x200] sm:$0xff]
                  %428 = vst [vmem:[%s362 + $0x100] sm:$0xff] %v427
                  %v429 = vld [vmem:[%s361 + $0x210] sm:$0xff]
                  %430 = vst [vmem:[%s362 + $0x108] sm:$0xff] %v429
                  %v431 = vld [vmem:[%s361 + $0x220] sm:$0xff]
                  %432 = vst [vmem:[%s362 + $0x110] sm:$0xff] %v431
                  %v433 = vld [vmem:[%s361 + $0x230] sm:$0xff]
                  %434 = vst [vmem:[%s362 + $0x118] sm:$0xff] %v433
                  %v435 = vld [vmem:[%s361 + $0x240] sm:$0xff]
                  %436 = vst [vmem:[%s362 + $0x120] sm:$0xff] %v435
                  %v437 = vld [vmem:[%s361 + $0x250] sm:$0xff]
                  %438 = vst [vmem:[%s362 + $0x128] sm:$0xff] %v437
                  %v439 = vld [vmem:[%s361 + $0x260] sm:$0xff]
                  %440 = vst [vmem:[%s362 + $0x130] sm:$0xff] %v439
                  %v441 = vld [vmem:[%s361 + $0x270] sm:$0xff]
                  %442 = vst [vmem:[%s362 + $0x138] sm:$0xff] %v441
                  %v443 = vld [vmem:[%s361 + $0x280] sm:$0xff]
                  %444 = vst [vmem:[%s362 + $0x140] sm:$0xff] %v443
                  %v445 = vld [vmem:[%s361 + $0x290] sm:$0xff]
                  %446 = vst [vmem:[%s362 + $0x148] sm:$0xff] %v445
                  %v447 = vld [vmem:[%s361 + $0x2a0] sm:$0xff]
                  %448 = vst [vmem:[%s362 + $0x150] sm:$0xff] %v447
                  %v449 = vld [vmem:[%s361 + $0x2b0] sm:$0xff]
                  %450 = vst [vmem:[%s362 + $0x158] sm:$0xff] %v449
                  %v451 = vld [vmem:[%s361 + $0x2c0] sm:$0xff]
                  %452 = vst [vmem:[%s362 + $0x160] sm:$0xff] %v451
                  %v453 = vld [vmem:[%s361 + $0x2d0] sm:$0xff]
                  %454 = vst [vmem:[%s362 + $0x168] sm:$0xff] %v453
                  %v455 = vld [vmem:[%s361 + $0x2e0] sm:$0xff]
                  %456 = vst [vmem:[%s362 + $0x170] sm:$0xff] %v455
                  %v457 = vld [vmem:[%s361 + $0x2f0] sm:$0xff]
                  %458 = vst [vmem:[%s362 + $0x178] sm:$0xff] %v457
                  %v459 = vld [vmem:[%s361 + $0x300] sm:$0xff]
                  %460 = vst [vmem:[%s362 + $0x180] sm:$0xff] %v459
                  %v461 = vld [vmem:[%s361 + $0x310] sm:$0xff]
                  %462 = vst [vmem:[%s362 + $0x188] sm:$0xff] %v461
                  %v463 = vld [vmem:[%s361 + $0x320] sm:$0xff]
                  %464 = vst [vmem:[%s362 + $0x190] sm:$0xff] %v463
                  %v465 = vld [vmem:[%s361 + $0x330] sm:$0xff]
                  %466 = vst [vmem:[%s362 + $0x198] sm:$0xff] %v465
                  %v467 = vld [vmem:[%s361 + $0x340] sm:$0xff]
                  %468 = vst [vmem:[%s362 + $0x1a0] sm:$0xff] %v467
                  %v469 = vld [vmem:[%s361 + $0x350] sm:$0xff]
                  %470 = vst [vmem:[%s362 + $0x1a8] sm:$0xff] %v469
                  %v471 = vld [vmem:[%s361 + $0x360] sm:$0xff]
                  %472 = vst [vmem:[%s362 + $0x1b0] sm:$0xff] %v471
                  %v473 = vld [vmem:[%s361 + $0x370] sm:$0xff]
                  %474 = vst [vmem:[%s362 + $0x1b8] sm:$0xff] %v473
                  %v475 = vld [vmem:[%s361 + $0x380] sm:$0xff]
                  %476 = vst [vmem:[%s362 + $0x1c0] sm:$0xff] %v475
                  %v477 = vld [vmem:[%s361 + $0x390] sm:$0xff]
                  %478 = vst [vmem:[%s362 + $0x1c8] sm:$0xff] %v477
                  %v479 = vld [vmem:[%s361 + $0x3a0] sm:$0xff]
                  %480 = vst [vmem:[%s362 + $0x1d0] sm:$0xff] %v479
                  %v481 = vld [vmem:[%s361 + $0x3b0] sm:$0xff]
                  %482 = vst [vmem:[%s362 + $0x1d8] sm:$0xff] %v481
                  %v483 = vld [vmem:[%s361 + $0x3c0] sm:$0xff]
                  %484 = vst [vmem:[%s362 + $0x1e0] sm:$0xff] %v483
                  %v485 = vld [vmem:[%s361 + $0x3d0] sm:$0xff]
                  %486 = vst [vmem:[%s362 + $0x1e8] sm:$0xff] %v485
                  %v487 = vld [vmem:[%s361 + $0x3e0] sm:$0xff]
                  %488 = vst [vmem:[%s362 + $0x1f0] sm:$0xff] %v487
                  %v489 = vld [vmem:[%s361 + $0x3f0] sm:$0xff]
                  %490 = vst [vmem:[%s362 + $0x1f8] sm:$0xff] %v489
                $region71: #{discriminator_forward.13} parent=65 // loop_footer
                  %s360 = sadd.s32 1, %s356
                $region72: #{discriminator_forward.13} parent=65 // loop_footer_branch
                  %355 = sbr.rel target = $region68
                $region73: #{discriminator_forward.13} parent=65 // loop_exit
                  _
              $region66: #{discriminator_forward.13} parent=50 // pred_fallthru
                _
              // Predicated region
              $region74: #{discriminator_forward.13} parent=50 // pred_check
                _
              $region75: #{discriminator_forward.13} parent=50 // pred_check_branch
                %492 = sbr.rel target = $region77
              $region76: #{discriminator_forward.13} parent=50 // pred_region
                _
              $region77: #{discriminator_forward.13} parent=50 // pred_fallthru
                _
            $region51: #{discriminator_forward.13} parent=46 // pred_fallthru
              _
            // Predicated region
            $region52: #{discriminator_forward.13} parent=46 // pred_check
              _
            $region53: #{discriminator_forward.13} parent=46 // pred_check_branch
              %215 = sbr.rel target = $region55
            $region54: #{discriminator_forward.13} parent=46 // pred_region
              loop: start=0, step=1, limit=1
              $region56: #{discriminator_forward.13} parent=54 // loop_pre_header
                _
              $region57: #{discriminator_forward.13} parent=54 // loop_header
                %s218 = sphi 0, %s222
                %p219 = scmp.ge.s32.totalorder %s218, 1
                %s223 = sphi %s209, %s209
                %s224 = sphi %s203, %s203
              $region58: #{discriminator_forward.13} parent=54 // loop_header_branch
                %221 = sbr.rel (%p219) target = $region62
              $region59: #{discriminator_forward.13} parent=54 // loop_body
                %v225 = vld [vmem:[%s223] sm:$0xff]
                %226 = vst [vmem:[%s224] sm:$0xff] %v225
                %v227 = vld [vmem:[%s223 + $0x10] sm:$0xff]
                %228 = vst [vmem:[%s224 + $0x8] sm:$0xff] %v227
                %v229 = vld [vmem:[%s223 + $0x20] sm:$0xff]
                %230 = vst [vmem:[%s224 + $0x10] sm:$0xff] %v229
                %v231 = vld [vmem:[%s223 + $0x30] sm:$0xff]
                %232 = vst [vmem:[%s224 + $0x18] sm:$0xff] %v231
                %v233 = vld [vmem:[%s223 + $0x40] sm:$0xff]
                %234 = vst [vmem:[%s224 + $0x20] sm:$0xff] %v233
                %v235 = vld [vmem:[%s223 + $0x50] sm:$0xff]
                %236 = vst [vmem:[%s224 + $0x28] sm:$0xff] %v235
                %v237 = vld [vmem:[%s223 + $0x60] sm:$0xff]
                %238 = vst [vmem:[%s224 + $0x30] sm:$0xff] %v237
                %v239 = vld [vmem:[%s223 + $0x70] sm:$0xff]
                %240 = vst [vmem:[%s224 + $0x38] sm:$0xff] %v239
                %v241 = vld [vmem:[%s223 + $0x80] sm:$0xff]
                %242 = vst [vmem:[%s224 + $0x40] sm:$0xff] %v241
                %v243 = vld [vmem:[%s223 + $0x90] sm:$0xff]
                %244 = vst [vmem:[%s224 + $0x48] sm:$0xff] %v243
                %v245 = vld [vmem:[%s223 + $0xa0] sm:$0xff]
                %246 = vst [vmem:[%s224 + $0x50] sm:$0xff] %v245
                %v247 = vld [vmem:[%s223 + $0xb0] sm:$0xff]
                %248 = vst [vmem:[%s224 + $0x58] sm:$0xff] %v247
                %v249 = vld [vmem:[%s223 + $0xc0] sm:$0xff]
                %250 = vst [vmem:[%s224 + $0x60] sm:$0xff] %v249
                %v251 = vld [vmem:[%s223 + $0xd0] sm:$0xff]
                %252 = vst [vmem:[%s224 + $0x68] sm:$0xff] %v251
                %v253 = vld [vmem:[%s223 + $0xe0] sm:$0xff]
                %254 = vst [vmem:[%s224 + $0x70] sm:$0xff] %v253
                %v255 = vld [vmem:[%s223 + $0xf0] sm:$0xff]
                %256 = vst [vmem:[%s224 + $0x78] sm:$0xff] %v255
                %v257 = vld [vmem:[%s223 + $0x100] sm:$0xff]
                %258 = vst [vmem:[%s224 + $0x80] sm:$0xff] %v257
                %v259 = vld [vmem:[%s223 + $0x110] sm:$0xff]
                %260 = vst [vmem:[%s224 + $0x88] sm:$0xff] %v259
                %v261 = vld [vmem:[%s223 + $0x120] sm:$0xff]
                %262 = vst [vmem:[%s224 + $0x90] sm:$0xff] %v261
                %v263 = vld [vmem:[%s223 + $0x130] sm:$0xff]
                %264 = vst [vmem:[%s224 + $0x98] sm:$0xff] %v263
                %v265 = vld [vmem:[%s223 + $0x140] sm:$0xff]
                %266 = vst [vmem:[%s224 + $0xa0] sm:$0xff] %v265
                %v267 = vld [vmem:[%s223 + $0x150] sm:$0xff]
                %268 = vst [vmem:[%s224 + $0xa8] sm:$0xff] %v267
                %v269 = vld [vmem:[%s223 + $0x160] sm:$0xff]
                %270 = vst [vmem:[%s224 + $0xb0] sm:$0xff] %v269
                %v271 = vld [vmem:[%s223 + $0x170] sm:$0xff]
                %272 = vst [vmem:[%s224 + $0xb8] sm:$0xff] %v271
                %v273 = vld [vmem:[%s223 + $0x180] sm:$0xff]
                %274 = vst [vmem:[%s224 + $0xc0] sm:$0xff] %v273
                %v275 = vld [vmem:[%s223 + $0x190] sm:$0xff]
                %276 = vst [vmem:[%s224 + $0xc8] sm:$0xff] %v275
                %v277 = vld [vmem:[%s223 + $0x1a0] sm:$0xff]
                %278 = vst [vmem:[%s224 + $0xd0] sm:$0xff] %v277
                %v279 = vld [vmem:[%s223 + $0x1b0] sm:$0xff]
                %280 = vst [vmem:[%s224 + $0xd8] sm:$0xff] %v279
                %v281 = vld [vmem:[%s223 + $0x1c0] sm:$0xff]
                %282 = vst [vmem:[%s224 + $0xe0] sm:$0xff] %v281
                %v283 = vld [vmem:[%s223 + $0x1d0] sm:$0xff]
                %284 = vst [vmem:[%s224 + $0xe8] sm:$0xff] %v283
                %v285 = vld [vmem:[%s223 + $0x1e0] sm:$0xff]
                %286 = vst [vmem:[%s224 + $0xf0] sm:$0xff] %v285
                %v287 = vld [vmem:[%s223 + $0x1f0] sm:$0xff]
                %288 = vst [vmem:[%s224 + $0xf8] sm:$0xff] %v287
                %v289 = vld [vmem:[%s223 + $0x200] sm:$0xff]
                %290 = vst [vmem:[%s224 + $0x100] sm:$0xff] %v289
                %v291 = vld [vmem:[%s223 + $0x210] sm:$0xff]
                %292 = vst [vmem:[%s224 + $0x108] sm:$0xff] %v291
                %v293 = vld [vmem:[%s223 + $0x220] sm:$0xff]
                %294 = vst [vmem:[%s224 + $0x110] sm:$0xff] %v293
                %v295 = vld [vmem:[%s223 + $0x230] sm:$0xff]
                %296 = vst [vmem:[%s224 + $0x118] sm:$0xff] %v295
                %v297 = vld [vmem:[%s223 + $0x240] sm:$0xff]
                %298 = vst [vmem:[%s224 + $0x120] sm:$0xff] %v297
                %v299 = vld [vmem:[%s223 + $0x250] sm:$0xff]
                %300 = vst [vmem:[%s224 + $0x128] sm:$0xff] %v299
                %v301 = vld [vmem:[%s223 + $0x260] sm:$0xff]
                %302 = vst [vmem:[%s224 + $0x130] sm:$0xff] %v301
                %v303 = vld [vmem:[%s223 + $0x270] sm:$0xff]
                %304 = vst [vmem:[%s224 + $0x138] sm:$0xff] %v303
                %v305 = vld [vmem:[%s223 + $0x280] sm:$0xff]
                %306 = vst [vmem:[%s224 + $0x140] sm:$0xff] %v305
                %v307 = vld [vmem:[%s223 + $0x290] sm:$0xff]
                %308 = vst [vmem:[%s224 + $0x148] sm:$0xff] %v307
                %v309 = vld [vmem:[%s223 + $0x2a0] sm:$0xff]
                %310 = vst [vmem:[%s224 + $0x150] sm:$0xff] %v309
                %v311 = vld [vmem:[%s223 + $0x2b0] sm:$0xff]
                %312 = vst [vmem:[%s224 + $0x158] sm:$0xff] %v311
                %v313 = vld [vmem:[%s223 + $0x2c0] sm:$0xff]
                %314 = vst [vmem:[%s224 + $0x160] sm:$0xff] %v313
                %v315 = vld [vmem:[%s223 + $0x2d0] sm:$0xff]
                %316 = vst [vmem:[%s224 + $0x168] sm:$0xff] %v315
                %v317 = vld [vmem:[%s223 + $0x2e0] sm:$0xff]
                %318 = vst [vmem:[%s224 + $0x170] sm:$0xff] %v317
                %v319 = vld [vmem:[%s223 + $0x2f0] sm:$0xff]
                %320 = vst [vmem:[%s224 + $0x178] sm:$0xff] %v319
                %v321 = vld [vmem:[%s223 + $0x300] sm:$0xff]
                %322 = vst [vmem:[%s224 + $0x180] sm:$0xff] %v321
                %v323 = vld [vmem:[%s223 + $0x310] sm:$0xff]
                %324 = vst [vmem:[%s224 + $0x188] sm:$0xff] %v323
                %v325 = vld [vmem:[%s223 + $0x320] sm:$0xff]
                %326 = vst [vmem:[%s224 + $0x190] sm:$0xff] %v325
                %v327 = vld [vmem:[%s223 + $0x330] sm:$0xff]
                %328 = vst [vmem:[%s224 + $0x198] sm:$0xff] %v327
                %v329 = vld [vmem:[%s223 + $0x340] sm:$0xff]
                %330 = vst [vmem:[%s224 + $0x1a0] sm:$0xff] %v329
                %v331 = vld [vmem:[%s223 + $0x350] sm:$0xff]
                %332 = vst [vmem:[%s224 + $0x1a8] sm:$0xff] %v331
                %v333 = vld [vmem:[%s223 + $0x360] sm:$0xff]
                %334 = vst [vmem:[%s224 + $0x1b0] sm:$0xff] %v333
                %v335 = vld [vmem:[%s223 + $0x370] sm:$0xff]
                %336 = vst [vmem:[%s224 + $0x1b8] sm:$0xff] %v335
                %v337 = vld [vmem:[%s223 + $0x380] sm:$0xff]
                %338 = vst [vmem:[%s224 + $0x1c0] sm:$0xff] %v337
                %v339 = vld [vmem:[%s223 + $0x390] sm:$0xff]
                %340 = vst [vmem:[%s224 + $0x1c8] sm:$0xff] %v339
                %v341 = vld [vmem:[%s223 + $0x3a0] sm:$0xff]
                %342 = vst [vmem:[%s224 + $0x1d0] sm:$0xff] %v341
                %v343 = vld [vmem:[%s223 + $0x3b0] sm:$0xff]
                %344 = vst [vmem:[%s224 + $0x1d8] sm:$0xff] %v343
                %v345 = vld [vmem:[%s223 + $0x3c0] sm:$0xff]
                %346 = vst [vmem:[%s224 + $0x1e0] sm:$0xff] %v345
                %v347 = vld [vmem:[%s223 + $0x3d0] sm:$0xff]
                %348 = vst [vmem:[%s224 + $0x1e8] sm:$0xff] %v347
                %v349 = vld [vmem:[%s223 + $0x3e0] sm:$0xff]
                %350 = vst [vmem:[%s224 + $0x1f0] sm:$0xff] %v349
                %v351 = vld [vmem:[%s223 + $0x3f0] sm:$0xff]
                %352 = vst [vmem:[%s224 + $0x1f8] sm:$0xff] %v351
              $region60: #{discriminator_forward.13} parent=54 // loop_footer
                %s222 = sadd.s32 1, %s218
              $region61: #{discriminator_forward.13} parent=54 // loop_footer_branch
                %217 = sbr.rel target = $region57
              $region62: #{discriminator_forward.13} parent=54 // loop_exit
                _
            $region55: #{discriminator_forward.13} parent=46 // pred_fallthru
              _
          $region47: #{discriminator_forward.13} parent=42 // pred_fallthru
            _
          %493 = vnop
        $region43: #{discriminator_forward.13} parent=15 // pred_fallthru
          _
        // Predicated region
        $region78: #{discriminator_forward.13} parent=15 // pred_check
          %p494 = pneg %p104
        $region79: #{discriminator_forward.13} parent=15 // pred_check_branch
          %496 = sbr.rel (%p494) target = $region81
        $region80: #{discriminator_forward.13} parent=15 // pred_region
          %s497 = smul.u32 2, %s17
          %p498 = scmp.lt.s32.totalorder %s497, 3
          %s499 = scalar_select %p498, %s497, 3
          %s500 = scalar_lea.vmem %s2, %s499
          %s501 = smul.u32 2, %s17
        $region81: #{discriminator_forward.13} parent=15 // pred_fallthru
          _
      $region16: #{discriminator_forward.13} parent=5 // pred_fallthru
        _
      %p502 = scmp.le.s32.totalorder 1, %s9
      %p503 = scmp.lt.s32.totalorder %s9, 17
      %p504 = pnand %p502, %p503
      %p505 = pneg %p504
      // Predicated region
      $region82: #{discriminator_forward.13} parent=5 // pred_check
        _
      $region83: #{discriminator_forward.13} parent=5 // pred_check_branch
        %507 = sbr.rel (%p504) target = $region85
      $region84: #{discriminator_forward.13} parent=5 // pred_region
        %s508 = ssub.s32 %s9, 1
        %s509 = sand.u32 %s43, 1
        %s510 = sand.u32 %s43, 1
        %s511 = smul.addr %s510, 48
        %s512 = scalar_lea.vmem [#allocation3], %s511
        // Predicated region
        $region86: #{discriminator_forward.13} parent=84 // pred_check
          %p513 = pneg %p56
        $region87: #{discriminator_forward.13} parent=84 // pred_check_branch
          %515 = sbr.rel (%p513) target = $region89
        $region88: #{discriminator_forward.13} parent=84 // pred_region
          _
        $region89: #{discriminator_forward.13} parent=84 // pred_fallthru
          _
        %s516 = sand.u32 %s71, 1
        %s517 = sand.u32 %s71, 1
        %s518 = smul.addr %s517, 512
        %s519 = scalar_lea.vmem [#allocation4], %s518
        // Predicated region
        $region90: #{discriminator_forward.13} parent=84 // pred_check
          %p520 = pneg %p84
        $region91: #{discriminator_forward.13} parent=84 // pred_check_branch
          %522 = sbr.rel (%p520) target = $region93
        $region92: #{discriminator_forward.13} parent=84 // pred_region
          _
        $region93: #{discriminator_forward.13} parent=84 // pred_fallthru
          _
        %s523 = sand.u32 %s43, 1
        %s524 = sand.u32 %s43, 1
        %s525 = smul.addr %s524, 48
        %s526 = scalar_lea.vmem [#allocation3], %s525
        %p527 = pneg %p56
        %p528 = pneg %p53
        %s529 = sand.u32 %s71, 1
        %s530 = sand.u32 %s71, 1
        %s531 = smul.addr %s530, 512
        %s532 = scalar_lea.vmem [#allocation4], %s531
        %p533 = pneg %p84
        %p534 = pneg %p81
        %s535 = smul.u32 2, %s20
        %p536 = scmp.lt.s32.totalorder %s535, 3
        %s537 = scalar_select %p536, %s535, 3
        %s538 = scalar_lea.vmem %s2, %s537
        %p539 = pneg %p110
        %p540 = pneg %p107
        %p541 = pneg %p138
        %p542 = pneg %p135
        %s543 = sand.u32 %s125, 1
        %s544 = sand.u32 %s125, 1
        %s545 = smul.addr %s544, 24
        %s546 = scalar_lea.vmem [#allocation5], %s545
        %s547 = smul.u32 3, %s19
        %s548 = smul.u32 4, %s21
        %s549 = smul.u32 64, %s21
        %s550 = smul.u32 2, %s20
        %s551 = smul.u32 2, %s20
        %p552 = scmp.lt.s32.totalorder %s551, 3
        %s553 = scalar_select %p552, %s551, 3
        %s554 = scalar_lea.vmem %s2, %s553
        %s555 = smul.u32 2, %s20
        %s556 = smul.u32 3, %s19
        %s557 = smul.u32 2, %s20
        %p558 = scmp.eq.s32.totalorder %s21, 0
        // Predicated region
        $region94: #{discriminator_forward.13} parent=84 // pred_check
          %p559 = pneg %p558
        $region95: #{discriminator_forward.13} parent=84 // pred_check_branch
          %561 = sbr.rel (%p559) target = $region97
        $region96: #{discriminator_forward.13} parent=84 // pred_region
          %562 = vst [vmem:[#allocation2] sm:$0xff] 0.0
          %563 = vst [vmem:[#allocation2 + $0x8] sm:$0xff] 0.0
          %564 = vst [vmem:[#allocation2 + $0x10] sm:$0xff] 0.0
          %565 = vst [vmem:[#allocation2 + $0x18] sm:$0xff] 0.0
          %566 = vst [vmem:[#allocation2 + $0x20] sm:$0xff] 0.0
          %567 = vst [vmem:[#allocation2 + $0x28] sm:$0xff] 0.0
        $region97: #{discriminator_forward.13} parent=84 // pred_fallthru
          _
        %v568 = vld [vmem:[#allocation2] sm:$0xff]
        %v569 = vld [vmem:[#allocation2 + $0x8] sm:$0xff]
        %v570 = vld [vmem:[#allocation2 + $0x10] sm:$0xff]
        %v571 = vld [vmem:[#allocation2 + $0x18] sm:$0xff]
        %v572 = vld [vmem:[#allocation2 + $0x20] sm:$0xff]
        %v573 = vld [vmem:[#allocation2 + $0x28] sm:$0xff]
        %v574 = vld [vmem:[%s512] sm:$0xff]
        %v575 = vld [vmem:[%s512 + $0x8] sm:$0xff]
        %v576 = vld [vmem:[%s512 + $0x10] sm:$0xff]
        %v577 = vld [vmem:[%s512 + $0x18] sm:$0xff]
        %v578 = vld [vmem:[%s512 + $0x20] sm:$0xff]
        %v579 = vld [vmem:[%s512 + $0x28] sm:$0xff]
        %v580 = vld [vmem:[%s519] sm:$0xff]
        %v581 = vld [vmem:[%s519 + $0x8] sm:$0xff]
        %v582 = vld [vmem:[%s519 + $0x10] sm:$0xff]
        %v583 = vld [vmem:[%s519 + $0x18] sm:$0xff]
        %v584 = vld [vmem:[%s519 + $0x20] sm:$0xff]
        %v585 = vld [vmem:[%s519 + $0x28] sm:$0xff]
        %v586 = vld [vmem:[%s519 + $0x30] sm:$0xff]
        %v587 = vld [vmem:[%s519 + $0x38] sm:$0xff]
        %v588 = vld [vmem:[%s519 + $0x40] sm:$0xff]
        %v589 = vld [vmem:[%s519 + $0x48] sm:$0xff]
        %v590 = vld [vmem:[%s519 + $0x50] sm:$0xff]
        %v591 = vld [vmem:[%s519 + $0x58] sm:$0xff]
        %v592 = vld [vmem:[%s519 + $0x60] sm:$0xff]
        %v593 = vld [vmem:[%s519 + $0x68] sm:$0xff]
        %v594 = vld [vmem:[%s519 + $0x70] sm:$0xff]
        %v595 = vld [vmem:[%s519 + $0x78] sm:$0xff]
        %v596 = vld [vmem:[%s519 + $0x80] sm:$0xff]
        %v597 = vld [vmem:[%s519 + $0x88] sm:$0xff]
        %v598 = vld [vmem:[%s519 + $0x90] sm:$0xff]
        %v599 = vld [vmem:[%s519 + $0x98] sm:$0xff]
        %v600 = vld [vmem:[%s519 + $0xa0] sm:$0xff]
        %v601 = vld [vmem:[%s519 + $0xa8] sm:$0xff]
        %v602 = vld [vmem:[%s519 + $0xb0] sm:$0xff]
        %v603 = vld [vmem:[%s519 + $0xb8] sm:$0xff]
        %v604 = vld [vmem:[%s519 + $0xc0] sm:$0xff]
        %v605 = vld [vmem:[%s519 + $0xc8] sm:$0xff]
        %v606 = vld [vmem:[%s519 + $0xd0] sm:$0xff]
        %v607 = vld [vmem:[%s519 + $0xd8] sm:$0xff]
        %v608 = vld [vmem:[%s519 + $0xe0] sm:$0xff]
        %v609 = vld [vmem:[%s519 + $0xe8] sm:$0xff]
        %v610 = vld [vmem:[%s519 + $0xf0] sm:$0xff]
        %v611 = vld [vmem:[%s519 + $0xf8] sm:$0xff]
        %v612 = vld [vmem:[%s519 + $0x100] sm:$0xff]
        %v613 = vld [vmem:[%s519 + $0x108] sm:$0xff]
        %v614 = vld [vmem:[%s519 + $0x110] sm:$0xff]
        %v615 = vld [vmem:[%s519 + $0x118] sm:$0xff]
        %v616 = vld [vmem:[%s519 + $0x120] sm:$0xff]
        %v617 = vld [vmem:[%s519 + $0x128] sm:$0xff]
        %v618 = vld [vmem:[%s519 + $0x130] sm:$0xff]
        %v619 = vld [vmem:[%s519 + $0x138] sm:$0xff]
        %v620 = vld [vmem:[%s519 + $0x140] sm:$0xff]
        %v621 = vld [vmem:[%s519 + $0x148] sm:$0xff]
        %v622 = vld [vmem:[%s519 + $0x150] sm:$0xff]
        %v623 = vld [vmem:[%s519 + $0x158] sm:$0xff]
        %v624 = vld [vmem:[%s519 + $0x160] sm:$0xff]
        %v625 = vld [vmem:[%s519 + $0x168] sm:$0xff]
        %v626 = vld [vmem:[%s519 + $0x170] sm:$0xff]
        %v627 = vld [vmem:[%s519 + $0x178] sm:$0xff]
        %v628 = vld [vmem:[%s519 + $0x180] sm:$0xff]
        %v629 = vld [vmem:[%s519 + $0x188] sm:$0xff]
        %v630 = vld [vmem:[%s519 + $0x190] sm:$0xff]
        %v631 = vld [vmem:[%s519 + $0x198] sm:$0xff]
        %v632 = vld [vmem:[%s519 + $0x1a0] sm:$0xff]
        %v633 = vld [vmem:[%s519 + $0x1a8] sm:$0xff]
        %v634 = vld [vmem:[%s519 + $0x1b0] sm:$0xff]
        %v635 = vld [vmem:[%s519 + $0x1b8] sm:$0xff]
        %v636 = vld [vmem:[%s519 + $0x1c0] sm:$0xff]
        %v637 = vld [vmem:[%s519 + $0x1c8] sm:$0xff]
        %v638 = vld [vmem:[%s519 + $0x1d0] sm:$0xff]
        %v639 = vld [vmem:[%s519 + $0x1d8] sm:$0xff]
        %v640 = vld [vmem:[%s519 + $0x1e0] sm:$0xff]
        %v641 = vld [vmem:[%s519 + $0x1e8] sm:$0xff]
        %v642 = vld [vmem:[%s519 + $0x1f0] sm:$0xff]
        %v643 = vld [vmem:[%s519 + $0x1f8] sm:$0xff]
        %v650 = vunpack.c.l.b16 %v574
        %v651 = vunpack.c.h.b16 %v574
        %v652 = vunpack.c.l.b16 %v575
        %v653 = vunpack.c.h.b16 %v575
        %v654 = vunpack.c.l.b16 %v576
        %v655 = vunpack.c.h.b16 %v576
        %v656 = vunpack.c.l.b16 %v577
        %v657 = vunpack.c.h.b16 %v577
        %v658 = vunpack.c.l.b16 %v578
        %v659 = vunpack.c.h.b16 %v578
        %v660 = vunpack.c.l.b16 %v579
        %v661 = vunpack.c.h.b16 %v579
        %v662 = vpack.c.b16 %v654, %v650
        %v663 = vpack.c.b16 %v655, %v651
        %v664 = vpack.c.b16 %v656, %v652
        %v665 = vpack.c.b16 %v657, %v653
        %v666 = vpack.c.b16 %v658, %v658
        %v667 = vpack.c.b16 %v659, %v659
        %v668 = vpack.c.b16 %v660, %v660
        %v669 = vpack.c.b16 %v661, %v661
        %v742 = vunpack.c.l.b16 %v580
        %v743 = vunpack.c.h.b16 %v580
        %v744 = vunpack.c.l.b16 %v581
        %v745 = vunpack.c.h.b16 %v581
        %v746 = vunpack.c.l.b16 %v582
        %v747 = vunpack.c.h.b16 %v582
        %v748 = vunpack.c.l.b16 %v583
        %v749 = vunpack.c.h.b16 %v583
        %v750 = vunpack.c.l.b16 %v584
        %v751 = vunpack.c.h.b16 %v584
        %v752 = vunpack.c.l.b16 %v585
        %v753 = vunpack.c.h.b16 %v585
        %v754 = vunpack.c.l.b16 %v586
        %v755 = vunpack.c.h.b16 %v586
        %v756 = vunpack.c.l.b16 %v587
        %v757 = vunpack.c.h.b16 %v587
        %v758 = vunpack.c.l.b16 %v588
        %v759 = vunpack.c.h.b16 %v588
        %v760 = vunpack.c.l.b16 %v589
        %v761 = vunpack.c.h.b16 %v589
        %v762 = vunpack.c.l.b16 %v590
        %v763 = vunpack.c.h.b16 %v590
        %v764 = vunpack.c.l.b16 %v591
        %v765 = vunpack.c.h.b16 %v591
        %v766 = vunpack.c.l.b16 %v592
        %v767 = vunpack.c.h.b16 %v592
        %v768 = vunpack.c.l.b16 %v593
        %v769 = vunpack.c.h.b16 %v593
        %v770 = vunpack.c.l.b16 %v594
        %v771 = vunpack.c.h.b16 %v594
        %v772 = vunpack.c.l.b16 %v595
        %v773 = vunpack.c.h.b16 %v595
        %v774 = vunpack.c.l.b16 %v596
        %v775 = vunpack.c.h.b16 %v596
        %v776 = vunpack.c.l.b16 %v597
        %v777 = vunpack.c.h.b16 %v597
        %v778 = vunpack.c.l.b16 %v598
        %v779 = vunpack.c.h.b16 %v598
        %v780 = vunpack.c.l.b16 %v599
        %v781 = vunpack.c.h.b16 %v599
        %v782 = vunpack.c.l.b16 %v600
        %v783 = vunpack.c.h.b16 %v600
        %v784 = vunpack.c.l.b16 %v601
        %v785 = vunpack.c.h.b16 %v601
        %v786 = vunpack.c.l.b16 %v602
        %v787 = vunpack.c.h.b16 %v602
        %v788 = vunpack.c.l.b16 %v603
        %v789 = vunpack.c.h.b16 %v603
        %v790 = vunpack.c.l.b16 %v604
        %v791 = vunpack.c.h.b16 %v604
        %v792 = vunpack.c.l.b16 %v605
        %v793 = vunpack.c.h.b16 %v605
        %v794 = vunpack.c.l.b16 %v606
        %v795 = vunpack.c.h.b16 %v606
        %v796 = vunpack.c.l.b16 %v607
        %v797 = vunpack.c.h.b16 %v607
        %v798 = vunpack.c.l.b16 %v608
        %v799 = vunpack.c.h.b16 %v608
        %v800 = vunpack.c.l.b16 %v609
        %v801 = vunpack.c.h.b16 %v609
        %v802 = vunpack.c.l.b16 %v610
        %v803 = vunpack.c.h.b16 %v610
        %v804 = vunpack.c.l.b16 %v611
        %v805 = vunpack.c.h.b16 %v611
        %v806 = vunpack.c.l.b16 %v612
        %v807 = vunpack.c.h.b16 %v612
        %v808 = vunpack.c.l.b16 %v613
        %v809 = vunpack.c.h.b16 %v613
        %v810 = vunpack.c.l.b16 %v614
        %v811 = vunpack.c.h.b16 %v614
        %v812 = vunpack.c.l.b16 %v615
        %v813 = vunpack.c.h.b16 %v615
        %v814 = vunpack.c.l.b16 %v616
        %v815 = vunpack.c.h.b16 %v616
        %v816 = vunpack.c.l.b16 %v617
        %v817 = vunpack.c.h.b16 %v617
        %v818 = vunpack.c.l.b16 %v618
        %v819 = vunpack.c.h.b16 %v618
        %v820 = vunpack.c.l.b16 %v619
        %v821 = vunpack.c.h.b16 %v619
        %v822 = vunpack.c.l.b16 %v620
        %v823 = vunpack.c.h.b16 %v620
        %v824 = vunpack.c.l.b16 %v621
        %v825 = vunpack.c.h.b16 %v621
        %v826 = vunpack.c.l.b16 %v622
        %v827 = vunpack.c.h.b16 %v622
        %v828 = vunpack.c.l.b16 %v623
        %v829 = vunpack.c.h.b16 %v623
        %v830 = vunpack.c.l.b16 %v624
        %v831 = vunpack.c.h.b16 %v624
        %v832 = vunpack.c.l.b16 %v625
        %v833 = vunpack.c.h.b16 %v625
        %v834 = vunpack.c.l.b16 %v626
        %v835 = vunpack.c.h.b16 %v626
        %v836 = vunpack.c.l.b16 %v627
        %v837 = vunpack.c.h.b16 %v627
        %v838 = vunpack.c.l.b16 %v628
        %v839 = vunpack.c.h.b16 %v628
        %v840 = vunpack.c.l.b16 %v629
        %v841 = vunpack.c.h.b16 %v629
        %v842 = vunpack.c.l.b16 %v630
        %v843 = vunpack.c.h.b16 %v630
        %v844 = vunpack.c.l.b16 %v631
        %v845 = vunpack.c.h.b16 %v631
        %v846 = vunpack.c.l.b16 %v632
        %v847 = vunpack.c.h.b16 %v632
        %v848 = vunpack.c.l.b16 %v633
        %v849 = vunpack.c.h.b16 %v633
        %v850 = vunpack.c.l.b16 %v634
        %v851 = vunpack.c.h.b16 %v634
        %v852 = vunpack.c.l.b16 %v635
        %v853 = vunpack.c.h.b16 %v635
        %v854 = vunpack.c.l.b16 %v636
        %v855 = vunpack.c.h.b16 %v636
        %v856 = vunpack.c.l.b16 %v637
        %v857 = vunpack.c.h.b16 %v637
        %v858 = vunpack.c.l.b16 %v638
        %v859 = vunpack.c.h.b16 %v638
        %v860 = vunpack.c.l.b16 %v639
        %v861 = vunpack.c.h.b16 %v639
        %v862 = vunpack.c.l.b16 %v640
        %v863 = vunpack.c.h.b16 %v640
        %v864 = vunpack.c.l.b16 %v641
        %v865 = vunpack.c.h.b16 %v641
        %v866 = vunpack.c.l.b16 %v642
        %v867 = vunpack.c.h.b16 %v642
        %v868 = vunpack.c.l.b16 %v643
        %v869 = vunpack.c.h.b16 %v643
        %v870 = vpack.c.b16 %v744, %v742
        %v871 = vpack.c.b16 %v745, %v743
        %v872 = vpack.c.b16 %v748, %v746
        %v873 = vpack.c.b16 %v749, %v747
        %v874 = vpack.c.b16 %v752, %v750
        %v875 = vpack.c.b16 %v753, %v751
        %v876 = vpack.c.b16 %v756, %v754
        %v877 = vpack.c.b16 %v757, %v755
        %v878 = vpack.c.b16 %v760, %v758
        %v879 = vpack.c.b16 %v761, %v759
        %v880 = vpack.c.b16 %v764, %v762
        %v881 = vpack.c.b16 %v765, %v763
        %v882 = vpack.c.b16 %v768, %v766
        %v883 = vpack.c.b16 %v769, %v767
        %v884 = vpack.c.b16 %v772, %v770
        %v885 = vpack.c.b16 %v773, %v771
        %v886 = vpack.c.b16 %v776, %v774
        %v887 = vpack.c.b16 %v777, %v775
        %v888 = vpack.c.b16 %v780, %v778
        %v889 = vpack.c.b16 %v781, %v779
        %v890 = vpack.c.b16 %v784, %v782
        %v891 = vpack.c.b16 %v785, %v783
        %v892 = vpack.c.b16 %v788, %v786
        %v893 = vpack.c.b16 %v789, %v787
        %v894 = vpack.c.b16 %v792, %v790
        %v895 = vpack.c.b16 %v793, %v791
        %v896 = vpack.c.b16 %v796, %v794
        %v897 = vpack.c.b16 %v797, %v795
        %v898 = vpack.c.b16 %v800, %v798
        %v899 = vpack.c.b16 %v801, %v799
        %v900 = vpack.c.b16 %v804, %v802
        %v901 = vpack.c.b16 %v805, %v803
        %v902 = vpack.c.b16 %v808, %v806
        %v903 = vpack.c.b16 %v809, %v807
        %v904 = vpack.c.b16 %v812, %v810
        %v905 = vpack.c.b16 %v813, %v811
        %v906 = vpack.c.b16 %v816, %v814
        %v907 = vpack.c.b16 %v817, %v815
        %v908 = vpack.c.b16 %v820, %v818
        %v909 = vpack.c.b16 %v821, %v819
        %v910 = vpack.c.b16 %v824, %v822
        %v911 = vpack.c.b16 %v825, %v823
        %v912 = vpack.c.b16 %v828, %v826
        %v913 = vpack.c.b16 %v829, %v827
        %v914 = vpack.c.b16 %v832, %v830
        %v915 = vpack.c.b16 %v833, %v831
        %v916 = vpack.c.b16 %v836, %v834
        %v917 = vpack.c.b16 %v837, %v835
        %v918 = vpack.c.b16 %v840, %v838
        %v919 = vpack.c.b16 %v841, %v839
        %v920 = vpack.c.b16 %v844, %v842
        %v921 = vpack.c.b16 %v845, %v843
        %v922 = vpack.c.b16 %v848, %v846
        %v923 = vpack.c.b16 %v849, %v847
        %v924 = vpack.c.b16 %v852, %v850
        %v925 = vpack.c.b16 %v853, %v851
        %v926 = vpack.c.b16 %v856, %v854
        %v927 = vpack.c.b16 %v857, %v855
        %v928 = vpack.c.b16 %v860, %v858
        %v929 = vpack.c.b16 %v861, %v859
        %v930 = vpack.c.b16 %v864, %v862
        %v931 = vpack.c.b16 %v865, %v863
        %v932 = vpack.c.b16 %v868, %v866
        %v933 = vpack.c.b16 %v869, %v867
        %998 = vmatprep.subr.bf16.mxu0 %v871
        %999 = vmatpush1.bf16.msra.mxu0 %v870
        %1000 = vmatprep.subr.bf16.mxu0 %v873
        %1001 = vmatpush1.bf16.msra.mxu0 %v872
        %1002 = vmatprep.subr.bf16.mxu0 %v875
        %1003 = vmatpush1.bf16.msra.mxu0 %v874
        %1004 = vmatprep.subr.bf16.mxu0 %v877
        %1005 = vmatpush1.bf16.msra.mxu0 %v876
        %1006 = vmatprep.subr.bf16.mxu0 %v879
        %1007 = vmatpush1.bf16.msra.mxu0 %v878
        %1008 = vmatprep.subr.bf16.mxu0 %v881
        %1009 = vmatpush1.bf16.msra.mxu0 %v880
        %1010 = vmatprep.subr.bf16.mxu0 %v883
        %1011 = vmatpush1.bf16.msra.mxu0 %v882
        %1012 = vmatprep.subr.bf16.mxu0 %v885
        %1013 = vmatpush1.bf16.msra.mxu0 %v884
        %1014 = vmatprep.subr.bf16.mxu0 %v887
        %1015 = vmatpush1.bf16.msra.mxu0 %v886
        %1016 = vmatprep.subr.bf16.mxu0 %v889
        %1017 = vmatpush1.bf16.msra.mxu0 %v888
        %1018 = vmatprep.subr.bf16.mxu0 %v891
        %1019 = vmatpush1.bf16.msra.mxu0 %v890
        %1020 = vmatprep.subr.bf16.mxu0 %v893
        %1021 = vmatpush1.bf16.msra.mxu0 %v892
        %1022 = vmatprep.subr.bf16.mxu0 %v895
        %1023 = vmatpush1.bf16.msra.mxu0 %v894
        %1024 = vmatprep.subr.bf16.mxu0 %v897
        %1025 = vmatpush1.bf16.msra.mxu0 %v896
        %1026 = vmatprep.subr.bf16.mxu0 %v899
        %1027 = vmatpush1.bf16.msra.mxu0 %v898
        %1028 = vmatprep.subr.bf16.mxu0 %v901
        %1029 = vmatpush1.bf16.msra.mxu0 %v900
        %1030 = vmatprep.mubr.bf16.mxu0 %v663
        %1031 = vmatmul.mubr.bf16.gmra.mrb[0].mxu0 %v662
        %v1032 = vpop.f32.mrb[0].mxu0
        %v1033 = vadd.f32 0.0, %v1032
        %v1034 = vpop.f32.mrb[0].mxu0
        %v1035 = vadd.f32 0.0, %v1034
        %v1036 = vpop.f32.mrb[0].mxu0
        %v1037 = vadd.f32 0.0, %v1036
        %v1038 = vpop.f32.mrb[0].mxu0
        %v1039 = vadd.f32 0.0, %v1038
        %1040 = vmatprep.mubr.bf16.mxu0 %v667
        %1041 = vmatmul.mubr.bf16.gmra.mrb[0].mxu0 %v666
        %v1042 = vpop.f32.mrb[0].mxu0
        %v1043 = vadd.f32 0.0, %v1042
        %v1044 = vpop.f32.mrb[0].mxu0
        %v1045 = vadd.f32 0.0, %v1044
        %v1046 = vpop.f32.mrb[0].mxu0
        %v1047 = vpop.f32.mrb[0].mxu0
        %1048 = vdwg.mxu0
        %1049 = vmatprep.subr.bf16.mxu0 %v903
        %1050 = vmatpush1.bf16.msra.mxu0 %v902
        %1051 = vmatprep.subr.bf16.mxu0 %v905
        %1052 = vmatpush1.bf16.msra.mxu0 %v904
        %1053 = vmatprep.subr.bf16.mxu0 %v907
        %1054 = vmatpush1.bf16.msra.mxu0 %v906
        %1055 = vmatprep.subr.bf16.mxu0 %v909
        %1056 = vmatpush1.bf16.msra.mxu0 %v908
        %1057 = vmatprep.subr.bf16.mxu0 %v911
        %1058 = vmatpush1.bf16.msra.mxu0 %v910
        %1059 = vmatprep.subr.bf16.mxu0 %v913
        %1060 = vmatpush1.bf16.msra.mxu0 %v912
        %1061 = vmatprep.subr.bf16.mxu0 %v915
        %1062 = vmatpush1.bf16.msra.mxu0 %v914
        %1063 = vmatprep.subr.bf16.mxu0 %v917
        %1064 = vmatpush1.bf16.msra.mxu0 %v916
        %1065 = vmatprep.subr.bf16.mxu0 %v919
        %1066 = vmatpush1.bf16.msra.mxu0 %v918
        %1067 = vmatprep.subr.bf16.mxu0 %v921
        %1068 = vmatpush1.bf16.msra.mxu0 %v920
        %1069 = vmatprep.subr.bf16.mxu0 %v923
        %1070 = vmatpush1.bf16.msra.mxu0 %v922
        %1071 = vmatprep.subr.bf16.mxu0 %v925
        %1072 = vmatpush1.bf16.msra.mxu0 %v924
        %1073 = vmatprep.subr.bf16.mxu0 %v927
        %1074 = vmatpush1.bf16.msra.mxu0 %v926
        %1075 = vmatprep.subr.bf16.mxu0 %v929
        %1076 = vmatpush1.bf16.msra.mxu0 %v928
        %1077 = vmatprep.subr.bf16.mxu0 %v931
        %1078 = vmatpush1.bf16.msra.mxu0 %v930
        %1079 = vmatprep.subr.bf16.mxu0 %v933
        %1080 = vmatpush1.bf16.msra.mxu0 %v932
        %1081 = vmatprep.mubr.bf16.mxu0 %v665
        %1082 = vmatmul.mubr.bf16.gmra.mrb[0].mxu0 %v664
        %v1083 = vpop.f32.mrb[0].mxu0
        %v1084 = vadd.f32 %v1033, %v1083
        %v1085 = vpop.f32.mrb[0].mxu0
        %v1086 = vadd.f32 %v1035, %v1085
        %v1087 = vpop.f32.mrb[0].mxu0
        %v1088 = vadd.f32 %v1037, %v1087
        %v1089 = vpop.f32.mrb[0].mxu0
        %v1090 = vadd.f32 %v1039, %v1089
        %1091 = vmatprep.mubr.bf16.mxu0 %v669
        %1092 = vmatmul.mubr.bf16.gmra.mrb[0].mxu0 %v668
        %v1093 = vpop.f32.mrb[0].mxu0
        %v1094 = vadd.f32 %v1043, %v1093
        %v1095 = vpop.f32.mrb[0].mxu0
        %v1096 = vadd.f32 %v1045, %v1095
        %v1097 = vpop.f32.mrb[0].mxu0
        %v1098 = vpop.f32.mrb[0].mxu0
        %1099 = vdwg.mxu0
        %v1100 = vadd.f32 %v568, %v1084
        %v1101 = vadd.f32 %v569, %v1086
        %v1102 = vadd.f32 %v570, %v1088
        %v1103 = vadd.f32 %v571, %v1090
        %v1104 = vadd.f32 %v572, %v1094
        %v1105 = vadd.f32 %v573, %v1096
        %1106 = vst [vmem:[#allocation2] sm:$0xff] %v1100
        %1107 = vst [vmem:[#allocation2 + $0x8] sm:$0xff] %v1101
        %1108 = vst [vmem:[#allocation2 + $0x10] sm:$0xff] %v1102
        %1109 = vst [vmem:[#allocation2 + $0x18] sm:$0xff] %v1103
        %1110 = vst [vmem:[#allocation2 + $0x20] sm:$0xff] %v1104
        %1111 = vst [vmem:[#allocation2 + $0x28] sm:$0xff] %v1105
        %p1112 = scmp.eq.s32.totalorder %s21, 7
        // Predicated region
        $region98: #{discriminator_forward.13} parent=84 // pred_check
          %p1113 = pneg %p1112
        $region99: #{discriminator_forward.13} parent=84 // pred_check_branch
          %1115 = sbr.rel (%p1113) target = $region101
        $region100: #{discriminator_forward.13} parent=84 // pred_region
          %v1116 = vld [vmem:[#allocation2] sm:$0xff]
          %v1117 = vld [vmem:[#allocation2 + $0x8] sm:$0xff]
          %v1118 = vld [vmem:[#allocation2 + $0x10] sm:$0xff]
          %v1119 = vld [vmem:[#allocation2 + $0x18] sm:$0xff]
          %v1120 = vld [vmem:[#allocation2 + $0x20] sm:$0xff]
          %v1121 = vld [vmem:[#allocation2 + $0x28] sm:$0xff]
          %v1122 = vld [vmem:[%s554] sm:$0x3]
          %v1124 = vlaneseq
          %v1125 = vshrl.u32 %v1124, 7
          %v1126 = vsub.s32 0, %v1125
          %v1127 = vrot.slane %v1122, %v1126
          %v1128 = vlaneseq
          %v1129 = vshrl.u32 %v1128, 7
          %v1130 = vsub.s32 1, %v1129
          %v1131 = vrot.slane %v1122, %v1130
          %v1134 = vadd.f32 %v1116, %v1127
          %v1135 = vadd.f32 %v1117, %v1131
          %v1136 = vadd.f32 %v1118, %v1127
          %v1137 = vadd.f32 %v1119, %v1131
          %v1138 = vadd.f32 %v1120, %v1127
          %v1139 = vadd.f32 %v1121, %v1131
          %v1140 = vpack.c.bf16 %v1136, %v1134
          %v1141 = vpack.c.bf16 %v1137, %v1135
          %v1142 = vpack.c.bf16 %v1138, %v1138
          %v1143 = vpack.c.bf16 %v1139, %v1139
          %v1148 = vunpack.c.l.b16 %v1140
          %v1149 = vunpack.c.l.b16 %v1141
          %v1150 = vunpack.c.h.b16 %v1140
          %v1151 = vunpack.c.h.b16 %v1141
          %v1152 = vunpack.c.l.b16 %v1142
          %v1153 = vunpack.c.l.b16 %v1143
          %v1154 = vpack.c.b16 %v1149, %v1148
          %v1155 = vpack.c.b16 %v1151, %v1150
          %v1156 = vpack.c.b16 %v1153, %v1152
          %1160 = vst [vmem:[%s546] sm:$0xff] %v1154
          %1161 = vst [vmem:[%s546 + $0x8] sm:$0xff] %v1155
          %1162 = vst [vmem:[%s546 + $0x10] sm:$0xff] %v1156
        $region101: #{discriminator_forward.13} parent=84 // pred_fallthru
          _
        %s1163 = sand.u32 %s125, 1
        %s1164 = sand.u32 %s125, 1
        %s1165 = smul.addr %s1164, 24
        %s1166 = scalar_lea.vmem [#allocation5], %s1165
        // Predicated region
        $region102: #{discriminator_forward.13} parent=84 // pred_check
          %p1167 = pneg %p135
        $region103: #{discriminator_forward.13} parent=84 // pred_check_branch
          %1169 = sbr.rel (%p1167) target = $region105
        $region104: #{discriminator_forward.13} parent=84 // pred_region
          %s1170 = smul.u32 3, %s19
          %s1171 = smul.u32 2, %s20
          %s1172 = smul.addr %s1170, 4
          %s1173 = sadd.s32 %s1171, %s1172
          %s1174 = smul.addr %s1173, 4
          %s1175 = scalar_lea.vmem %s3, %s1174
          // Predicated region
          $region106: #{discriminator_forward.13} parent=104 // pred_check
            _
          $region107: #{discriminator_forward.13} parent=104 // pred_check_branch
            %1177 = sbr.rel (0) target = $region109
          $region108: #{discriminator_forward.13} parent=104 // pred_region
            // Predicated region
            $region110: #{discriminator_forward.13} parent=108 // pred_check
              _
            $region111: #{discriminator_forward.13} parent=108 // pred_check_branch
              %1179 = sbr.rel (0) target = $region113
            $region112: #{discriminator_forward.13} parent=108 // pred_region
              // Predicated region
              $region125: #{discriminator_forward.13} parent=112 // pred_check
                _
              $region126: #{discriminator_forward.13} parent=112 // pred_check_branch
                %1198 = sbr.rel (0) target = $region128
              $region127: #{discriminator_forward.13} parent=112 // pred_region
                loop: start=0, step=1, limit=1
                $region129: #{discriminator_forward.13} parent=127 // loop_pre_header
                  _
                $region130: #{discriminator_forward.13} parent=127 // loop_header
                  %s1200 = sphi 0, %s1204
                  %p1201 = scmp.ge.s32.totalorder %s1200, 1
                  %s1205 = sphi %s1166, %s1166
                  %s1206 = sphi %s1175, %s1175
                $region131: #{discriminator_forward.13} parent=127 // loop_header_branch
                  %1203 = sbr.rel (%p1201) target = $region135
                $region132: #{discriminator_forward.13} parent=127 // loop_body
                  %v1207 = vld [vmem:[%s1205] sm:$0xff]
                  %1208 = vst [vmem:[%s1206] sm:$0xff] %v1207
                  %v1209 = vld [vmem:[%s1205 + $0x8] sm:$0xff]
                  %1210 = vst [vmem:[%s1206 + $0x10] sm:$0xff] %v1209
                  %v1211 = vld [vmem:[%s1205 + $0x10] sm:$0xff]
                  %1212 = vst [vmem:[%s1206 + $0x20] sm:$0xff] %v1211
                $region133: #{discriminator_forward.13} parent=127 // loop_footer
                  %s1204 = sadd.s32 1, %s1200
                $region134: #{discriminator_forward.13} parent=127 // loop_footer_branch
                  %1199 = sbr.rel target = $region130
                $region135: #{discriminator_forward.13} parent=127 // loop_exit
                  _
              $region128: #{discriminator_forward.13} parent=112 // pred_fallthru
                _
              // Predicated region
              $region136: #{discriminator_forward.13} parent=112 // pred_check
                _
              $region137: #{discriminator_forward.13} parent=112 // pred_check_branch
                %1214 = sbr.rel target = $region139
              $region138: #{discriminator_forward.13} parent=112 // pred_region
                _
              $region139: #{discriminator_forward.13} parent=112 // pred_fallthru
                _
            $region113: #{discriminator_forward.13} parent=108 // pred_fallthru
              _
            // Predicated region
            $region114: #{discriminator_forward.13} parent=108 // pred_check
              _
            $region115: #{discriminator_forward.13} parent=108 // pred_check_branch
              %1181 = sbr.rel target = $region117
            $region116: #{discriminator_forward.13} parent=108 // pred_region
              loop: start=0, step=1, limit=1
              $region118: #{discriminator_forward.13} parent=116 // loop_pre_header
                _
              $region119: #{discriminator_forward.13} parent=116 // loop_header
                %s1184 = sphi 0, %s1188
                %p1185 = scmp.ge.s32.totalorder %s1184, 1
                %s1189 = sphi %s1166, %s1166
                %s1190 = sphi %s1175, %s1175
              $region120: #{discriminator_forward.13} parent=116 // loop_header_branch
                %1187 = sbr.rel (%p1185) target = $region124
              $region121: #{discriminator_forward.13} parent=116 // loop_body
                %v1191 = vld [vmem:[%s1189] sm:$0xff]
                %1192 = vst [vmem:[%s1190] sm:$0xff] %v1191
                %v1193 = vld [vmem:[%s1189 + $0x8] sm:$0xff]
                %1194 = vst [vmem:[%s1190 + $0x10] sm:$0xff] %v1193
                %v1195 = vld [vmem:[%s1189 + $0x10] sm:$0xff]
                %1196 = vst [vmem:[%s1190 + $0x20] sm:$0xff] %v1195
              $region122: #{discriminator_forward.13} parent=116 // loop_footer
                %s1188 = sadd.s32 1, %s1184
              $region123: #{discriminator_forward.13} parent=116 // loop_footer_branch
                %1183 = sbr.rel target = $region119
              $region124: #{discriminator_forward.13} parent=116 // loop_exit
                _
            $region117: #{discriminator_forward.13} parent=108 // pred_fallthru
              _
          $region109: #{discriminator_forward.13} parent=104 // pred_fallthru
            _
          %1215 = vnop
        $region105: #{discriminator_forward.13} parent=84 // pred_fallthru
          _
      $region85: #{discriminator_forward.13} parent=5 // pred_fallthru
        _
      %p1216 = scmp.le.s32.totalorder 2, %s9
      // Predicated region
      $region140: #{discriminator_forward.13} parent=5 // pred_check
        %p1217 = pneg %p1216
      $region141: #{discriminator_forward.13} parent=5 // pred_check_branch
        %1219 = sbr.rel (%p1217) target = $region143
      $region142: #{discriminator_forward.13} parent=5 // pred_region
        %s1220 = ssub.s32 %s9, 2
        // Predicated region
        $region144: #{discriminator_forward.13} parent=142 // pred_check
          %p1221 = pneg %p141
        $region145: #{discriminator_forward.13} parent=142 // pred_check_branch
          %1223 = sbr.rel (%p1221) target = $region147
        $region146: #{discriminator_forward.13} parent=142 // pred_region
          %s1224 = sand.u32 %s126, 1
          %s1225 = sand.u32 %s126, 1
          %s1226 = smul.addr %s1225, 24
          %s1227 = scalar_lea.vmem [#allocation5], %s1226
        $region147: #{discriminator_forward.13} parent=142 // pred_fallthru
          _
      $region143: #{discriminator_forward.13} parent=5 // pred_fallthru
        _
    $region6: #{discriminator_forward.13} parent=1 // loop_footer
      %s13 = sadd.s32 1, %s9
    $region7: #{discriminator_forward.13} parent=1 // loop_footer_branch
      %8 = sbr.rel target = $region3
    $region8: #{discriminator_forward.13} parent=1 // loop_exit
      _

// kernel: discriminator_forward.14
$region0: #{discriminator_forward.14}
  #allocation0 [shape = 'u32[]', space=smem, size = 0x4, offset = 0x4, fixed_abs, tag = 'smem constant byte address 0x4 - core index']
  #allocation1 [shape = 'u32[144,128]{1,0:T(1,128)}', space=vmem, size = 0x12000, scoped, tag = 'internal scratch']
  %s0 = inlined_call_operand.vmem [shape: bf16[2,9,512], index: 0, kind: input, shape index: {}]
  %s1 = inlined_call_operand.vmem [shape: f32[512,32], index: 1, kind: input, shape index: {}]
  %s2 = inlined_call_operand.vmem [shape: f32[32,512], index: 2, kind: input, shape index: {}]
  %s3 = inlined_call_operand.vmem [shape: f32[1,512], index: 3, kind: input, shape index: {}]
  %s4 = inlined_call_operand.vmem [shape: f32[1,512], index: 4, kind: input, shape index: {}]
  %s5 = inlined_call_operand.vmem [shape: bf16[2,9,512], index: 5, kind: output, shape index: {}]
  %s6 = sld [smem:[#allocation0]]
  $region53: #{discriminator_forward.14} parent=0
    _
  %s8 = ssub.s32 1, %s6
  %s9 = scalar_select 0, %s8, %s6
  loop: start=0, step=1, limit=4
  $region2: #{discriminator_forward.14} parent=0 // loop_pre_header
    _
  $region3: #{discriminator_forward.14} parent=0 // loop_header
    %s11 = sphi 0, %s15
    %p12 = scmp.ge.s32.totalorder %s11, 4
    %s21 = sphi 0, %s23
    %s24 = sphi 0, %s21
    %s25 = sphi 0, %s24
    %s41 = sphi 0, %s25
    %s45 = sphi 0, %s45
    %s47 = sphi 0, %s45
    %s48 = sphi 0, %s47
    %s62 = sphi 0, %s48
    %s66 = sphi 0, %s66
    %s68 = sphi 0, %s66
    %s69 = sphi 0, %s68
    %s83 = sphi 0, %s69
    %s87 = sphi 0, %s87
    %s89 = sphi 0, %s87
    %s90 = sphi 0, %s89
    %s104 = sphi 0, %s90
    %s108 = sphi 0, %s108
    %s110 = sphi 0, %s108
    %s111 = sphi 0, %s110
    %s125 = sphi 0, %s111
    %s131 = sphi 0, %s133
    %s134 = sphi 0, %s131
    %s135 = sphi 0, %s134
    %s151 = sphi 0, %s135
  $region4: #{discriminator_forward.14} parent=0 // loop_header_branch
    %14 = sbr.rel (%p12) target = $region8
  $region5: #{discriminator_forward.14} parent=0 // loop_body
    %s16 = ssub.s32 %s11, 1
    %s17 = ssub.s32 %s11, 2
    %s18 = sadd.s32 %s11, 1
    %s19 = ssub.s32 %s11, %s18
    %p20 = scmp.eq.s32.totalorder %s19, 0
    %s22 = sadd.s32 %s21, 1
    %s23 = scalar_select %p20, %s21, %s22
    %p26 = pneg %p20
    %p27 = scmp.eq.s32.totalorder %s11, 1
    %p28 = por %p26, %p27
    %p29 = scmp.ne.s32.totalorder %s21, %s24
    %p30 = scmp.eq.s32.totalorder %s11, 0
    %p31 = por %p29, %p30
    %p32 = scmp.ne.s32.totalorder %s21, %s24
    %p33 = scmp.eq.s32.totalorder %s16, 1
    %p34 = por %p32, %p33
    %p35 = scmp.ne.s32.totalorder %s24, %s25
    %p36 = scmp.eq.s32.totalorder %s16, 0
    %p37 = por %p35, %p36
    %p38 = scmp.ne.s32.totalorder %s24, %s25
    %p39 = scmp.eq.s32.totalorder %s17, 1
    %p40 = por %p38, %p39
    %p42 = scmp.ne.s32.totalorder %s25, %s41
    %p43 = scmp.eq.s32.totalorder %s17, 0
    %p44 = por %p42, %p43
    %s46 = sadd.s32 %s45, 1
    %p49 = scmp.eq.s32.totalorder %s11, 1
    %p50 = scmp.ne.s32.totalorder %s45, %s47
    %p51 = scmp.eq.s32.totalorder %s11, 0
    %p52 = por %p50, %p51
    %p53 = scmp.ne.s32.totalorder %s45, %s47
    %p54 = scmp.eq.s32.totalorder %s16, 1
    %p55 = por %p53, %p54
    %p56 = scmp.ne.s32.totalorder %s47, %s48
    %p57 = scmp.eq.s32.totalorder %s16, 0
    %p58 = por %p56, %p57
    %p59 = scmp.ne.s32.totalorder %s47, %s48
    %p60 = scmp.eq.s32.totalorder %s17, 1
    %p61 = por %p59, %p60
    %p63 = scmp.ne.s32.totalorder %s48, %s62
    %p64 = scmp.eq.s32.totalorder %s17, 0
    %p65 = por %p63, %p64
    %s67 = sadd.s32 %s66, 1
    %p70 = scmp.eq.s32.totalorder %s11, 1
    %p71 = scmp.ne.s32.totalorder %s66, %s68
    %p72 = scmp.eq.s32.totalorder %s11, 0
    %p73 = por %p71, %p72
    %p74 = scmp.ne.s32.totalorder %s66, %s68
    %p75 = scmp.eq.s32.totalorder %s16, 1
    %p76 = por %p74, %p75
    %p77 = scmp.ne.s32.totalorder %s68, %s69
    %p78 = scmp.eq.s32.totalorder %s16, 0
    %p79 = por %p77, %p78
    %p80 = scmp.ne.s32.totalorder %s68, %s69
    %p81 = scmp.eq.s32.totalorder %s17, 1
    %p82 = por %p80, %p81
    %p84 = scmp.ne.s32.totalorder %s69, %s83
    %p85 = scmp.eq.s32.totalorder %s17, 0
    %p86 = por %p84, %p85
    %s88 = sadd.s32 %s87, 1
    %p91 = scmp.eq.s32.totalorder %s11, 1
    %p92 = scmp.ne.s32.totalorder %s87, %s89
    %p93 = scmp.eq.s32.totalorder %s11, 0
    %p94 = por %p92, %p93
    %p95 = scmp.ne.s32.totalorder %s87, %s89
    %p96 = scmp.eq.s32.totalorder %s16, 1
    %p97 = por %p95, %p96
    %p98 = scmp.ne.s32.totalorder %s89, %s90
    %p99 = scmp.eq.s32.totalorder %s16, 0
    %p100 = por %p98, %p99
    %p101 = scmp.ne.s32.totalorder %s89, %s90
    %p102 = scmp.eq.s32.totalorder %s17, 1
    %p103 = por %p101, %p102
    %p105 = scmp.ne.s32.totalorder %s90, %s104
    %p106 = scmp.eq.s32.totalorder %s17, 0
    %p107 = por %p105, %p106
    %s109 = sadd.s32 %s108, 1
    %p112 = scmp.eq.s32.totalorder %s11, 1
    %p113 = scmp.ne.s32.totalorder %s108, %s110
    %p114 = scmp.eq.s32.totalorder %s11, 0
    %p115 = por %p113, %p114
    %p116 = scmp.ne.s32.totalorder %s108, %s110
    %p117 = scmp.eq.s32.totalorder %s16, 1
    %p118 = por %p116, %p117
    %p119 = scmp.ne.s32.totalorder %s110, %s111
    %p120 = scmp.eq.s32.totalorder %s16, 0
    %p121 = por %p119, %p120
    %p122 = scmp.ne.s32.totalorder %s110, %s111
    %p123 = scmp.eq.s32.totalorder %s17, 1
    %p124 = por %p122, %p123
    %p126 = scmp.ne.s32.totalorder %s111, %s125
    %p127 = scmp.eq.s32.totalorder %s17, 0
    %p128 = por %p126, %p127
    %s129 = ssub.s32 %s11, %s18
    %p130 = scmp.eq.s32.totalorder %s129, 0
    %s132 = sadd.s32 %s131, 1
    %s133 = scalar_select %p130, %s131, %s132
    %p136 = pneg %p130
    %p137 = scmp.eq.s32.totalorder %s11, 1
    %p138 = por %p136, %p137
    %p139 = scmp.ne.s32.totalorder %s131, %s134
    %p140 = scmp.eq.s32.totalorder %s11, 0
    %p141 = por %p139, %p140
    %p142 = scmp.ne.s32.totalorder %s131, %s134
    %p143 = scmp.eq.s32.totalorder %s16, 1
    %p144 = por %p142, %p143
    %p145 = scmp.ne.s32.totalorder %s134, %s135
    %p146 = scmp.eq.s32.totalorder %s16, 0
    %p147 = por %p145, %p146
    %p148 = scmp.ne.s32.totalorder %s134, %s135
    %p149 = scmp.eq.s32.totalorder %s17, 1
    %p150 = por %p148, %p149
    %p152 = scmp.ne.s32.totalorder %s135, %s151
    %p153 = scmp.eq.s32.totalorder %s17, 0
    %p154 = por %p152, %p153
    %p155 = scmp.le.s32.totalorder 1, %s11
    %p156 = scmp.lt.s32.totalorder %s11, 3
    %p157 = pnand %p155, %p156
    %p158 = pneg %p157
    // Predicated region
    $region9: #{discriminator_forward.14} parent=5 // pred_check
      _
    $region10: #{discriminator_forward.14} parent=5 // pred_check_branch
      %160 = sbr.rel (%p157) target = $region12
    $region11: #{discriminator_forward.14} parent=5 // pred_region
      %s161 = ssub.s32 %s11, 1
      // Predicated region
      $region13: #{discriminator_forward.14} parent=11 // pred_check
        %p162 = pneg %p58
      $region14: #{discriminator_forward.14} parent=11 // pred_check_branch
        %164 = sbr.rel (%p162) target = $region16
      $region15: #{discriminator_forward.14} parent=11 // pred_region
        _
      $region16: #{discriminator_forward.14} parent=11 // pred_fallthru
        _
      // Predicated region
      $region17: #{discriminator_forward.14} parent=11 // pred_check
        %p165 = pneg %p79
      $region18: #{discriminator_forward.14} parent=11 // pred_check_branch
        %167 = sbr.rel (%p165) target = $region20
      $region19: #{discriminator_forward.14} parent=11 // pred_region
        _
      $region20: #{discriminator_forward.14} parent=11 // pred_fallthru
        _
      // Predicated region
      $region21: #{discriminator_forward.14} parent=11 // pred_check
        %p168 = pneg %p100
      $region22: #{discriminator_forward.14} parent=11 // pred_check_branch
        %170 = sbr.rel (%p168) target = $region24
      $region23: #{discriminator_forward.14} parent=11 // pred_region
        _
      $region24: #{discriminator_forward.14} parent=11 // pred_fallthru
        _
      // Predicated region
      $region25: #{discriminator_forward.14} parent=11 // pred_check
        %p171 = pneg %p121
      $region26: #{discriminator_forward.14} parent=11 // pred_check_branch
        %173 = sbr.rel (%p171) target = $region28
      $region27: #{discriminator_forward.14} parent=11 // pred_region
        _
      $region28: #{discriminator_forward.14} parent=11 // pred_fallthru
        _
    $region12: #{discriminator_forward.14} parent=5 // pred_fallthru
      _
    %p174 = scmp.lt.s32.totalorder %s11, 2
    // Predicated region
    $region29: #{discriminator_forward.14} parent=5 // pred_check
      %p175 = pneg %p174
    $region30: #{discriminator_forward.14} parent=5 // pred_check_branch
      %177 = sbr.rel (%p175) target = $region32
    $region31: #{discriminator_forward.14} parent=5 // pred_region
      // Predicated region
      $region33: #{discriminator_forward.14} parent=31 // pred_check
        %p178 = pneg %p31
      $region34: #{discriminator_forward.14} parent=31 // pred_check_branch
        %180 = sbr.rel (%p178) target = $region36
      $region35: #{discriminator_forward.14} parent=31 // pred_region
        %p181 = scmp.lt.s32.totalorder %s11, 1
        %s182 = scalar_select %p181, %s11, 1
        %s183 = smul.addr %s182, 8
        %s184 = smul.addr %s183, 4
        %s185 = scalar_lea.vmem %s0, %s184
      $region36: #{discriminator_forward.14} parent=31 // pred_fallthru
        _
    $region32: #{discriminator_forward.14} parent=5 // pred_fallthru
      _
    %p186 = scmp.le.s32.totalorder 1, %s11
    %p187 = scmp.lt.s32.totalorder %s11, 3
    %p188 = pnand %p186, %p187
    %p189 = pneg %p188
    // Predicated region
    $region37: #{discriminator_forward.14} parent=5 // pred_check
      _
    $region38: #{discriminator_forward.14} parent=5 // pred_check_branch
      %191 = sbr.rel (%p188) target = $region40
    $region39: #{discriminator_forward.14} parent=5 // pred_region
      %s192 = ssub.s32 %s11, 1
      %p193 = scmp.lt.s32.totalorder %s16, 1
      %s194 = scalar_select %p193, %s16, 1
      %s195 = smul.addr %s194, 8
      %s196 = smul.addr %s195, 4
      %s197 = scalar_lea.vmem %s0, %s196
      %p198 = pneg %p37
      %p199 = pneg %p34
      %p200 = pneg %p58
      %p201 = pneg %p55
      %p202 = pneg %p79
      %p203 = pneg %p76
      %p204 = pneg %p100
      %p205 = pneg %p97
      %p206 = pneg %p121
      %p207 = pneg %p118
      %p208 = pneg %p147
      %p209 = pneg %p144
      %p210 = scmp.lt.s32.totalorder %s16, 1
      %s211 = scalar_select %p210, %s16, 1
      %s212 = smul.addr %s211, 8
      %s213 = smul.addr %s212, 4
      %s214 = scalar_lea.vmem %s5, %s213
      %p215 = scmp.lt.s32.totalorder %s16, 1
      %s216 = scalar_select %p215, %s16, 1
      %s217 = smul.addr %s216, 8
      %s218 = smul.addr %s217, 4
      %s219 = scalar_lea.vmem %s0, %s218
      %p220 = scmp.lt.s32.totalorder %s16, 1
      %s221 = scalar_select %p220, %s16, 1
      %s222 = smul.addr %s221, 8
      %s223 = smul.addr %s222, 4
      %s224 = scalar_lea.vmem %s5, %s223
      %v225 = vld [vmem:[%s219] sm:$0xff]
      %v226 = vld [vmem:[%s219 + $0x8] sm:$0xff]
      %v227 = vld [vmem:[%s219 + $0x10] sm:$0x11]
      %v228 = vld [vmem:[%s219 + $0x18] sm:$0x11]
      %v229 = vunpack.c.l.bf16 %v225
      %v230 = vunpack.c.h.bf16 %v225
      %v231 = vunpack.c.l.bf16 %v226
      %v232 = vunpack.c.h.bf16 %v226
      %v233 = vunpack.c.l.bf16 %v227
      %v234 = vunpack.c.h.bf16 %v227
      %v235 = vunpack.c.l.bf16 %v228
      %v236 = vunpack.c.h.bf16 %v228
      %vm237 = vcmask 1040384
      %v238 = vsel %vm237, %v233, 0.0
      %v239 = vadd.f32 %v229, %v238
      %v240 = vrot.slane %v239, 4
      %v241 = vadd.f32 %v239, %v240
      %v242 = vrot.slane %v241, 2
      %v243 = vadd.f32 %v241, %v242
      %v244 = vrot.slane %v243, 1
      %v245 = vadd.f32 %v243, %v244
      %v246 = vsel %vm237, %v234, 0.0
      %v247 = vadd.f32 %v230, %v246
      %v248 = vrot.slane %v247, 4
      %v249 = vadd.f32 %v247, %v248
      %v250 = vrot.slane %v249, 2
      %v251 = vadd.f32 %v249, %v250
      %v252 = vrot.slane %v251, 1
      %v253 = vadd.f32 %v251, %v252
      %v254 = vsel %vm237, %v235, 0.0
      %v255 = vadd.f32 %v231, %v254
      %v256 = vrot.slane %v255, 4
      %v257 = vadd.f32 %v255, %v256
      %v258 = vrot.slane %v257, 2
      %v259 = vadd.f32 %v257, %v258
      %v260 = vrot.slane %v259, 1
      %v261 = vadd.f32 %v259, %v260
      %v262 = vsel %vm237, %v236, 0.0
      %v263 = vadd.f32 %v232, %v262
      %v264 = vrot.slane %v263, 4
      %v265 = vadd.f32 %v263, %v264
      %v266 = vrot.slane %v265, 2
      %v267 = vadd.f32 %v265, %v266
      %v268 = vrot.slane %v267, 1
      %v269 = vadd.f32 %v267, %v268
      %v270 = vld [vmem:[%s1] sm:$0xff]
      %v271 = vld [vmem:[%s1 + $0x8] sm:$0xff]
      %v272 = vld [vmem:[%s1 + $0x10] sm:$0xff]
      %v273 = vld [vmem:[%s1 + $0x18] sm:$0xff]
      %v274 = vld [vmem:[%s1 + $0x20] sm:$0xff]
      %v275 = vld [vmem:[%s1 + $0x28] sm:$0xff]
      %v276 = vld [vmem:[%s1 + $0x30] sm:$0xff]
      %v277 = vld [vmem:[%s1 + $0x38] sm:$0xff]
      %v278 = vld [vmem:[%s1 + $0x40] sm:$0xff]
      %v279 = vld [vmem:[%s1 + $0x48] sm:$0xff]
      %v280 = vld [vmem:[%s1 + $0x50] sm:$0xff]
      %v281 = vld [vmem:[%s1 + $0x58] sm:$0xff]
      %v282 = vld [vmem:[%s1 + $0x60] sm:$0xff]
      %v283 = vld [vmem:[%s1 + $0x68] sm:$0xff]
      %v284 = vld [vmem:[%s1 + $0x70] sm:$0xff]
      %v285 = vld [vmem:[%s1 + $0x78] sm:$0xff]
      %v286 = vld [vmem:[%s1 + $0x80] sm:$0xff]
      %v287 = vld [vmem:[%s1 + $0x88] sm:$0xff]
      %v288 = vld [vmem:[%s1 + $0x90] sm:$0xff]
      %v289 = vld [vmem:[%s1 + $0x98] sm:$0xff]
      %v290 = vld [vmem:[%s1 + $0xa0] sm:$0xff]
      %v291 = vld [vmem:[%s1 + $0xa8] sm:$0xff]
      %v292 = vld [vmem:[%s1 + $0xb0] sm:$0xff]
      %v293 = vld [vmem:[%s1 + $0xb8] sm:$0xff]
      %v294 = vld [vmem:[%s1 + $0xc0] sm:$0xff]
      %v295 = vld [vmem:[%s1 + $0xc8] sm:$0xff]
      %v296 = vld [vmem:[%s1 + $0xd0] sm:$0xff]
      %v297 = vld [vmem:[%s1 + $0xd8] sm:$0xff]
      %v298 = vld [vmem:[%s1 + $0xe0] sm:$0xff]
      %v299 = vld [vmem:[%s1 + $0xe8] sm:$0xff]
      %v300 = vld [vmem:[%s1 + $0xf0] sm:$0xff]
      %v301 = vld [vmem:[%s1 + $0xf8] sm:$0xff]
      %v302 = vld [vmem:[%s1 + $0x100] sm:$0xff]
      %v303 = vld [vmem:[%s1 + $0x108] sm:$0xff]
      %v304 = vld [vmem:[%s1 + $0x110] sm:$0xff]
      %v305 = vld [vmem:[%s1 + $0x118] sm:$0xff]
      %v306 = vld [vmem:[%s1 + $0x120] sm:$0xff]
      %v307 = vld [vmem:[%s1 + $0x128] sm:$0xff]
      %v308 = vld [vmem:[%s1 + $0x130] sm:$0xff]
      %v309 = vld [vmem:[%s1 + $0x138] sm:$0xff]
      %v310 = vld [vmem:[%s1 + $0x140] sm:$0xff]
      %v311 = vld [vmem:[%s1 + $0x148] sm:$0xff]
      %v312 = vld [vmem:[%s1 + $0x150] sm:$0xff]
      %v313 = vld [vmem:[%s1 + $0x158] sm:$0xff]
      %v314 = vld [vmem:[%s1 + $0x160] sm:$0xff]
      %v315 = vld [vmem:[%s1 + $0x168] sm:$0xff]
      %v316 = vld [vmem:[%s1 + $0x170] sm:$0xff]
      %v317 = vld [vmem:[%s1 + $0x178] sm:$0xff]
      %v318 = vld [vmem:[%s1 + $0x180] sm:$0xff]
      %v319 = vld [vmem:[%s1 + $0x188] sm:$0xff]
      %v320 = vld [vmem:[%s1 + $0x190] sm:$0xff]
      %v321 = vld [vmem:[%s1 + $0x198] sm:$0xff]
      %v322 = vld [vmem:[%s1 + $0x1a0] sm:$0xff]
      %v323 = vld [vmem:[%s1 + $0x1a8] sm:$0xff]
      %v324 = vld [vmem:[%s1 + $0x1b0] sm:$0xff]
      %v325 = vld [vmem:[%s1 + $0x1b8] sm:$0xff]
      %v326 = vld [vmem:[%s1 + $0x1c0] sm:$0xff]
      %v327 = vld [vmem:[%s1 + $0x1c8] sm:$0xff]
      %v328 = vld [vmem:[%s1 + $0x1d0] sm:$0xff]
      %v329 = vld [vmem:[%s1 + $0x1d8] sm:$0xff]
      %v330 = vld [vmem:[%s1 + $0x1e0] sm:$0xff]
      %v331 = vld [vmem:[%s1 + $0x1e8] sm:$0xff]
      %v332 = vld [vmem:[%s1 + $0x1f0] sm:$0xff]
      %v333 = vld [vmem:[%s1 + $0x1f8] sm:$0xff]
      %334 = vmatprep.subr.mxu0 0.0
      %335 = vmatpush1.msra.mxu0 %v270
      %336 = vmatprep.subr.mxu0 0.0
      %337 = vmatpush1.msra.mxu0 %v271
      %338 = vmatprep.subr.mxu0 0.0
      %339 = vmatpush1.msra.mxu0 %v272
      %340 = vmatprep.subr.mxu0 0.0
      %341 = vmatpush1.msra.mxu0 %v273
      %342 = vmatprep.subr.mxu0 0.0
      %343 = vmatpush1.msra.mxu0 %v274
      %344 = vmatprep.subr.mxu0 0.0
      %345 = vmatpush1.msra.mxu0 %v275
      %346 = vmatprep.subr.mxu0 0.0
      %347 = vmatpush1.msra.mxu0 %v276
      %348 = vmatprep.subr.mxu0 0.0
      %349 = vmatpush1.msra.mxu0 %v277
      %350 = vmatprep.subr.mxu0 0.0
      %351 = vmatpush1.msra.mxu0 %v278
      %352 = vmatprep.subr.mxu0 0.0
      %353 = vmatpush1.msra.mxu0 %v279
      %354 = vmatprep.subr.mxu0 0.0
      %355 = vmatpush1.msra.mxu0 %v280
      %356 = vmatprep.subr.mxu0 0.0
      %357 = vmatpush1.msra.mxu0 %v281
      %358 = vmatprep.subr.mxu0 0.0
      %359 = vmatpush1.msra.mxu0 %v282
      %360 = vmatprep.subr.mxu0 0.0
      %361 = vmatpush1.msra.mxu0 %v283
      %362 = vmatprep.subr.mxu0 0.0
      %363 = vmatpush1.msra.mxu0 %v284
      %364 = vmatprep.subr.mxu0 0.0
      %365 = vmatpush1.msra.mxu0 %v285
      %366 = vmatprep.subr.mxu0 0.0
      %367 = vmatpush1.msra.mxu0 %v286
      %368 = vmatprep.subr.mxu0 0.0
      %369 = vmatpush1.msra.mxu0 %v287
      %370 = vmatprep.subr.mxu0 0.0
      %371 = vmatpush1.msra.mxu0 %v288
      %372 = vmatprep.subr.mxu0 0.0
      %373 = vmatpush1.msra.mxu0 %v289
      %374 = vmatprep.subr.mxu0 0.0
      %375 = vmatpush1.msra.mxu0 %v290
      %376 = vmatprep.subr.mxu0 0.0
      %377 = vmatpush1.msra.mxu0 %v291
      %378 = vmatprep.subr.mxu0 0.0
      %379 = vmatpush1.msra.mxu0 %v292
      %380 = vmatprep.subr.mxu0 0.0
      %381 = vmatpush1.msra.mxu0 %v293
      %382 = vmatprep.subr.mxu0 0.0
      %383 = vmatpush1.msra.mxu0 %v294
      %384 = vmatprep.subr.mxu0 0.0
      %385 = vmatpush1.msra.mxu0 %v295
      %386 = vmatprep.subr.mxu0 0.0
      %387 = vmatpush1.msra.mxu0 %v296
      %388 = vmatprep.subr.mxu0 0.0
      %389 = vmatpush1.msra.mxu0 %v297
      %390 = vmatprep.subr.mxu0 0.0
      %391 = vmatpush1.msra.mxu0 %v298
      %392 = vmatprep.subr.mxu0 0.0
      %393 = vmatpush1.msra.mxu0 %v299
      %394 = vmatprep.subr.mxu0 0.0
      %395 = vmatpush1.msra.mxu0 %v300
      %396 = vmatprep.subr.mxu0 0.0
      %397 = vmatpush1.msra.mxu0 %v301
      %398 = vmatprep.mubr.f32.mxu0 %v253
      %399 = vmatmul.mubr.f32.gmra.mrb[0].mxu0 %v245
      %v400 = vpop.f32.mrb[0].mxu0
      %v401 = vadd.f32 0.0, %v400
      %v402 = vpop.f32.mrb[0].mxu0
      %403 = vdwg.mxu0
      %404 = vmatprep.subr.mxu0 0.0
      %405 = vmatpush1.msra.mxu0 %v302
      %406 = vmatprep.subr.mxu0 0.0
      %407 = vmatpush1.msra.mxu0 %v303
      %408 = vmatprep.subr.mxu0 0.0
      %409 = vmatpush1.msra.mxu0 %v304
      %410 = vmatprep.subr.mxu0 0.0
      %411 = vmatpush1.msra.mxu0 %v305
      %412 = vmatprep.subr.mxu0 0.0
      %413 = vmatpush1.msra.mxu0 %v306
      %414 = vmatprep.subr.mxu0 0.0
      %415 = vmatpush1.msra.mxu0 %v307
      %416 = vmatprep.subr.mxu0 0.0
      %417 = vmatpush1.msra.mxu0 %v308
      %418 = vmatprep.subr.mxu0 0.0
      %419 = vmatpush1.msra.mxu0 %v309
      %420 = vmatprep.subr.mxu0 0.0
      %421 = vmatpush1.msra.mxu0 %v310
      %422 = vmatprep.subr.mxu0 0.0
      %423 = vmatpush1.msra.mxu0 %v311
      %424 = vmatprep.subr.mxu0 0.0
      %425 = vmatpush1.msra.mxu0 %v312
      %426 = vmatprep.subr.mxu0 0.0
      %427 = vmatpush1.msra.mxu0 %v313
      %428 = vmatprep.subr.mxu0 0.0
      %429 = vmatpush1.msra.mxu0 %v314
      %430 = vmatprep.subr.mxu0 0.0
      %431 = vmatpush1.msra.mxu0 %v315
      %432 = vmatprep.subr.mxu0 0.0
      %433 = vmatpush1.msra.mxu0 %v316
      %434 = vmatprep.subr.mxu0 0.0
      %435 = vmatpush1.msra.mxu0 %v317
      %436 = vmatprep.subr.mxu0 0.0
      %437 = vmatpush1.msra.mxu0 %v318
      %438 = vmatprep.subr.mxu0 0.0
      %439 = vmatpush1.msra.mxu0 %v319
      %440 = vmatprep.subr.mxu0 0.0
      %441 = vmatpush1.msra.mxu0 %v320
      %442 = vmatprep.subr.mxu0 0.0
      %443 = vmatpush1.msra.mxu0 %v321
      %444 = vmatprep.subr.mxu0 0.0
      %445 = vmatpush1.msra.mxu0 %v322
      %446 = vmatprep.subr.mxu0 0.0
      %447 = vmatpush1.msra.mxu0 %v323
      %448 = vmatprep.subr.mxu0 0.0
      %449 = vmatpush1.msra.mxu0 %v324
      %450 = vmatprep.subr.mxu0 0.0
      %451 = vmatpush1.msra.mxu0 %v325
      %452 = vmatprep.subr.mxu0 0.0
      %453 = vmatpush1.msra.mxu0 %v326
      %454 = vmatprep.subr.mxu0 0.0
      %455 = vmatpush1.msra.mxu0 %v327
      %456 = vmatprep.subr.mxu0 0.0
      %457 = vmatpush1.msra.mxu0 %v328
      %458 = vmatprep.subr.mxu0 0.0
      %459 = vmatpush1.msra.mxu0 %v329
      %460 = vmatprep.subr.mxu0 0.0
      %461 = vmatpush1.msra.mxu0 %v330
      %462 = vmatprep.subr.mxu0 0.0
      %463 = vmatpush1.msra.mxu0 %v331
      %464 = vmatprep.subr.mxu0 0.0
      %465 = vmatpush1.msra.mxu0 %v332
      %466 = vmatprep.subr.mxu0 0.0
      %467 = vmatpush1.msra.mxu0 %v333
      %468 = vmatprep.mubr.f32.mxu0 %v269
      %469 = vmatmul.mubr.f32.gmra.mrb[0].mxu0 %v261
      %v470 = vpop.f32.mrb[0].mxu0
      %v471 = vadd.f32 %v401, %v470
      %v472 = vpop.f32.mrb[0].mxu0
      %473 = vdwg.mxu0
      %v474 = vrcp.pop 144.0
      %v475 = vmul.f32 %v471, %v474
      %v476 = vld [vmem:[%s2] sm:$0xff]
      %v477 = vld [vmem:[%s2 + $0x8] sm:$0xff]
      %v478 = vld [vmem:[%s2 + $0x10] sm:$0xff]
      %v479 = vld [vmem:[%s2 + $0x18] sm:$0xff]
      %v480 = vld [vmem:[%s2 + $0x20] sm:$0xff]
      %v481 = vld [vmem:[%s2 + $0x28] sm:$0xff]
      %v482 = vld [vmem:[%s2 + $0x30] sm:$0xff]
      %v483 = vld [vmem:[%s2 + $0x38] sm:$0xff]
      %v484 = vld [vmem:[%s2 + $0x40] sm:$0xff]
      %v485 = vld [vmem:[%s2 + $0x48] sm:$0xff]
      %v486 = vld [vmem:[%s2 + $0x50] sm:$0xff]
      %v487 = vld [vmem:[%s2 + $0x58] sm:$0xff]
      %v488 = vld [vmem:[%s2 + $0x60] sm:$0xff]
      %v489 = vld [vmem:[%s2 + $0x68] sm:$0xff]
      %v490 = vld [vmem:[%s2 + $0x70] sm:$0xff]
      %v491 = vld [vmem:[%s2 + $0x78] sm:$0xff]
      %vm492 = vcmask 261120
      %v494 = vsel %vm492, %v475, 0
      %496 = vmatprep.subr.mxu0 %v477
      %497 = vmatpush1.msra.mxu0 %v476
      %498 = vmatprep.subr.mxu0 %v481
      %499 = vmatpush1.msra.mxu0 %v480
      %500 = vmatprep.subr.mxu0 %v485
      %501 = vmatpush1.msra.mxu0 %v484
      %502 = vmatprep.subr.mxu0 %v489
      %503 = vmatpush1.msra.mxu0 %v488
      %504 = vmatprep.subr.mxu0 0.0
      %505 = vmatpush1.msra.mxu0 0.0
      %506 = vmatprep.subr.mxu0 0.0
      %507 = vmatpush1.msra.mxu0 0.0
      %508 = vmatprep.subr.mxu0 0.0
      %509 = vmatpush1.msra.mxu0 0.0
      %510 = vmatprep.subr.mxu0 0.0
      %511 = vmatpush1.msra.mxu0 0.0
      %512 = vmatprep.subr.mxu0 0.0
      %513 = vmatpush1.msra.mxu0 0.0
      %514 = vmatprep.subr.mxu0 0.0
      %515 = vmatpush1.msra.mxu0 0.0
      %516 = vmatprep.subr.mxu0 0.0
      %517 = vmatpush1.msra.mxu0 0.0
      %518 = vmatprep.subr.mxu0 0.0
      %519 = vmatpush1.msra.mxu0 0.0
      %520 = vmatprep.subr.mxu0 0.0
      %521 = vmatpush1.msra.mxu0 0.0
      %522 = vmatprep.subr.mxu0 0.0
      %523 = vmatpush1.msra.mxu0 0.0
      %524 = vmatprep.subr.mxu0 0.0
      %525 = vmatpush1.msra.mxu0 0.0
      %526 = vmatprep.subr.mxu0 0.0
      %527 = vmatpush1.msra.mxu0 0.0
      %528 = vmatprep.subr.mxu0 0.0
      %529 = vmatpush1.msra.mxu0 0.0
      %530 = vmatprep.subr.mxu0 0.0
      %531 = vmatpush1.msra.mxu0 0.0
      %532 = vmatprep.subr.mxu0 0.0
      %533 = vmatpush1.msra.mxu0 0.0
      %534 = vmatprep.subr.mxu0 0.0
      %535 = vmatpush1.msra.mxu0 0.0
      %536 = vmatprep.subr.mxu0 0.0
      %537 = vmatpush1.msra.mxu0 0.0
      %538 = vmatprep.subr.mxu0 0.0
      %539 = vmatpush1.msra.mxu0 0.0
      %540 = vmatprep.subr.mxu0 0.0
      %541 = vmatpush1.msra.mxu0 0.0
      %542 = vmatprep.subr.mxu0 0.0
      %543 = vmatpush1.msra.mxu0 0.0
      %544 = vmatprep.subr.mxu0 0.0
      %545 = vmatpush1.msra.mxu0 0.0
      %546 = vmatprep.subr.mxu0 0.0
      %547 = vmatpush1.msra.mxu0 0.0
      %548 = vmatprep.subr.mxu0 0.0
      %549 = vmatpush1.msra.mxu0 0.0
      %550 = vmatprep.subr.mxu0 0.0
      %551 = vmatpush1.msra.mxu0 0.0
      %552 = vmatprep.subr.mxu0 0.0
      %553 = vmatpush1.msra.mxu0 0.0
      %554 = vmatprep.subr.mxu0 0.0
      %555 = vmatpush1.msra.mxu0 0.0
      %556 = vmatprep.subr.mxu0 0.0
      %557 = vmatpush1.msra.mxu0 0.0
      %558 = vmatprep.subr.mxu0 0.0
      %559 = vmatpush1.msra.mxu0 0.0
      %560 = vmatprep.mubr.f32.mxu0 0.0
      %561 = vmatmul.mubr.f32.gmra.mrb[0].mxu0 %v494
      %v562 = vpop.f32.mrb[0].mxu0
      %v563 = vadd.f32 0.0, %v562
      %v564 = vpop.f32.mrb[0].mxu0
      %v565 = vadd.f32 0.0, %v564
      %566 = vdwg.mxu0
      %567 = vmatprep.subr.mxu0 %v479
      %568 = vmatpush1.msra.mxu0 %v478
      %569 = vmatprep.subr.mxu0 %v483
      %570 = vmatpush1.msra.mxu0 %v482
      %571 = vmatprep.subr.mxu0 %v487
      %572 = vmatpush1.msra.mxu0 %v486
      %573 = vmatprep.subr.mxu0 %v491
      %574 = vmatpush1.msra.mxu0 %v490
      %575 = vmatprep.subr.mxu0 0.0
      %576 = vmatpush1.msra.mxu0 0.0
      %577 = vmatprep.subr.mxu0 0.0
      %578 = vmatpush1.msra.mxu0 0.0
      %579 = vmatprep.subr.mxu0 0.0
      %580 = vmatpush1.msra.mxu0 0.0
      %581 = vmatprep.subr.mxu0 0.0
      %582 = vmatpush1.msra.mxu0 0.0
      %583 = vmatprep.subr.mxu0 0.0
      %584 = vmatpush1.msra.mxu0 0.0
      %585 = vmatprep.subr.mxu0 0.0
      %586 = vmatpush1.msra.mxu0 0.0
      %587 = vmatprep.subr.mxu0 0.0
      %588 = vmatpush1.msra.mxu0 0.0
      %589 = vmatprep.subr.mxu0 0.0
      %590 = vmatpush1.msra.mxu0 0.0
      %591 = vmatprep.subr.mxu0 0.0
      %592 = vmatpush1.msra.mxu0 0.0
      %593 = vmatprep.subr.mxu0 0.0
      %594 = vmatpush1.msra.mxu0 0.0
      %595 = vmatprep.subr.mxu0 0.0
      %596 = vmatpush1.msra.mxu0 0.0
      %597 = vmatprep.subr.mxu0 0.0
      %598 = vmatpush1.msra.mxu0 0.0
      %599 = vmatprep.subr.mxu0 0.0
      %600 = vmatpush1.msra.mxu0 0.0
      %601 = vmatprep.subr.mxu0 0.0
      %602 = vmatpush1.msra.mxu0 0.0
      %603 = vmatprep.subr.mxu0 0.0
      %604 = vmatpush1.msra.mxu0 0.0
      %605 = vmatprep.subr.mxu0 0.0
      %606 = vmatpush1.msra.mxu0 0.0
      %607 = vmatprep.subr.mxu0 0.0
      %608 = vmatpush1.msra.mxu0 0.0
      %609 = vmatprep.subr.mxu0 0.0
      %610 = vmatpush1.msra.mxu0 0.0
      %611 = vmatprep.subr.mxu0 0.0
      %612 = vmatpush1.msra.mxu0 0.0
      %613 = vmatprep.subr.mxu0 0.0
      %614 = vmatpush1.msra.mxu0 0.0
      %615 = vmatprep.subr.mxu0 0.0
      %616 = vmatpush1.msra.mxu0 0.0
      %617 = vmatprep.subr.mxu0 0.0
      %618 = vmatpush1.msra.mxu0 0.0
      %619 = vmatprep.subr.mxu0 0.0
      %620 = vmatpush1.msra.mxu0 0.0
      %621 = vmatprep.subr.mxu0 0.0
      %622 = vmatpush1.msra.mxu0 0.0
      %623 = vmatprep.subr.mxu0 0.0
      %624 = vmatpush1.msra.mxu0 0.0
      %625 = vmatprep.subr.mxu0 0.0
      %626 = vmatpush1.msra.mxu0 0.0
      %627 = vmatprep.subr.mxu0 0.0
      %628 = vmatpush1.msra.mxu0 0.0
      %629 = vmatprep.subr.mxu0 0.0
      %630 = vmatpush1.msra.mxu0 0.0
      %631 = vmatprep.mubr.f32.mxu0 0.0
      %632 = vmatmul.mubr.f32.gmra.mrb[0].mxu0 %v494
      %v633 = vpop.f32.mrb[0].mxu0
      %v634 = vadd.f32 0.0, %v633
      %v635 = vpop.f32.mrb[0].mxu0
      %v636 = vadd.f32 0.0, %v635
      %637 = vdwg.mxu0
      %v638 = vlaneseq
      %v639 = vshrl.u32 %v638, 7
      %v640 = vsub.s32 0, %v639
      %v641 = vrot.slane %v563, %v640
      %v642 = vlaneseq
      %v643 = vshrl.u32 %v642, 7
      %v644 = vsub.s32 0, %v643
      %v645 = vrot.slane %v565, %v644
      %v646 = vlaneseq
      %v647 = vshrl.u32 %v646, 7
      %v648 = vsub.s32 0, %v647
      %v649 = vrot.slane %v634, %v648
      %v650 = vlaneseq
      %v651 = vshrl.u32 %v650, 7
      %v652 = vsub.s32 0, %v651
      %v653 = vrot.slane %v636, %v652
      %v654 = vsub.f32 %v229, %v641
      %v655 = vsub.f32 %v230, %v645
      %v656 = vsub.f32 %v231, %v649
      %v657 = vsub.f32 %v232, %v653
      %v658 = vsub.f32 %v233, %v641
      %v659 = vsub.f32 %v234, %v645
      %v660 = vsub.f32 %v235, %v649
      %v661 = vsub.f32 %v236, %v653
      %v662 = vmul.f32 %v654, %v654
      %v663 = vmul.f32 %v655, %v655
      %v664 = vmul.f32 %v656, %v656
      %v665 = vmul.f32 %v657, %v657
      %v666 = vmul.f32 %v658, %v658
      %v667 = vmul.f32 %v659, %v659
      %v668 = vmul.f32 %v660, %v660
      %v669 = vmul.f32 %v661, %v661
      %v670 = vsel %vm237, %v666, 0.0
      %v671 = vadd.f32 %v662, %v670
      %v672 = vrot.slane %v671, 4
      %v673 = vadd.f32 %v671, %v672
      %v674 = vrot.slane %v673, 2
      %v675 = vadd.f32 %v673, %v674
      %v676 = vrot.slane %v675, 1
      %v677 = vadd.f32 %v675, %v676
      %v678 = vsel %vm237, %v667, 0.0
      %v679 = vadd.f32 %v663, %v678
      %v680 = vrot.slane %v679, 4
      %v681 = vadd.f32 %v679, %v680
      %v682 = vrot.slane %v681, 2
      %v683 = vadd.f32 %v681, %v682
      %v684 = vrot.slane %v683, 1
      %v685 = vadd.f32 %v683, %v684
      %v686 = vsel %vm237, %v668, 0.0
      %v687 = vadd.f32 %v664, %v686
      %v688 = vrot.slane %v687, 4
      %v689 = vadd.f32 %v687, %v688
      %v690 = vrot.slane %v689, 2
      %v691 = vadd.f32 %v689, %v690
      %v692 = vrot.slane %v691, 1
      %v693 = vadd.f32 %v691, %v692
      %v694 = vsel %vm237, %v669, 0.0
      %v695 = vadd.f32 %v665, %v694
      %v696 = vrot.slane %v695, 4
      %v697 = vadd.f32 %v695, %v696
      %v698 = vrot.slane %v697, 2
      %v699 = vadd.f32 %v697, %v698
      %v700 = vrot.slane %v699, 1
      %v701 = vadd.f32 %v699, %v700
      %702 = vmatprep.subr.mxu0 0.0
      %703 = vmatpush1.msra.mxu0 %v270
      %704 = vmatprep.subr.mxu0 0.0
      %705 = vmatpush1.msra.mxu0 %v271
      %706 = vmatprep.subr.mxu0 0.0
      %707 = vmatpush1.msra.mxu0 %v272
      %708 = vmatprep.subr.mxu0 0.0
      %709 = vmatpush1.msra.mxu0 %v273
      %710 = vmatprep.subr.mxu0 0.0
      %711 = vmatpush1.msra.mxu0 %v274
      %712 = vmatprep.subr.mxu0 0.0
      %713 = vmatpush1.msra.mxu0 %v275
      %714 = vmatprep.subr.mxu0 0.0
      %715 = vmatpush1.msra.mxu0 %v276
      %716 = vmatprep.subr.mxu0 0.0
      %717 = vmatpush1.msra.mxu0 %v277
      %718 = vmatprep.subr.mxu0 0.0
      %719 = vmatpush1.msra.mxu0 %v278
      %720 = vmatprep.subr.mxu0 0.0
      %721 = vmatpush1.msra.mxu0 %v279
      %722 = vmatprep.subr.mxu0 0.0
      %723 = vmatpush1.msra.mxu0 %v280
      %724 = vmatprep.subr.mxu0 0.0
      %725 = vmatpush1.msra.mxu0 %v281
      %726 = vmatprep.subr.mxu0 0.0
      %727 = vmatpush1.msra.mxu0 %v282
      %728 = vmatprep.subr.mxu0 0.0
      %729 = vmatpush1.msra.mxu0 %v283
      %730 = vmatprep.subr.mxu0 0.0
      %731 = vmatpush1.msra.mxu0 %v284
      %732 = vmatprep.subr.mxu0 0.0
      %733 = vmatpush1.msra.mxu0 %v285
      %734 = vmatprep.subr.mxu0 0.0
      %735 = vmatpush1.msra.mxu0 %v286
      %736 = vmatprep.subr.mxu0 0.0
      %737 = vmatpush1.msra.mxu0 %v287
      %738 = vmatprep.subr.mxu0 0.0
      %739 = vmatpush1.msra.mxu0 %v288
      %740 = vmatprep.subr.mxu0 0.0
      %741 = vmatpush1.msra.mxu0 %v289
      %742 = vmatprep.subr.mxu0 0.0
      %743 = vmatpush1.msra.mxu0 %v290
      %744 = vmatprep.subr.mxu0 0.0
      %745 = vmatpush1.msra.mxu0 %v291
      %746 = vmatprep.subr.mxu0 0.0
      %747 = vmatpush1.msra.mxu0 %v292
      %748 = vmatprep.subr.mxu0 0.0
      %749 = vmatpush1.msra.mxu0 %v293
      %750 = vmatprep.subr.mxu0 0.0
      %751 = vmatpush1.msra.mxu0 %v294
      %752 = vmatprep.subr.mxu0 0.0
      %753 = vmatpush1.msra.mxu0 %v295
      %754 = vmatprep.subr.mxu0 0.0
      %755 = vmatpush1.msra.mxu0 %v296
      %756 = vmatprep.subr.mxu0 0.0
      %757 = vmatpush1.msra.mxu0 %v297
      %758 = vmatprep.subr.mxu0 0.0
      %759 = vmatpush1.msra.mxu0 %v298
      %760 = vmatprep.subr.mxu0 0.0
      %761 = vmatpush1.msra.mxu0 %v299
      %762 = vmatprep.subr.mxu0 0.0
      %763 = vmatpush1.msra.mxu0 %v300
      %764 = vmatprep.subr.mxu0 0.0
      %765 = vmatpush1.msra.mxu0 %v301
      %766 = vmatprep.mubr.f32.mxu0 %v685
      %767 = vmatmul.mubr.f32.gmra.mrb[0].mxu0 %v677
      %v768 = vpop.f32.mrb[0].mxu0
      %v769 = vadd.f32 0.0, %v768
      %v770 = vpop.f32.mrb[0].mxu0
      %771 = vdwg.mxu0
      %772 = vmatprep.subr.mxu0 0.0
      %773 = vmatpush1.msra.mxu0 %v302
      %774 = vmatprep.subr.mxu0 0.0
      %775 = vmatpush1.msra.mxu0 %v303
      %776 = vmatprep.subr.mxu0 0.0
      %777 = vmatpush1.msra.mxu0 %v304
      %778 = vmatprep.subr.mxu0 0.0
      %779 = vmatpush1.msra.mxu0 %v305
      %780 = vmatprep.subr.mxu0 0.0
      %781 = vmatpush1.msra.mxu0 %v306
      %782 = vmatprep.subr.mxu0 0.0
      %783 = vmatpush1.msra.mxu0 %v307
      %784 = vmatprep.subr.mxu0 0.0
      %785 = vmatpush1.msra.mxu0 %v308
      %786 = vmatprep.subr.mxu0 0.0
      %787 = vmatpush1.msra.mxu0 %v309
      %788 = vmatprep.subr.mxu0 0.0
      %789 = vmatpush1.msra.mxu0 %v310
      %790 = vmatprep.subr.mxu0 0.0
      %791 = vmatpush1.msra.mxu0 %v311
      %792 = vmatprep.subr.mxu0 0.0
      %793 = vmatpush1.msra.mxu0 %v312
      %794 = vmatprep.subr.mxu0 0.0
      %795 = vmatpush1.msra.mxu0 %v313
      %796 = vmatprep.subr.mxu0 0.0
      %797 = vmatpush1.msra.mxu0 %v314
      %798 = vmatprep.subr.mxu0 0.0
      %799 = vmatpush1.msra.mxu0 %v315
      %800 = vmatprep.subr.mxu0 0.0
      %801 = vmatpush1.msra.mxu0 %v316
      %802 = vmatprep.subr.mxu0 0.0
      %803 = vmatpush1.msra.mxu0 %v317
      %804 = vmatprep.subr.mxu0 0.0
      %805 = vmatpush1.msra.mxu0 %v318
      %806 = vmatprep.subr.mxu0 0.0
      %807 = vmatpush1.msra.mxu0 %v319
      %808 = vmatprep.subr.mxu0 0.0
      %809 = vmatpush1.msra.mxu0 %v320
      %810 = vmatprep.subr.mxu0 0.0
      %811 = vmatpush1.msra.mxu0 %v321
      %812 = vmatprep.subr.mxu0 0.0
      %813 = vmatpush1.msra.mxu0 %v322
      %814 = vmatprep.subr.mxu0 0.0
      %815 = vmatpush1.msra.mxu0 %v323
      %816 = vmatprep.subr.mxu0 0.0
      %817 = vmatpush1.msra.mxu0 %v324
      %818 = vmatprep.subr.mxu0 0.0
      %819 = vmatpush1.msra.mxu0 %v325
      %820 = vmatprep.subr.mxu0 0.0
      %821 = vmatpush1.msra.mxu0 %v326
      %822 = vmatprep.subr.mxu0 0.0
      %823 = vmatpush1.msra.mxu0 %v327
      %824 = vmatprep.subr.mxu0 0.0
      %825 = vmatpush1.msra.mxu0 %v328
      %826 = vmatprep.subr.mxu0 0.0
      %827 = vmatpush1.msra.mxu0 %v329
      %828 = vmatprep.subr.mxu0 0.0
      %829 = vmatpush1.msra.mxu0 %v330
      %830 = vmatprep.subr.mxu0 0.0
      %831 = vmatpush1.msra.mxu0 %v331
      %832 = vmatprep.subr.mxu0 0.0
      %833 = vmatpush1.msra.mxu0 %v332
      %834 = vmatprep.subr.mxu0 0.0
      %835 = vmatpush1.msra.mxu0 %v333
      %836 = vmatprep.mubr.f32.mxu0 %v701
      %837 = vmatmul.mubr.f32.gmra.mrb[0].mxu0 %v693
      %v838 = vpop.f32.mrb[0].mxu0
      %v839 = vadd.f32 %v769, %v838
      %v840 = vpop.f32.mrb[0].mxu0
      %841 = vdwg.mxu0
      %v842 = vmul.f32 %v839, %v474
      %v843 = vadd.f32 %v842, 1e-05
      %v844 = vrsqrt.pop %v843
      %v846 = vsel %vm492, %v844, 0
      %848 = vmatprep.subr.mxu0 %v477
      %849 = vmatpush1.msra.mxu0 %v476
      %850 = vmatprep.subr.mxu0 %v481
      %851 = vmatpush1.msra.mxu0 %v480
      %852 = vmatprep.subr.mxu0 %v485
      %853 = vmatpush1.msra.mxu0 %v484
      %854 = vmatprep.subr.mxu0 %v489
      %855 = vmatpush1.msra.mxu0 %v488
      %856 = vmatprep.subr.mxu0 0.0
      %857 = vmatpush1.msra.mxu0 0.0
      %858 = vmatprep.subr.mxu0 0.0
      %859 = vmatpush1.msra.mxu0 0.0
      %860 = vmatprep.subr.mxu0 0.0
      %861 = vmatpush1.msra.mxu0 0.0
      %862 = vmatprep.subr.mxu0 0.0
      %863 = vmatpush1.msra.mxu0 0.0
      %864 = vmatprep.subr.mxu0 0.0
      %865 = vmatpush1.msra.mxu0 0.0
      %866 = vmatprep.subr.mxu0 0.0
      %867 = vmatpush1.msra.mxu0 0.0
      %868 = vmatprep.subr.mxu0 0.0
      %869 = vmatpush1.msra.mxu0 0.0
      %870 = vmatprep.subr.mxu0 0.0
      %871 = vmatpush1.msra.mxu0 0.0
      %872 = vmatprep.subr.mxu0 0.0
      %873 = vmatpush1.msra.mxu0 0.0
      %874 = vmatprep.subr.mxu0 0.0
      %875 = vmatpush1.msra.mxu0 0.0
      %876 = vmatprep.subr.mxu0 0.0
      %877 = vmatpush1.msra.mxu0 0.0
      %878 = vmatprep.subr.mxu0 0.0
      %879 = vmatpush1.msra.mxu0 0.0
      %880 = vmatprep.subr.mxu0 0.0
      %881 = vmatpush1.msra.mxu0 0.0
      %882 = vmatprep.subr.mxu0 0.0
      %883 = vmatpush1.msra.mxu0 0.0
      %884 = vmatprep.subr.mxu0 0.0
      %885 = vmatpush1.msra.mxu0 0.0
      %886 = vmatprep.subr.mxu0 0.0
      %887 = vmatpush1.msra.mxu0 0.0
      %888 = vmatprep.subr.mxu0 0.0
      %889 = vmatpush1.msra.mxu0 0.0
      %890 = vmatprep.subr.mxu0 0.0
      %891 = vmatpush1.msra.mxu0 0.0
      %892 = vmatprep.subr.mxu0 0.0
      %893 = vmatpush1.msra.mxu0 0.0
      %894 = vmatprep.subr.mxu0 0.0
      %895 = vmatpush1.msra.mxu0 0.0
      %896 = vmatprep.subr.mxu0 0.0
      %897 = vmatpush1.msra.mxu0 0.0
      %898 = vmatprep.subr.mxu0 0.0
      %899 = vmatpush1.msra.mxu0 0.0
      %900 = vmatprep.subr.mxu0 0.0
      %901 = vmatpush1.msra.mxu0 0.0
      %902 = vmatprep.subr.mxu0 0.0
      %903 = vmatpush1.msra.mxu0 0.0
      %904 = vmatprep.subr.mxu0 0.0
      %905 = vmatpush1.msra.mxu0 0.0
      %906 = vmatprep.subr.mxu0 0.0
      %907 = vmatpush1.msra.mxu0 0.0
      %908 = vmatprep.subr.mxu0 0.0
      %909 = vmatpush1.msra.mxu0 0.0
      %910 = vmatprep.subr.mxu0 0.0
      %911 = vmatpush1.msra.mxu0 0.0
      %912 = vmatprep.mubr.f32.mxu0 0.0
      %913 = vmatmul.mubr.f32.gmra.mrb[0].mxu0 %v846
      %v914 = vpop.f32.mrb[0].mxu0
      %v915 = vadd.f32 0.0, %v914
      %v916 = vpop.f32.mrb[0].mxu0
      %v917 = vadd.f32 0.0, %v916
      %918 = vdwg.mxu0
      %919 = vmatprep.subr.mxu0 %v479
      %920 = vmatpush1.msra.mxu0 %v478
      %921 = vmatprep.subr.mxu0 %v483
      %922 = vmatpush1.msra.mxu0 %v482
      %923 = vmatprep.subr.mxu0 %v487
      %924 = vmatpush1.msra.mxu0 %v486
      %925 = vmatprep.subr.mxu0 %v491
      %926 = vmatpush1.msra.mxu0 %v490
      %927 = vmatprep.subr.mxu0 0.0
      %928 = vmatpush1.msra.mxu0 0.0
      %929 = vmatprep.subr.mxu0 0.0
      %930 = vmatpush1.msra.mxu0 0.0
      %931 = vmatprep.subr.mxu0 0.0
      %932 = vmatpush1.msra.mxu0 0.0
      %933 = vmatprep.subr.mxu0 0.0
      %934 = vmatpush1.msra.mxu0 0.0
      %935 = vmatprep.subr.mxu0 0.0
      %936 = vmatpush1.msra.mxu0 0.0
      %937 = vmatprep.subr.mxu0 0.0
      %938 = vmatpush1.msra.mxu0 0.0
      %939 = vmatprep.subr.mxu0 0.0
      %940 = vmatpush1.msra.mxu0 0.0
      %941 = vmatprep.subr.mxu0 0.0
      %942 = vmatpush1.msra.mxu0 0.0
      %943 = vmatprep.subr.mxu0 0.0
      %944 = vmatpush1.msra.mxu0 0.0
      %945 = vmatprep.subr.mxu0 0.0
      %946 = vmatpush1.msra.mxu0 0.0
      %947 = vmatprep.subr.mxu0 0.0
      %948 = vmatpush1.msra.mxu0 0.0
      %949 = vmatprep.subr.mxu0 0.0
      %950 = vmatpush1.msra.mxu0 0.0
      %951 = vmatprep.subr.mxu0 0.0
      %952 = vmatpush1.msra.mxu0 0.0
      %953 = vmatprep.subr.mxu0 0.0
      %954 = vmatpush1.msra.mxu0 0.0
      %955 = vmatprep.subr.mxu0 0.0
      %956 = vmatpush1.msra.mxu0 0.0
      %957 = vmatprep.subr.mxu0 0.0
      %958 = vmatpush1.msra.mxu0 0.0
      %959 = vmatprep.subr.mxu0 0.0
      %960 = vmatpush1.msra.mxu0 0.0
      %961 = vmatprep.subr.mxu0 0.0
      %962 = vmatpush1.msra.mxu0 0.0
      %963 = vmatprep.subr.mxu0 0.0
      %964 = vmatpush1.msra.mxu0 0.0
      %965 = vmatprep.subr.mxu0 0.0
      %966 = vmatpush1.msra.mxu0 0.0
      %967 = vmatprep.subr.mxu0 0.0
      %968 = vmatpush1.msra.mxu0 0.0
      %969 = vmatprep.subr.mxu0 0.0
      %970 = vmatpush1.msra.mxu0 0.0
      %971 = vmatprep.subr.mxu0 0.0
      %972 = vmatpush1.msra.mxu0 0.0
      %973 = vmatprep.subr.mxu0 0.0
      %974 = vmatpush1.msra.mxu0 0.0
      %975 = vmatprep.subr.mxu0 0.0
      %976 = vmatpush1.msra.mxu0 0.0
      %977 = vmatprep.subr.mxu0 0.0
      %978 = vmatpush1.msra.mxu0 0.0
      %979 = vmatprep.subr.mxu0 0.0
      %980 = vmatpush1.msra.mxu0 0.0
      %981 = vmatprep.subr.mxu0 0.0
      %982 = vmatpush1.msra.mxu0 0.0
      %983 = vmatprep.mubr.f32.mxu0 0.0
      %984 = vmatmul.mubr.f32.gmra.mrb[0].mxu0 %v846
      %v985 = vpop.f32.mrb[0].mxu0
      %v986 = vadd.f32 0.0, %v985
      %v987 = vpop.f32.mrb[0].mxu0
      %v988 = vadd.f32 0.0, %v987
      %989 = vdwg.mxu0
      %v990 = vlaneseq
      %v991 = vshrl.u32 %v990, 7
      %v992 = vsub.s32 0, %v991
      %v993 = vrot.slane %v915, %v992
      %v994 = vlaneseq
      %v995 = vshrl.u32 %v994, 7
      %v996 = vsub.s32 0, %v995
      %v997 = vrot.slane %v917, %v996
      %v998 = vlaneseq
      %v999 = vshrl.u32 %v998, 7
      %v1000 = vsub.s32 0, %v999
      %v1001 = vrot.slane %v986, %v1000
      %v1002 = vlaneseq
      %v1003 = vshrl.u32 %v1002, 7
      %v1004 = vsub.s32 0, %v1003
      %v1005 = vrot.slane %v988, %v1004
      %v1006 = vmul.f32 %v654, %v993
      %v1007 = vmul.f32 %v655, %v997
      %v1008 = vmul.f32 %v656, %v1001
      %v1009 = vmul.f32 %v657, %v1005
      %v1010 = vmul.f32 %v658, %v993
      %v1011 = vmul.f32 %v659, %v997
      %v1012 = vmul.f32 %v660, %v1001
      %v1013 = vmul.f32 %v661, %v1005
      %v1014 = vld [vmem:[%s3] sm:$0xf]
      %v1016 = vlaneseq
      %v1017 = vshrl.u32 %v1016, 7
      %v1018 = vsub.s32 0, %v1017
      %v1019 = vrot.slane %v1014, %v1018
      %v1020 = vlaneseq
      %v1021 = vshrl.u32 %v1020, 7
      %v1022 = vsub.s32 1, %v1021
      %v1023 = vrot.slane %v1014, %v1022
      %v1024 = vlaneseq
      %v1025 = vshrl.u32 %v1024, 7
      %v1026 = vsub.s32 2, %v1025
      %v1027 = vrot.slane %v1014, %v1026
      %v1028 = vlaneseq
      %v1029 = vshrl.u32 %v1028, 7
      %v1030 = vsub.s32 3, %v1029
      %v1031 = vrot.slane %v1014, %v1030
      %v1036 = vmul.f32 %v1006, %v1019
      %v1037 = vmul.f32 %v1007, %v1023
      %v1038 = vmul.f32 %v1008, %v1027
      %v1039 = vmul.f32 %v1009, %v1031
      %v1040 = vmul.f32 %v1010, %v1019
      %v1041 = vmul.f32 %v1011, %v1023
      %v1042 = vmul.f32 %v1012, %v1027
      %v1043 = vmul.f32 %v1013, %v1031
      %v1044 = vld [vmem:[%s4] sm:$0xf]
      %v1046 = vlaneseq
      %v1047 = vshrl.u32 %v1046, 7
      %v1048 = vsub.s32 0, %v1047
      %v1049 = vrot.slane %v1044, %v1048
      %v1050 = vlaneseq
      %v1051 = vshrl.u32 %v1050, 7
      %v1052 = vsub.s32 1, %v1051
      %v1053 = vrot.slane %v1044, %v1052
      %v1054 = vlaneseq
      %v1055 = vshrl.u32 %v1054, 7
      %v1056 = vsub.s32 2, %v1055
      %v1057 = vrot.slane %v1044, %v1056
      %v1058 = vlaneseq
      %v1059 = vshrl.u32 %v1058, 7
      %v1060 = vsub.s32 3, %v1059
      %v1061 = vrot.slane %v1044, %v1060
      %v1066 = vadd.f32 %v1036, %v1049
      %v1067 = vadd.f32 %v1037, %v1053
      %v1068 = vadd.f32 %v1038, %v1057
      %v1069 = vadd.f32 %v1039, %v1061
      %v1070 = vadd.f32 %v1040, %v1049
      %v1071 = vadd.f32 %v1041, %v1053
      %v1072 = vadd.f32 %v1042, %v1057
      %v1073 = vadd.f32 %v1043, %v1061
      %v1074 = vmul.f32 %v1066, 0.2
      %v1075 = vmul.f32 %v1067, 0.2
      %v1076 = vmul.f32 %v1068, 0.2
      %v1077 = vmul.f32 %v1069, 0.2
      %v1078 = vmul.f32 %v1070, 0.2
      %v1079 = vmul.f32 %v1071, 0.2
      %v1080 = vmul.f32 %v1072, 0.2
      %v1081 = vmul.f32 %v1073, 0.2
      %v1082 = vmax.f32 %v1066, %v1074
      %v1083 = vmax.f32 %v1067, %v1075
      %v1084 = vmax.f32 %v1068, %v1076
      %v1085 = vmax.f32 %v1069, %v1077
      %v1086 = vmax.f32 %v1070, %v1078
      %v1087 = vmax.f32 %v1071, %v1079
      %v1088 = vmax.f32 %v1072, %v1080
      %v1089 = vmax.f32 %v1073, %v1081
      %v1090 = vpack.c.bf16 %v1086, %v1082
      %v1091 = vpack.c.bf16 %v1087, %v1083
      %v1092 = vpack.c.bf16 %v1088, %v1084
      %v1093 = vpack.c.bf16 %v1089, %v1085
      %v1098 = vunpack.c.l.b16 %v1090
      %v1099 = vunpack.c.l.b16 %v1091
      %v1100 = vunpack.c.l.b16 %v1092
      %v1101 = vunpack.c.l.b16 %v1093
      %v1102 = vunpack.c.h.b16 %v1090
      %v1103 = vunpack.c.h.b16 %v1091
      %v1104 = vunpack.c.h.b16 %v1092
      %v1105 = vunpack.c.h.b16 %v1093
      %v1106 = vpack.c.b16 %v1099, %v1098
      %v1107 = vpack.c.b16 %v1101, %v1100
      %v1108 = vpack.c.b16 %v1103, %v1102
      %v1109 = vpack.c.b16 %v1105, %v1104
      %1114 = vst [vmem:[%s224] sm:$0xff] %v1106
      %1115 = vst [vmem:[%s224 + $0x8] sm:$0xff] %v1107
      %vm1116 = vcmask 1040384
      %vm1117 = vsmask.f32 256
      %vm1118 = vmand %vm1116, %vm1117
      %vm1119 = vcmask 1044484
      %vm1120 = vsmask.f32 4352
      %vm1121 = vmand %vm1119, %vm1120
      %vm1122 = vmor %vm1121, %vm1118
      %v1123 = vld [vmem:[%s224 + $0x10] sm:$0x11]
      %v1124 = vsel %vm1122, %v1108, %v1123
      %1125 = vst [vmem:[%s224 + $0x10] sm:$0x11] %v1124
      %v1126 = vld [vmem:[%s224 + $0x18] sm:$0x11]
      %v1127 = vsel %vm1122, %v1109, %v1126
      %1128 = vst [vmem:[%s224 + $0x18] sm:$0x11] %v1127
      %p1129 = scmp.lt.s32.totalorder %s16, 1
      %s1130 = scalar_select %p1129, %s16, 1
      %s1131 = smul.addr %s1130, 8
      %s1132 = smul.addr %s1131, 4
      %s1133 = scalar_lea.vmem %s5, %s1132
      // Predicated region
      $region41: #{discriminator_forward.14} parent=39 // pred_check
        %p1134 = pneg %p144
      $region42: #{discriminator_forward.14} parent=39 // pred_check_branch
        %1136 = sbr.rel (%p1134) target = $region44
      $region43: #{discriminator_forward.14} parent=39 // pred_region
        _
      $region44: #{discriminator_forward.14} parent=39 // pred_fallthru
        _
    $region40: #{discriminator_forward.14} parent=5 // pred_fallthru
      _
    %p1137 = scmp.le.s32.totalorder 2, %s11
    // Predicated region
    $region45: #{discriminator_forward.14} parent=5 // pred_check
      %p1138 = pneg %p1137
    $region46: #{discriminator_forward.14} parent=5 // pred_check_branch
      %1140 = sbr.rel (%p1138) target = $region48
    $region47: #{discriminator_forward.14} parent=5 // pred_region
      %s1141 = ssub.s32 %s11, 2
      // Predicated region
      $region49: #{discriminator_forward.14} parent=47 // pred_check
        %p1142 = pneg %p150
      $region50: #{discriminator_forward.14} parent=47 // pred_check_branch
        %1144 = sbr.rel (%p1142) target = $region52
      $region51: #{discriminator_forward.14} parent=47 // pred_region
        %p1145 = scmp.lt.s32.totalorder %s17, 1
        %s1146 = scalar_select %p1145, %s17, 1
        %s1147 = smul.addr %s1146, 8
        %s1148 = smul.addr %s1147, 4
        %s1149 = scalar_lea.vmem %s5, %s1148
      $region52: #{discriminator_forward.14} parent=47 // pred_fallthru
        _
    $region48: #{discriminator_forward.14} parent=5 // pred_fallthru
      _
  $region6: #{discriminator_forward.14} parent=0 // loop_footer
    %s15 = sadd.s32 1, %s11
  $region7: #{discriminator_forward.14} parent=0 // loop_footer_branch
    %10 = sbr.rel target = $region3
  $region8: #{discriminator_forward.14} parent=0 // loop_exit
    _

// kernel: discriminator_forward.15
$region0: #{discriminator_forward.15}
  #allocation0 [shape = 'u32[]', space=smem, size = 0x4, offset = 0x4, fixed_abs, tag = 'smem constant byte address 0x4 - core index']
  #allocation1 [shape = 'u32[144,128]{1,0:T(1,128)}', space=vmem, size = 0x12000, scoped, tag = 'internal scratch']
  #allocation2 [shape = 'f32[1,128]{1,0:T(1,128)}', space=vmem, size = 0x200, scoped, tag = 'scratch operand']
  #allocation3 [shape = 'f32[1,1]{1,0:T(1,128)S(1)}', space=vmem, size = 0x200, scoped, tag = 'scoped memory for discriminator_forward.15']
  %s0 = inlined_call_operand.vmem [shape: bf16[2,8192,128], index: 0, kind: input, shape index: {}]
  %s1 = inlined_call_operand.vmem [shape: bf16[1,8192], index: 1, kind: input, shape index: {}]
  %s2 = inlined_call_operand.<no memory space> [shape: f32[1,1], index: 2, kind: input, shape index: {}]
  %s3 = inlined_call_operand.vmem [shape: f32[2,1,1], index: 3, kind: output, shape index: {}]
  %s4 = sld [smem:[#allocation0]]
  $region53: #{discriminator_forward.15} parent=0
    _
  %s6 = ssub.s32 1, %s4
  %s7 = scalar_select 0, %s6, %s4
  %v8 = vstv %s2
  %9 = vst [vmem:[#allocation3] sm:$0x1] %v8
  loop: start=0, step=1, limit=34
  $region2: #{discriminator_forward.15} parent=0 // loop_pre_header
    _
  $region3: #{discriminator_forward.15} parent=0 // loop_header
    %s11 = sphi 0, %s15
    %p12 = scmp.ge.s32.totalorder %s11, 34
    %s18 = sphi 0, %s30
    %s19 = sphi 0, %s26
    %s20 = sphi 0, %s18
    %s21 = sphi 0, %s19
    %s22 = sphi 0, %s20
    %s23 = sphi 0, %s21
    %s35 = sphi 0, %s37
    %s38 = sphi 0, %s35
    %s39 = sphi 0, %s38
    %s55 = sphi 0, %s39
    %s61 = sphi 0, %s63
    %s64 = sphi 0, %s61
    %s65 = sphi 0, %s64
    %s81 = sphi 0, %s65
    %s85 = sphi 0, %s85
    %s87 = sphi 0, %s85
    %s88 = sphi 0, %s87
    %s102 = sphi 0, %s88
    %s108 = sphi 0, %s110
    %s111 = sphi 0, %s108
    %s112 = sphi 0, %s111
    %s128 = sphi 0, %s112
  $region4: #{discriminator_forward.15} parent=0 // loop_header_branch
    %14 = sbr.rel (%p12) target = $region8
  $region5: #{discriminator_forward.15} parent=0 // loop_body
    %s16 = ssub.s32 %s11, 1
    %s17 = ssub.s32 %s11, 2
    %s24 = sadd.s32 1, %s19
    %p25 = scmp.ge.s32.totalorder %s24, 16
    %s26 = scalar_select %p25, 0, %s24
    %s27 = sadd.s32 1, %s18
    %s28 = scalar_select %p25, %s27, %s18
    %p29 = scmp.ge.s32.totalorder %s28, 2
    %s30 = scalar_select %p29, 0, %s28
    %s31 = ssub.s32 %s18, %s30
    %s32 = ssub.s32 %s19, %s26
    %s33 = sor.u32 %s31, %s32
    %p34 = scmp.eq.s32.totalorder %s33, 0
    %s36 = sadd.s32 %s35, 1
    %s37 = scalar_select %p34, %s35, %s36
    %p40 = pneg %p34
    %p41 = scmp.eq.s32.totalorder %s11, 31
    %p42 = por %p40, %p41
    %p43 = scmp.ne.s32.totalorder %s35, %s38
    %p44 = scmp.eq.s32.totalorder %s11, 0
    %p45 = por %p43, %p44
    %p46 = scmp.ne.s32.totalorder %s35, %s38
    %p47 = scmp.eq.s32.totalorder %s16, 31
    %p48 = por %p46, %p47
    %p49 = scmp.ne.s32.totalorder %s38, %s39
    %p50 = scmp.eq.s32.totalorder %s16, 0
    %p51 = por %p49, %p50
    %p52 = scmp.ne.s32.totalorder %s38, %s39
    %p53 = scmp.eq.s32.totalorder %s17, 31
    %p54 = por %p52, %p53
    %p56 = scmp.ne.s32.totalorder %s39, %s55
    %p57 = scmp.eq.s32.totalorder %s17, 0
    %p58 = por %p56, %p57
    %s59 = ssub.s32 %s19, %s26
    %p60 = scmp.eq.s32.totalorder %s59, 0
    %s62 = sadd.s32 %s61, 1
    %s63 = scalar_select %p60, %s61, %s62
    %p66 = pneg %p60
    %p67 = scmp.eq.s32.totalorder %s11, 31
    %p68 = por %p66, %p67
    %p69 = scmp.ne.s32.totalorder %s61, %s64
    %p70 = scmp.eq.s32.totalorder %s11, 0
    %p71 = por %p69, %p70
    %p72 = scmp.ne.s32.totalorder %s61, %s64
    %p73 = scmp.eq.s32.totalorder %s16, 31
    %p74 = por %p72, %p73
    %p75 = scmp.ne.s32.totalorder %s64, %s65
    %p76 = scmp.eq.s32.totalorder %s16, 0
    %p77 = por %p75, %p76
    %p78 = scmp.ne.s32.totalorder %s64, %s65
    %p79 = scmp.eq.s32.totalorder %s17, 31
    %p80 = por %p78, %p79
    %p82 = scmp.ne.s32.totalorder %s65, %s81
    %p83 = scmp.eq.s32.totalorder %s17, 0
    %p84 = por %p82, %p83
    %s86 = sadd.s32 %s85, 1
    %p89 = scmp.eq.s32.totalorder %s11, 31
    %p90 = scmp.ne.s32.totalorder %s85, %s87
    %p91 = scmp.eq.s32.totalorder %s11, 0
    %p92 = por %p90, %p91
    %p93 = scmp.ne.s32.totalorder %s85, %s87
    %p94 = scmp.eq.s32.totalorder %s16, 31
    %p95 = por %p93, %p94
    %p96 = scmp.ne.s32.totalorder %s87, %s88
    %p97 = scmp.eq.s32.totalorder %s16, 0
    %p98 = por %p96, %p97
    %p99 = scmp.ne.s32.totalorder %s87, %s88
    %p100 = scmp.eq.s32.totalorder %s17, 31
    %p101 = por %p99, %p100
    %p103 = scmp.ne.s32.totalorder %s88, %s102
    %p104 = scmp.eq.s32.totalorder %s17, 0
    %p105 = por %p103, %p104
    %s106 = ssub.s32 %s18, %s30
    %p107 = scmp.eq.s32.totalorder %s106, 0
    %s109 = sadd.s32 %s108, 1
    %s110 = scalar_select %p107, %s108, %s109
    %p113 = pneg %p107
    %p114 = scmp.eq.s32.totalorder %s11, 31
    %p115 = por %p113, %p114
    %p116 = scmp.ne.s32.totalorder %s108, %s111
    %p117 = scmp.eq.s32.totalorder %s11, 0
    %p118 = por %p116, %p117
    %p119 = scmp.ne.s32.totalorder %s108, %s111
    %p120 = scmp.eq.s32.totalorder %s16, 31
    %p121 = por %p119, %p120
    %p122 = scmp.ne.s32.totalorder %s111, %s112
    %p123 = scmp.eq.s32.totalorder %s16, 0
    %p124 = por %p122, %p123
    %p125 = scmp.ne.s32.totalorder %s111, %s112
    %p126 = scmp.eq.s32.totalorder %s17, 31
    %p127 = por %p125, %p126
    %p129 = scmp.ne.s32.totalorder %s112, %s128
    %p130 = scmp.eq.s32.totalorder %s17, 0
    %p131 = por %p129, %p130
    %p132 = scmp.le.s32.totalorder 1, %s11
    %p133 = scmp.lt.s32.totalorder %s11, 33
    %p134 = pnand %p132, %p133
    %p135 = pneg %p134
    // Predicated region
    $region9: #{discriminator_forward.15} parent=5 // pred_check
      _
    $region10: #{discriminator_forward.15} parent=5 // pred_check_branch
      %137 = sbr.rel (%p134) target = $region12
    $region11: #{discriminator_forward.15} parent=5 // pred_region
      %s138 = ssub.s32 %s11, 1
      // Predicated region
      $region13: #{discriminator_forward.15} parent=11 // pred_check
        %p139 = pneg %p98
      $region14: #{discriminator_forward.15} parent=11 // pred_check_branch
        %141 = sbr.rel (%p139) target = $region16
      $region15: #{discriminator_forward.15} parent=11 // pred_region
        _
      $region16: #{discriminator_forward.15} parent=11 // pred_fallthru
        _
    $region12: #{discriminator_forward.15} parent=5 // pred_fallthru
      _
    %p142 = scmp.lt.s32.totalorder %s11, 32
    // Predicated region
    $region17: #{discriminator_forward.15} parent=5 // pred_check
      %p143 = pneg %p142
    $region18: #{discriminator_forward.15} parent=5 // pred_check_branch
      %145 = sbr.rel (%p143) target = $region20
    $region19: #{discriminator_forward.15} parent=5 // pred_region
      // Predicated region
      $region21: #{discriminator_forward.15} parent=19 // pred_check
        %p146 = pneg %p45
      $region22: #{discriminator_forward.15} parent=19 // pred_check_branch
        %148 = sbr.rel (%p146) target = $region24
      $region23: #{discriminator_forward.15} parent=19 // pred_region
        %s149 = smul.u32 64, %s19
        %p150 = scmp.lt.s32.totalorder %s18, 1
        %s151 = scalar_select %p150, %s18, 1
        %p152 = scmp.lt.s32.totalorder %s149, 1023
        %s153 = scalar_select %p152, %s149, 1023
        %s154 = smul.addr %s151, 1024
        %s155 = sadd.s32 %s153, %s154
        %s156 = smul.addr %s155, 4
        %s157 = scalar_lea.vmem %s0, %s156
        %s158 = smul.u32 64, %s19
      $region24: #{discriminator_forward.15} parent=19 // pred_fallthru
        _
      // Predicated region
      $region25: #{discriminator_forward.15} parent=19 // pred_check
        %p159 = pneg %p71
      $region26: #{discriminator_forward.15} parent=19 // pred_check_branch
        %161 = sbr.rel (%p159) target = $region28
      $region27: #{discriminator_forward.15} parent=19 // pred_region
        %s162 = smul.u32 4, %s19
        %p163 = scmp.lt.s32.totalorder %s162, 63
        %s164 = scalar_select %p163, %s162, 63
        %s165 = scalar_lea.vmem %s1, %s164
        %s166 = smul.u32 4, %s19
      $region28: #{discriminator_forward.15} parent=19 // pred_fallthru
        _
    $region20: #{discriminator_forward.15} parent=5 // pred_fallthru
      _
    %p167 = scmp.le.s32.totalorder 1, %s11
    %p168 = scmp.lt.s32.totalorder %s11, 33
    %p169 = pnand %p167, %p168
    %p170 = pneg %p169
    // Predicated region
    $region29: #{discriminator_forward.15} parent=5 // pred_check
      _
    $region30: #{discriminator_forward.15} parent=5 // pred_check_branch
      %172 = sbr.rel (%p169) target = $region32
    $region31: #{discriminator_forward.15} parent=5 // pred_region
      %s173 = ssub.s32 %s11, 1
      %s174 = smul.u32 64, %s21
      %p175 = scmp.lt.s32.totalorder %s20, 1
      %s176 = scalar_select %p175, %s20, 1
      %p177 = scmp.lt.s32.totalorder %s174, 1023
      %s178 = scalar_select %p177, %s174, 1023
      %s179 = smul.addr %s176, 1024
      %s180 = sadd.s32 %s178, %s179
      %s181 = smul.addr %s180, 4
      %s182 = scalar_lea.vmem %s0, %s181
      %p183 = pneg %p51
      %p184 = pneg %p48
      %s185 = smul.u32 4, %s21
      %p186 = scmp.lt.s32.totalorder %s185, 63
      %s187 = scalar_select %p186, %s185, 63
      %s188 = scalar_lea.vmem %s1, %s187
      %p189 = pneg %p77
      %p190 = pneg %p74
      %p191 = pneg %p98
      %p192 = pneg %p95
      %p193 = pneg %p124
      %p194 = pneg %p121
      %p195 = scmp.lt.s32.totalorder %s20, 1
      %s196 = scalar_select %p195, %s20, 1
      %s197 = scalar_lea.vmem %s3, %s196
      %s198 = smul.u32 64, %s21
      %p199 = scmp.lt.s32.totalorder %s20, 1
      %s200 = scalar_select %p199, %s20, 1
      %p201 = scmp.lt.s32.totalorder %s198, 1023
      %s202 = scalar_select %p201, %s198, 1023
      %s203 = smul.addr %s200, 1024
      %s204 = sadd.s32 %s202, %s203
      %s205 = smul.addr %s204, 4
      %s206 = scalar_lea.vmem %s0, %s205
      %s207 = smul.u32 64, %s21
      %s208 = smul.u32 4, %s21
      %p209 = scmp.lt.s32.totalorder %s208, 63
      %s210 = scalar_select %p209, %s208, 63
      %s211 = scalar_lea.vmem %s1, %s210
      %s212 = smul.u32 4, %s21
      %p213 = scmp.lt.s32.totalorder %s20, 1
      %s214 = scalar_select %p213, %s20, 1
      %s215 = scalar_lea.vmem %s3, %s214
      %p217 = scmp.eq.s32.totalorder %s21, 0
      // Predicated region
      $region33: #{discriminator_forward.15} parent=31 // pred_check
        %p218 = pneg %p217
      $region34: #{discriminator_forward.15} parent=31 // pred_check_branch
        %220 = sbr.rel (%p218) target = $region36
      $region35: #{discriminator_forward.15} parent=31 // pred_region
        %221 = vst [vmem:[#allocation2] sm:$0x1] 0.0
      $region36: #{discriminator_forward.15} parent=31 // pred_fallthru
        _
      %v222 = vld [vmem:[#allocation2] sm:$0x1]
      %v223 = vld [vmem:[%s211] sm:$0xf]
      %v224 = vld [vmem:[%s206] sm:$0xf]
      %v225 = vld [vmem:[%s206 + $0x4] sm:$0xf]
      %v226 = vld [vmem:[%s206 + $0x8] sm:$0xf]
      %v227 = vld [vmem:[%s206 + $0xc] sm:$0xf]
      %v228 = vld [vmem:[%s206 + $0x10] sm:$0xf]
      %v229 = vld [vmem:[%s206 + $0x14] sm:$0xf]
      %v230 = vld [vmem:[%s206 + $0x18] sm:$0xf]
      %v231 = vld [vmem:[%s206 + $0x1c] sm:$0xf]
      %v232 = vld [vmem:[%s206 + $0x20] sm:$0xf]
      %v233 = vld [vmem:[%s206 + $0x24] sm:$0xf]
      %v234 = vld [vmem:[%s206 + $0x28] sm:$0xf]
      %v235 = vld [vmem:[%s206 + $0x2c] sm:$0xf]
      %v236 = vld [vmem:[%s206 + $0x30] sm:$0xf]
      %v237 = vld [vmem:[%s206 + $0x34] sm:$0xf]
      %v238 = vld [vmem:[%s206 + $0x38] sm:$0xf]
      %v239 = vld [vmem:[%s206 + $0x3c] sm:$0xf]
      %v240 = vld [vmem:[%s206 + $0x40] sm:$0xf]
      %v241 = vld [vmem:[%s206 + $0x44] sm:$0xf]
      %v242 = vld [vmem:[%s206 + $0x48] sm:$0xf]
      %v243 = vld [vmem:[%s206 + $0x4c] sm:$0xf]
      %v244 = vld [vmem:[%s206 + $0x50] sm:$0xf]
      %v245 = vld [vmem:[%s206 + $0x54] sm:$0xf]
      %v246 = vld [vmem:[%s206 + $0x58] sm:$0xf]
      %v247 = vld [vmem:[%s206 + $0x5c] sm:$0xf]
      %v248 = vld [vmem:[%s206 + $0x60] sm:$0xf]
      %v249 = vld [vmem:[%s206 + $0x64] sm:$0xf]
      %v250 = vld [vmem:[%s206 + $0x68] sm:$0xf]
      %v251 = vld [vmem:[%s206 + $0x6c] sm:$0xf]
      %v252 = vld [vmem:[%s206 + $0x70] sm:$0xf]
      %v253 = vld [vmem:[%s206 + $0x74] sm:$0xf]
      %v254 = vld [vmem:[%s206 + $0x78] sm:$0xf]
      %v255 = vld [vmem:[%s206 + $0x7c] sm:$0xf]
      %v256 = vld [vmem:[%s206 + $0x80] sm:$0xf]
      %v257 = vld [vmem:[%s206 + $0x84] sm:$0xf]
      %v258 = vld [vmem:[%s206 + $0x88] sm:$0xf]
      %v259 = vld [vmem:[%s206 + $0x8c] sm:$0xf]
      %v260 = vld [vmem:[%s206 + $0x90] sm:$0xf]
      %v261 = vld [vmem:[%s206 + $0x94] sm:$0xf]
      %v262 = vld [vmem:[%s206 + $0x98] sm:$0xf]
      %v263 = vld [vmem:[%s206 + $0x9c] sm:$0xf]
      %v264 = vld [vmem:[%s206 + $0xa0] sm:$0xf]
      %v265 = vld [vmem:[%s206 + $0xa4] sm:$0xf]
      %v266 = vld [vmem:[%s206 + $0xa8] sm:$0xf]
      %v267 = vld [vmem:[%s206 + $0xac] sm:$0xf]
      %v268 = vld [vmem:[%s206 + $0xb0] sm:$0xf]
      %v269 = vld [vmem:[%s206 + $0xb4] sm:$0xf]
      %v270 = vld [vmem:[%s206 + $0xb8] sm:$0xf]
      %v271 = vld [vmem:[%s206 + $0xbc] sm:$0xf]
      %v272 = vld [vmem:[%s206 + $0xc0] sm:$0xf]
      %v273 = vld [vmem:[%s206 + $0xc4] sm:$0xf]
      %v274 = vld [vmem:[%s206 + $0xc8] sm:$0xf]
      %v275 = vld [vmem:[%s206 + $0xcc] sm:$0xf]
      %v276 = vld [vmem:[%s206 + $0xd0] sm:$0xf]
      %v277 = vld [vmem:[%s206 + $0xd4] sm:$0xf]
      %v278 = vld [vmem:[%s206 + $0xd8] sm:$0xf]
      %v279 = vld [vmem:[%s206 + $0xdc] sm:$0xf]
      %v280 = vld [vmem:[%s206 + $0xe0] sm:$0xf]
      %v281 = vld [vmem:[%s206 + $0xe4] sm:$0xf]
      %v282 = vld [vmem:[%s206 + $0xe8] sm:$0xf]
      %v283 = vld [vmem:[%s206 + $0xec] sm:$0xf]
      %v284 = vld [vmem:[%s206 + $0xf0] sm:$0xf]
      %v285 = vld [vmem:[%s206 + $0xf4] sm:$0xf]
      %v286 = vld [vmem:[%s206 + $0xf8] sm:$0xf]
      %v287 = vld [vmem:[%s206 + $0xfc] sm:$0xf]
      %v290 = vunpack.c.l.s4 1966171168
      %v291 = vunpack.c.0.s8 %v290
      %v292 = vlaneseq
      %v293 = vshrl.u32 %v292, 7
      %v294 = vsub.s32 %v291, %v293
      %v295 = vrot.slane %v223, %v294
      %v296 = vcombine.high %v295, %v295
      %v298 = vunpack.c.l.s4 1966171168
      %v299 = vunpack.c.0.s8 %v298
      %v300 = vlaneseq
      %v301 = vshrl.u32 %v300, 7
      %v302 = vsub.s32 %v299, %v301
      %v303 = vrot.slane %v295, %v302
      %v305 = vunpack.c.l.s4 1966171168
      %v306 = vunpack.c.0.s8 %v305
      %v307 = vlaneseq
      %v308 = vshrl.u32 %v307, 7
      %v309 = vsub.s32 %v306, %v308
      %v310 = vrot.slane %v296, %v309
      %v311 = vcombine.high %v303, %v303
      %v312 = vcombine.high %v310, %v310
      %v381 = vunpack.c.l.b16 %v224
      %v382 = vunpack.c.l.b16 %v225
      %v383 = vunpack.c.l.b16 %v226
      %v384 = vunpack.c.l.b16 %v227
      %v385 = vunpack.c.l.b16 %v228
      %v386 = vunpack.c.l.b16 %v229
      %v387 = vunpack.c.l.b16 %v230
      %v388 = vunpack.c.l.b16 %v231
      %v389 = vunpack.c.l.b16 %v232
      %v390 = vunpack.c.l.b16 %v233
      %v391 = vunpack.c.l.b16 %v234
      %v392 = vunpack.c.l.b16 %v235
      %v393 = vunpack.c.l.b16 %v236
      %v394 = vunpack.c.l.b16 %v237
      %v395 = vunpack.c.l.b16 %v238
      %v396 = vunpack.c.l.b16 %v239
      %v397 = vunpack.c.l.b16 %v240
      %v398 = vunpack.c.l.b16 %v241
      %v399 = vunpack.c.l.b16 %v242
      %v400 = vunpack.c.l.b16 %v243
      %v401 = vunpack.c.l.b16 %v244
      %v402 = vunpack.c.l.b16 %v245
      %v403 = vunpack.c.l.b16 %v246
      %v404 = vunpack.c.l.b16 %v247
      %v405 = vunpack.c.l.b16 %v248
      %v406 = vunpack.c.l.b16 %v249
      %v407 = vunpack.c.l.b16 %v250
      %v408 = vunpack.c.l.b16 %v251
      %v409 = vunpack.c.l.b16 %v252
      %v410 = vunpack.c.l.b16 %v253
      %v411 = vunpack.c.l.b16 %v254
      %v412 = vunpack.c.l.b16 %v255
      %v413 = vunpack.c.l.b16 %v256
      %v414 = vunpack.c.l.b16 %v257
      %v415 = vunpack.c.l.b16 %v258
      %v416 = vunpack.c.l.b16 %v259
      %v417 = vunpack.c.l.b16 %v260
      %v418 = vunpack.c.l.b16 %v261
      %v419 = vunpack.c.l.b16 %v262
      %v420 = vunpack.c.l.b16 %v263
      %v421 = vunpack.c.l.b16 %v264
      %v422 = vunpack.c.l.b16 %v265
      %v423 = vunpack.c.l.b16 %v266
      %v424 = vunpack.c.l.b16 %v267
      %v425 = vunpack.c.l.b16 %v268
      %v426 = vunpack.c.l.b16 %v269
      %v427 = vunpack.c.l.b16 %v270
      %v428 = vunpack.c.l.b16 %v271
      %v429 = vunpack.c.l.b16 %v272
      %v430 = vunpack.c.l.b16 %v273
      %v431 = vunpack.c.l.b16 %v274
      %v432 = vunpack.c.l.b16 %v275
      %v433 = vunpack.c.l.b16 %v276
      %v434 = vunpack.c.l.b16 %v277
      %v435 = vunpack.c.l.b16 %v278
      %v436 = vunpack.c.l.b16 %v279
      %v437 = vunpack.c.l.b16 %v280
      %v438 = vunpack.c.l.b16 %v281
      %v439 = vunpack.c.l.b16 %v282
      %v440 = vunpack.c.l.b16 %v283
      %v441 = vunpack.c.l.b16 %v284
      %v442 = vunpack.c.l.b16 %v285
      %v443 = vunpack.c.l.b16 %v286
      %v444 = vunpack.c.l.b16 %v287
      %v445 = vpack.c.b16 %v382, %v381
      %v446 = vpack.c.b16 %v384, %v383
      %v447 = vpack.c.b16 %v386, %v385
      %v448 = vpack.c.b16 %v388, %v387
      %v449 = vpack.c.b16 %v390, %v389
      %v450 = vpack.c.b16 %v392, %v391
      %v451 = vpack.c.b16 %v394, %v393
      %v452 = vpack.c.b16 %v396, %v395
      %v453 = vpack.c.b16 %v398, %v397
      %v454 = vpack.c.b16 %v400, %v399
      %v455 = vpack.c.b16 %v402, %v401
      %v456 = vpack.c.b16 %v404, %v403
      %v457 = vpack.c.b16 %v406, %v405
      %v458 = vpack.c.b16 %v408, %v407
      %v459 = vpack.c.b16 %v410, %v409
      %v460 = vpack.c.b16 %v412, %v411
      %v461 = vpack.c.b16 %v414, %v413
      %v462 = vpack.c.b16 %v416, %v415
      %v463 = vpack.c.b16 %v418, %v417
      %v464 = vpack.c.b16 %v420, %v419
      %v465 = vpack.c.b16 %v422, %v421
      %v466 = vpack.c.b16 %v424, %v423
      %v467 = vpack.c.b16 %v426, %v425
      %v468 = vpack.c.b16 %v428, %v427
      %v469 = vpack.c.b16 %v430, %v429
      %v470 = vpack.c.b16 %v432, %v431
      %v471 = vpack.c.b16 %v434, %v433
      %v472 = vpack.c.b16 %v436, %v435
      %v473 = vpack.c.b16 %v438, %v437
      %v474 = vpack.c.b16 %v440, %v439
      %v475 = vpack.c.b16 %v442, %v441
      %v476 = vpack.c.b16 %v444, %v443
      %509 = vmatprep.subr.bf16.mxu0 0
      %510 = vmatpush1.bf16.msra.mxu0 %v445
      %511 = vmatprep.subr.bf16.mxu0 0
      %512 = vmatpush1.bf16.msra.mxu0 %v446
      %513 = vmatprep.subr.bf16.mxu0 0
      %514 = vmatpush1.bf16.msra.mxu0 %v447
      %515 = vmatprep.subr.bf16.mxu0 0
      %516 = vmatpush1.bf16.msra.mxu0 %v448
      %517 = vmatprep.subr.bf16.mxu0 0
      %518 = vmatpush1.bf16.msra.mxu0 %v449
      %519 = vmatprep.subr.bf16.mxu0 0
      %520 = vmatpush1.bf16.msra.mxu0 %v450
      %521 = vmatprep.subr.bf16.mxu0 0
      %522 = vmatpush1.bf16.msra.mxu0 %v451
      %523 = vmatprep.subr.bf16.mxu0 0
      %524 = vmatpush1.bf16.msra.mxu0 %v452
      %525 = vmatprep.subr.bf16.mxu0 0
      %526 = vmatpush1.bf16.msra.mxu0 %v453
      %527 = vmatprep.subr.bf16.mxu0 0
      %528 = vmatpush1.bf16.msra.mxu0 %v454
      %529 = vmatprep.subr.bf16.mxu0 0
      %530 = vmatpush1.bf16.msra.mxu0 %v455
      %531 = vmatprep.subr.bf16.mxu0 0
      %532 = vmatpush1.bf16.msra.mxu0 %v456
      %533 = vmatprep.subr.bf16.mxu0 0
      %534 = vmatpush1.bf16.msra.mxu0 %v457
      %535 = vmatprep.subr.bf16.mxu0 0
      %536 = vmatpush1.bf16.msra.mxu0 %v458
      %537 = vmatprep.subr.bf16.mxu0 0
      %538 = vmatpush1.bf16.msra.mxu0 %v459
      %539 = vmatprep.subr.bf16.mxu0 0
      %540 = vmatpush1.bf16.msra.mxu0 %v460
      %541 = vmatprep.mubr.bf16.mxu0 %v310
      %542 = vmatmul.mubr.bf16.gmra.mrb[0].mxu0 %v303
      %v543 = vpop.f32.mrb[0].mxu0
      %v544 = vadd.f32 0.0, %v543
      %v545 = vpop.f32.mrb[0].mxu0
      %v546 = vpop.f32.mrb[0].mxu0
      %v547 = vpop.f32.mrb[0].mxu0
      %548 = vdwg.mxu0
      %549 = vmatprep.subr.bf16.mxu0 0
      %550 = vmatpush1.bf16.msra.mxu0 %v461
      %551 = vmatprep.subr.bf16.mxu0 0
      %552 = vmatpush1.bf16.msra.mxu0 %v462
      %553 = vmatprep.subr.bf16.mxu0 0
      %554 = vmatpush1.bf16.msra.mxu0 %v463
      %555 = vmatprep.subr.bf16.mxu0 0
      %556 = vmatpush1.bf16.msra.mxu0 %v464
      %557 = vmatprep.subr.bf16.mxu0 0
      %558 = vmatpush1.bf16.msra.mxu0 %v465
      %559 = vmatprep.subr.bf16.mxu0 0
      %560 = vmatpush1.bf16.msra.mxu0 %v466
      %561 = vmatprep.subr.bf16.mxu0 0
      %562 = vmatpush1.bf16.msra.mxu0 %v467
      %563 = vmatprep.subr.bf16.mxu0 0
      %564 = vmatpush1.bf16.msra.mxu0 %v468
      %565 = vmatprep.subr.bf16.mxu0 0
      %566 = vmatpush1.bf16.msra.mxu0 %v469
      %567 = vmatprep.subr.bf16.mxu0 0
      %568 = vmatpush1.bf16.msra.mxu0 %v470
      %569 = vmatprep.subr.bf16.mxu0 0
      %570 = vmatpush1.bf16.msra.mxu0 %v471
      %571 = vmatprep.subr.bf16.mxu0 0
      %572 = vmatpush1.bf16.msra.mxu0 %v472
      %573 = vmatprep.subr.bf16.mxu0 0
      %574 = vmatpush1.bf16.msra.mxu0 %v473
      %575 = vmatprep.subr.bf16.mxu0 0
      %576 = vmatpush1.bf16.msra.mxu0 %v474
      %577 = vmatprep.subr.bf16.mxu0 0
      %578 = vmatpush1.bf16.msra.mxu0 %v475
      %579 = vmatprep.subr.bf16.mxu0 0
      %580 = vmatpush1.bf16.msra.mxu0 %v476
      %581 = vmatprep.mubr.bf16.mxu0 %v312
      %582 = vmatmul.mubr.bf16.gmra.mrb[0].mxu0 %v311
      %v583 = vpop.f32.mrb[0].mxu0
      %v584 = vadd.f32 %v544, %v583
      %v585 = vpop.f32.mrb[0].mxu0
      %v586 = vpop.f32.mrb[0].mxu0
      %v587 = vpop.f32.mrb[0].mxu0
      %588 = vdwg.mxu0
      %v589 = vadd.f32 %v222, %v584
      %590 = vst [vmem:[#allocation2] sm:$0x1] %v589
      %p591 = scmp.eq.s32.totalorder %s21, 15
      // Predicated region
      $region37: #{discriminator_forward.15} parent=31 // pred_check
        %p592 = pneg %p591
      $region38: #{discriminator_forward.15} parent=31 // pred_check_branch
        %594 = sbr.rel (%p592) target = $region40
      $region39: #{discriminator_forward.15} parent=31 // pred_region
        %v595 = vld [vmem:[#allocation2] sm:$0x1]
        %v596 = vld [vmem:[#allocation3] sm:$0x1]
        %598 = vset.pattern.permute.xlu0 0
        %599 = vperm.xlu0 %598, %v596
        %v600 = vpop.permute.xlu0 %599
        %v602 = vlaneseq
        %v603 = vshrl.u32 %v602, 7
        %v604 = vsub.s32 0, %v603
        %v605 = vrot.slane %v600, %v604
        %v606 = vadd.f32 %v595, %v605
        %v607 = vxor.u32 %v606, 2147483648
        %v608 = vmul.f32 %v607, 1.442695
        %v609 = vpow.pop %v608
        %v610 = vadd.f32 %v609, 1.0
        %v611 = vrcp.pop %v610
        %v612 = vmul.f32 1.0, %v611
        %v613 = vlaneseq
        %v614 = vand.u32 %v613, 127
        %vm615 = vcmp.lt.s32.totalorder %v614, 4
        %v616 = vsel %vm615, %v612, 0.0
        %vm617 = vcmask 1040384
        %v618 = vsel %vm617, %v616, 0.0
        %619 = vadd.xlane.f32.xlu0 %v618
        %v620 = vpop.xlane.xlu0 %619
        %v621 = vrot.slane %v620, 4
        %v622 = vadd.f32 %v620, %v621
        %v623 = vrot.slane %v622, 2
        %v624 = vadd.f32 %v622, %v623
        %v625 = vrot.slane %v624, 1
        %v626 = vadd.f32 %v624, %v625
        %s627 = vtos %v626
        %v628 = vrcp.pop 4.0
        %s629 = vtos %v628
        %s630 = smul.f32 %s627, %s629
        %v631 = vstv %s630
        %vm632 = vcmask 0
        %633 = vst.msk [vmem:[%s215] sm:$0x1] %vm632, %v631
      $region40: #{discriminator_forward.15} parent=31 // pred_fallthru
        _
      %p634 = scmp.lt.s32.totalorder %s20, 1
      %s635 = scalar_select %p634, %s20, 1
      %s636 = scalar_lea.vmem %s3, %s635
      // Predicated region
      $region41: #{discriminator_forward.15} parent=31 // pred_check
        %p637 = pneg %p121
      $region42: #{discriminator_forward.15} parent=31 // pred_check_branch
        %639 = sbr.rel (%p637) target = $region44
      $region43: #{discriminator_forward.15} parent=31 // pred_region
        _
      $region44: #{discriminator_forward.15} parent=31 // pred_fallthru
        _
    $region32: #{discriminator_forward.15} parent=5 // pred_fallthru
      _
    %p640 = scmp.le.s32.totalorder 2, %s11
    // Predicated region
    $region45: #{discriminator_forward.15} parent=5 // pred_check
      %p641 = pneg %p640
    $region46: #{discriminator_forward.15} parent=5 // pred_check_branch
      %643 = sbr.rel (%p641) target = $region48
    $region47: #{discriminator_forward.15} parent=5 // pred_region
      %s644 = ssub.s32 %s11, 2
      // Predicated region
      $region49: #{discriminator_forward.15} parent=47 // pred_check
        %p645 = pneg %p127
      $region50: #{discriminator_forward.15} parent=47 // pred_check_branch
        %647 = sbr.rel (%p645) target = $region52
      $region51: #{discriminator_forward.15} parent=47 // pred_region
        %p648 = scmp.lt.s32.totalorder %s22, 1
        %s649 = scalar_select %p648, %s22, 1
        %s650 = scalar_lea.vmem %s3, %s649
      $region52: #{discriminator_forward.15} parent=47 // pred_fallthru
        _
    $region48: #{discriminator_forward.15} parent=5 // pred_fallthru
      _
  $region6: #{discriminator_forward.15} parent=0 // loop_footer
    %s15 = sadd.s32 1, %s11
  $region7: #{discriminator_forward.15} parent=0 // loop_footer_branch
    %10 = sbr.rel target = $region3
  $region8: #{discriminator_forward.15} parent=0 // loop_exit
    _

</llo_original>
